<compile_context>
chip_gen: v7x
topology: tpu7x:2x2x1
jax: 0.10.0
libtpu: 0.0.40
codegen_flags: <defaults>
</compile_context>

<pallas_src>
import jax
import jax.numpy as jnp
from jax.experimental import pallas as pl
from jax.experimental.pallas import tpu as pltpu


def _round_up(x, m):
    return (x + m - 1) // m * m


# ---------------------------------------------------------------------------
# Kernel A: conv1 + conv2 + ReLU + 2x2 max-pool + lane-dense repack (fused)
#   p1_ref : (B, 840, 16)  bf16  im2col patches; row = h*32 + w (h,w < 26 valid),
#                                lane t = 3*dy + dx (t < 9 valid), rest zero.
#   w1_ref : (16, 128)     bf16  conv1 weights (rows = taps, cols = out-chan, 32 real)
#   b1_ref : (1, 128)      f32
#   w2_ref : (1152, 128)   bf16  conv2 weights, row = tap*128 + in-chan, col = out-chan (64 real)
#   b2_ref : (1, 128)      f32
#   sel_ref: (288, 384)    bf16  4 stacked row-selection matrices for the W-pool gather
#   lp_ref : (128, 128)    bf16  lane permutation: lanes 0..63 -> 64..127
#   o_ref  : (B, 72, 128)  bf16  pooled features, row j = hp*6 + wq, lane l = (w%2)*64 + c
# ---------------------------------------------------------------------------
def _conv_kernel(p1_ref, w1_ref, b1_ref, w2_ref, b2_ref, sel_ref, lp_ref, o_ref):
    w1 = w1_ref[...]
    b1 = b1_ref[...]
    w2 = w2_ref[...]
    b2 = b2_ref[...]
    sel = sel_ref[...]
    lperm = lp_ref[...]
    B = o_ref.shape[0]

    def body(bl, carry):
        # ---- conv1: (840,16) @ (16,128) + bias + ReLU; never leaves VMEM ----
        a1 = jnp.dot(p1_ref[bl], w1, preferred_element_type=jnp.float32)      # (840,128)
        y1 = jnp.maximum(a1 + b1, 0.0).astype(jnp.bfloat16)

        # ---- conv2 as a single concatenated-K matmul (9 taps -> K = 1152) ----
        taps = [y1[dy * 32 + dx: dy * 32 + dx + 768, :]
                for dy in range(3) for dx in range(3)]                        # 9 x (768,128)
        lhs = jnp.concatenate(taps, axis=1)                                   # (768,1152)
        y2 = jnp.dot(lhs, w2, preferred_element_type=jnp.float32)             # (768,128)
        y2 = jnp.maximum(y2 + b2, 0.0)

        # ---- 2x2 max-pool: H half via reshape, W half via tiny selection matmuls ----
        y2 = y2.reshape(12, 2, 32, 128)
        yh = jnp.maximum(y2[:, 0], y2[:, 1]).reshape(384, 128)                # rows = hp*32 + w
        g = jnp.dot(sel, yh.astype(jnp.bfloat16),
                    preferred_element_type=jnp.float32)                       # (288,128)
        p_even = jnp.maximum(g[0:72], g[72:144])                              # max over (w, w+1)
        p_odd = jnp.maximum(g[144:216], g[216:288])                           # max over (w+2, w+3)
        # pack: lanes 0..63 <- even pooled W position, lanes 64..127 <- odd pooled W position
        z = p_even + jnp.dot(p_odd.astype(jnp.bfloat16), lperm,
                             preferred_element_type=jnp.float32)              # (72,128)
        o_ref[bl] = z.astype(o_ref.dtype)
        return carry

    jax.lax.fori_loop(0, B, body, 0)


def conv_block(p1, w1m, b1c, w2m, b2c, sel, lperm, *, B):
    Np = p1.shape[0]
    return pl.pallas_call(
        _conv_kernel,
        out_shape=jax.ShapeDtypeStruct((Np, 72, 128), jnp.bfloat16),
        grid=(Np // B,),
        in_specs=[
            pl.BlockSpec((B, 840, 16), lambda i: (i, 0, 0)),
            pl.BlockSpec((16, 128), lambda i: (0, 0)),
            pl.BlockSpec((1, 128), lambda i: (0, 0)),
            pl.BlockSpec((1152, 128), lambda i: (0, 0)),
            pl.BlockSpec((1, 128), lambda i: (0, 0)),
            pl.BlockSpec((288, 384), lambda i: (0, 0)),
            pl.BlockSpec((128, 128), lambda i: (0, 0)),
        ],
        out_specs=pl.BlockSpec((B, 72, 128), lambda i: (i, 0, 0)),
        compiler_params=pltpu.CompilerParams(dimension_semantics=("parallel",)),
    )(p1, w1m, b1c, w2m, b2c, sel, lperm)


# ---------------------------------------------------------------------------
# Kernel B: fc1 (D = 9216, weight VMEM-resident) + ReLU + fc2 + log_softmax
# ---------------------------------------------------------------------------
def _head_kernel(x_ref, w1_ref, b1_ref, w2_ref, b2_ref, o_ref):
    h = jnp.dot(x_ref[...], w1_ref[...], preferred_element_type=jnp.float32)  # (tn,128)
    h = jnp.maximum(h + b1_ref[...], 0.0)
    logits = jnp.dot(h, w2_ref[...], preferred_element_type=jnp.float32) + b2_ref[...]
    m = jnp.max(logits, axis=1, keepdims=True)
    s = logits - m
    lse = jnp.log(jnp.sum(jnp.exp(s), axis=1, keepdims=True))
    o_ref[...] = (s - lse).astype(o_ref.dtype)


def head(xf, w1, b1, w2, b2, *, tn):
    Np, D = xf.shape
    H = w1.shape[1]   # 128
    C = w2.shape[1]   # 10
    return pl.pallas_call(
        _head_kernel,
        out_shape=jax.ShapeDtypeStruct((Np, C), jnp.float32),
        grid=(Np // tn,),
        in_specs=[
            pl.BlockSpec((tn, D), lambda i: (i, 0)),
            pl.BlockSpec((D, H), lambda i: (0, 0)),   # constant block index -> fetched once
            pl.BlockSpec((1, H), lambda i: (0, 0)),
            pl.BlockSpec((H, C), lambda i: (0, 0)),
            pl.BlockSpec((1, C), lambda i: (0, 0)),
        ],
        out_specs=pl.BlockSpec((tn, C), lambda i: (i, 0)),
        compiler_params=pltpu.CompilerParams(dimension_semantics=("parallel",)),
    )(xf, w1, b1, w2, b2)


# ---------------------------------------------------------------------------
# Glue: one-time parameter packing + full forward
# ---------------------------------------------------------------------------
def cnn_forward(x, params):
    N = x.shape[0]
    f32, bf16 = jnp.float32, jnp.bfloat16

    # ---- tile / padded-batch selection ----
    TN = min(256, max(8, _round_up(pl.cdiv(N, 2), 8)))   # head batch tile (>=2 tiles for 2 TCs)
    Np = _round_up(N, TN)                                 # padded batch, multiple of 8
    B = 8 if Np >= 16 else 4                              # conv images per grid step

    # ---- weight packing (identical numerics; padded channels use zero weights/bias) ----
    w1m = jnp.zeros((16, 128), f32).at[:9, :32].set(
        params["conv1_w"].reshape(32, 9).T).astype(bf16)                     # (taps, cout)
    b1c = jnp.zeros((1, 128), f32).at[0, :32].set(params["conv1_b"])

    w2t = jnp.transpose(params["conv2_w"], (2, 3, 1, 0))                     # (dy,dx,cin,cout)
    w2m = jnp.zeros((3, 3, 128, 128), f32).at[:, :, :32, :64].set(w2t)
    w2m = w2m.reshape(1152, 128).astype(bf16)                                # concat-K layout
    b2c = jnp.zeros((1, 128), f32).at[0, :64].set(params["conv2_b"])

    # fc1 columns re-permuted once so the lane-dense (h, w, c) flatten (D = 9216, no padding)
    # matches PyTorch's NCHW .view(-1, 64*12*12) order.
    wf1 = params["fc1_w"].reshape(128, 64, 12, 12).transpose(2, 3, 1, 0)     # (h,w,c,out)
    wf1 = wf1.reshape(9216, 128).astype(bf16)
    bf1 = params["fc1_b"][None, :].astype(f32)                               # (1,128)
    wf2 = params["fc2_w"].T.astype(f32)                                      # (128,10)
    bf2 = params["fc2_b"][None, :].astype(f32)                               # (1,10)

    # W-pool row-gather selections (offsets 0..3 from rows hp*32 + 4*wq) and lane permutation.
    r72 = jnp.arange(72)
    base = (r72 // 6) * 32 + (r72 % 6) * 4
    sel = (base[None, :, None] + jnp.arange(4)[:, None, None]
           == jnp.arange(384)[None, None, :]).reshape(288, 384).astype(bf16)
    lane = jnp.arange(128)
    lperm = ((lane[:, None] + 64) == lane[None, :]).astype(bf16)             # (128,128)

    # ---- conv1 im2col patches (tiny, ~27 KB/image), batch padded to Np ----
    x2 = jnp.pad(x.reshape(N, 28, 28), ((0, Np - N), (0, 0), (0, 0)))
    cols = jnp.stack([x2[:, dy:dy + 26, dx:dx + 26]
                      for dy in range(3) for dx in range(3)], axis=-1)       # (Np,26,26,9)
    cols = jnp.pad(cols, ((0, 0), (0, 0), (0, 6), (0, 7)))                   # (Np,26,32,16)
    p1 = jnp.pad(cols.reshape(Np, 832, 16), ((0, 0), (0, 8), (0, 0))).astype(bf16)

    # ---- fused conv1 + conv2 + ReLU + 2x2 max-pool + repack ----
    y = conv_block(p1, w1m, b1c, w2m, b2c, sel, lperm, B=B)                  # (Np,72,128) bf16

    # dropout(p=0.25): identity in eval/inference mode -> no-op here.
    xf = y.reshape(Np, 9216)                                                 # free bitcast reshape

    # ---- fc1 + ReLU + fc2 + log_softmax ----
    out = head(xf, wf1, bf1, wf2, bf2, tn=TN)                                # (Np,10) f32
    return out[:N]


def init_params(key):
    ks = jax.random.split(key, 8)
    s = 0.05
    return {
        "conv1_w": jax.random.normal(ks[0], (32, 1, 3, 3), jnp.float32) * s,
        "conv1_b": jax.random.normal(ks[1], (32,), jnp.float32) * s,
        "conv2_w": jax.random.normal(ks[2], (64, 32, 3, 3), jnp.float32) * s,
        "conv2_b": jax.random.normal(ks[3], (64,), jnp.float32) * s,
        "fc1_w": jax.random.normal(ks[4], (128, 9216), jnp.float32) * s,
        "fc1_b": jax.random.normal(ks[5], (128,), jnp.float32) * s,
        "fc2_w": jax.random.normal(ks[6], (10, 128), jnp.float32) * s,
        "fc2_b": jax.random.normal(ks[7], (10,), jnp.float32) * s,
    }


if __name__ == "__main__":
    key = jax.random.PRNGKey(0)
    pkey, xkey = jax.random.split(key)
    params = init_params(pkey)

    # MNIST-shaped input (the module's fc1 = Linear(9216,128) forces 1x28x28).
    x = jax.random.normal(xkey, (2, 1, 28, 28), jnp.float32)

    fwd = jax.jit(cnn_forward)
    out = jax.block_until_ready(fwd(x, params))

    assert out.shape == (2, 10) and out.dtype == jnp.float32
    # log_softmax rows must exponentiate-sum to ~1
    assert bool(jnp.all(jnp.abs(jnp.sum(jnp.exp(out), axis=1) - 1.0) < 1e-3))
    print("KERNEL_OK")
</pallas_src>

<mosaic_0001>
module attributes {stable_mosaic.version = 11 : i64} {
  func.func @_conv_kernel(%arg0: i32, %arg1: memref<4x840x16xbf16, #tpu.memory_space<vmem>>, %arg2: memref<16x128xbf16, #tpu.memory_space<vmem>>, %arg3: memref<1x128xf32, #tpu.memory_space<vmem>>, %arg4: memref<1152x128xbf16, #tpu.memory_space<vmem>>, %arg5: memref<1x128xf32, #tpu.memory_space<vmem>>, %arg6: memref<288x384xbf16, #tpu.memory_space<vmem>>, %arg7: memref<128x128xbf16, #tpu.memory_space<vmem>>, %arg8: memref<4x72x128xbf16, #tpu.memory_space<vmem>>) attributes {dimension_semantics = [#tpu.dimension_semantics<parallel>], iteration_bounds = array<i64: 2>, scalar_prefetch = 0 : i64, scratch_operands = 0 : i64, tpu.core_type = #tpu.core_type<tc>, window_params = [{transform_indices = @transform_0, window_bounds = array<i64: 4, 840, 16>}, {pipeline_mode = #tpu.pipeline_mode<synchronous>, transform_indices = @transform_1, window_bounds = array<i64: 16, 128>}, {pipeline_mode = #tpu.pipeline_mode<synchronous>, transform_indices = @transform_2, window_bounds = array<i64: 1, 128>}, {pipeline_mode = #tpu.pipeline_mode<synchronous>, transform_indices = @transform_3, window_bounds = array<i64: 1152, 128>}, {pipeline_mode = #tpu.pipeline_mode<synchronous>, transform_indices = @transform_4, window_bounds = array<i64: 1, 128>}, {pipeline_mode = #tpu.pipeline_mode<synchronous>, transform_indices = @transform_5, window_bounds = array<i64: 288, 384>}, {pipeline_mode = #tpu.pipeline_mode<synchronous>, transform_indices = @transform_6, window_bounds = array<i64: 128, 128>}, {transform_indices = @transform_7, window_bounds = array<i64: 4, 72, 128>}]} {
    %c0 = arith.constant 0 : index
    %c0_0 = arith.constant 0 : index
    %0 = vector.load %arg2[%c0, %c0_0] : memref<16x128xbf16, #tpu.memory_space<vmem>>, vector<16x128xbf16>
    %c0_1 = arith.constant 0 : index
    %c0_2 = arith.constant 0 : index
    %1 = vector.load %arg3[%c0_1, %c0_2] : memref<1x128xf32, #tpu.memory_space<vmem>>, vector<1x128xf32>
    %c0_3 = arith.constant 0 : index
    %c0_4 = arith.constant 0 : index
    %2 = vector.load %arg4[%c0_3, %c0_4] : memref<1152x128xbf16, #tpu.memory_space<vmem>>, vector<1152x128xbf16>
    %c0_5 = arith.constant 0 : index
    %c0_6 = arith.constant 0 : index
    %3 = vector.load %arg5[%c0_5, %c0_6] : memref<1x128xf32, #tpu.memory_space<vmem>>, vector<1x128xf32>
    %c0_7 = arith.constant 0 : index
    %c0_8 = arith.constant 0 : index
    %4 = vector.load %arg6[%c0_7, %c0_8] : memref<288x384xbf16, #tpu.memory_space<vmem>>, vector<288x384xbf16>
    %c0_9 = arith.constant 0 : index
    %c0_10 = arith.constant 0 : index
    %5 = vector.load %arg7[%c0_9, %c0_10] : memref<128x128xbf16, #tpu.memory_space<vmem>>, vector<128x128xbf16>
    %c0_i32 = arith.constant 0 : i32
    %c4_i32 = arith.constant 4 : i32
    %6 = arith.addi %c0_i32, %c4_i32 : i32
    %c1_i32 = arith.constant 1 : i32
    scf.for %arg9 = %c0_i32 to %6 step %c1_i32  : i32 {
      %7 = arith.index_cast %arg9 : i32 to index
      %c0_12 = arith.constant 0 : index
      %c0_13 = arith.constant 0 : index
      %8 = vector.load %arg1[%7, %c0_12, %c0_13] : memref<4x840x16xbf16, #tpu.memory_space<vmem>>, vector<1x840x16xbf16>
      %9 = vector.shape_cast %8 : vector<1x840x16xbf16> to vector<840x16xbf16>
      %cst = arith.constant dense<0.000000e+00> : vector<840x128xf32>
      %10 = tpu.matmul %9, %0, %cst {dimension_numbers = #tpu.dot_dimension_numbers<[1], [0], [0], [1], [0, 0, 1, 1], [], []>} : vector<840x16xbf16>, vector<16x128xbf16>, vector<840x128xf32> -> vector<840x128xf32>
      %11 = vector.broadcast %1 : vector<1x128xf32> to vector<840x128xf32>
      %12 = arith.addf %10, %11 : vector<840x128xf32>
      %cst_14 = arith.constant 0.000000e+00 : f32
      %13 = vector.broadcast %cst_14 : f32 to vector<840x128xf32>
      %14 = arith.maximumf %12, %13 : vector<840x128xf32>
      %15 = arith.truncf %14 : vector<840x128xf32> to vector<840x128xbf16>
      %16 = vector.extract_strided_slice %15 {offsets = [0, 0], sizes = [768, 128], strides = [1, 1]} : vector<840x128xbf16> to vector<768x128xbf16>
      %17 = vector.extract_strided_slice %15 {offsets = [1, 0], sizes = [768, 128], strides = [1, 1]} : vector<840x128xbf16> to vector<768x128xbf16>
      %18 = vector.extract_strided_slice %15 {offsets = [2, 0], sizes = [768, 128], strides = [1, 1]} : vector<840x128xbf16> to vector<768x128xbf16>
      %19 = vector.extract_strided_slice %15 {offsets = [32, 0], sizes = [768, 128], strides = [1, 1]} : vector<840x128xbf16> to vector<768x128xbf16>
      %20 = vector.extract_strided_slice %15 {offsets = [33, 0], sizes = [768, 128], strides = [1, 1]} : vector<840x128xbf16> to vector<768x128xbf16>
      %21 = vector.extract_strided_slice %15 {offsets = [34, 0], sizes = [768, 128], strides = [1, 1]} : vector<840x128xbf16> to vector<768x128xbf16>
      %22 = vector.extract_strided_slice %15 {offsets = [64, 0], sizes = [768, 128], strides = [1, 1]} : vector<840x128xbf16> to vector<768x128xbf16>
      %23 = vector.extract_strided_slice %15 {offsets = [65, 0], sizes = [768, 128], strides = [1, 1]} : vector<840x128xbf16> to vector<768x128xbf16>
      %24 = vector.extract_strided_slice %15 {offsets = [66, 0], sizes = [768, 128], strides = [1, 1]} : vector<840x128xbf16> to vector<768x128xbf16>
      %25 = tpu.concatenate %16, %17, %18, %19, %20, %21, %22, %23, %24 in 1 : vector<768x128xbf16>, vector<768x128xbf16>, vector<768x128xbf16>, vector<768x128xbf16>, vector<768x128xbf16>, vector<768x128xbf16>, vector<768x128xbf16>, vector<768x128xbf16>, vector<768x128xbf16> -> vector<768x1152xbf16>
      %cst_15 = arith.constant dense<0.000000e+00> : vector<768x128xf32>
      %26 = tpu.matmul %25, %2, %cst_15 {dimension_numbers = #tpu.dot_dimension_numbers<[1], [0], [0], [1], [0, 0, 1, 1], [], []>} : vector<768x1152xbf16>, vector<1152x128xbf16>, vector<768x128xf32> -> vector<768x128xf32>
      %27 = vector.broadcast %3 : vector<1x128xf32> to vector<768x128xf32>
      %28 = arith.addf %26, %27 : vector<768x128xf32>
      %cst_16 = arith.constant 0.000000e+00 : f32
      %29 = vector.broadcast %cst_16 : f32 to vector<768x128xf32>
      %30 = arith.maximumf %28, %29 : vector<768x128xf32>
      %31 = vector.shape_cast %30 : vector<768x128xf32> to vector<12x2x32x128xf32>
      %32 = vector.extract_strided_slice %31 {offsets = [0, 0, 0, 0], sizes = [12, 1, 32, 128], strides = [1, 1, 1, 1]} : vector<12x2x32x128xf32> to vector<12x1x32x128xf32>
      %33 = vector.shape_cast %32 : vector<12x1x32x128xf32> to vector<12x32x128xf32>
      %34 = vector.extract_strided_slice %31 {offsets = [0, 1, 0, 0], sizes = [12, 1, 32, 128], strides = [1, 1, 1, 1]} : vector<12x2x32x128xf32> to vector<12x1x32x128xf32>
      %35 = vector.shape_cast %34 : vector<12x1x32x128xf32> to vector<12x32x128xf32>
      %36 = arith.maximumf %33, %35 : vector<12x32x128xf32>
      %37 = vector.shape_cast %36 : vector<12x32x128xf32> to vector<384x128xf32>
      %38 = arith.truncf %37 : vector<384x128xf32> to vector<384x128xbf16>
      %cst_17 = arith.constant dense<0.000000e+00> : vector<288x128xf32>
      %39 = tpu.matmul %4, %38, %cst_17 {dimension_numbers = #tpu.dot_dimension_numbers<[1], [0], [0], [1], [0, 0, 1, 1], [], []>} : vector<288x384xbf16>, vector<384x128xbf16>, vector<288x128xf32> -> vector<288x128xf32>
      %40 = vector.extract_strided_slice %39 {offsets = [0, 0], sizes = [72, 128], strides = [1, 1]} : vector<288x128xf32> to vector<72x128xf32>
      %41 = vector.extract_strided_slice %39 {offsets = [72, 0], sizes = [72, 128], strides = [1, 1]} : vector<288x128xf32> to vector<72x128xf32>
      %42 = arith.maximumf %40, %41 : vector<72x128xf32>
      %43 = vector.extract_strided_slice %39 {offsets = [144, 0], sizes = [72, 128], strides = [1, 1]} : vector<288x128xf32> to vector<72x128xf32>
      %44 = vector.extract_strided_slice %39 {offsets = [216, 0], sizes = [72, 128], strides = [1, 1]} : vector<288x128xf32> to vector<72x128xf32>
      %45 = arith.maximumf %43, %44 : vector<72x128xf32>
      %46 = arith.truncf %45 : vector<72x128xf32> to vector<72x128xbf16>
      %cst_18 = arith.constant dense<0.000000e+00> : vector<72x128xf32>
      %47 = tpu.matmul %46, %5, %cst_18 {dimension_numbers = #tpu.dot_dimension_numbers<[1], [0], [0], [1], [0, 0, 1, 1], [], []>} : vector<72x128xbf16>, vector<128x128xbf16>, vector<72x128xf32> -> vector<72x128xf32>
      %48 = arith.addf %42, %47 : vector<72x128xf32>
      %49 = arith.truncf %48 : vector<72x128xf32> to vector<72x128xbf16>
      %50 = arith.index_cast %arg9 : i32 to index
      %c0_19 = arith.constant 0 : index
      %c0_20 = arith.constant 0 : index
      %51 = vector.load %arg8[%50, %c0_19, %c0_20] : memref<4x72x128xbf16, #tpu.memory_space<vmem>>, vector<1x72x128xbf16>
      %52 = vector.shape_cast %51 : vector<1x72x128xbf16> to vector<72x128xbf16>
      %53 = vector.shape_cast %49 : vector<72x128xbf16> to vector<1x72x128xbf16>
      tpu.vector_store %arg8[%50, %c0_19, %c0_20], %53 {strides = array<i32>} : memref<4x72x128xbf16, #tpu.memory_space<vmem>>, vector<1x72x128xbf16>,
    }
    %c4_i32_11 = arith.constant 4 : i32
    return
  }
  func.func @transform_0(%arg0: i32) -> (i32, i32, i32) {
    %c0_i32 = arith.constant 0 : i32
    %c0_i32_0 = arith.constant 0 : i32
    %c0_i32_1 = arith.constant 0 : i32
    return %arg0, %c0_i32, %c0_i32_0 : i32, i32, i32
  }
  func.func @transform_1(%arg0: i32) -> (i32, i32) {
    %c0_i32 = arith.constant 0 : i32
    %c0_i32_0 = arith.constant 0 : i32
    %c0_i32_1 = arith.constant 0 : i32
    return %c0_i32, %c0_i32_0 : i32, i32
  }
  func.func @transform_2(%arg0: i32) -> (i32, i32) {
    %c0_i32 = arith.constant 0 : i32
    %c0_i32_0 = arith.constant 0 : i32
    %c0_i32_1 = arith.constant 0 : i32
    return %c0_i32, %c0_i32_0 : i32, i32
  }
  func.func @transform_3(%arg0: i32) -> (i32, i32) {
    %c0_i32 = arith.constant 0 : i32
    %c0_i32_0 = arith.constant 0 : i32
    %c0_i32_1 = arith.constant 0 : i32
    return %c0_i32, %c0_i32_0 : i32, i32
  }
  func.func @transform_4(%arg0: i32) -> (i32, i32) {
    %c0_i32 = arith.constant 0 : i32
    %c0_i32_0 = arith.constant 0 : i32
    %c0_i32_1 = arith.constant 0 : i32
    return %c0_i32, %c0_i32_0 : i32, i32
  }
  func.func @transform_5(%arg0: i32) -> (i32, i32) {
    %c0_i32 = arith.constant 0 : i32
    %c0_i32_0 = arith.constant 0 : i32
    %c0_i32_1 = arith.constant 0 : i32
    return %c0_i32, %c0_i32_0 : i32, i32
  }
  func.func @transform_6(%arg0: i32) -> (i32, i32) {
    %c0_i32 = arith.constant 0 : i32
    %c0_i32_0 = arith.constant 0 : i32
    %c0_i32_1 = arith.constant 0 : i32
    return %c0_i32, %c0_i32_0 : i32, i32
  }
  func.func @transform_7(%arg0: i32) -> (i32, i32, i32) {
    %c0_i32 = arith.constant 0 : i32
    %c0_i32_0 = arith.constant 0 : i32
    %c0_i32_1 = arith.constant 0 : i32
    return %arg0, %c0_i32, %c0_i32_0 : i32, i32, i32
  }
}

module attributes {stable_mosaic.version = 11 : i64} {
  func.func @_head_kernel(%arg0: i32, %arg1: memref<8x9216xbf16, #tpu.memory_space<vmem>>, %arg2: memref<9216x128xbf16, #tpu.memory_space<vmem>>, %arg3: memref<1x128xf32, #tpu.memory_space<vmem>>, %arg4: memref<128x10xf32, #tpu.memory_space<vmem>>, %arg5: memref<1x10xf32, #tpu.memory_space<vmem>>, %arg6: memref<8x10xf32, #tpu.memory_space<vmem>>) attributes {dimension_semantics = [#tpu.dimension_semantics<parallel>], iteration_bounds = array<i64: 1>, scalar_prefetch = 0 : i64, scratch_operands = 0 : i64, tpu.core_type = #tpu.core_type<tc>, window_params = [{transform_indices = @transform_0, window_bounds = array<i64: 8, 9216>}, {pipeline_mode = #tpu.pipeline_mode<synchronous>, transform_indices = @transform_1, window_bounds = array<i64: 9216, 128>}, {pipeline_mode = #tpu.pipeline_mode<synchronous>, transform_indices = @transform_2, window_bounds = array<i64: 1, 128>}, {pipeline_mode = #tpu.pipeline_mode<synchronous>, transform_indices = @transform_3, window_bounds = array<i64: 128, 10>}, {pipeline_mode = #tpu.pipeline_mode<synchronous>, transform_indices = @transform_4, window_bounds = array<i64: 1, 10>}, {transform_indices = @transform_5, window_bounds = array<i64: 8, 10>}]} {
    %c0 = arith.constant 0 : index
    %c0_0 = arith.constant 0 : index
    %0 = vector.load %arg1[%c0, %c0_0] : memref<8x9216xbf16, #tpu.memory_space<vmem>>, vector<8x9216xbf16>
    %c0_1 = arith.constant 0 : index
    %c0_2 = arith.constant 0 : index
    %1 = vector.load %arg2[%c0_1, %c0_2] : memref<9216x128xbf16, #tpu.memory_space<vmem>>, vector<9216x128xbf16>
    %cst = arith.constant dense<0.000000e+00> : vector<8x128xf32>
    %2 = tpu.matmul %0, %1, %cst {dimension_numbers = #tpu.dot_dimension_numbers<[1], [0], [0], [1], [0, 0, 1, 1], [], []>} : vector<8x9216xbf16>, vector<9216x128xbf16>, vector<8x128xf32> -> vector<8x128xf32>
    %c0_3 = arith.constant 0 : index
    %c0_4 = arith.constant 0 : index
    %3 = vector.load %arg3[%c0_3, %c0_4] : memref<1x128xf32, #tpu.memory_space<vmem>>, vector<1x128xf32>
    %4 = vector.broadcast %3 : vector<1x128xf32> to vector<8x128xf32>
    %5 = arith.addf %2, %4 : vector<8x128xf32>
    %cst_5 = arith.constant 0.000000e+00 : f32
    %6 = vector.broadcast %cst_5 : f32 to vector<8x128xf32>
    %7 = arith.maximumf %5, %6 : vector<8x128xf32>
    %c0_6 = arith.constant 0 : index
    %c0_7 = arith.constant 0 : index
    %8 = vector.load %arg4[%c0_6, %c0_7] : memref<128x10xf32, #tpu.memory_space<vmem>>, vector<128x10xf32>
    %cst_8 = arith.constant dense<0.000000e+00> : vector<8x10xf32>
    %9 = tpu.matmul %7, %8, %cst_8 {dimension_numbers = #tpu.dot_dimension_numbers<[1], [0], [0], [1], [0, 0, 1, 1], [], []>} : vector<8x128xf32>, vector<128x10xf32>, vector<8x10xf32> -> vector<8x10xf32>
    %c0_9 = arith.constant 0 : index
    %c0_10 = arith.constant 0 : index
    %10 = vector.load %arg5[%c0_9, %c0_10] : memref<1x10xf32, #tpu.memory_space<vmem>>, vector<1x10xf32>
    %11 = vector.broadcast %10 : vector<1x10xf32> to vector<8x10xf32>
    %12 = arith.addf %9, %11 : vector<8x10xf32>
    %cst_11 = arith.constant dense<0xFF800000> : vector<8xf32>
    %13 = vector.multi_reduction <maximumf>, %12, %cst_11 [1] : vector<8x10xf32> to vector<8xf32>
    %14 = vector.shape_cast %13 : vector<8xf32> to vector<8x1xf32>
    %15 = vector.broadcast %14 : vector<8x1xf32> to vector<8x10xf32>
    %16 = arith.subf %12, %15 : vector<8x10xf32>
    %17 = math.exp %16 : vector<8x10xf32>
    %cst_12 = arith.constant dense<0.000000e+00> : vector<8xf32>
    %18 = vector.multi_reduction <add>, %17, %cst_12 [1] : vector<8x10xf32> to vector<8xf32>
    %19 = vector.shape_cast %18 : vector<8xf32> to vector<8x1xf32>
    %20 = math.log %19 : vector<8x1xf32>
    %21 = vector.broadcast %20 : vector<8x1xf32> to vector<8x10xf32>
    %22 = arith.subf %16, %21 : vector<8x10xf32>
    %c0_13 = arith.constant 0 : index
    %c0_14 = arith.constant 0 : index
    %23 = vector.load %arg6[%c0_13, %c0_14] : memref<8x10xf32, #tpu.memory_space<vmem>>, vector<8x10xf32>
    tpu.vector_store %arg6[%c0_13, %c0_14], %22 {strides = array<i32>} : memref<8x10xf32, #tpu.memory_space<vmem>>, vector<8x10xf32>,
    return
  }
  func.func @transform_0(%arg0: i32) -> (i32, i32) {
    %c0_i32 = arith.constant 0 : i32
    %c0_i32_0 = arith.constant 0 : i32
    return %arg0, %c0_i32 : i32, i32
  }
  func.func @transform_1(%arg0: i32) -> (i32, i32) {
    %c0_i32 = arith.constant 0 : i32
    %c0_i32_0 = arith.constant 0 : i32
    %c0_i32_1 = arith.constant 0 : i32
    return %c0_i32, %c0_i32_0 : i32, i32
  }
  func.func @transform_2(%arg0: i32) -> (i32, i32) {
    %c0_i32 = arith.constant 0 : i32
    %c0_i32_0 = arith.constant 0 : i32
    %c0_i32_1 = arith.constant 0 : i32
    return %c0_i32, %c0_i32_0 : i32, i32
  }
  func.func @transform_3(%arg0: i32) -> (i32, i32) {
    %c0_i32 = arith.constant 0 : i32
    %c0_i32_0 = arith.constant 0 : i32
    %c0_i32_1 = arith.constant 0 : i32
    return %c0_i32, %c0_i32_0 : i32, i32
  }
  func.func @transform_4(%arg0: i32) -> (i32, i32) {
    %c0_i32 = arith.constant 0 : i32
    %c0_i32_0 = arith.constant 0 : i32
    %c0_i32_1 = arith.constant 0 : i32
    return %c0_i32, %c0_i32_0 : i32, i32
  }
  func.func @transform_5(%arg0: i32) -> (i32, i32) {
    %c0_i32 = arith.constant 0 : i32
    %c0_i32_0 = arith.constant 0 : i32
    return %arg0, %c0_i32 : i32, i32
  }
}

</mosaic_0001>

<llo_original>
// kernel: cnn_forward.2
$region0: #{cnn_forward.2}
  #allocation0 [shape = 'u32[]', space=smem, size = 0x4, offset = 0x4, fixed_abs, tag = 'smem constant byte address 0x4 - core index']
  #allocation1 [shape = 'u32[144,128]{1,0:T(1,128)}', space=vmem, size = 0x12000, scoped, tag = 'internal scratch']
  %s0 = inlined_call_operand.vmem [shape: bf16[8,840,16], index: 0, kind: input, shape index: {}]
  %s1 = inlined_call_operand.vmem [shape: bf16[16,128], index: 1, kind: input, shape index: {}]
  %s2 = inlined_call_operand.vmem [shape: f32[1,128], index: 2, kind: input, shape index: {}]
  %s3 = inlined_call_operand.vmem [shape: bf16[1152,128], index: 3, kind: input, shape index: {}]
  %s4 = inlined_call_operand.vmem [shape: f32[1,128], index: 4, kind: input, shape index: {}]
  %s5 = inlined_call_operand.vmem [shape: bf16[288,384], index: 5, kind: input, shape index: {}]
  %s6 = inlined_call_operand.vmem [shape: bf16[128,128], index: 6, kind: input, shape index: {}]
  %s7 = inlined_call_operand.vmem [shape: bf16[8,72,128], index: 7, kind: output, shape index: {}]
  %s8 = sld [smem:[#allocation0]]
  $region68: #{cnn_forward.2} parent=0
    _
  %s10 = ssub.s32 1, %s8
  %s11 = scalar_select 0, %s10, %s8
  loop: start=0, step=1, limit=4
  $region2: #{cnn_forward.2} parent=0 // loop_pre_header
    _
  $region3: #{cnn_forward.2} parent=0 // loop_header
    %s13 = sphi 0, %s17
    %p14 = scmp.ge.s32.totalorder %s13, 4
    %s23 = sphi 0, %s25
    %s26 = sphi 0, %s23
    %s27 = sphi 0, %s26
    %s43 = sphi 0, %s27
    %s47 = sphi 0, %s47
    %s49 = sphi 0, %s47
    %s50 = sphi 0, %s49
    %s64 = sphi 0, %s50
    %s68 = sphi 0, %s68
    %s70 = sphi 0, %s68
    %s71 = sphi 0, %s70
    %s85 = sphi 0, %s71
    %s89 = sphi 0, %s89
    %s91 = sphi 0, %s89
    %s92 = sphi 0, %s91
    %s106 = sphi 0, %s92
    %s110 = sphi 0, %s110
    %s112 = sphi 0, %s110
    %s113 = sphi 0, %s112
    %s127 = sphi 0, %s113
    %s131 = sphi 0, %s131
    %s133 = sphi 0, %s131
    %s134 = sphi 0, %s133
    %s148 = sphi 0, %s134
    %s152 = sphi 0, %s152
    %s154 = sphi 0, %s152
    %s155 = sphi 0, %s154
    %s169 = sphi 0, %s155
    %s175 = sphi 0, %s177
    %s178 = sphi 0, %s175
    %s179 = sphi 0, %s178
    %s195 = sphi 0, %s179
  $region4: #{cnn_forward.2} parent=0 // loop_header_branch
    %16 = sbr.rel (%p14) target = $region8
  $region5: #{cnn_forward.2} parent=0 // loop_body
    %s18 = ssub.s32 %s13, 1
    %s19 = ssub.s32 %s13, 2
    %s20 = sadd.s32 %s13, 1
    %s21 = ssub.s32 %s13, %s20
    %p22 = scmp.eq.s32.totalorder %s21, 0
    %s24 = sadd.s32 %s23, 1
    %s25 = scalar_select %p22, %s23, %s24
    %p28 = pneg %p22
    %p29 = scmp.eq.s32.totalorder %s13, 1
    %p30 = por %p28, %p29
    %p31 = scmp.ne.s32.totalorder %s23, %s26
    %p32 = scmp.eq.s32.totalorder %s13, 0
    %p33 = por %p31, %p32
    %p34 = scmp.ne.s32.totalorder %s23, %s26
    %p35 = scmp.eq.s32.totalorder %s18, 1
    %p36 = por %p34, %p35
    %p37 = scmp.ne.s32.totalorder %s26, %s27
    %p38 = scmp.eq.s32.totalorder %s18, 0
    %p39 = por %p37, %p38
    %p40 = scmp.ne.s32.totalorder %s26, %s27
    %p41 = scmp.eq.s32.totalorder %s19, 1
    %p42 = por %p40, %p41
    %p44 = scmp.ne.s32.totalorder %s27, %s43
    %p45 = scmp.eq.s32.totalorder %s19, 0
    %p46 = por %p44, %p45
    %s48 = sadd.s32 %s47, 1
    %p51 = scmp.eq.s32.totalorder %s13, 1
    %p52 = scmp.ne.s32.totalorder %s47, %s49
    %p53 = scmp.eq.s32.totalorder %s13, 0
    %p54 = por %p52, %p53
    %p55 = scmp.ne.s32.totalorder %s47, %s49
    %p56 = scmp.eq.s32.totalorder %s18, 1
    %p57 = por %p55, %p56
    %p58 = scmp.ne.s32.totalorder %s49, %s50
    %p59 = scmp.eq.s32.totalorder %s18, 0
    %p60 = por %p58, %p59
    %p61 = scmp.ne.s32.totalorder %s49, %s50
    %p62 = scmp.eq.s32.totalorder %s19, 1
    %p63 = por %p61, %p62
    %p65 = scmp.ne.s32.totalorder %s50, %s64
    %p66 = scmp.eq.s32.totalorder %s19, 0
    %p67 = por %p65, %p66
    %s69 = sadd.s32 %s68, 1
    %p72 = scmp.eq.s32.totalorder %s13, 1
    %p73 = scmp.ne.s32.totalorder %s68, %s70
    %p74 = scmp.eq.s32.totalorder %s13, 0
    %p75 = por %p73, %p74
    %p76 = scmp.ne.s32.totalorder %s68, %s70
    %p77 = scmp.eq.s32.totalorder %s18, 1
    %p78 = por %p76, %p77
    %p79 = scmp.ne.s32.totalorder %s70, %s71
    %p80 = scmp.eq.s32.totalorder %s18, 0
    %p81 = por %p79, %p80
    %p82 = scmp.ne.s32.totalorder %s70, %s71
    %p83 = scmp.eq.s32.totalorder %s19, 1
    %p84 = por %p82, %p83
    %p86 = scmp.ne.s32.totalorder %s71, %s85
    %p87 = scmp.eq.s32.totalorder %s19, 0
    %p88 = por %p86, %p87
    %s90 = sadd.s32 %s89, 1
    %p93 = scmp.eq.s32.totalorder %s13, 1
    %p94 = scmp.ne.s32.totalorder %s89, %s91
    %p95 = scmp.eq.s32.totalorder %s13, 0
    %p96 = por %p94, %p95
    %p97 = scmp.ne.s32.totalorder %s89, %s91
    %p98 = scmp.eq.s32.totalorder %s18, 1
    %p99 = por %p97, %p98
    %p100 = scmp.ne.s32.totalorder %s91, %s92
    %p101 = scmp.eq.s32.totalorder %s18, 0
    %p102 = por %p100, %p101
    %p103 = scmp.ne.s32.totalorder %s91, %s92
    %p104 = scmp.eq.s32.totalorder %s19, 1
    %p105 = por %p103, %p104
    %p107 = scmp.ne.s32.totalorder %s92, %s106
    %p108 = scmp.eq.s32.totalorder %s19, 0
    %p109 = por %p107, %p108
    %s111 = sadd.s32 %s110, 1
    %p114 = scmp.eq.s32.totalorder %s13, 1
    %p115 = scmp.ne.s32.totalorder %s110, %s112
    %p116 = scmp.eq.s32.totalorder %s13, 0
    %p117 = por %p115, %p116
    %p118 = scmp.ne.s32.totalorder %s110, %s112
    %p119 = scmp.eq.s32.totalorder %s18, 1
    %p120 = por %p118, %p119
    %p121 = scmp.ne.s32.totalorder %s112, %s113
    %p122 = scmp.eq.s32.totalorder %s18, 0
    %p123 = por %p121, %p122
    %p124 = scmp.ne.s32.totalorder %s112, %s113
    %p125 = scmp.eq.s32.totalorder %s19, 1
    %p126 = por %p124, %p125
    %p128 = scmp.ne.s32.totalorder %s113, %s127
    %p129 = scmp.eq.s32.totalorder %s19, 0
    %p130 = por %p128, %p129
    %s132 = sadd.s32 %s131, 1
    %p135 = scmp.eq.s32.totalorder %s13, 1
    %p136 = scmp.ne.s32.totalorder %s131, %s133
    %p137 = scmp.eq.s32.totalorder %s13, 0
    %p138 = por %p136, %p137
    %p139 = scmp.ne.s32.totalorder %s131, %s133
    %p140 = scmp.eq.s32.totalorder %s18, 1
    %p141 = por %p139, %p140
    %p142 = scmp.ne.s32.totalorder %s133, %s134
    %p143 = scmp.eq.s32.totalorder %s18, 0
    %p144 = por %p142, %p143
    %p145 = scmp.ne.s32.totalorder %s133, %s134
    %p146 = scmp.eq.s32.totalorder %s19, 1
    %p147 = por %p145, %p146
    %p149 = scmp.ne.s32.totalorder %s134, %s148
    %p150 = scmp.eq.s32.totalorder %s19, 0
    %p151 = por %p149, %p150
    %s153 = sadd.s32 %s152, 1
    %p156 = scmp.eq.s32.totalorder %s13, 1
    %p157 = scmp.ne.s32.totalorder %s152, %s154
    %p158 = scmp.eq.s32.totalorder %s13, 0
    %p159 = por %p157, %p158
    %p160 = scmp.ne.s32.totalorder %s152, %s154
    %p161 = scmp.eq.s32.totalorder %s18, 1
    %p162 = por %p160, %p161
    %p163 = scmp.ne.s32.totalorder %s154, %s155
    %p164 = scmp.eq.s32.totalorder %s18, 0
    %p165 = por %p163, %p164
    %p166 = scmp.ne.s32.totalorder %s154, %s155
    %p167 = scmp.eq.s32.totalorder %s19, 1
    %p168 = por %p166, %p167
    %p170 = scmp.ne.s32.totalorder %s155, %s169
    %p171 = scmp.eq.s32.totalorder %s19, 0
    %p172 = por %p170, %p171
    %s173 = ssub.s32 %s13, %s20
    %p174 = scmp.eq.s32.totalorder %s173, 0
    %s176 = sadd.s32 %s175, 1
    %s177 = scalar_select %p174, %s175, %s176
    %p180 = pneg %p174
    %p181 = scmp.eq.s32.totalorder %s13, 1
    %p182 = por %p180, %p181
    %p183 = scmp.ne.s32.totalorder %s175, %s178
    %p184 = scmp.eq.s32.totalorder %s13, 0
    %p185 = por %p183, %p184
    %p186 = scmp.ne.s32.totalorder %s175, %s178
    %p187 = scmp.eq.s32.totalorder %s18, 1
    %p188 = por %p186, %p187
    %p189 = scmp.ne.s32.totalorder %s178, %s179
    %p190 = scmp.eq.s32.totalorder %s18, 0
    %p191 = por %p189, %p190
    %p192 = scmp.ne.s32.totalorder %s178, %s179
    %p193 = scmp.eq.s32.totalorder %s19, 1
    %p194 = por %p192, %p193
    %p196 = scmp.ne.s32.totalorder %s179, %s195
    %p197 = scmp.eq.s32.totalorder %s19, 0
    %p198 = por %p196, %p197
    %p199 = scmp.le.s32.totalorder 1, %s13
    %p200 = scmp.lt.s32.totalorder %s13, 3
    %p201 = pnand %p199, %p200
    %p202 = pneg %p201
    // Predicated region
    $region9: #{cnn_forward.2} parent=5 // pred_check
      _
    $region10: #{cnn_forward.2} parent=5 // pred_check_branch
      %204 = sbr.rel (%p201) target = $region12
    $region11: #{cnn_forward.2} parent=5 // pred_region
      %s205 = ssub.s32 %s13, 1
      // Predicated region
      $region13: #{cnn_forward.2} parent=11 // pred_check
        %p206 = pneg %p60
      $region14: #{cnn_forward.2} parent=11 // pred_check_branch
        %208 = sbr.rel (%p206) target = $region16
      $region15: #{cnn_forward.2} parent=11 // pred_region
        _
      $region16: #{cnn_forward.2} parent=11 // pred_fallthru
        _
      // Predicated region
      $region17: #{cnn_forward.2} parent=11 // pred_check
        %p209 = pneg %p81
      $region18: #{cnn_forward.2} parent=11 // pred_check_branch
        %211 = sbr.rel (%p209) target = $region20
      $region19: #{cnn_forward.2} parent=11 // pred_region
        _
      $region20: #{cnn_forward.2} parent=11 // pred_fallthru
        _
      // Predicated region
      $region21: #{cnn_forward.2} parent=11 // pred_check
        %p212 = pneg %p102
      $region22: #{cnn_forward.2} parent=11 // pred_check_branch
        %214 = sbr.rel (%p212) target = $region24
      $region23: #{cnn_forward.2} parent=11 // pred_region
        _
      $region24: #{cnn_forward.2} parent=11 // pred_fallthru
        _
      // Predicated region
      $region25: #{cnn_forward.2} parent=11 // pred_check
        %p215 = pneg %p123
      $region26: #{cnn_forward.2} parent=11 // pred_check_branch
        %217 = sbr.rel (%p215) target = $region28
      $region27: #{cnn_forward.2} parent=11 // pred_region
        _
      $region28: #{cnn_forward.2} parent=11 // pred_fallthru
        _
      // Predicated region
      $region29: #{cnn_forward.2} parent=11 // pred_check
        %p218 = pneg %p144
      $region30: #{cnn_forward.2} parent=11 // pred_check_branch
        %220 = sbr.rel (%p218) target = $region32
      $region31: #{cnn_forward.2} parent=11 // pred_region
        _
      $region32: #{cnn_forward.2} parent=11 // pred_fallthru
        _
      // Predicated region
      $region33: #{cnn_forward.2} parent=11 // pred_check
        %p221 = pneg %p165
      $region34: #{cnn_forward.2} parent=11 // pred_check_branch
        %223 = sbr.rel (%p221) target = $region36
      $region35: #{cnn_forward.2} parent=11 // pred_region
        _
      $region36: #{cnn_forward.2} parent=11 // pred_fallthru
        _
    $region12: #{cnn_forward.2} parent=5 // pred_fallthru
      _
    %p224 = scmp.lt.s32.totalorder %s13, 2
    // Predicated region
    $region37: #{cnn_forward.2} parent=5 // pred_check
      %p225 = pneg %p224
    $region38: #{cnn_forward.2} parent=5 // pred_check_branch
      %227 = sbr.rel (%p225) target = $region40
    $region39: #{cnn_forward.2} parent=5 // pred_region
      // Predicated region
      $region41: #{cnn_forward.2} parent=39 // pred_check
        %p228 = pneg %p33
      $region42: #{cnn_forward.2} parent=39 // pred_check_branch
        %230 = sbr.rel (%p228) target = $region44
      $region43: #{cnn_forward.2} parent=39 // pred_region
        %s231 = smul.u32 4, %s13
        %p232 = scmp.lt.s32.totalorder %s231, 7
        %s233 = scalar_select %p232, %s231, 7
        %s234 = smul.addr %s233, 105
        %s235 = smul.addr %s234, 4
        %s236 = scalar_lea.vmem %s0, %s235
        %s237 = smul.u32 4, %s13
      $region44: #{cnn_forward.2} parent=39 // pred_fallthru
        _
    $region40: #{cnn_forward.2} parent=5 // pred_fallthru
      _
    %p238 = scmp.le.s32.totalorder 1, %s13
    %p239 = scmp.lt.s32.totalorder %s13, 3
    %p240 = pnand %p238, %p239
    %p241 = pneg %p240
    // Predicated region
    $region45: #{cnn_forward.2} parent=5 // pred_check
      _
    $region46: #{cnn_forward.2} parent=5 // pred_check_branch
      %243 = sbr.rel (%p240) target = $region48
    $region47: #{cnn_forward.2} parent=5 // pred_region
      %s244 = ssub.s32 %s13, 1
      %s245 = smul.u32 4, %s18
      %p246 = scmp.lt.s32.totalorder %s245, 7
      %s247 = scalar_select %p246, %s245, 7
      %s248 = smul.addr %s247, 105
      %s249 = smul.addr %s248, 4
      %s250 = scalar_lea.vmem %s0, %s249
      %p251 = pneg %p39
      %p252 = pneg %p36
      %p253 = pneg %p60
      %p254 = pneg %p57
      %p255 = pneg %p81
      %p256 = pneg %p78
      %p257 = pneg %p102
      %p258 = pneg %p99
      %p259 = pneg %p123
      %p260 = pneg %p120
      %p261 = pneg %p144
      %p262 = pneg %p141
      %p263 = pneg %p165
      %p264 = pneg %p162
      %p265 = pneg %p191
      %p266 = pneg %p188
      %s267 = smul.u32 4, %s18
      %p268 = scmp.lt.s32.totalorder %s267, 7
      %s269 = scalar_select %p268, %s267, 7
      %s270 = smul.addr %s269, 9
      %s271 = smul.addr %s270, 4
      %s272 = scalar_lea.vmem %s7, %s271
      %s273 = smul.u32 4, %s18
      %p274 = scmp.lt.s32.totalorder %s273, 7
      %s275 = scalar_select %p274, %s273, 7
      %s276 = smul.addr %s275, 105
      %s277 = smul.addr %s276, 4
      %s278 = scalar_lea.vmem %s0, %s277
      %s279 = smul.u32 4, %s18
      %s280 = smul.u32 4, %s18
      %p281 = scmp.lt.s32.totalorder %s280, 7
      %s282 = scalar_select %p281, %s280, 7
      %s283 = smul.addr %s282, 9
      %s284 = smul.addr %s283, 4
      %s285 = scalar_lea.vmem %s7, %s284
      %s286 = smul.u32 4, %s18
      %v288 = vld [vmem:[%s1] sm:$0xf]
      %v289 = vld [vmem:[%s1 + $0x4] sm:$0xf]
      %v290 = vld [vmem:[%s2] sm:$0x1]
      %v291 = vld [vmem:[%s3] sm:$0xf]
      %v292 = vld [vmem:[%s3 + $0x4] sm:$0xf]
      %v293 = vld [vmem:[%s3 + $0x8] sm:$0xf]
      %v294 = vld [vmem:[%s3 + $0xc] sm:$0xf]
      %v295 = vld [vmem:[%s3 + $0x10] sm:$0xf]
      %v296 = vld [vmem:[%s3 + $0x14] sm:$0xf]
      %v297 = vld [vmem:[%s3 + $0x18] sm:$0xf]
      %v298 = vld [vmem:[%s3 + $0x1c] sm:$0xf]
      %v299 = vld [vmem:[%s3 + $0x20] sm:$0xf]
      %v300 = vld [vmem:[%s3 + $0x24] sm:$0xf]
      %v301 = vld [vmem:[%s3 + $0x28] sm:$0xf]
      %v302 = vld [vmem:[%s3 + $0x2c] sm:$0xf]
      %v303 = vld [vmem:[%s3 + $0x30] sm:$0xf]
      %v304 = vld [vmem:[%s3 + $0x34] sm:$0xf]
      %v305 = vld [vmem:[%s3 + $0x38] sm:$0xf]
      %v306 = vld [vmem:[%s3 + $0x3c] sm:$0xf]
      %v307 = vld [vmem:[%s3 + $0x40] sm:$0xf]
      %v308 = vld [vmem:[%s3 + $0x44] sm:$0xf]
      %v309 = vld [vmem:[%s3 + $0x48] sm:$0xf]
      %v310 = vld [vmem:[%s3 + $0x4c] sm:$0xf]
      %v311 = vld [vmem:[%s3 + $0x50] sm:$0xf]
      %v312 = vld [vmem:[%s3 + $0x54] sm:$0xf]
      %v313 = vld [vmem:[%s3 + $0x58] sm:$0xf]
      %v314 = vld [vmem:[%s3 + $0x5c] sm:$0xf]
      %v315 = vld [vmem:[%s3 + $0x60] sm:$0xf]
      %v316 = vld [vmem:[%s3 + $0x64] sm:$0xf]
      %v317 = vld [vmem:[%s3 + $0x68] sm:$0xf]
      %v318 = vld [vmem:[%s3 + $0x6c] sm:$0xf]
      %v319 = vld [vmem:[%s3 + $0x70] sm:$0xf]
      %v320 = vld [vmem:[%s3 + $0x74] sm:$0xf]
      %v321 = vld [vmem:[%s3 + $0x78] sm:$0xf]
      %v322 = vld [vmem:[%s3 + $0x7c] sm:$0xf]
      %v323 = vld [vmem:[%s3 + $0x80] sm:$0xf]
      %v324 = vld [vmem:[%s3 + $0x84] sm:$0xf]
      %v325 = vld [vmem:[%s3 + $0x88] sm:$0xf]
      %v326 = vld [vmem:[%s3 + $0x8c] sm:$0xf]
      %v327 = vld [vmem:[%s3 + $0x90] sm:$0xf]
      %v328 = vld [vmem:[%s3 + $0x94] sm:$0xf]
      %v329 = vld [vmem:[%s3 + $0x98] sm:$0xf]
      %v330 = vld [vmem:[%s3 + $0x9c] sm:$0xf]
      %v331 = vld [vmem:[%s3 + $0xa0] sm:$0xf]
      %v332 = vld [vmem:[%s3 + $0xa4] sm:$0xf]
      %v333 = vld [vmem:[%s3 + $0xa8] sm:$0xf]
      %v334 = vld [vmem:[%s3 + $0xac] sm:$0xf]
      %v335 = vld [vmem:[%s3 + $0xb0] sm:$0xf]
      %v336 = vld [vmem:[%s3 + $0xb4] sm:$0xf]
      %v337 = vld [vmem:[%s3 + $0xb8] sm:$0xf]
      %v338 = vld [vmem:[%s3 + $0xbc] sm:$0xf]
      %v339 = vld [vmem:[%s3 + $0xc0] sm:$0xf]
      %v340 = vld [vmem:[%s3 + $0xc4] sm:$0xf]
      %v341 = vld [vmem:[%s3 + $0xc8] sm:$0xf]
      %v342 = vld [vmem:[%s3 + $0xcc] sm:$0xf]
      %v343 = vld [vmem:[%s3 + $0xd0] sm:$0xf]
      %v344 = vld [vmem:[%s3 + $0xd4] sm:$0xf]
      %v345 = vld [vmem:[%s3 + $0xd8] sm:$0xf]
      %v346 = vld [vmem:[%s3 + $0xdc] sm:$0xf]
      %v347 = vld [vmem:[%s3 + $0xe0] sm:$0xf]
      %v348 = vld [vmem:[%s3 + $0xe4] sm:$0xf]
      %v349 = vld [vmem:[%s3 + $0xe8] sm:$0xf]
      %v350 = vld [vmem:[%s3 + $0xec] sm:$0xf]
      %v351 = vld [vmem:[%s3 + $0xf0] sm:$0xf]
      %v352 = vld [vmem:[%s3 + $0xf4] sm:$0xf]
      %v353 = vld [vmem:[%s3 + $0xf8] sm:$0xf]
      %v354 = vld [vmem:[%s3 + $0xfc] sm:$0xf]
      %v355 = vld [vmem:[%s3 + $0x100] sm:$0xf]
      %v356 = vld [vmem:[%s3 + $0x104] sm:$0xf]
      %v357 = vld [vmem:[%s3 + $0x108] sm:$0xf]
      %v358 = vld [vmem:[%s3 + $0x10c] sm:$0xf]
      %v359 = vld [vmem:[%s3 + $0x110] sm:$0xf]
      %v360 = vld [vmem:[%s3 + $0x114] sm:$0xf]
      %v361 = vld [vmem:[%s3 + $0x118] sm:$0xf]
      %v362 = vld [vmem:[%s3 + $0x11c] sm:$0xf]
      %v363 = vld [vmem:[%s3 + $0x120] sm:$0xf]
      %v364 = vld [vmem:[%s3 + $0x124] sm:$0xf]
      %v365 = vld [vmem:[%s3 + $0x128] sm:$0xf]
      %v366 = vld [vmem:[%s3 + $0x12c] sm:$0xf]
      %v367 = vld [vmem:[%s3 + $0x130] sm:$0xf]
      %v368 = vld [vmem:[%s3 + $0x134] sm:$0xf]
      %v369 = vld [vmem:[%s3 + $0x138] sm:$0xf]
      %v370 = vld [vmem:[%s3 + $0x13c] sm:$0xf]
      %v371 = vld [vmem:[%s3 + $0x140] sm:$0xf]
      %v372 = vld [vmem:[%s3 + $0x144] sm:$0xf]
      %v373 = vld [vmem:[%s3 + $0x148] sm:$0xf]
      %v374 = vld [vmem:[%s3 + $0x14c] sm:$0xf]
      %v375 = vld [vmem:[%s3 + $0x150] sm:$0xf]
      %v376 = vld [vmem:[%s3 + $0x154] sm:$0xf]
      %v377 = vld [vmem:[%s3 + $0x158] sm:$0xf]
      %v378 = vld [vmem:[%s3 + $0x15c] sm:$0xf]
      %v379 = vld [vmem:[%s3 + $0x160] sm:$0xf]
      %v380 = vld [vmem:[%s3 + $0x164] sm:$0xf]
      %v381 = vld [vmem:[%s3 + $0x168] sm:$0xf]
      %v382 = vld [vmem:[%s3 + $0x16c] sm:$0xf]
      %v383 = vld [vmem:[%s3 + $0x170] sm:$0xf]
      %v384 = vld [vmem:[%s3 + $0x174] sm:$0xf]
      %v385 = vld [vmem:[%s3 + $0x178] sm:$0xf]
      %v386 = vld [vmem:[%s3 + $0x17c] sm:$0xf]
      %v387 = vld [vmem:[%s3 + $0x180] sm:$0xf]
      %v388 = vld [vmem:[%s3 + $0x184] sm:$0xf]
      %v389 = vld [vmem:[%s3 + $0x188] sm:$0xf]
      %v390 = vld [vmem:[%s3 + $0x18c] sm:$0xf]
      %v391 = vld [vmem:[%s3 + $0x190] sm:$0xf]
      %v392 = vld [vmem:[%s3 + $0x194] sm:$0xf]
      %v393 = vld [vmem:[%s3 + $0x198] sm:$0xf]
      %v394 = vld [vmem:[%s3 + $0x19c] sm:$0xf]
      %v395 = vld [vmem:[%s3 + $0x1a0] sm:$0xf]
      %v396 = vld [vmem:[%s3 + $0x1a4] sm:$0xf]
      %v397 = vld [vmem:[%s3 + $0x1a8] sm:$0xf]
      %v398 = vld [vmem:[%s3 + $0x1ac] sm:$0xf]
      %v399 = vld [vmem:[%s3 + $0x1b0] sm:$0xf]
      %v400 = vld [vmem:[%s3 + $0x1b4] sm:$0xf]
      %v401 = vld [vmem:[%s3 + $0x1b8] sm:$0xf]
      %v402 = vld [vmem:[%s3 + $0x1bc] sm:$0xf]
      %v403 = vld [vmem:[%s3 + $0x1c0] sm:$0xf]
      %v404 = vld [vmem:[%s3 + $0x1c4] sm:$0xf]
      %v405 = vld [vmem:[%s3 + $0x1c8] sm:$0xf]
      %v406 = vld [vmem:[%s3 + $0x1cc] sm:$0xf]
      %v407 = vld [vmem:[%s3 + $0x1d0] sm:$0xf]
      %v408 = vld [vmem:[%s3 + $0x1d4] sm:$0xf]
      %v409 = vld [vmem:[%s3 + $0x1d8] sm:$0xf]
      %v410 = vld [vmem:[%s3 + $0x1dc] sm:$0xf]
      %v411 = vld [vmem:[%s3 + $0x1e0] sm:$0xf]
      %v412 = vld [vmem:[%s3 + $0x1e4] sm:$0xf]
      %v413 = vld [vmem:[%s3 + $0x1e8] sm:$0xf]
      %v414 = vld [vmem:[%s3 + $0x1ec] sm:$0xf]
      %v415 = vld [vmem:[%s3 + $0x1f0] sm:$0xf]
      %v416 = vld [vmem:[%s3 + $0x1f4] sm:$0xf]
      %v417 = vld [vmem:[%s3 + $0x1f8] sm:$0xf]
      %v418 = vld [vmem:[%s3 + $0x1fc] sm:$0xf]
      %v419 = vld [vmem:[%s3 + $0x200] sm:$0xf]
      %v420 = vld [vmem:[%s3 + $0x204] sm:$0xf]
      %v421 = vld [vmem:[%s3 + $0x208] sm:$0xf]
      %v422 = vld [vmem:[%s3 + $0x20c] sm:$0xf]
      %v423 = vld [vmem:[%s3 + $0x210] sm:$0xf]
      %v424 = vld [vmem:[%s3 + $0x214] sm:$0xf]
      %v425 = vld [vmem:[%s3 + $0x218] sm:$0xf]
      %v426 = vld [vmem:[%s3 + $0x21c] sm:$0xf]
      %v427 = vld [vmem:[%s3 + $0x220] sm:$0xf]
      %v428 = vld [vmem:[%s3 + $0x224] sm:$0xf]
      %v429 = vld [vmem:[%s3 + $0x228] sm:$0xf]
      %v430 = vld [vmem:[%s3 + $0x22c] sm:$0xf]
      %v431 = vld [vmem:[%s3 + $0x230] sm:$0xf]
      %v432 = vld [vmem:[%s3 + $0x234] sm:$0xf]
      %v433 = vld [vmem:[%s3 + $0x238] sm:$0xf]
      %v434 = vld [vmem:[%s3 + $0x23c] sm:$0xf]
      %v435 = vld [vmem:[%s4] sm:$0x1]
      %v436 = vld [vmem:[%s5] sm:$0xff]
      %v437 = vld [vmem:[%s5 + $0x8] sm:$0xf]
      %v438 = vld [vmem:[%s5 + $0xc] sm:$0xff]
      %v439 = vld [vmem:[%s5 + $0x14] sm:$0xf]
      %v440 = vld [vmem:[%s5 + $0x18] sm:$0xff]
      %v441 = vld [vmem:[%s5 + $0x20] sm:$0xf]
      %v442 = vld [vmem:[%s5 + $0x24] sm:$0xff]
      %v443 = vld [vmem:[%s5 + $0x2c] sm:$0xf]
      %v444 = vld [vmem:[%s5 + $0x30] sm:$0xff]
      %v445 = vld [vmem:[%s5 + $0x38] sm:$0xf]
      %v446 = vld [vmem:[%s5 + $0x3c] sm:$0xff]
      %v447 = vld [vmem:[%s5 + $0x44] sm:$0xf]
      %v448 = vld [vmem:[%s5 + $0x48] sm:$0xff]
      %v449 = vld [vmem:[%s5 + $0x50] sm:$0xf]
      %v450 = vld [vmem:[%s5 + $0x54] sm:$0xff]
      %v451 = vld [vmem:[%s5 + $0x5c] sm:$0xf]
      %v452 = vld [vmem:[%s5 + $0x60] sm:$0xff]
      %v453 = vld [vmem:[%s5 + $0x68] sm:$0xf]
      %v454 = vld [vmem:[%s5 + $0x6c] sm:$0xff]
      %v455 = vld [vmem:[%s5 + $0x74] sm:$0xf]
      %v456 = vld [vmem:[%s5 + $0x78] sm:$0xff]
      %v457 = vld [vmem:[%s5 + $0x80] sm:$0xf]
      %v458 = vld [vmem:[%s5 + $0x84] sm:$0xff]
      %v459 = vld [vmem:[%s5 + $0x8c] sm:$0xf]
      %v460 = vld [vmem:[%s5 + $0x90] sm:$0xff]
      %v461 = vld [vmem:[%s5 + $0x98] sm:$0xf]
      %v462 = vld [vmem:[%s5 + $0x9c] sm:$0xff]
      %v463 = vld [vmem:[%s5 + $0xa4] sm:$0xf]
      %v464 = vld [vmem:[%s5 + $0xa8] sm:$0xff]
      %v465 = vld [vmem:[%s5 + $0xb0] sm:$0xf]
      %v466 = vld [vmem:[%s5 + $0xb4] sm:$0xff]
      %v467 = vld [vmem:[%s5 + $0xbc] sm:$0xf]
      %v468 = vld [vmem:[%s5 + $0xc0] sm:$0xff]
      %v469 = vld [vmem:[%s5 + $0xc8] sm:$0xf]
      %v470 = vld [vmem:[%s5 + $0xcc] sm:$0xff]
      %v471 = vld [vmem:[%s5 + $0xd4] sm:$0xf]
      %v472 = vld [vmem:[%s5 + $0xd8] sm:$0xff]
      %v473 = vld [vmem:[%s5 + $0xe0] sm:$0xf]
      %v474 = vld [vmem:[%s5 + $0xe4] sm:$0xff]
      %v475 = vld [vmem:[%s5 + $0xec] sm:$0xf]
      %v476 = vld [vmem:[%s5 + $0xf0] sm:$0xff]
      %v477 = vld [vmem:[%s5 + $0xf8] sm:$0xf]
      %v478 = vld [vmem:[%s5 + $0xfc] sm:$0xff]
      %v479 = vld [vmem:[%s5 + $0x104] sm:$0xf]
      %v480 = vld [vmem:[%s5 + $0x108] sm:$0xff]
      %v481 = vld [vmem:[%s5 + $0x110] sm:$0xf]
      %v482 = vld [vmem:[%s5 + $0x114] sm:$0xff]
      %v483 = vld [vmem:[%s5 + $0x11c] sm:$0xf]
      %v484 = vld [vmem:[%s5 + $0x120] sm:$0xff]
      %v485 = vld [vmem:[%s5 + $0x128] sm:$0xf]
      %v486 = vld [vmem:[%s5 + $0x12c] sm:$0xff]
      %v487 = vld [vmem:[%s5 + $0x134] sm:$0xf]
      %v488 = vld [vmem:[%s5 + $0x138] sm:$0xff]
      %v489 = vld [vmem:[%s5 + $0x140] sm:$0xf]
      %v490 = vld [vmem:[%s5 + $0x144] sm:$0xff]
      %v491 = vld [vmem:[%s5 + $0x14c] sm:$0xf]
      %v492 = vld [vmem:[%s5 + $0x150] sm:$0xff]
      %v493 = vld [vmem:[%s5 + $0x158] sm:$0xf]
      %v494 = vld [vmem:[%s5 + $0x15c] sm:$0xff]
      %v495 = vld [vmem:[%s5 + $0x164] sm:$0xf]
      %v496 = vld [vmem:[%s5 + $0x168] sm:$0xff]
      %v497 = vld [vmem:[%s5 + $0x170] sm:$0xf]
      %v498 = vld [vmem:[%s5 + $0x174] sm:$0xff]
      %v499 = vld [vmem:[%s5 + $0x17c] sm:$0xf]
      %v500 = vld [vmem:[%s5 + $0x180] sm:$0xff]
      %v501 = vld [vmem:[%s5 + $0x188] sm:$0xf]
      %v502 = vld [vmem:[%s5 + $0x18c] sm:$0xff]
      %v503 = vld [vmem:[%s5 + $0x194] sm:$0xf]
      %v504 = vld [vmem:[%s5 + $0x198] sm:$0xff]
      %v505 = vld [vmem:[%s5 + $0x1a0] sm:$0xf]
      %v506 = vld [vmem:[%s5 + $0x1a4] sm:$0xff]
      %v507 = vld [vmem:[%s5 + $0x1ac] sm:$0xf]
      %v508 = vld [vmem:[%s6] sm:$0xf]
      %v509 = vld [vmem:[%s6 + $0x4] sm:$0xf]
      %v510 = vld [vmem:[%s6 + $0x8] sm:$0xf]
      %v511 = vld [vmem:[%s6 + $0xc] sm:$0xf]
      %v512 = vld [vmem:[%s6 + $0x10] sm:$0xf]
      %v513 = vld [vmem:[%s6 + $0x14] sm:$0xf]
      %v514 = vld [vmem:[%s6 + $0x18] sm:$0xf]
      %v515 = vld [vmem:[%s6 + $0x1c] sm:$0xf]
      %v516 = vld [vmem:[%s6 + $0x20] sm:$0xf]
      %v517 = vld [vmem:[%s6 + $0x24] sm:$0xf]
      %v518 = vld [vmem:[%s6 + $0x28] sm:$0xf]
      %v519 = vld [vmem:[%s6 + $0x2c] sm:$0xf]
      %v520 = vld [vmem:[%s6 + $0x30] sm:$0xf]
      %v521 = vld [vmem:[%s6 + $0x34] sm:$0xf]
      %v522 = vld [vmem:[%s6 + $0x38] sm:$0xf]
      %v523 = vld [vmem:[%s6 + $0x3c] sm:$0xf]
      loop: start=0, step=1, limit=4
      $region49: #{cnn_forward.2} parent=47 // loop_pre_header
        _
      $region50: #{cnn_forward.2} parent=47 // loop_header
        %s525 = sphi 0, %s529
        %p526 = scmp.ge.s32.totalorder %s525, 4
      $region51: #{cnn_forward.2} parent=47 // loop_header_branch
        %528 = sbr.rel (%p526) target = $region55
      $region52: #{cnn_forward.2} parent=47 // loop_body
        %s530 = smul.u32 %s525, 105
        %s531 = smul.addr %s530, 4
        %s532 = scalar_lea.vmem %s278, %s531
        %v533 = vld [vmem:[%s532] sm:$0xf]
        %v534 = vld [vmem:[%s532 + $0x4] sm:$0xf]
        %v535 = vld [vmem:[%s532 + $0x8] sm:$0xf]
        %v536 = vld [vmem:[%s532 + $0xc] sm:$0xf]
        %v537 = vld [vmem:[%s532 + $0x10] sm:$0xf]
        %v538 = vld [vmem:[%s532 + $0x14] sm:$0xf]
        %v539 = vld [vmem:[%s532 + $0x18] sm:$0xf]
        %v540 = vld [vmem:[%s532 + $0x1c] sm:$0xf]
        %v541 = vld [vmem:[%s532 + $0x20] sm:$0xf]
        %v542 = vld [vmem:[%s532 + $0x24] sm:$0xf]
        %v543 = vld [vmem:[%s532 + $0x28] sm:$0xf]
        %v544 = vld [vmem:[%s532 + $0x2c] sm:$0xf]
        %v545 = vld [vmem:[%s532 + $0x30] sm:$0xf]
        %v546 = vld [vmem:[%s532 + $0x34] sm:$0xf]
        %v547 = vld [vmem:[%s532 + $0x38] sm:$0xf]
        %v548 = vld [vmem:[%s532 + $0x3c] sm:$0xf]
        %v549 = vld [vmem:[%s532 + $0x40] sm:$0xf]
        %v550 = vld [vmem:[%s532 + $0x44] sm:$0xf]
        %v551 = vld [vmem:[%s532 + $0x48] sm:$0xf]
        %v552 = vld [vmem:[%s532 + $0x4c] sm:$0xf]
        %v553 = vld [vmem:[%s532 + $0x50] sm:$0xf]
        %v554 = vld [vmem:[%s532 + $0x54] sm:$0xf]
        %v555 = vld [vmem:[%s532 + $0x58] sm:$0xf]
        %v556 = vld [vmem:[%s532 + $0x5c] sm:$0xf]
        %v557 = vld [vmem:[%s532 + $0x60] sm:$0xf]
        %v558 = vld [vmem:[%s532 + $0x64] sm:$0xf]
        %v559 = vld [vmem:[%s532 + $0x68] sm:$0xf]
        %v560 = vld [vmem:[%s532 + $0x6c] sm:$0xf]
        %v561 = vld [vmem:[%s532 + $0x70] sm:$0xf]
        %v562 = vld [vmem:[%s532 + $0x74] sm:$0xf]
        %v563 = vld [vmem:[%s532 + $0x78] sm:$0xf]
        %v564 = vld [vmem:[%s532 + $0x7c] sm:$0xf]
        %v565 = vld [vmem:[%s532 + $0x80] sm:$0xf]
        %v566 = vld [vmem:[%s532 + $0x84] sm:$0xf]
        %v567 = vld [vmem:[%s532 + $0x88] sm:$0xf]
        %v568 = vld [vmem:[%s532 + $0x8c] sm:$0xf]
        %v569 = vld [vmem:[%s532 + $0x90] sm:$0xf]
        %v570 = vld [vmem:[%s532 + $0x94] sm:$0xf]
        %v571 = vld [vmem:[%s532 + $0x98] sm:$0xf]
        %v572 = vld [vmem:[%s532 + $0x9c] sm:$0xf]
        %v573 = vld [vmem:[%s532 + $0xa0] sm:$0xf]
        %v574 = vld [vmem:[%s532 + $0xa4] sm:$0xf]
        %v575 = vld [vmem:[%s532 + $0xa8] sm:$0xf]
        %v576 = vld [vmem:[%s532 + $0xac] sm:$0xf]
        %v577 = vld [vmem:[%s532 + $0xb0] sm:$0xf]
        %v578 = vld [vmem:[%s532 + $0xb4] sm:$0xf]
        %v579 = vld [vmem:[%s532 + $0xb8] sm:$0xf]
        %v580 = vld [vmem:[%s532 + $0xbc] sm:$0xf]
        %v581 = vld [vmem:[%s532 + $0xc0] sm:$0xf]
        %v582 = vld [vmem:[%s532 + $0xc4] sm:$0xf]
        %v583 = vld [vmem:[%s532 + $0xc8] sm:$0xf]
        %v584 = vld [vmem:[%s532 + $0xcc] sm:$0xf]
        %v585 = vld [vmem:[%s532 + $0xd0] sm:$0xf]
        %v586 = vld [vmem:[%s532 + $0xd4] sm:$0xf]
        %v587 = vld [vmem:[%s532 + $0xd8] sm:$0xf]
        %v588 = vld [vmem:[%s532 + $0xdc] sm:$0xf]
        %v589 = vld [vmem:[%s532 + $0xe0] sm:$0xf]
        %v590 = vld [vmem:[%s532 + $0xe4] sm:$0xf]
        %v591 = vld [vmem:[%s532 + $0xe8] sm:$0xf]
        %v592 = vld [vmem:[%s532 + $0xec] sm:$0xf]
        %v593 = vld [vmem:[%s532 + $0xf0] sm:$0xf]
        %v594 = vld [vmem:[%s532 + $0xf4] sm:$0xf]
        %v595 = vld [vmem:[%s532 + $0xf8] sm:$0xf]
        %v596 = vld [vmem:[%s532 + $0xfc] sm:$0xf]
        %v597 = vld [vmem:[%s532 + $0x100] sm:$0xf]
        %v598 = vld [vmem:[%s532 + $0x104] sm:$0xf]
        %v599 = vld [vmem:[%s532 + $0x108] sm:$0xf]
        %v600 = vld [vmem:[%s532 + $0x10c] sm:$0xf]
        %v601 = vld [vmem:[%s532 + $0x110] sm:$0xf]
        %v602 = vld [vmem:[%s532 + $0x114] sm:$0xf]
        %v603 = vld [vmem:[%s532 + $0x118] sm:$0xf]
        %v604 = vld [vmem:[%s532 + $0x11c] sm:$0xf]
        %v605 = vld [vmem:[%s532 + $0x120] sm:$0xf]
        %v606 = vld [vmem:[%s532 + $0x124] sm:$0xf]
        %v607 = vld [vmem:[%s532 + $0x128] sm:$0xf]
        %v608 = vld [vmem:[%s532 + $0x12c] sm:$0xf]
        %v609 = vld [vmem:[%s532 + $0x130] sm:$0xf]
        %v610 = vld [vmem:[%s532 + $0x134] sm:$0xf]
        %v611 = vld [vmem:[%s532 + $0x138] sm:$0xf]
        %v612 = vld [vmem:[%s532 + $0x13c] sm:$0xf]
        %v613 = vld [vmem:[%s532 + $0x140] sm:$0xf]
        %v614 = vld [vmem:[%s532 + $0x144] sm:$0xf]
        %v615 = vld [vmem:[%s532 + $0x148] sm:$0xf]
        %v616 = vld [vmem:[%s532 + $0x14c] sm:$0xf]
        %v617 = vld [vmem:[%s532 + $0x150] sm:$0xf]
        %v618 = vld [vmem:[%s532 + $0x154] sm:$0xf]
        %v619 = vld [vmem:[%s532 + $0x158] sm:$0xf]
        %v620 = vld [vmem:[%s532 + $0x15c] sm:$0xf]
        %v621 = vld [vmem:[%s532 + $0x160] sm:$0xf]
        %v622 = vld [vmem:[%s532 + $0x164] sm:$0xf]
        %v623 = vld [vmem:[%s532 + $0x168] sm:$0xf]
        %v624 = vld [vmem:[%s532 + $0x16c] sm:$0xf]
        %v625 = vld [vmem:[%s532 + $0x170] sm:$0xf]
        %v626 = vld [vmem:[%s532 + $0x174] sm:$0xf]
        %v627 = vld [vmem:[%s532 + $0x178] sm:$0xf]
        %v628 = vld [vmem:[%s532 + $0x17c] sm:$0xf]
        %v629 = vld [vmem:[%s532 + $0x180] sm:$0xf]
        %v630 = vld [vmem:[%s532 + $0x184] sm:$0xf]
        %v631 = vld [vmem:[%s532 + $0x188] sm:$0xf]
        %v632 = vld [vmem:[%s532 + $0x18c] sm:$0xf]
        %v633 = vld [vmem:[%s532 + $0x190] sm:$0xf]
        %v634 = vld [vmem:[%s532 + $0x194] sm:$0xf]
        %v635 = vld [vmem:[%s532 + $0x198] sm:$0xf]
        %v636 = vld [vmem:[%s532 + $0x19c] sm:$0xf]
        %v637 = vld [vmem:[%s532 + $0x1a0] sm:$0xf]
        %v639 = vlaneseq
        %v640 = vshrl.u32 %v639, 7
        %v641 = vsub.s32 0, %v640
        %v642 = vrot.slane %v290, %v641
        %v749 = vunpack.c.l.b16 %v533
        %v750 = vunpack.c.l.b16 %v534
        %v751 = vunpack.c.l.b16 %v535
        %v752 = vunpack.c.l.b16 %v536
        %v753 = vunpack.c.l.b16 %v537
        %v754 = vunpack.c.l.b16 %v538
        %v755 = vunpack.c.l.b16 %v539
        %v756 = vunpack.c.l.b16 %v540
        %v757 = vunpack.c.l.b16 %v541
        %v758 = vunpack.c.l.b16 %v542
        %v759 = vunpack.c.l.b16 %v543
        %v760 = vunpack.c.l.b16 %v544
        %v761 = vunpack.c.l.b16 %v545
        %v762 = vunpack.c.l.b16 %v546
        %v763 = vunpack.c.l.b16 %v547
        %v764 = vunpack.c.l.b16 %v548
        %v765 = vunpack.c.l.b16 %v549
        %v766 = vunpack.c.l.b16 %v550
        %v767 = vunpack.c.l.b16 %v551
        %v768 = vunpack.c.l.b16 %v552
        %v769 = vunpack.c.l.b16 %v553
        %v770 = vunpack.c.l.b16 %v554
        %v771 = vunpack.c.l.b16 %v555
        %v772 = vunpack.c.l.b16 %v556
        %v773 = vunpack.c.l.b16 %v557
        %v774 = vunpack.c.l.b16 %v558
        %v775 = vunpack.c.l.b16 %v559
        %v776 = vunpack.c.l.b16 %v560
        %v777 = vunpack.c.l.b16 %v561
        %v778 = vunpack.c.l.b16 %v562
        %v779 = vunpack.c.l.b16 %v563
        %v780 = vunpack.c.l.b16 %v564
        %v781 = vunpack.c.l.b16 %v565
        %v782 = vunpack.c.l.b16 %v566
        %v783 = vunpack.c.l.b16 %v567
        %v784 = vunpack.c.l.b16 %v568
        %v785 = vunpack.c.l.b16 %v569
        %v786 = vunpack.c.l.b16 %v570
        %v787 = vunpack.c.l.b16 %v571
        %v788 = vunpack.c.l.b16 %v572
        %v789 = vunpack.c.l.b16 %v573
        %v790 = vunpack.c.l.b16 %v574
        %v791 = vunpack.c.l.b16 %v575
        %v792 = vunpack.c.l.b16 %v576
        %v793 = vunpack.c.l.b16 %v577
        %v794 = vunpack.c.l.b16 %v578
        %v795 = vunpack.c.l.b16 %v579
        %v796 = vunpack.c.l.b16 %v580
        %v797 = vunpack.c.l.b16 %v581
        %v798 = vunpack.c.l.b16 %v582
        %v799 = vunpack.c.l.b16 %v583
        %v800 = vunpack.c.l.b16 %v584
        %v801 = vunpack.c.l.b16 %v585
        %v802 = vunpack.c.l.b16 %v586
        %v803 = vunpack.c.l.b16 %v587
        %v804 = vunpack.c.l.b16 %v588
        %v805 = vunpack.c.l.b16 %v589
        %v806 = vunpack.c.l.b16 %v590
        %v807 = vunpack.c.l.b16 %v591
        %v808 = vunpack.c.l.b16 %v592
        %v809 = vunpack.c.l.b16 %v593
        %v810 = vunpack.c.l.b16 %v594
        %v811 = vunpack.c.l.b16 %v595
        %v812 = vunpack.c.l.b16 %v596
        %v813 = vunpack.c.l.b16 %v597
        %v814 = vunpack.c.l.b16 %v598
        %v815 = vunpack.c.l.b16 %v599
        %v816 = vunpack.c.l.b16 %v600
        %v817 = vunpack.c.l.b16 %v601
        %v818 = vunpack.c.l.b16 %v602
        %v819 = vunpack.c.l.b16 %v603
        %v820 = vunpack.c.l.b16 %v604
        %v821 = vunpack.c.l.b16 %v605
        %v822 = vunpack.c.l.b16 %v606
        %v823 = vunpack.c.l.b16 %v607
        %v824 = vunpack.c.l.b16 %v608
        %v825 = vunpack.c.l.b16 %v609
        %v826 = vunpack.c.l.b16 %v610
        %v827 = vunpack.c.l.b16 %v611
        %v828 = vunpack.c.l.b16 %v612
        %v829 = vunpack.c.l.b16 %v613
        %v830 = vunpack.c.l.b16 %v614
        %v831 = vunpack.c.l.b16 %v615
        %v832 = vunpack.c.l.b16 %v616
        %v833 = vunpack.c.l.b16 %v617
        %v834 = vunpack.c.l.b16 %v618
        %v835 = vunpack.c.l.b16 %v619
        %v836 = vunpack.c.l.b16 %v620
        %v837 = vunpack.c.l.b16 %v621
        %v838 = vunpack.c.l.b16 %v622
        %v839 = vunpack.c.l.b16 %v623
        %v840 = vunpack.c.l.b16 %v624
        %v841 = vunpack.c.l.b16 %v625
        %v842 = vunpack.c.l.b16 %v626
        %v843 = vunpack.c.l.b16 %v627
        %v844 = vunpack.c.l.b16 %v628
        %v845 = vunpack.c.l.b16 %v629
        %v846 = vunpack.c.l.b16 %v630
        %v847 = vunpack.c.l.b16 %v631
        %v848 = vunpack.c.l.b16 %v632
        %v849 = vunpack.c.l.b16 %v633
        %v850 = vunpack.c.l.b16 %v634
        %v851 = vunpack.c.l.b16 %v635
        %v852 = vunpack.c.l.b16 %v636
        %v853 = vunpack.c.l.b16 %v637
        %v854 = vpack.c.b16 %v750, %v749
        %v855 = vpack.c.b16 %v752, %v751
        %v856 = vpack.c.b16 %v754, %v753
        %v857 = vpack.c.b16 %v756, %v755
        %v858 = vpack.c.b16 %v758, %v757
        %v859 = vpack.c.b16 %v760, %v759
        %v860 = vpack.c.b16 %v762, %v761
        %v861 = vpack.c.b16 %v764, %v763
        %v862 = vpack.c.b16 %v766, %v765
        %v863 = vpack.c.b16 %v768, %v767
        %v864 = vpack.c.b16 %v770, %v769
        %v865 = vpack.c.b16 %v772, %v771
        %v866 = vpack.c.b16 %v774, %v773
        %v867 = vpack.c.b16 %v776, %v775
        %v868 = vpack.c.b16 %v778, %v777
        %v869 = vpack.c.b16 %v780, %v779
        %v870 = vpack.c.b16 %v782, %v781
        %v871 = vpack.c.b16 %v784, %v783
        %v872 = vpack.c.b16 %v786, %v785
        %v873 = vpack.c.b16 %v788, %v787
        %v874 = vpack.c.b16 %v790, %v789
        %v875 = vpack.c.b16 %v792, %v791
        %v876 = vpack.c.b16 %v794, %v793
        %v877 = vpack.c.b16 %v796, %v795
        %v878 = vpack.c.b16 %v798, %v797
        %v879 = vpack.c.b16 %v800, %v799
        %v880 = vpack.c.b16 %v802, %v801
        %v881 = vpack.c.b16 %v804, %v803
        %v882 = vpack.c.b16 %v806, %v805
        %v883 = vpack.c.b16 %v808, %v807
        %v884 = vpack.c.b16 %v810, %v809
        %v885 = vpack.c.b16 %v812, %v811
        %v886 = vpack.c.b16 %v814, %v813
        %v887 = vpack.c.b16 %v816, %v815
        %v888 = vpack.c.b16 %v818, %v817
        %v889 = vpack.c.b16 %v820, %v819
        %v890 = vpack.c.b16 %v822, %v821
        %v891 = vpack.c.b16 %v824, %v823
        %v892 = vpack.c.b16 %v826, %v825
        %v893 = vpack.c.b16 %v828, %v827
        %v894 = vpack.c.b16 %v830, %v829
        %v895 = vpack.c.b16 %v832, %v831
        %v896 = vpack.c.b16 %v834, %v833
        %v897 = vpack.c.b16 %v836, %v835
        %v898 = vpack.c.b16 %v838, %v837
        %v899 = vpack.c.b16 %v840, %v839
        %v900 = vpack.c.b16 %v842, %v841
        %v901 = vpack.c.b16 %v844, %v843
        %v902 = vpack.c.b16 %v846, %v845
        %v903 = vpack.c.b16 %v848, %v847
        %v904 = vpack.c.b16 %v850, %v849
        %v905 = vpack.c.b16 %v852, %v851
        %v906 = vpack.c.b16 %v853, %v853
        %v909 = vunpack.c.l.b16 %v288
        %v910 = vunpack.c.l.b16 %v289
        %v911 = vpack.c.b16 %v910, %v909
        %vm913 = vcmask 130048
        %v915 = vsel %vm913, %v854, 0
        %v918 = vsel %vm913, %v855, 0
        %v921 = vsel %vm913, %v856, 0
        %v924 = vsel %vm913, %v857, 0
        %v927 = vsel %vm913, %v858, 0
        %v930 = vsel %vm913, %v859, 0
        %v933 = vsel %vm913, %v860, 0
        %v936 = vsel %vm913, %v861, 0
        %v939 = vsel %vm913, %v862, 0
        %v942 = vsel %vm913, %v863, 0
        %v945 = vsel %vm913, %v864, 0
        %v948 = vsel %vm913, %v865, 0
        %v951 = vsel %vm913, %v866, 0
        %v954 = vsel %vm913, %v867, 0
        %v957 = vsel %vm913, %v868, 0
        %v960 = vsel %vm913, %v869, 0
        %v963 = vsel %vm913, %v870, 0
        %v966 = vsel %vm913, %v871, 0
        %v969 = vsel %vm913, %v872, 0
        %v972 = vsel %vm913, %v873, 0
        %v975 = vsel %vm913, %v874, 0
        %v978 = vsel %vm913, %v875, 0
        %v981 = vsel %vm913, %v876, 0
        %v984 = vsel %vm913, %v877, 0
        %v987 = vsel %vm913, %v878, 0
        %v990 = vsel %vm913, %v879, 0
        %v993 = vsel %vm913, %v880, 0
        %v996 = vsel %vm913, %v881, 0
        %v999 = vsel %vm913, %v882, 0
        %v1002 = vsel %vm913, %v883, 0
        %v1005 = vsel %vm913, %v884, 0
        %v1008 = vsel %vm913, %v885, 0
        %v1011 = vsel %vm913, %v886, 0
        %v1014 = vsel %vm913, %v887, 0
        %v1017 = vsel %vm913, %v888, 0
        %v1020 = vsel %vm913, %v889, 0
        %v1023 = vsel %vm913, %v890, 0
        %v1026 = vsel %vm913, %v891, 0
        %v1029 = vsel %vm913, %v892, 0
        %v1032 = vsel %vm913, %v893, 0
        %v1035 = vsel %vm913, %v894, 0
        %v1038 = vsel %vm913, %v895, 0
        %v1041 = vsel %vm913, %v896, 0
        %v1044 = vsel %vm913, %v897, 0
        %v1047 = vsel %vm913, %v898, 0
        %v1050 = vsel %vm913, %v899, 0
        %v1053 = vsel %vm913, %v900, 0
        %v1056 = vsel %vm913, %v901, 0
        %v1059 = vsel %vm913, %v902, 0
        %v1062 = vsel %vm913, %v903, 0
        %v1065 = vsel %vm913, %v904, 0
        %v1068 = vsel %vm913, %v905, 0
        %v1071 = vsel %vm913, %v906, 0
        %1073 = vmatprep.subr.bf16.mxu0 0
        %1074 = vmatpush1.bf16.msra.mxu0 %v911
        %1075 = vmatprep.subr.bf16.mxu0 0
        %1076 = vmatpush1.bf16.msra.mxu0 0
        %1077 = vmatprep.subr.bf16.mxu0 0
        %1078 = vmatpush1.bf16.msra.mxu0 0
        %1079 = vmatprep.subr.bf16.mxu0 0
        %1080 = vmatpush1.bf16.msra.mxu0 0
        %1081 = vmatprep.subr.bf16.mxu0 0
        %1082 = vmatpush1.bf16.msra.mxu0 0
        %1083 = vmatprep.subr.bf16.mxu0 0
        %1084 = vmatpush1.bf16.msra.mxu0 0
        %1085 = vmatprep.subr.bf16.mxu0 0
        %1086 = vmatpush1.bf16.msra.mxu0 0
        %1087 = vmatprep.subr.bf16.mxu0 0
        %1088 = vmatpush1.bf16.msra.mxu0 0
        %1089 = vmatprep.subr.bf16.mxu0 0
        %1090 = vmatpush1.bf16.msra.mxu0 0
        %1091 = vmatprep.subr.bf16.mxu0 0
        %1092 = vmatpush1.bf16.msra.mxu0 0
        %1093 = vmatprep.subr.bf16.mxu0 0
        %1094 = vmatpush1.bf16.msra.mxu0 0
        %1095 = vmatprep.subr.bf16.mxu0 0
        %1096 = vmatpush1.bf16.msra.mxu0 0
        %1097 = vmatprep.subr.bf16.mxu0 0
        %1098 = vmatpush1.bf16.msra.mxu0 0
        %1099 = vmatprep.subr.bf16.mxu0 0
        %1100 = vmatpush1.bf16.msra.mxu0 0
        %1101 = vmatprep.subr.bf16.mxu0 0
        %1102 = vmatpush1.bf16.msra.mxu0 0
        %1103 = vmatprep.subr.bf16.mxu0 0
        %1104 = vmatpush1.bf16.msra.mxu0 0
        %1105 = vmatprep.mubr.bf16.mxu0 0
        %1106 = vmatmul.mubr.bf16.gmra.mrb[0].mxu0 %v915
        %v1107 = vpop.f32.mrb[0].mxu0
        %v1108 = vadd.f32 %v642, %v1107
        %v1109 = vpop.f32.mrb[0].mxu0
        %v1110 = vpop.f32.mrb[0].mxu0
        %v1111 = vadd.f32 %v642, %v1110
        %v1112 = vpop.f32.mrb[0].mxu0
        %1113 = vmatprep.mubr.bf16.mxu0 0
        %1114 = vmatmul.mubr.bf16.gmra.mrb[0].mxu0 %v918
        %v1115 = vpop.f32.mrb[0].mxu0
        %v1116 = vadd.f32 %v642, %v1115
        %v1117 = vpop.f32.mrb[0].mxu0
        %v1118 = vpop.f32.mrb[0].mxu0
        %v1119 = vadd.f32 %v642, %v1118
        %v1120 = vpop.f32.mrb[0].mxu0
        %1121 = vmatprep.mubr.bf16.mxu0 0
        %1122 = vmatmul.mubr.bf16.gmra.mrb[0].mxu0 %v921
        %v1123 = vpop.f32.mrb[0].mxu0
        %v1124 = vadd.f32 %v642, %v1123
        %v1125 = vpop.f32.mrb[0].mxu0
        %v1126 = vpop.f32.mrb[0].mxu0
        %v1127 = vadd.f32 %v642, %v1126
        %v1128 = vpop.f32.mrb[0].mxu0
        %1129 = vmatprep.mubr.bf16.mxu0 0
        %1130 = vmatmul.mubr.bf16.gmra.mrb[0].mxu0 %v924
        %v1131 = vpop.f32.mrb[0].mxu0
        %v1132 = vadd.f32 %v642, %v1131
        %v1133 = vpop.f32.mrb[0].mxu0
        %v1134 = vpop.f32.mrb[0].mxu0
        %v1135 = vadd.f32 %v642, %v1134
        %v1136 = vpop.f32.mrb[0].mxu0
        %1137 = vmatprep.mubr.bf16.mxu0 0
        %1138 = vmatmul.mubr.bf16.gmra.mrb[0].mxu0 %v927
        %v1139 = vpop.f32.mrb[0].mxu0
        %v1140 = vadd.f32 %v642, %v1139
        %v1141 = vpop.f32.mrb[0].mxu0
        %v1142 = vpop.f32.mrb[0].mxu0
        %v1143 = vadd.f32 %v642, %v1142
        %v1144 = vpop.f32.mrb[0].mxu0
        %1145 = vmatprep.mubr.bf16.mxu0 0
        %1146 = vmatmul.mubr.bf16.gmra.mrb[0].mxu0 %v930
        %v1147 = vpop.f32.mrb[0].mxu0
        %v1148 = vadd.f32 %v642, %v1147
        %v1149 = vpop.f32.mrb[0].mxu0
        %v1150 = vpop.f32.mrb[0].mxu0
        %v1151 = vadd.f32 %v642, %v1150
        %v1152 = vpop.f32.mrb[0].mxu0
        %1153 = vmatprep.mubr.bf16.mxu0 0
        %1154 = vmatmul.mubr.bf16.gmra.mrb[0].mxu0 %v933
        %v1155 = vpop.f32.mrb[0].mxu0
        %v1156 = vadd.f32 %v642, %v1155
        %v1157 = vpop.f32.mrb[0].mxu0
        %v1158 = vpop.f32.mrb[0].mxu0
        %v1159 = vadd.f32 %v642, %v1158
        %v1160 = vpop.f32.mrb[0].mxu0
        %1161 = vmatprep.mubr.bf16.mxu0 0
        %1162 = vmatmul.mubr.bf16.gmra.mrb[0].mxu0 %v936
        %v1163 = vpop.f32.mrb[0].mxu0
        %v1164 = vadd.f32 %v642, %v1163
        %v1165 = vpop.f32.mrb[0].mxu0
        %v1166 = vpop.f32.mrb[0].mxu0
        %v1167 = vadd.f32 %v642, %v1166
        %v1168 = vpop.f32.mrb[0].mxu0
        %1169 = vmatprep.mubr.bf16.mxu0 0
        %1170 = vmatmul.mubr.bf16.gmra.mrb[0].mxu0 %v939
        %v1171 = vpop.f32.mrb[0].mxu0
        %v1172 = vadd.f32 %v642, %v1171
        %v1173 = vpop.f32.mrb[0].mxu0
        %v1174 = vpop.f32.mrb[0].mxu0
        %v1175 = vadd.f32 %v642, %v1174
        %v1176 = vpop.f32.mrb[0].mxu0
        %1177 = vmatprep.mubr.bf16.mxu0 0
        %1178 = vmatmul.mubr.bf16.gmra.mrb[0].mxu0 %v942
        %v1179 = vpop.f32.mrb[0].mxu0
        %v1180 = vadd.f32 %v642, %v1179
        %v1181 = vpop.f32.mrb[0].mxu0
        %v1182 = vpop.f32.mrb[0].mxu0
        %v1183 = vadd.f32 %v642, %v1182
        %v1184 = vpop.f32.mrb[0].mxu0
        %1185 = vmatprep.mubr.bf16.mxu0 0
        %1186 = vmatmul.mubr.bf16.gmra.mrb[0].mxu0 %v945
        %v1187 = vpop.f32.mrb[0].mxu0
        %v1188 = vadd.f32 %v642, %v1187
        %v1189 = vpop.f32.mrb[0].mxu0
        %v1190 = vpop.f32.mrb[0].mxu0
        %v1191 = vadd.f32 %v642, %v1190
        %v1192 = vpop.f32.mrb[0].mxu0
        %1193 = vmatprep.mubr.bf16.mxu0 0
        %1194 = vmatmul.mubr.bf16.gmra.mrb[0].mxu0 %v948
        %v1195 = vpop.f32.mrb[0].mxu0
        %v1196 = vadd.f32 %v642, %v1195
        %v1197 = vpop.f32.mrb[0].mxu0
        %v1198 = vpop.f32.mrb[0].mxu0
        %v1199 = vadd.f32 %v642, %v1198
        %v1200 = vpop.f32.mrb[0].mxu0
        %1201 = vmatprep.mubr.bf16.mxu0 0
        %1202 = vmatmul.mubr.bf16.gmra.mrb[0].mxu0 %v951
        %v1203 = vpop.f32.mrb[0].mxu0
        %v1204 = vadd.f32 %v642, %v1203
        %v1205 = vpop.f32.mrb[0].mxu0
        %v1206 = vpop.f32.mrb[0].mxu0
        %v1207 = vadd.f32 %v642, %v1206
        %v1208 = vpop.f32.mrb[0].mxu0
        %1209 = vmatprep.mubr.bf16.mxu0 0
        %1210 = vmatmul.mubr.bf16.gmra.mrb[0].mxu0 %v954
        %v1211 = vpop.f32.mrb[0].mxu0
        %v1212 = vadd.f32 %v642, %v1211
        %v1213 = vpop.f32.mrb[0].mxu0
        %v1214 = vpop.f32.mrb[0].mxu0
        %v1215 = vadd.f32 %v642, %v1214
        %v1216 = vpop.f32.mrb[0].mxu0
        %1217 = vmatprep.mubr.bf16.mxu0 0
        %1218 = vmatmul.mubr.bf16.gmra.mrb[0].mxu0 %v957
        %v1219 = vpop.f32.mrb[0].mxu0
        %v1220 = vadd.f32 %v642, %v1219
        %v1221 = vpop.f32.mrb[0].mxu0
        %v1222 = vpop.f32.mrb[0].mxu0
        %v1223 = vadd.f32 %v642, %v1222
        %v1224 = vpop.f32.mrb[0].mxu0
        %1225 = vmatprep.mubr.bf16.mxu0 0
        %1226 = vmatmul.mubr.bf16.gmra.mrb[0].mxu0 %v960
        %v1227 = vpop.f32.mrb[0].mxu0
        %v1228 = vadd.f32 %v642, %v1227
        %v1229 = vpop.f32.mrb[0].mxu0
        %v1230 = vpop.f32.mrb[0].mxu0
        %v1231 = vadd.f32 %v642, %v1230
        %v1232 = vpop.f32.mrb[0].mxu0
        %1233 = vmatprep.mubr.bf16.mxu0 0
        %1234 = vmatmul.mubr.bf16.gmra.mrb[0].mxu0 %v963
        %v1235 = vpop.f32.mrb[0].mxu0
        %v1236 = vadd.f32 %v642, %v1235
        %v1237 = vpop.f32.mrb[0].mxu0
        %v1238 = vpop.f32.mrb[0].mxu0
        %v1239 = vadd.f32 %v642, %v1238
        %v1240 = vpop.f32.mrb[0].mxu0
        %1241 = vmatprep.mubr.bf16.mxu0 0
        %1242 = vmatmul.mubr.bf16.gmra.mrb[0].mxu0 %v966
        %v1243 = vpop.f32.mrb[0].mxu0
        %v1244 = vadd.f32 %v642, %v1243
        %v1245 = vpop.f32.mrb[0].mxu0
        %v1246 = vpop.f32.mrb[0].mxu0
        %v1247 = vadd.f32 %v642, %v1246
        %v1248 = vpop.f32.mrb[0].mxu0
        %1249 = vmatprep.mubr.bf16.mxu0 0
        %1250 = vmatmul.mubr.bf16.gmra.mrb[0].mxu0 %v969
        %v1251 = vpop.f32.mrb[0].mxu0
        %v1252 = vadd.f32 %v642, %v1251
        %v1253 = vpop.f32.mrb[0].mxu0
        %v1254 = vpop.f32.mrb[0].mxu0
        %v1255 = vadd.f32 %v642, %v1254
        %v1256 = vpop.f32.mrb[0].mxu0
        %1257 = vmatprep.mubr.bf16.mxu0 0
        %1258 = vmatmul.mubr.bf16.gmra.mrb[0].mxu0 %v972
        %v1259 = vpop.f32.mrb[0].mxu0
        %v1260 = vadd.f32 %v642, %v1259
        %v1261 = vpop.f32.mrb[0].mxu0
        %v1262 = vpop.f32.mrb[0].mxu0
        %v1263 = vadd.f32 %v642, %v1262
        %v1264 = vpop.f32.mrb[0].mxu0
        %1265 = vmatprep.mubr.bf16.mxu0 0
        %1266 = vmatmul.mubr.bf16.gmra.mrb[0].mxu0 %v975
        %v1267 = vpop.f32.mrb[0].mxu0
        %v1268 = vadd.f32 %v642, %v1267
        %v1269 = vpop.f32.mrb[0].mxu0
        %v1270 = vpop.f32.mrb[0].mxu0
        %v1271 = vadd.f32 %v642, %v1270
        %v1272 = vpop.f32.mrb[0].mxu0
        %1273 = vmatprep.mubr.bf16.mxu0 0
        %1274 = vmatmul.mubr.bf16.gmra.mrb[0].mxu0 %v978
        %v1275 = vpop.f32.mrb[0].mxu0
        %v1276 = vadd.f32 %v642, %v1275
        %v1277 = vpop.f32.mrb[0].mxu0
        %v1278 = vpop.f32.mrb[0].mxu0
        %v1279 = vadd.f32 %v642, %v1278
        %v1280 = vpop.f32.mrb[0].mxu0
        %1281 = vmatprep.mubr.bf16.mxu0 0
        %1282 = vmatmul.mubr.bf16.gmra.mrb[0].mxu0 %v981
        %v1283 = vpop.f32.mrb[0].mxu0
        %v1284 = vadd.f32 %v642, %v1283
        %v1285 = vpop.f32.mrb[0].mxu0
        %v1286 = vpop.f32.mrb[0].mxu0
        %v1287 = vadd.f32 %v642, %v1286
        %v1288 = vpop.f32.mrb[0].mxu0
        %1289 = vmatprep.mubr.bf16.mxu0 0
        %1290 = vmatmul.mubr.bf16.gmra.mrb[0].mxu0 %v984
        %v1291 = vpop.f32.mrb[0].mxu0
        %v1292 = vadd.f32 %v642, %v1291
        %v1293 = vpop.f32.mrb[0].mxu0
        %v1294 = vpop.f32.mrb[0].mxu0
        %v1295 = vadd.f32 %v642, %v1294
        %v1296 = vpop.f32.mrb[0].mxu0
        %1297 = vmatprep.mubr.bf16.mxu0 0
        %1298 = vmatmul.mubr.bf16.gmra.mrb[0].mxu0 %v987
        %v1299 = vpop.f32.mrb[0].mxu0
        %v1300 = vadd.f32 %v642, %v1299
        %v1301 = vpop.f32.mrb[0].mxu0
        %v1302 = vpop.f32.mrb[0].mxu0
        %v1303 = vadd.f32 %v642, %v1302
        %v1304 = vpop.f32.mrb[0].mxu0
        %1305 = vmatprep.mubr.bf16.mxu0 0
        %1306 = vmatmul.mubr.bf16.gmra.mrb[0].mxu0 %v990
        %v1307 = vpop.f32.mrb[0].mxu0
        %v1308 = vadd.f32 %v642, %v1307
        %v1309 = vpop.f32.mrb[0].mxu0
        %v1310 = vpop.f32.mrb[0].mxu0
        %v1311 = vadd.f32 %v642, %v1310
        %v1312 = vpop.f32.mrb[0].mxu0
        %1313 = vmatprep.mubr.bf16.mxu0 0
        %1314 = vmatmul.mubr.bf16.gmra.mrb[0].mxu0 %v993
        %v1315 = vpop.f32.mrb[0].mxu0
        %v1316 = vadd.f32 %v642, %v1315
        %v1317 = vpop.f32.mrb[0].mxu0
        %v1318 = vpop.f32.mrb[0].mxu0
        %v1319 = vadd.f32 %v642, %v1318
        %v1320 = vpop.f32.mrb[0].mxu0
        %1321 = vmatprep.mubr.bf16.mxu0 0
        %1322 = vmatmul.mubr.bf16.gmra.mrb[0].mxu0 %v996
        %v1323 = vpop.f32.mrb[0].mxu0
        %v1324 = vadd.f32 %v642, %v1323
        %v1325 = vpop.f32.mrb[0].mxu0
        %v1326 = vpop.f32.mrb[0].mxu0
        %v1327 = vadd.f32 %v642, %v1326
        %v1328 = vpop.f32.mrb[0].mxu0
        %1329 = vmatprep.mubr.bf16.mxu0 0
        %1330 = vmatmul.mubr.bf16.gmra.mrb[0].mxu0 %v999
        %v1331 = vpop.f32.mrb[0].mxu0
        %v1332 = vadd.f32 %v642, %v1331
        %v1333 = vpop.f32.mrb[0].mxu0
        %v1334 = vpop.f32.mrb[0].mxu0
        %v1335 = vadd.f32 %v642, %v1334
        %v1336 = vpop.f32.mrb[0].mxu0
        %1337 = vmatprep.mubr.bf16.mxu0 0
        %1338 = vmatmul.mubr.bf16.gmra.mrb[0].mxu0 %v1002
        %v1339 = vpop.f32.mrb[0].mxu0
        %v1340 = vadd.f32 %v642, %v1339
        %v1341 = vpop.f32.mrb[0].mxu0
        %v1342 = vpop.f32.mrb[0].mxu0
        %v1343 = vadd.f32 %v642, %v1342
        %v1344 = vpop.f32.mrb[0].mxu0
        %1345 = vmatprep.mubr.bf16.mxu0 0
        %1346 = vmatmul.mubr.bf16.gmra.mrb[0].mxu0 %v1005
        %v1347 = vpop.f32.mrb[0].mxu0
        %v1348 = vadd.f32 %v642, %v1347
        %v1349 = vpop.f32.mrb[0].mxu0
        %v1350 = vpop.f32.mrb[0].mxu0
        %v1351 = vadd.f32 %v642, %v1350
        %v1352 = vpop.f32.mrb[0].mxu0
        %1353 = vmatprep.mubr.bf16.mxu0 0
        %1354 = vmatmul.mubr.bf16.gmra.mrb[0].mxu0 %v1008
        %v1355 = vpop.f32.mrb[0].mxu0
        %v1356 = vadd.f32 %v642, %v1355
        %v1357 = vpop.f32.mrb[0].mxu0
        %v1358 = vpop.f32.mrb[0].mxu0
        %v1359 = vadd.f32 %v642, %v1358
        %v1360 = vpop.f32.mrb[0].mxu0
        %1361 = vmatprep.mubr.bf16.mxu0 0
        %1362 = vmatmul.mubr.bf16.gmra.mrb[0].mxu0 %v1011
        %v1363 = vpop.f32.mrb[0].mxu0
        %v1364 = vadd.f32 %v642, %v1363
        %v1365 = vpop.f32.mrb[0].mxu0
        %v1366 = vpop.f32.mrb[0].mxu0
        %v1367 = vadd.f32 %v642, %v1366
        %v1368 = vpop.f32.mrb[0].mxu0
        %1369 = vmatprep.mubr.bf16.mxu0 0
        %1370 = vmatmul.mubr.bf16.gmra.mrb[0].mxu0 %v1014
        %v1371 = vpop.f32.mrb[0].mxu0
        %v1372 = vadd.f32 %v642, %v1371
        %v1373 = vpop.f32.mrb[0].mxu0
        %v1374 = vpop.f32.mrb[0].mxu0
        %v1375 = vadd.f32 %v642, %v1374
        %v1376 = vpop.f32.mrb[0].mxu0
        %1377 = vmatprep.mubr.bf16.mxu0 0
        %1378 = vmatmul.mubr.bf16.gmra.mrb[0].mxu0 %v1017
        %v1379 = vpop.f32.mrb[0].mxu0
        %v1380 = vadd.f32 %v642, %v1379
        %v1381 = vpop.f32.mrb[0].mxu0
        %v1382 = vpop.f32.mrb[0].mxu0
        %v1383 = vadd.f32 %v642, %v1382
        %v1384 = vpop.f32.mrb[0].mxu0
        %1385 = vmatprep.mubr.bf16.mxu0 0
        %1386 = vmatmul.mubr.bf16.gmra.mrb[0].mxu0 %v1020
        %v1387 = vpop.f32.mrb[0].mxu0
        %v1388 = vadd.f32 %v642, %v1387
        %v1389 = vpop.f32.mrb[0].mxu0
        %v1390 = vpop.f32.mrb[0].mxu0
        %v1391 = vadd.f32 %v642, %v1390
        %v1392 = vpop.f32.mrb[0].mxu0
        %1393 = vmatprep.mubr.bf16.mxu0 0
        %1394 = vmatmul.mubr.bf16.gmra.mrb[0].mxu0 %v1023
        %v1395 = vpop.f32.mrb[0].mxu0
        %v1396 = vadd.f32 %v642, %v1395
        %v1397 = vpop.f32.mrb[0].mxu0
        %v1398 = vpop.f32.mrb[0].mxu0
        %v1399 = vadd.f32 %v642, %v1398
        %v1400 = vpop.f32.mrb[0].mxu0
        %1401 = vmatprep.mubr.bf16.mxu0 0
        %1402 = vmatmul.mubr.bf16.gmra.mrb[0].mxu0 %v1026
        %v1403 = vpop.f32.mrb[0].mxu0
        %v1404 = vadd.f32 %v642, %v1403
        %v1405 = vpop.f32.mrb[0].mxu0
        %v1406 = vpop.f32.mrb[0].mxu0
        %v1407 = vadd.f32 %v642, %v1406
        %v1408 = vpop.f32.mrb[0].mxu0
        %1409 = vmatprep.mubr.bf16.mxu0 0
        %1410 = vmatmul.mubr.bf16.gmra.mrb[0].mxu0 %v1029
        %v1411 = vpop.f32.mrb[0].mxu0
        %v1412 = vadd.f32 %v642, %v1411
        %v1413 = vpop.f32.mrb[0].mxu0
        %v1414 = vpop.f32.mrb[0].mxu0
        %v1415 = vadd.f32 %v642, %v1414
        %v1416 = vpop.f32.mrb[0].mxu0
        %1417 = vmatprep.mubr.bf16.mxu0 0
        %1418 = vmatmul.mubr.bf16.gmra.mrb[0].mxu0 %v1032
        %v1419 = vpop.f32.mrb[0].mxu0
        %v1420 = vadd.f32 %v642, %v1419
        %v1421 = vpop.f32.mrb[0].mxu0
        %v1422 = vpop.f32.mrb[0].mxu0
        %v1423 = vadd.f32 %v642, %v1422
        %v1424 = vpop.f32.mrb[0].mxu0
        %1425 = vmatprep.mubr.bf16.mxu0 0
        %1426 = vmatmul.mubr.bf16.gmra.mrb[0].mxu0 %v1035
        %v1427 = vpop.f32.mrb[0].mxu0
        %v1428 = vadd.f32 %v642, %v1427
        %v1429 = vpop.f32.mrb[0].mxu0
        %v1430 = vpop.f32.mrb[0].mxu0
        %v1431 = vadd.f32 %v642, %v1430
        %v1432 = vpop.f32.mrb[0].mxu0
        %1433 = vmatprep.mubr.bf16.mxu0 0
        %1434 = vmatmul.mubr.bf16.gmra.mrb[0].mxu0 %v1038
        %v1435 = vpop.f32.mrb[0].mxu0
        %v1436 = vadd.f32 %v642, %v1435
        %v1437 = vpop.f32.mrb[0].mxu0
        %v1438 = vpop.f32.mrb[0].mxu0
        %v1439 = vadd.f32 %v642, %v1438
        %v1440 = vpop.f32.mrb[0].mxu0
        %1441 = vmatprep.mubr.bf16.mxu0 0
        %1442 = vmatmul.mubr.bf16.gmra.mrb[0].mxu0 %v1041
        %v1443 = vpop.f32.mrb[0].mxu0
        %v1444 = vadd.f32 %v642, %v1443
        %v1445 = vpop.f32.mrb[0].mxu0
        %v1446 = vpop.f32.mrb[0].mxu0
        %v1447 = vadd.f32 %v642, %v1446
        %v1448 = vpop.f32.mrb[0].mxu0
        %1449 = vmatprep.mubr.bf16.mxu0 0
        %1450 = vmatmul.mubr.bf16.gmra.mrb[0].mxu0 %v1044
        %v1451 = vpop.f32.mrb[0].mxu0
        %v1452 = vadd.f32 %v642, %v1451
        %v1453 = vpop.f32.mrb[0].mxu0
        %v1454 = vpop.f32.mrb[0].mxu0
        %v1455 = vadd.f32 %v642, %v1454
        %v1456 = vpop.f32.mrb[0].mxu0
        %1457 = vmatprep.mubr.bf16.mxu0 0
        %1458 = vmatmul.mubr.bf16.gmra.mrb[0].mxu0 %v1047
        %v1459 = vpop.f32.mrb[0].mxu0
        %v1460 = vadd.f32 %v642, %v1459
        %v1461 = vpop.f32.mrb[0].mxu0
        %v1462 = vpop.f32.mrb[0].mxu0
        %v1463 = vadd.f32 %v642, %v1462
        %v1464 = vpop.f32.mrb[0].mxu0
        %1465 = vmatprep.mubr.bf16.mxu0 0
        %1466 = vmatmul.mubr.bf16.gmra.mrb[0].mxu0 %v1050
        %v1467 = vpop.f32.mrb[0].mxu0
        %v1468 = vadd.f32 %v642, %v1467
        %v1469 = vpop.f32.mrb[0].mxu0
        %v1470 = vpop.f32.mrb[0].mxu0
        %v1471 = vadd.f32 %v642, %v1470
        %v1472 = vpop.f32.mrb[0].mxu0
        %1473 = vmatprep.mubr.bf16.mxu0 0
        %1474 = vmatmul.mubr.bf16.gmra.mrb[0].mxu0 %v1053
        %v1475 = vpop.f32.mrb[0].mxu0
        %v1476 = vadd.f32 %v642, %v1475
        %v1477 = vpop.f32.mrb[0].mxu0
        %v1478 = vpop.f32.mrb[0].mxu0
        %v1479 = vadd.f32 %v642, %v1478
        %v1480 = vpop.f32.mrb[0].mxu0
        %1481 = vmatprep.mubr.bf16.mxu0 0
        %1482 = vmatmul.mubr.bf16.gmra.mrb[0].mxu0 %v1056
        %v1483 = vpop.f32.mrb[0].mxu0
        %v1484 = vadd.f32 %v642, %v1483
        %v1485 = vpop.f32.mrb[0].mxu0
        %v1486 = vpop.f32.mrb[0].mxu0
        %v1487 = vadd.f32 %v642, %v1486
        %v1488 = vpop.f32.mrb[0].mxu0
        %1489 = vmatprep.mubr.bf16.mxu0 0
        %1490 = vmatmul.mubr.bf16.gmra.mrb[0].mxu0 %v1059
        %v1491 = vpop.f32.mrb[0].mxu0
        %v1492 = vadd.f32 %v642, %v1491
        %v1493 = vpop.f32.mrb[0].mxu0
        %v1494 = vpop.f32.mrb[0].mxu0
        %v1495 = vadd.f32 %v642, %v1494
        %v1496 = vpop.f32.mrb[0].mxu0
        %1497 = vmatprep.mubr.bf16.mxu0 0
        %1498 = vmatmul.mubr.bf16.gmra.mrb[0].mxu0 %v1062
        %v1499 = vpop.f32.mrb[0].mxu0
        %v1500 = vadd.f32 %v642, %v1499
        %v1501 = vpop.f32.mrb[0].mxu0
        %v1502 = vpop.f32.mrb[0].mxu0
        %v1503 = vadd.f32 %v642, %v1502
        %v1504 = vpop.f32.mrb[0].mxu0
        %1505 = vmatprep.mubr.bf16.mxu0 0
        %1506 = vmatmul.mubr.bf16.gmra.mrb[0].mxu0 %v1065
        %v1507 = vpop.f32.mrb[0].mxu0
        %v1508 = vadd.f32 %v642, %v1507
        %v1509 = vpop.f32.mrb[0].mxu0
        %v1510 = vpop.f32.mrb[0].mxu0
        %v1511 = vadd.f32 %v642, %v1510
        %v1512 = vpop.f32.mrb[0].mxu0
        %1513 = vmatprep.mubr.bf16.mxu0 0
        %1514 = vmatmul.mubr.bf16.gmra.mrb[0].mxu0 %v1068
        %v1515 = vpop.f32.mrb[0].mxu0
        %v1516 = vadd.f32 %v642, %v1515
        %v1517 = vpop.f32.mrb[0].mxu0
        %v1518 = vpop.f32.mrb[0].mxu0
        %v1519 = vadd.f32 %v642, %v1518
        %v1520 = vpop.f32.mrb[0].mxu0
        %1521 = vmatprep.mubr.bf16.mxu0 0
        %1522 = vmatmul.mubr.bf16.gmra.mrb[0].mxu0 %v1071
        %v1523 = vpop.f32.mrb[0].mxu0
        %v1524 = vadd.f32 %v642, %v1523
        %v1525 = vpop.f32.mrb[0].mxu0
        %v1526 = vpop.f32.mrb[0].mxu0
        %v1527 = vpop.f32.mrb[0].mxu0
        %1528 = vdwg.mxu0
        %v1529 = vmax.f32 %v1108, 0.0
        %v1530 = vmax.f32 %v1111, 0.0
        %v1531 = vmax.f32 %v1116, 0.0
        %v1532 = vmax.f32 %v1119, 0.0
        %v1533 = vmax.f32 %v1124, 0.0
        %v1534 = vmax.f32 %v1127, 0.0
        %v1535 = vmax.f32 %v1132, 0.0
        %v1536 = vmax.f32 %v1135, 0.0
        %v1537 = vmax.f32 %v1140, 0.0
        %v1538 = vmax.f32 %v1143, 0.0
        %v1539 = vmax.f32 %v1148, 0.0
        %v1540 = vmax.f32 %v1151, 0.0
        %v1541 = vmax.f32 %v1156, 0.0
        %v1542 = vmax.f32 %v1159, 0.0
        %v1543 = vmax.f32 %v1164, 0.0
        %v1544 = vmax.f32 %v1167, 0.0
        %v1545 = vmax.f32 %v1172, 0.0
        %v1546 = vmax.f32 %v1175, 0.0
        %v1547 = vmax.f32 %v1180, 0.0
        %v1548 = vmax.f32 %v1183, 0.0
        %v1549 = vmax.f32 %v1188, 0.0
        %v1550 = vmax.f32 %v1191, 0.0
        %v1551 = vmax.f32 %v1196, 0.0
        %v1552 = vmax.f32 %v1199, 0.0
        %v1553 = vmax.f32 %v1204, 0.0
        %v1554 = vmax.f32 %v1207, 0.0
        %v1555 = vmax.f32 %v1212, 0.0
        %v1556 = vmax.f32 %v1215, 0.0
        %v1557 = vmax.f32 %v1220, 0.0
        %v1558 = vmax.f32 %v1223, 0.0
        %v1559 = vmax.f32 %v1228, 0.0
        %v1560 = vmax.f32 %v1231, 0.0
        %v1561 = vmax.f32 %v1236, 0.0
        %v1562 = vmax.f32 %v1239, 0.0
        %v1563 = vmax.f32 %v1244, 0.0
        %v1564 = vmax.f32 %v1247, 0.0
        %v1565 = vmax.f32 %v1252, 0.0
        %v1566 = vmax.f32 %v1255, 0.0
        %v1567 = vmax.f32 %v1260, 0.0
        %v1568 = vmax.f32 %v1263, 0.0
        %v1569 = vmax.f32 %v1268, 0.0
        %v1570 = vmax.f32 %v1271, 0.0
        %v1571 = vmax.f32 %v1276, 0.0
        %v1572 = vmax.f32 %v1279, 0.0
        %v1573 = vmax.f32 %v1284, 0.0
        %v1574 = vmax.f32 %v1287, 0.0
        %v1575 = vmax.f32 %v1292, 0.0
        %v1576 = vmax.f32 %v1295, 0.0
        %v1577 = vmax.f32 %v1300, 0.0
        %v1578 = vmax.f32 %v1303, 0.0
        %v1579 = vmax.f32 %v1308, 0.0
        %v1580 = vmax.f32 %v1311, 0.0
        %v1581 = vmax.f32 %v1316, 0.0
        %v1582 = vmax.f32 %v1319, 0.0
        %v1583 = vmax.f32 %v1324, 0.0
        %v1584 = vmax.f32 %v1327, 0.0
        %v1585 = vmax.f32 %v1332, 0.0
        %v1586 = vmax.f32 %v1335, 0.0
        %v1587 = vmax.f32 %v1340, 0.0
        %v1588 = vmax.f32 %v1343, 0.0
        %v1589 = vmax.f32 %v1348, 0.0
        %v1590 = vmax.f32 %v1351, 0.0
        %v1591 = vmax.f32 %v1356, 0.0
        %v1592 = vmax.f32 %v1359, 0.0
        %v1593 = vmax.f32 %v1364, 0.0
        %v1594 = vmax.f32 %v1367, 0.0
        %v1595 = vmax.f32 %v1372, 0.0
        %v1596 = vmax.f32 %v1375, 0.0
        %v1597 = vmax.f32 %v1380, 0.0
        %v1598 = vmax.f32 %v1383, 0.0
        %v1599 = vmax.f32 %v1388, 0.0
        %v1600 = vmax.f32 %v1391, 0.0
        %v1601 = vmax.f32 %v1396, 0.0
        %v1602 = vmax.f32 %v1399, 0.0
        %v1603 = vmax.f32 %v1404, 0.0
        %v1604 = vmax.f32 %v1407, 0.0
        %v1605 = vmax.f32 %v1412, 0.0
        %v1606 = vmax.f32 %v1415, 0.0
        %v1607 = vmax.f32 %v1420, 0.0
        %v1608 = vmax.f32 %v1423, 0.0
        %v1609 = vmax.f32 %v1428, 0.0
        %v1610 = vmax.f32 %v1431, 0.0
        %v1611 = vmax.f32 %v1436, 0.0
        %v1612 = vmax.f32 %v1439, 0.0
        %v1613 = vmax.f32 %v1444, 0.0
        %v1614 = vmax.f32 %v1447, 0.0
        %v1615 = vmax.f32 %v1452, 0.0
        %v1616 = vmax.f32 %v1455, 0.0
        %v1617 = vmax.f32 %v1460, 0.0
        %v1618 = vmax.f32 %v1463, 0.0
        %v1619 = vmax.f32 %v1468, 0.0
        %v1620 = vmax.f32 %v1471, 0.0
        %v1621 = vmax.f32 %v1476, 0.0
        %v1622 = vmax.f32 %v1479, 0.0
        %v1623 = vmax.f32 %v1484, 0.0
        %v1624 = vmax.f32 %v1487, 0.0
        %v1625 = vmax.f32 %v1492, 0.0
        %v1626 = vmax.f32 %v1495, 0.0
        %v1627 = vmax.f32 %v1500, 0.0
        %v1628 = vmax.f32 %v1503, 0.0
        %v1629 = vmax.f32 %v1508, 0.0
        %v1630 = vmax.f32 %v1511, 0.0
        %v1631 = vmax.f32 %v1516, 0.0
        %v1632 = vmax.f32 %v1519, 0.0
        %v1633 = vmax.f32 %v1524, 0.0
        %v1634 = vpack.c.bf16 %v1530, %v1529
        %v1635 = vpack.c.bf16 %v1532, %v1531
        %v1636 = vpack.c.bf16 %v1534, %v1533
        %v1637 = vpack.c.bf16 %v1536, %v1535
        %v1638 = vpack.c.bf16 %v1538, %v1537
        %v1639 = vpack.c.bf16 %v1540, %v1539
        %v1640 = vpack.c.bf16 %v1542, %v1541
        %v1641 = vpack.c.bf16 %v1544, %v1543
        %v1642 = vpack.c.bf16 %v1546, %v1545
        %v1643 = vpack.c.bf16 %v1548, %v1547
        %v1644 = vpack.c.bf16 %v1550, %v1549
        %v1645 = vpack.c.bf16 %v1552, %v1551
        %v1646 = vpack.c.bf16 %v1554, %v1553
        %v1647 = vpack.c.bf16 %v1556, %v1555
        %v1648 = vpack.c.bf16 %v1558, %v1557
        %v1649 = vpack.c.bf16 %v1560, %v1559
        %v1650 = vpack.c.bf16 %v1562, %v1561
        %v1651 = vpack.c.bf16 %v1564, %v1563
        %v1652 = vpack.c.bf16 %v1566, %v1565
        %v1653 = vpack.c.bf16 %v1568, %v1567
        %v1654 = vpack.c.bf16 %v1570, %v1569
        %v1655 = vpack.c.bf16 %v1572, %v1571
        %v1656 = vpack.c.bf16 %v1574, %v1573
        %v1657 = vpack.c.bf16 %v1576, %v1575
        %v1658 = vpack.c.bf16 %v1578, %v1577
        %v1659 = vpack.c.bf16 %v1580, %v1579
        %v1660 = vpack.c.bf16 %v1582, %v1581
        %v1661 = vpack.c.bf16 %v1584, %v1583
        %v1662 = vpack.c.bf16 %v1586, %v1585
        %v1663 = vpack.c.bf16 %v1588, %v1587
        %v1664 = vpack.c.bf16 %v1590, %v1589
        %v1665 = vpack.c.bf16 %v1592, %v1591
        %v1666 = vpack.c.bf16 %v1594, %v1593
        %v1667 = vpack.c.bf16 %v1596, %v1595
        %v1668 = vpack.c.bf16 %v1598, %v1597
        %v1669 = vpack.c.bf16 %v1600, %v1599
        %v1670 = vpack.c.bf16 %v1602, %v1601
        %v1671 = vpack.c.bf16 %v1604, %v1603
        %v1672 = vpack.c.bf16 %v1606, %v1605
        %v1673 = vpack.c.bf16 %v1608, %v1607
        %v1674 = vpack.c.bf16 %v1610, %v1609
        %v1675 = vpack.c.bf16 %v1612, %v1611
        %v1676 = vpack.c.bf16 %v1614, %v1613
        %v1677 = vpack.c.bf16 %v1616, %v1615
        %v1678 = vpack.c.bf16 %v1618, %v1617
        %v1679 = vpack.c.bf16 %v1620, %v1619
        %v1680 = vpack.c.bf16 %v1622, %v1621
        %v1681 = vpack.c.bf16 %v1624, %v1623
        %v1682 = vpack.c.bf16 %v1626, %v1625
        %v1683 = vpack.c.bf16 %v1628, %v1627
        %v1684 = vpack.c.bf16 %v1630, %v1629
        %v1685 = vpack.c.bf16 %v1632, %v1631
        %v1686 = vpack.c.bf16 %v1633, %v1633
        %vm1687 = vsmask.f32 7424
        %v1689 = vshrl.u32 %v1634, 16
        %v1691 = vshll.u32 %v1634, 16
        %v1693 = vrot.slane %v1691, 1
        %v1694 = vor.u32 %v1689, %v1693
        %v1696 = vshll.u32 %v1635, 16
        %v1698 = vrot.slane %v1696, 1
        %v1699 = vsel %vm1687, %v1694, %v1698
        %v1700 = vshrl.u32 %v1635, 16
        %v1702 = vor.u32 %v1700, %v1698
        %v1704 = vshll.u32 %v1636, 16
        %v1706 = vrot.slane %v1704, 1
        %v1707 = vsel %vm1687, %v1702, %v1706
        %v1708 = vshrl.u32 %v1636, 16
        %v1710 = vor.u32 %v1708, %v1706
        %v1712 = vshll.u32 %v1637, 16
        %v1714 = vrot.slane %v1712, 1
        %v1715 = vsel %vm1687, %v1710, %v1714
        %v1716 = vshrl.u32 %v1637, 16
        %v1718 = vor.u32 %v1716, %v1714
        %v1720 = vshll.u32 %v1638, 16
        %v1722 = vrot.slane %v1720, 1
        %v1723 = vsel %vm1687, %v1718, %v1722
        %v1724 = vshrl.u32 %v1638, 16
        %v1726 = vor.u32 %v1724, %v1722
        %v1728 = vshll.u32 %v1639, 16
        %v1730 = vrot.slane %v1728, 1
        %v1731 = vsel %vm1687, %v1726, %v1730
        %v1732 = vshrl.u32 %v1639, 16
        %v1734 = vor.u32 %v1732, %v1730
        %v1736 = vshll.u32 %v1640, 16
        %v1738 = vrot.slane %v1736, 1
        %v1739 = vsel %vm1687, %v1734, %v1738
        %v1740 = vshrl.u32 %v1640, 16
        %v1742 = vor.u32 %v1740, %v1738
        %v1744 = vshll.u32 %v1641, 16
        %v1746 = vrot.slane %v1744, 1
        %v1747 = vsel %vm1687, %v1742, %v1746
        %v1748 = vshrl.u32 %v1641, 16
        %v1750 = vor.u32 %v1748, %v1746
        %v1752 = vshll.u32 %v1642, 16
        %v1754 = vrot.slane %v1752, 1
        %v1755 = vsel %vm1687, %v1750, %v1754
        %v1756 = vshrl.u32 %v1642, 16
        %v1758 = vor.u32 %v1756, %v1754
        %v1760 = vshll.u32 %v1643, 16
        %v1762 = vrot.slane %v1760, 1
        %v1763 = vsel %vm1687, %v1758, %v1762
        %v1764 = vshrl.u32 %v1643, 16
        %v1766 = vor.u32 %v1764, %v1762
        %v1768 = vshll.u32 %v1644, 16
        %v1770 = vrot.slane %v1768, 1
        %v1771 = vsel %vm1687, %v1766, %v1770
        %v1772 = vshrl.u32 %v1644, 16
        %v1774 = vor.u32 %v1772, %v1770
        %v1776 = vshll.u32 %v1645, 16
        %v1778 = vrot.slane %v1776, 1
        %v1779 = vsel %vm1687, %v1774, %v1778
        %v1780 = vshrl.u32 %v1645, 16
        %v1782 = vor.u32 %v1780, %v1778
        %v1784 = vshll.u32 %v1646, 16
        %v1786 = vrot.slane %v1784, 1
        %v1787 = vsel %vm1687, %v1782, %v1786
        %v1788 = vshrl.u32 %v1646, 16
        %v1790 = vor.u32 %v1788, %v1786
        %v1792 = vshll.u32 %v1647, 16
        %v1794 = vrot.slane %v1792, 1
        %v1795 = vsel %vm1687, %v1790, %v1794
        %v1796 = vshrl.u32 %v1647, 16
        %v1798 = vor.u32 %v1796, %v1794
        %v1800 = vshll.u32 %v1648, 16
        %v1802 = vrot.slane %v1800, 1
        %v1803 = vsel %vm1687, %v1798, %v1802
        %v1804 = vshrl.u32 %v1648, 16
        %v1806 = vor.u32 %v1804, %v1802
        %v1808 = vshll.u32 %v1649, 16
        %v1810 = vrot.slane %v1808, 1
        %v1811 = vsel %vm1687, %v1806, %v1810
        %v1812 = vshrl.u32 %v1649, 16
        %v1814 = vor.u32 %v1812, %v1810
        %v1816 = vshll.u32 %v1650, 16
        %v1818 = vrot.slane %v1816, 1
        %v1819 = vsel %vm1687, %v1814, %v1818
        %v1820 = vshrl.u32 %v1650, 16
        %v1822 = vor.u32 %v1820, %v1818
        %v1824 = vshll.u32 %v1651, 16
        %v1826 = vrot.slane %v1824, 1
        %v1827 = vsel %vm1687, %v1822, %v1826
        %v1828 = vshrl.u32 %v1651, 16
        %v1830 = vor.u32 %v1828, %v1826
        %v1832 = vshll.u32 %v1652, 16
        %v1834 = vrot.slane %v1832, 1
        %v1835 = vsel %vm1687, %v1830, %v1834
        %v1836 = vshrl.u32 %v1652, 16
        %v1838 = vor.u32 %v1836, %v1834
        %v1840 = vshll.u32 %v1653, 16
        %v1842 = vrot.slane %v1840, 1
        %v1843 = vsel %vm1687, %v1838, %v1842
        %v1844 = vshrl.u32 %v1653, 16
        %v1846 = vor.u32 %v1844, %v1842
        %v1848 = vshll.u32 %v1654, 16
        %v1850 = vrot.slane %v1848, 1
        %v1851 = vsel %vm1687, %v1846, %v1850
        %v1852 = vshrl.u32 %v1654, 16
        %v1854 = vor.u32 %v1852, %v1850
        %v1856 = vshll.u32 %v1655, 16
        %v1858 = vrot.slane %v1856, 1
        %v1859 = vsel %vm1687, %v1854, %v1858
        %v1860 = vshrl.u32 %v1655, 16
        %v1862 = vor.u32 %v1860, %v1858
        %v1864 = vshll.u32 %v1656, 16
        %v1866 = vrot.slane %v1864, 1
        %v1867 = vsel %vm1687, %v1862, %v1866
        %v1868 = vshrl.u32 %v1656, 16
        %v1870 = vor.u32 %v1868, %v1866
        %v1872 = vshll.u32 %v1657, 16
        %v1874 = vrot.slane %v1872, 1
        %v1875 = vsel %vm1687, %v1870, %v1874
        %v1876 = vshrl.u32 %v1657, 16
        %v1878 = vor.u32 %v1876, %v1874
        %v1880 = vshll.u32 %v1658, 16
        %v1882 = vrot.slane %v1880, 1
        %v1883 = vsel %vm1687, %v1878, %v1882
        %v1884 = vshrl.u32 %v1658, 16
        %v1886 = vor.u32 %v1884, %v1882
        %v1888 = vshll.u32 %v1659, 16
        %v1890 = vrot.slane %v1888, 1
        %v1891 = vsel %vm1687, %v1886, %v1890
        %v1892 = vshrl.u32 %v1659, 16
        %v1894 = vor.u32 %v1892, %v1890
        %v1896 = vshll.u32 %v1660, 16
        %v1898 = vrot.slane %v1896, 1
        %v1899 = vsel %vm1687, %v1894, %v1898
        %v1900 = vshrl.u32 %v1660, 16
        %v1902 = vor.u32 %v1900, %v1898
        %v1904 = vshll.u32 %v1661, 16
        %v1906 = vrot.slane %v1904, 1
        %v1907 = vsel %vm1687, %v1902, %v1906
        %v1908 = vshrl.u32 %v1661, 16
        %v1910 = vor.u32 %v1908, %v1906
        %v1912 = vshll.u32 %v1662, 16
        %v1914 = vrot.slane %v1912, 1
        %v1915 = vsel %vm1687, %v1910, %v1914
        %v1916 = vshrl.u32 %v1662, 16
        %v1918 = vor.u32 %v1916, %v1914
        %v1920 = vshll.u32 %v1663, 16
        %v1922 = vrot.slane %v1920, 1
        %v1923 = vsel %vm1687, %v1918, %v1922
        %v1924 = vshrl.u32 %v1663, 16
        %v1926 = vor.u32 %v1924, %v1922
        %v1928 = vshll.u32 %v1664, 16
        %v1930 = vrot.slane %v1928, 1
        %v1931 = vsel %vm1687, %v1926, %v1930
        %v1932 = vshrl.u32 %v1664, 16
        %v1934 = vor.u32 %v1932, %v1930
        %v1936 = vshll.u32 %v1665, 16
        %v1938 = vrot.slane %v1936, 1
        %v1939 = vsel %vm1687, %v1934, %v1938
        %v1940 = vshrl.u32 %v1665, 16
        %v1942 = vor.u32 %v1940, %v1938
        %v1944 = vshll.u32 %v1666, 16
        %v1946 = vrot.slane %v1944, 1
        %v1947 = vsel %vm1687, %v1942, %v1946
        %v1948 = vshrl.u32 %v1666, 16
        %v1950 = vor.u32 %v1948, %v1946
        %v1952 = vshll.u32 %v1667, 16
        %v1954 = vrot.slane %v1952, 1
        %v1955 = vsel %vm1687, %v1950, %v1954
        %v1956 = vshrl.u32 %v1667, 16
        %v1958 = vor.u32 %v1956, %v1954
        %v1960 = vshll.u32 %v1668, 16
        %v1962 = vrot.slane %v1960, 1
        %v1963 = vsel %vm1687, %v1958, %v1962
        %v1964 = vshrl.u32 %v1668, 16
        %v1966 = vor.u32 %v1964, %v1962
        %v1968 = vshll.u32 %v1669, 16
        %v1970 = vrot.slane %v1968, 1
        %v1971 = vsel %vm1687, %v1966, %v1970
        %v1972 = vshrl.u32 %v1669, 16
        %v1974 = vor.u32 %v1972, %v1970
        %v1976 = vshll.u32 %v1670, 16
        %v1978 = vrot.slane %v1976, 1
        %v1979 = vsel %vm1687, %v1974, %v1978
        %v1980 = vshrl.u32 %v1670, 16
        %v1982 = vor.u32 %v1980, %v1978
        %v1984 = vshll.u32 %v1671, 16
        %v1986 = vrot.slane %v1984, 1
        %v1987 = vsel %vm1687, %v1982, %v1986
        %v1988 = vshrl.u32 %v1671, 16
        %v1990 = vor.u32 %v1988, %v1986
        %v1992 = vshll.u32 %v1672, 16
        %v1994 = vrot.slane %v1992, 1
        %v1995 = vsel %vm1687, %v1990, %v1994
        %v1996 = vshrl.u32 %v1672, 16
        %v1998 = vor.u32 %v1996, %v1994
        %v2000 = vshll.u32 %v1673, 16
        %v2002 = vrot.slane %v2000, 1
        %v2003 = vsel %vm1687, %v1998, %v2002
        %v2004 = vshrl.u32 %v1673, 16
        %v2006 = vor.u32 %v2004, %v2002
        %v2008 = vshll.u32 %v1674, 16
        %v2010 = vrot.slane %v2008, 1
        %v2011 = vsel %vm1687, %v2006, %v2010
        %v2012 = vshrl.u32 %v1674, 16
        %v2014 = vor.u32 %v2012, %v2010
        %v2016 = vshll.u32 %v1675, 16
        %v2018 = vrot.slane %v2016, 1
        %v2019 = vsel %vm1687, %v2014, %v2018
        %v2020 = vshrl.u32 %v1675, 16
        %v2022 = vor.u32 %v2020, %v2018
        %v2024 = vshll.u32 %v1676, 16
        %v2026 = vrot.slane %v2024, 1
        %v2027 = vsel %vm1687, %v2022, %v2026
        %v2028 = vshrl.u32 %v1676, 16
        %v2030 = vor.u32 %v2028, %v2026
        %v2032 = vshll.u32 %v1677, 16
        %v2034 = vrot.slane %v2032, 1
        %v2035 = vsel %vm1687, %v2030, %v2034
        %v2036 = vshrl.u32 %v1677, 16
        %v2038 = vor.u32 %v2036, %v2034
        %v2040 = vshll.u32 %v1678, 16
        %v2042 = vrot.slane %v2040, 1
        %v2043 = vsel %vm1687, %v2038, %v2042
        %v2044 = vshrl.u32 %v1678, 16
        %v2046 = vor.u32 %v2044, %v2042
        %v2048 = vshll.u32 %v1679, 16
        %v2050 = vrot.slane %v2048, 1
        %v2051 = vsel %vm1687, %v2046, %v2050
        %v2052 = vshrl.u32 %v1679, 16
        %v2054 = vor.u32 %v2052, %v2050
        %v2056 = vshll.u32 %v1680, 16
        %v2058 = vrot.slane %v2056, 1
        %v2059 = vsel %vm1687, %v2054, %v2058
        %v2060 = vshrl.u32 %v1680, 16
        %v2062 = vor.u32 %v2060, %v2058
        %v2064 = vshll.u32 %v1681, 16
        %v2066 = vrot.slane %v2064, 1
        %v2067 = vsel %vm1687, %v2062, %v2066
        %v2068 = vshrl.u32 %v1681, 16
        %v2070 = vor.u32 %v2068, %v2066
        %v2072 = vshll.u32 %v1682, 16
        %v2074 = vrot.slane %v2072, 1
        %v2075 = vsel %vm1687, %v2070, %v2074
        %vm2173 = vcmask 1046528
        %v2174 = vrot.slane %v1634, 1
        %v2175 = vrot.slane %v1635, 1
        %v2176 = vsel %vm2173, %v2174, %v2175
        %v2177 = vrot.slane %v1636, 1
        %v2178 = vsel %vm2173, %v2175, %v2177
        %v2179 = vrot.slane %v1637, 1
        %v2180 = vsel %vm2173, %v2177, %v2179
        %v2181 = vrot.slane %v1638, 1
        %v2182 = vsel %vm2173, %v2179, %v2181
        %v2183 = vrot.slane %v1639, 1
        %v2184 = vsel %vm2173, %v2181, %v2183
        %v2185 = vrot.slane %v1640, 1
        %v2186 = vsel %vm2173, %v2183, %v2185
        %v2187 = vrot.slane %v1641, 1
        %v2188 = vsel %vm2173, %v2185, %v2187
        %v2189 = vrot.slane %v1642, 1
        %v2190 = vsel %vm2173, %v2187, %v2189
        %v2191 = vrot.slane %v1643, 1
        %v2192 = vsel %vm2173, %v2189, %v2191
        %v2193 = vrot.slane %v1644, 1
        %v2194 = vsel %vm2173, %v2191, %v2193
        %v2195 = vrot.slane %v1645, 1
        %v2196 = vsel %vm2173, %v2193, %v2195
        %v2197 = vrot.slane %v1646, 1
        %v2198 = vsel %vm2173, %v2195, %v2197
        %v2199 = vrot.slane %v1647, 1
        %v2200 = vsel %vm2173, %v2197, %v2199
        %v2201 = vrot.slane %v1648, 1
        %v2202 = vsel %vm2173, %v2199, %v2201
        %v2203 = vrot.slane %v1649, 1
        %v2204 = vsel %vm2173, %v2201, %v2203
        %v2205 = vrot.slane %v1650, 1
        %v2206 = vsel %vm2173, %v2203, %v2205
        %v2207 = vrot.slane %v1651, 1
        %v2208 = vsel %vm2173, %v2205, %v2207
        %v2209 = vrot.slane %v1652, 1
        %v2210 = vsel %vm2173, %v2207, %v2209
        %v2211 = vrot.slane %v1653, 1
        %v2212 = vsel %vm2173, %v2209, %v2211
        %v2213 = vrot.slane %v1654, 1
        %v2214 = vsel %vm2173, %v2211, %v2213
        %v2215 = vrot.slane %v1655, 1
        %v2216 = vsel %vm2173, %v2213, %v2215
        %v2217 = vrot.slane %v1656, 1
        %v2218 = vsel %vm2173, %v2215, %v2217
        %v2219 = vrot.slane %v1657, 1
        %v2220 = vsel %vm2173, %v2217, %v2219
        %v2221 = vrot.slane %v1658, 1
        %v2222 = vsel %vm2173, %v2219, %v2221
        %v2223 = vrot.slane %v1659, 1
        %v2224 = vsel %vm2173, %v2221, %v2223
        %v2225 = vrot.slane %v1660, 1
        %v2226 = vsel %vm2173, %v2223, %v2225
        %v2227 = vrot.slane %v1661, 1
        %v2228 = vsel %vm2173, %v2225, %v2227
        %v2229 = vrot.slane %v1662, 1
        %v2230 = vsel %vm2173, %v2227, %v2229
        %v2231 = vrot.slane %v1663, 1
        %v2232 = vsel %vm2173, %v2229, %v2231
        %v2233 = vrot.slane %v1664, 1
        %v2234 = vsel %vm2173, %v2231, %v2233
        %v2235 = vrot.slane %v1665, 1
        %v2236 = vsel %vm2173, %v2233, %v2235
        %v2237 = vrot.slane %v1666, 1
        %v2238 = vsel %vm2173, %v2235, %v2237
        %v2239 = vrot.slane %v1667, 1
        %v2240 = vsel %vm2173, %v2237, %v2239
        %v2241 = vrot.slane %v1668, 1
        %v2242 = vsel %vm2173, %v2239, %v2241
        %v2243 = vrot.slane %v1669, 1
        %v2244 = vsel %vm2173, %v2241, %v2243
        %v2245 = vrot.slane %v1670, 1
        %v2246 = vsel %vm2173, %v2243, %v2245
        %v2247 = vrot.slane %v1671, 1
        %v2248 = vsel %vm2173, %v2245, %v2247
        %v2249 = vrot.slane %v1672, 1
        %v2250 = vsel %vm2173, %v2247, %v2249
        %v2251 = vrot.slane %v1673, 1
        %v2252 = vsel %vm2173, %v2249, %v2251
        %v2253 = vrot.slane %v1674, 1
        %v2254 = vsel %vm2173, %v2251, %v2253
        %v2255 = vrot.slane %v1675, 1
        %v2256 = vsel %vm2173, %v2253, %v2255
        %v2257 = vrot.slane %v1676, 1
        %v2258 = vsel %vm2173, %v2255, %v2257
        %v2259 = vrot.slane %v1677, 1
        %v2260 = vsel %vm2173, %v2257, %v2259
        %v2261 = vrot.slane %v1678, 1
        %v2262 = vsel %vm2173, %v2259, %v2261
        %v2263 = vrot.slane %v1679, 1
        %v2264 = vsel %vm2173, %v2261, %v2263
        %v2265 = vrot.slane %v1680, 1
        %v2266 = vsel %vm2173, %v2263, %v2265
        %v2267 = vrot.slane %v1681, 1
        %v2268 = vsel %vm2173, %v2265, %v2267
        %v2269 = vrot.slane %v1682, 1
        %v2270 = vsel %vm2173, %v2267, %v2269
        %v2319 = vshrl.u32 %v1682, 16
        %v2321 = vor.u32 %v2319, %v2074
        %v2323 = vshll.u32 %v1683, 16
        %v2325 = vrot.slane %v2323, 1
        %v2326 = vsel %vm1687, %v2321, %v2325
        %v2327 = vshrl.u32 %v1683, 16
        %v2329 = vor.u32 %v2327, %v2325
        %v2331 = vshll.u32 %v1684, 16
        %v2333 = vrot.slane %v2331, 1
        %v2334 = vsel %vm1687, %v2329, %v2333
        %v2339 = vrot.slane %v1683, 1
        %v2340 = vsel %vm2173, %v2269, %v2339
        %v2341 = vrot.slane %v1684, 1
        %v2342 = vsel %vm2173, %v2339, %v2341
        %v2345 = vshrl.u32 %v1684, 16
        %v2347 = vor.u32 %v2345, %v2333
        %v2349 = vshll.u32 %v1685, 16
        %v2351 = vrot.slane %v2349, 1
        %v2352 = vsel %vm1687, %v2347, %v2351
        %v2353 = vshrl.u32 %v1685, 16
        %v2355 = vor.u32 %v2353, %v2351
        %v2357 = vshll.u32 %v1686, 16
        %v2359 = vrot.slane %v2357, 1
        %v2360 = vsel %vm1687, %v2355, %v2359
        %v2365 = vrot.slane %v1685, 1
        %v2366 = vsel %vm2173, %v2341, %v2365
        %v2367 = vrot.slane %v1686, 1
        %v2368 = vsel %vm2173, %v2365, %v2367
        %v2372 = vlaneseq
        %v2373 = vshrl.u32 %v2372, 7
        %v2374 = vsub.s32 0, %v2373
        %v2375 = vrot.slane %v435, %v2374
        %v2521 = vunpack.c.l.b16 %v291
        %v2522 = vunpack.c.l.b16 %v292
        %v2523 = vunpack.c.l.b16 %v293
        %v2524 = vunpack.c.l.b16 %v294
        %v2525 = vunpack.c.l.b16 %v295
        %v2526 = vunpack.c.l.b16 %v296
        %v2527 = vunpack.c.l.b16 %v297
        %v2528 = vunpack.c.l.b16 %v298
        %v2529 = vunpack.c.l.b16 %v299
        %v2530 = vunpack.c.l.b16 %v300
        %v2531 = vunpack.c.l.b16 %v301
        %v2532 = vunpack.c.l.b16 %v302
        %v2533 = vunpack.c.l.b16 %v303
        %v2534 = vunpack.c.l.b16 %v304
        %v2535 = vunpack.c.l.b16 %v305
        %v2536 = vunpack.c.l.b16 %v306
        %v2537 = vunpack.c.l.b16 %v307
        %v2538 = vunpack.c.l.b16 %v308
        %v2539 = vunpack.c.l.b16 %v309
        %v2540 = vunpack.c.l.b16 %v310
        %v2541 = vunpack.c.l.b16 %v311
        %v2542 = vunpack.c.l.b16 %v312
        %v2543 = vunpack.c.l.b16 %v313
        %v2544 = vunpack.c.l.b16 %v314
        %v2545 = vunpack.c.l.b16 %v315
        %v2546 = vunpack.c.l.b16 %v316
        %v2547 = vunpack.c.l.b16 %v317
        %v2548 = vunpack.c.l.b16 %v318
        %v2549 = vunpack.c.l.b16 %v319
        %v2550 = vunpack.c.l.b16 %v320
        %v2551 = vunpack.c.l.b16 %v321
        %v2552 = vunpack.c.l.b16 %v322
        %v2553 = vunpack.c.l.b16 %v323
        %v2554 = vunpack.c.l.b16 %v324
        %v2555 = vunpack.c.l.b16 %v325
        %v2556 = vunpack.c.l.b16 %v326
        %v2557 = vunpack.c.l.b16 %v327
        %v2558 = vunpack.c.l.b16 %v328
        %v2559 = vunpack.c.l.b16 %v329
        %v2560 = vunpack.c.l.b16 %v330
        %v2561 = vunpack.c.l.b16 %v331
        %v2562 = vunpack.c.l.b16 %v332
        %v2563 = vunpack.c.l.b16 %v333
        %v2564 = vunpack.c.l.b16 %v334
        %v2565 = vunpack.c.l.b16 %v335
        %v2566 = vunpack.c.l.b16 %v336
        %v2567 = vunpack.c.l.b16 %v337
        %v2568 = vunpack.c.l.b16 %v338
        %v2569 = vunpack.c.l.b16 %v339
        %v2570 = vunpack.c.l.b16 %v340
        %v2571 = vunpack.c.l.b16 %v341
        %v2572 = vunpack.c.l.b16 %v342
        %v2573 = vunpack.c.l.b16 %v343
        %v2574 = vunpack.c.l.b16 %v344
        %v2575 = vunpack.c.l.b16 %v345
        %v2576 = vunpack.c.l.b16 %v346
        %v2577 = vunpack.c.l.b16 %v347
        %v2578 = vunpack.c.l.b16 %v348
        %v2579 = vunpack.c.l.b16 %v349
        %v2580 = vunpack.c.l.b16 %v350
        %v2581 = vunpack.c.l.b16 %v351
        %v2582 = vunpack.c.l.b16 %v352
        %v2583 = vunpack.c.l.b16 %v353
        %v2584 = vunpack.c.l.b16 %v354
        %v2585 = vunpack.c.l.b16 %v355
        %v2586 = vunpack.c.l.b16 %v356
        %v2587 = vunpack.c.l.b16 %v357
        %v2588 = vunpack.c.l.b16 %v358
        %v2589 = vunpack.c.l.b16 %v359
        %v2590 = vunpack.c.l.b16 %v360
        %v2591 = vunpack.c.l.b16 %v361
        %v2592 = vunpack.c.l.b16 %v362
        %v2593 = vunpack.c.l.b16 %v363
        %v2594 = vunpack.c.l.b16 %v364
        %v2595 = vunpack.c.l.b16 %v365
        %v2596 = vunpack.c.l.b16 %v366
        %v2597 = vunpack.c.l.b16 %v367
        %v2598 = vunpack.c.l.b16 %v368
        %v2599 = vunpack.c.l.b16 %v369
        %v2600 = vunpack.c.l.b16 %v370
        %v2601 = vunpack.c.l.b16 %v371
        %v2602 = vunpack.c.l.b16 %v372
        %v2603 = vunpack.c.l.b16 %v373
        %v2604 = vunpack.c.l.b16 %v374
        %v2605 = vunpack.c.l.b16 %v375
        %v2606 = vunpack.c.l.b16 %v376
        %v2607 = vunpack.c.l.b16 %v377
        %v2608 = vunpack.c.l.b16 %v378
        %v2609 = vunpack.c.l.b16 %v379
        %v2610 = vunpack.c.l.b16 %v380
        %v2611 = vunpack.c.l.b16 %v381
        %v2612 = vunpack.c.l.b16 %v382
        %v2613 = vunpack.c.l.b16 %v383
        %v2614 = vunpack.c.l.b16 %v384
        %v2615 = vunpack.c.l.b16 %v385
        %v2616 = vunpack.c.l.b16 %v386
        %v2617 = vunpack.c.l.b16 %v387
        %v2618 = vunpack.c.l.b16 %v388
        %v2619 = vunpack.c.l.b16 %v389
        %v2620 = vunpack.c.l.b16 %v390
        %v2621 = vunpack.c.l.b16 %v391
        %v2622 = vunpack.c.l.b16 %v392
        %v2623 = vunpack.c.l.b16 %v393
        %v2624 = vunpack.c.l.b16 %v394
        %v2625 = vunpack.c.l.b16 %v395
        %v2626 = vunpack.c.l.b16 %v396
        %v2627 = vunpack.c.l.b16 %v397
        %v2628 = vunpack.c.l.b16 %v398
        %v2629 = vunpack.c.l.b16 %v399
        %v2630 = vunpack.c.l.b16 %v400
        %v2631 = vunpack.c.l.b16 %v401
        %v2632 = vunpack.c.l.b16 %v402
        %v2633 = vunpack.c.l.b16 %v403
        %v2634 = vunpack.c.l.b16 %v404
        %v2635 = vunpack.c.l.b16 %v405
        %v2636 = vunpack.c.l.b16 %v406
        %v2637 = vunpack.c.l.b16 %v407
        %v2638 = vunpack.c.l.b16 %v408
        %v2639 = vunpack.c.l.b16 %v409
        %v2640 = vunpack.c.l.b16 %v410
        %v2641 = vunpack.c.l.b16 %v411
        %v2642 = vunpack.c.l.b16 %v412
        %v2643 = vunpack.c.l.b16 %v413
        %v2644 = vunpack.c.l.b16 %v414
        %v2645 = vunpack.c.l.b16 %v415
        %v2646 = vunpack.c.l.b16 %v416
        %v2647 = vunpack.c.l.b16 %v417
        %v2648 = vunpack.c.l.b16 %v418
        %v2649 = vunpack.c.l.b16 %v419
        %v2650 = vunpack.c.l.b16 %v420
        %v2651 = vunpack.c.l.b16 %v421
        %v2652 = vunpack.c.l.b16 %v422
        %v2653 = vunpack.c.l.b16 %v423
        %v2654 = vunpack.c.l.b16 %v424
        %v2655 = vunpack.c.l.b16 %v425
        %v2656 = vunpack.c.l.b16 %v426
        %v2657 = vunpack.c.l.b16 %v427
        %v2658 = vunpack.c.l.b16 %v428
        %v2659 = vunpack.c.l.b16 %v429
        %v2660 = vunpack.c.l.b16 %v430
        %v2661 = vunpack.c.l.b16 %v431
        %v2662 = vunpack.c.l.b16 %v432
        %v2663 = vunpack.c.l.b16 %v433
        %v2664 = vunpack.c.l.b16 %v434
        %v2665 = vpack.c.b16 %v2522, %v2521
        %v2666 = vpack.c.b16 %v2524, %v2523
        %v2667 = vpack.c.b16 %v2526, %v2525
        %v2668 = vpack.c.b16 %v2528, %v2527
        %v2669 = vpack.c.b16 %v2530, %v2529
        %v2670 = vpack.c.b16 %v2532, %v2531
        %v2671 = vpack.c.b16 %v2534, %v2533
        %v2672 = vpack.c.b16 %v2536, %v2535
        %v2673 = vpack.c.b16 %v2538, %v2537
        %v2674 = vpack.c.b16 %v2540, %v2539
        %v2675 = vpack.c.b16 %v2542, %v2541
        %v2676 = vpack.c.b16 %v2544, %v2543
        %v2677 = vpack.c.b16 %v2546, %v2545
        %v2678 = vpack.c.b16 %v2548, %v2547
        %v2679 = vpack.c.b16 %v2550, %v2549
        %v2680 = vpack.c.b16 %v2552, %v2551
        %v2681 = vpack.c.b16 %v2554, %v2553
        %v2682 = vpack.c.b16 %v2556, %v2555
        %v2683 = vpack.c.b16 %v2558, %v2557
        %v2684 = vpack.c.b16 %v2560, %v2559
        %v2685 = vpack.c.b16 %v2562, %v2561
        %v2686 = vpack.c.b16 %v2564, %v2563
        %v2687 = vpack.c.b16 %v2566, %v2565
        %v2688 = vpack.c.b16 %v2568, %v2567
        %v2689 = vpack.c.b16 %v2570, %v2569
        %v2690 = vpack.c.b16 %v2572, %v2571
        %v2691 = vpack.c.b16 %v2574, %v2573
        %v2692 = vpack.c.b16 %v2576, %v2575
        %v2693 = vpack.c.b16 %v2578, %v2577
        %v2694 = vpack.c.b16 %v2580, %v2579
        %v2695 = vpack.c.b16 %v2582, %v2581
        %v2696 = vpack.c.b16 %v2584, %v2583
        %v2697 = vpack.c.b16 %v2586, %v2585
        %v2698 = vpack.c.b16 %v2588, %v2587
        %v2699 = vpack.c.b16 %v2590, %v2589
        %v2700 = vpack.c.b16 %v2592, %v2591
        %v2701 = vpack.c.b16 %v2594, %v2593
        %v2702 = vpack.c.b16 %v2596, %v2595
        %v2703 = vpack.c.b16 %v2598, %v2597
        %v2704 = vpack.c.b16 %v2600, %v2599
        %v2705 = vpack.c.b16 %v2602, %v2601
        %v2706 = vpack.c.b16 %v2604, %v2603
        %v2707 = vpack.c.b16 %v2606, %v2605
        %v2708 = vpack.c.b16 %v2608, %v2607
        %v2709 = vpack.c.b16 %v2610, %v2609
        %v2710 = vpack.c.b16 %v2612, %v2611
        %v2711 = vpack.c.b16 %v2614, %v2613
        %v2712 = vpack.c.b16 %v2616, %v2615
        %v2713 = vpack.c.b16 %v2618, %v2617
        %v2714 = vpack.c.b16 %v2620, %v2619
        %v2715 = vpack.c.b16 %v2622, %v2621
        %v2716 = vpack.c.b16 %v2624, %v2623
        %v2717 = vpack.c.b16 %v2626, %v2625
        %v2718 = vpack.c.b16 %v2628, %v2627
        %v2719 = vpack.c.b16 %v2630, %v2629
        %v2720 = vpack.c.b16 %v2632, %v2631
        %v2721 = vpack.c.b16 %v2634, %v2633
        %v2722 = vpack.c.b16 %v2636, %v2635
        %v2723 = vpack.c.b16 %v2638, %v2637
        %v2724 = vpack.c.b16 %v2640, %v2639
        %v2725 = vpack.c.b16 %v2642, %v2641
        %v2726 = vpack.c.b16 %v2644, %v2643
        %v2727 = vpack.c.b16 %v2646, %v2645
        %v2728 = vpack.c.b16 %v2648, %v2647
        %v2729 = vpack.c.b16 %v2650, %v2649
        %v2730 = vpack.c.b16 %v2652, %v2651
        %v2731 = vpack.c.b16 %v2654, %v2653
        %v2732 = vpack.c.b16 %v2656, %v2655
        %v2733 = vpack.c.b16 %v2658, %v2657
        %v2734 = vpack.c.b16 %v2660, %v2659
        %v2735 = vpack.c.b16 %v2662, %v2661
        %v2736 = vpack.c.b16 %v2664, %v2663
        %2809 = vmatprep.subr.bf16.mxu0 0
        %2810 = vmatpush1.bf16.msra.mxu0 %v2665
        %2811 = vmatprep.subr.bf16.mxu0 0
        %2812 = vmatpush1.bf16.msra.mxu0 %v2666
        %2813 = vmatprep.subr.bf16.mxu0 0
        %2814 = vmatpush1.bf16.msra.mxu0 %v2667
        %2815 = vmatprep.subr.bf16.mxu0 0
        %2816 = vmatpush1.bf16.msra.mxu0 %v2668
        %2817 = vmatprep.subr.bf16.mxu0 0
        %2818 = vmatpush1.bf16.msra.mxu0 %v2669
        %2819 = vmatprep.subr.bf16.mxu0 0
        %2820 = vmatpush1.bf16.msra.mxu0 %v2670
        %2821 = vmatprep.subr.bf16.mxu0 0
        %2822 = vmatpush1.bf16.msra.mxu0 %v2671
        %2823 = vmatprep.subr.bf16.mxu0 0
        %2824 = vmatpush1.bf16.msra.mxu0 %v2672
        %2825 = vmatprep.subr.bf16.mxu0 0
        %2826 = vmatpush1.bf16.msra.mxu0 %v2673
        %2827 = vmatprep.subr.bf16.mxu0 0
        %2828 = vmatpush1.bf16.msra.mxu0 %v2674
        %2829 = vmatprep.subr.bf16.mxu0 0
        %2830 = vmatpush1.bf16.msra.mxu0 %v2675
        %2831 = vmatprep.subr.bf16.mxu0 0
        %2832 = vmatpush1.bf16.msra.mxu0 %v2676
        %2833 = vmatprep.subr.bf16.mxu0 0
        %2834 = vmatpush1.bf16.msra.mxu0 %v2677
        %2835 = vmatprep.subr.bf16.mxu0 0
        %2836 = vmatpush1.bf16.msra.mxu0 %v2678
        %2837 = vmatprep.subr.bf16.mxu0 0
        %2838 = vmatpush1.bf16.msra.mxu0 %v2679
        %2839 = vmatprep.subr.bf16.mxu0 0
        %2840 = vmatpush1.bf16.msra.mxu0 %v2680
        %2841 = vmatprep.mubr.bf16.mxu0 %v1699
        %2842 = vmatmul.mubr.bf16.gmra.mrb[0].mxu0 %v1634
        %v2843 = vpop.f32.mrb[0].mxu0
        %v2844 = vadd.f32 %v2375, %v2843
        %v2845 = vpop.f32.mrb[0].mxu0
        %v2846 = vpop.f32.mrb[0].mxu0
        %v2847 = vadd.f32 %v2375, %v2846
        %v2848 = vpop.f32.mrb[0].mxu0
        %2849 = vmatprep.mubr.bf16.mxu0 %v1707
        %2850 = vmatmul.mubr.bf16.gmra.mrb[0].mxu0 %v1635
        %v2851 = vpop.f32.mrb[0].mxu0
        %v2852 = vadd.f32 %v2375, %v2851
        %v2853 = vpop.f32.mrb[0].mxu0
        %v2854 = vpop.f32.mrb[0].mxu0
        %v2855 = vadd.f32 %v2375, %v2854
        %v2856 = vpop.f32.mrb[0].mxu0
        %2857 = vmatprep.mubr.bf16.mxu0 %v1715
        %2858 = vmatmul.mubr.bf16.gmra.mrb[0].mxu0 %v1636
        %v2859 = vpop.f32.mrb[0].mxu0
        %v2860 = vadd.f32 %v2375, %v2859
        %v2861 = vpop.f32.mrb[0].mxu0
        %v2862 = vpop.f32.mrb[0].mxu0
        %v2863 = vadd.f32 %v2375, %v2862
        %v2864 = vpop.f32.mrb[0].mxu0
        %2865 = vmatprep.mubr.bf16.mxu0 %v1723
        %2866 = vmatmul.mubr.bf16.gmra.mrb[0].mxu0 %v1637
        %v2867 = vpop.f32.mrb[0].mxu0
        %v2868 = vadd.f32 %v2375, %v2867
        %v2869 = vpop.f32.mrb[0].mxu0
        %v2870 = vpop.f32.mrb[0].mxu0
        %v2871 = vadd.f32 %v2375, %v2870
        %v2872 = vpop.f32.mrb[0].mxu0
        %2873 = vmatprep.mubr.bf16.mxu0 %v1731
        %2874 = vmatmul.mubr.bf16.gmra.mrb[0].mxu0 %v1638
        %v2875 = vpop.f32.mrb[0].mxu0
        %v2876 = vadd.f32 %v2375, %v2875
        %v2877 = vpop.f32.mrb[0].mxu0
        %v2878 = vpop.f32.mrb[0].mxu0
        %v2879 = vadd.f32 %v2375, %v2878
        %v2880 = vpop.f32.mrb[0].mxu0
        %2881 = vmatprep.mubr.bf16.mxu0 %v1739
        %2882 = vmatmul.mubr.bf16.gmra.mrb[0].mxu0 %v1639
        %v2883 = vpop.f32.mrb[0].mxu0
        %v2884 = vadd.f32 %v2375, %v2883
        %v2885 = vpop.f32.mrb[0].mxu0
        %v2886 = vpop.f32.mrb[0].mxu0
        %v2887 = vadd.f32 %v2375, %v2886
        %v2888 = vpop.f32.mrb[0].mxu0
        %2889 = vmatprep.mubr.bf16.mxu0 %v1747
        %2890 = vmatmul.mubr.bf16.gmra.mrb[0].mxu0 %v1640
        %v2891 = vpop.f32.mrb[0].mxu0
        %v2892 = vadd.f32 %v2375, %v2891
        %v2893 = vpop.f32.mrb[0].mxu0
        %v2894 = vpop.f32.mrb[0].mxu0
        %v2895 = vadd.f32 %v2375, %v2894
        %v2896 = vpop.f32.mrb[0].mxu0
        %2897 = vmatprep.mubr.bf16.mxu0 %v1755
        %2898 = vmatmul.mubr.bf16.gmra.mrb[0].mxu0 %v1641
        %v2899 = vpop.f32.mrb[0].mxu0
        %v2900 = vadd.f32 %v2375, %v2899
        %v2901 = vpop.f32.mrb[0].mxu0
        %v2902 = vpop.f32.mrb[0].mxu0
        %v2903 = vadd.f32 %v2375, %v2902
        %v2904 = vpop.f32.mrb[0].mxu0
        %2905 = vmatprep.mubr.bf16.mxu0 %v1763
        %2906 = vmatmul.mubr.bf16.gmra.mrb[0].mxu0 %v1642
        %v2907 = vpop.f32.mrb[0].mxu0
        %v2908 = vadd.f32 %v2375, %v2907
        %v2909 = vpop.f32.mrb[0].mxu0
        %v2910 = vpop.f32.mrb[0].mxu0
        %v2911 = vadd.f32 %v2375, %v2910
        %v2912 = vpop.f32.mrb[0].mxu0
        %2913 = vmatprep.mubr.bf16.mxu0 %v1771
        %2914 = vmatmul.mubr.bf16.gmra.mrb[0].mxu0 %v1643
        %v2915 = vpop.f32.mrb[0].mxu0
        %v2916 = vadd.f32 %v2375, %v2915
        %v2917 = vpop.f32.mrb[0].mxu0
        %v2918 = vpop.f32.mrb[0].mxu0
        %v2919 = vadd.f32 %v2375, %v2918
        %v2920 = vpop.f32.mrb[0].mxu0
        %2921 = vmatprep.mubr.bf16.mxu0 %v1779
        %2922 = vmatmul.mubr.bf16.gmra.mrb[0].mxu0 %v1644
        %v2923 = vpop.f32.mrb[0].mxu0
        %v2924 = vadd.f32 %v2375, %v2923
        %v2925 = vpop.f32.mrb[0].mxu0
        %v2926 = vpop.f32.mrb[0].mxu0
        %v2927 = vadd.f32 %v2375, %v2926
        %v2928 = vpop.f32.mrb[0].mxu0
        %2929 = vmatprep.mubr.bf16.mxu0 %v1787
        %2930 = vmatmul.mubr.bf16.gmra.mrb[0].mxu0 %v1645
        %v2931 = vpop.f32.mrb[0].mxu0
        %v2932 = vadd.f32 %v2375, %v2931
        %v2933 = vpop.f32.mrb[0].mxu0
        %v2934 = vpop.f32.mrb[0].mxu0
        %v2935 = vadd.f32 %v2375, %v2934
        %v2936 = vpop.f32.mrb[0].mxu0
        %2937 = vmatprep.mubr.bf16.mxu0 %v1795
        %2938 = vmatmul.mubr.bf16.gmra.mrb[0].mxu0 %v1646
        %v2939 = vpop.f32.mrb[0].mxu0
        %v2940 = vadd.f32 %v2375, %v2939
        %v2941 = vpop.f32.mrb[0].mxu0
        %v2942 = vpop.f32.mrb[0].mxu0
        %v2943 = vadd.f32 %v2375, %v2942
        %v2944 = vpop.f32.mrb[0].mxu0
        %2945 = vmatprep.mubr.bf16.mxu0 %v1803
        %2946 = vmatmul.mubr.bf16.gmra.mrb[0].mxu0 %v1647
        %v2947 = vpop.f32.mrb[0].mxu0
        %v2948 = vadd.f32 %v2375, %v2947
        %v2949 = vpop.f32.mrb[0].mxu0
        %v2950 = vpop.f32.mrb[0].mxu0
        %v2951 = vadd.f32 %v2375, %v2950
        %v2952 = vpop.f32.mrb[0].mxu0
        %2953 = vmatprep.mubr.bf16.mxu0 %v1811
        %2954 = vmatmul.mubr.bf16.gmra.mrb[0].mxu0 %v1648
        %v2955 = vpop.f32.mrb[0].mxu0
        %v2956 = vadd.f32 %v2375, %v2955
        %v2957 = vpop.f32.mrb[0].mxu0
        %v2958 = vpop.f32.mrb[0].mxu0
        %v2959 = vadd.f32 %v2375, %v2958
        %v2960 = vpop.f32.mrb[0].mxu0
        %2961 = vmatprep.mubr.bf16.mxu0 %v1819
        %2962 = vmatmul.mubr.bf16.gmra.mrb[0].mxu0 %v1649
        %v2963 = vpop.f32.mrb[0].mxu0
        %v2964 = vadd.f32 %v2375, %v2963
        %v2965 = vpop.f32.mrb[0].mxu0
        %v2966 = vpop.f32.mrb[0].mxu0
        %v2967 = vadd.f32 %v2375, %v2966
        %v2968 = vpop.f32.mrb[0].mxu0
        %2969 = vmatprep.mubr.bf16.mxu0 %v1827
        %2970 = vmatmul.mubr.bf16.gmra.mrb[0].mxu0 %v1650
        %v2971 = vpop.f32.mrb[0].mxu0
        %v2972 = vadd.f32 %v2375, %v2971
        %v2973 = vpop.f32.mrb[0].mxu0
        %v2974 = vpop.f32.mrb[0].mxu0
        %v2975 = vadd.f32 %v2375, %v2974
        %v2976 = vpop.f32.mrb[0].mxu0
        %2977 = vmatprep.mubr.bf16.mxu0 %v1835
        %2978 = vmatmul.mubr.bf16.gmra.mrb[0].mxu0 %v1651
        %v2979 = vpop.f32.mrb[0].mxu0
        %v2980 = vadd.f32 %v2375, %v2979
        %v2981 = vpop.f32.mrb[0].mxu0
        %v2982 = vpop.f32.mrb[0].mxu0
        %v2983 = vadd.f32 %v2375, %v2982
        %v2984 = vpop.f32.mrb[0].mxu0
        %2985 = vmatprep.mubr.bf16.mxu0 %v1843
        %2986 = vmatmul.mubr.bf16.gmra.mrb[0].mxu0 %v1652
        %v2987 = vpop.f32.mrb[0].mxu0
        %v2988 = vadd.f32 %v2375, %v2987
        %v2989 = vpop.f32.mrb[0].mxu0
        %v2990 = vpop.f32.mrb[0].mxu0
        %v2991 = vadd.f32 %v2375, %v2990
        %v2992 = vpop.f32.mrb[0].mxu0
        %2993 = vmatprep.mubr.bf16.mxu0 %v1851
        %2994 = vmatmul.mubr.bf16.gmra.mrb[0].mxu0 %v1653
        %v2995 = vpop.f32.mrb[0].mxu0
        %v2996 = vadd.f32 %v2375, %v2995
        %v2997 = vpop.f32.mrb[0].mxu0
        %v2998 = vpop.f32.mrb[0].mxu0
        %v2999 = vadd.f32 %v2375, %v2998
        %v3000 = vpop.f32.mrb[0].mxu0
        %3001 = vmatprep.mubr.bf16.mxu0 %v1859
        %3002 = vmatmul.mubr.bf16.gmra.mrb[0].mxu0 %v1654
        %v3003 = vpop.f32.mrb[0].mxu0
        %v3004 = vadd.f32 %v2375, %v3003
        %v3005 = vpop.f32.mrb[0].mxu0
        %v3006 = vpop.f32.mrb[0].mxu0
        %v3007 = vadd.f32 %v2375, %v3006
        %v3008 = vpop.f32.mrb[0].mxu0
        %3009 = vmatprep.mubr.bf16.mxu0 %v1867
        %3010 = vmatmul.mubr.bf16.gmra.mrb[0].mxu0 %v1655
        %v3011 = vpop.f32.mrb[0].mxu0
        %v3012 = vadd.f32 %v2375, %v3011
        %v3013 = vpop.f32.mrb[0].mxu0
        %v3014 = vpop.f32.mrb[0].mxu0
        %v3015 = vadd.f32 %v2375, %v3014
        %v3016 = vpop.f32.mrb[0].mxu0
        %3017 = vmatprep.mubr.bf16.mxu0 %v1875
        %3018 = vmatmul.mubr.bf16.gmra.mrb[0].mxu0 %v1656
        %v3019 = vpop.f32.mrb[0].mxu0
        %v3020 = vadd.f32 %v2375, %v3019
        %v3021 = vpop.f32.mrb[0].mxu0
        %v3022 = vpop.f32.mrb[0].mxu0
        %v3023 = vadd.f32 %v2375, %v3022
        %v3024 = vpop.f32.mrb[0].mxu0
        %3025 = vmatprep.mubr.bf16.mxu0 %v1883
        %3026 = vmatmul.mubr.bf16.gmra.mrb[0].mxu0 %v1657
        %v3027 = vpop.f32.mrb[0].mxu0
        %v3028 = vadd.f32 %v2375, %v3027
        %v3029 = vpop.f32.mrb[0].mxu0
        %v3030 = vpop.f32.mrb[0].mxu0
        %v3031 = vadd.f32 %v2375, %v3030
        %v3032 = vpop.f32.mrb[0].mxu0
        %3033 = vmatprep.mubr.bf16.mxu0 %v1891
        %3034 = vmatmul.mubr.bf16.gmra.mrb[0].mxu0 %v1658
        %v3035 = vpop.f32.mrb[0].mxu0
        %v3036 = vadd.f32 %v2375, %v3035
        %v3037 = vpop.f32.mrb[0].mxu0
        %v3038 = vpop.f32.mrb[0].mxu0
        %v3039 = vadd.f32 %v2375, %v3038
        %v3040 = vpop.f32.mrb[0].mxu0
        %3041 = vmatprep.mubr.bf16.mxu0 %v1899
        %3042 = vmatmul.mubr.bf16.gmra.mrb[0].mxu0 %v1659
        %v3043 = vpop.f32.mrb[0].mxu0
        %v3044 = vadd.f32 %v2375, %v3043
        %v3045 = vpop.f32.mrb[0].mxu0
        %v3046 = vpop.f32.mrb[0].mxu0
        %v3047 = vadd.f32 %v2375, %v3046
        %v3048 = vpop.f32.mrb[0].mxu0
        %3049 = vmatprep.mubr.bf16.mxu0 %v1907
        %3050 = vmatmul.mubr.bf16.gmra.mrb[0].mxu0 %v1660
        %v3051 = vpop.f32.mrb[0].mxu0
        %v3052 = vadd.f32 %v2375, %v3051
        %v3053 = vpop.f32.mrb[0].mxu0
        %v3054 = vpop.f32.mrb[0].mxu0
        %v3055 = vadd.f32 %v2375, %v3054
        %v3056 = vpop.f32.mrb[0].mxu0
        %3057 = vmatprep.mubr.bf16.mxu0 %v1915
        %3058 = vmatmul.mubr.bf16.gmra.mrb[0].mxu0 %v1661
        %v3059 = vpop.f32.mrb[0].mxu0
        %v3060 = vadd.f32 %v2375, %v3059
        %v3061 = vpop.f32.mrb[0].mxu0
        %v3062 = vpop.f32.mrb[0].mxu0
        %v3063 = vadd.f32 %v2375, %v3062
        %v3064 = vpop.f32.mrb[0].mxu0
        %3065 = vmatprep.mubr.bf16.mxu0 %v1923
        %3066 = vmatmul.mubr.bf16.gmra.mrb[0].mxu0 %v1662
        %v3067 = vpop.f32.mrb[0].mxu0
        %v3068 = vadd.f32 %v2375, %v3067
        %v3069 = vpop.f32.mrb[0].mxu0
        %v3070 = vpop.f32.mrb[0].mxu0
        %v3071 = vadd.f32 %v2375, %v3070
        %v3072 = vpop.f32.mrb[0].mxu0
        %3073 = vmatprep.mubr.bf16.mxu0 %v1931
        %3074 = vmatmul.mubr.bf16.gmra.mrb[0].mxu0 %v1663
        %v3075 = vpop.f32.mrb[0].mxu0
        %v3076 = vadd.f32 %v2375, %v3075
        %v3077 = vpop.f32.mrb[0].mxu0
        %v3078 = vpop.f32.mrb[0].mxu0
        %v3079 = vadd.f32 %v2375, %v3078
        %v3080 = vpop.f32.mrb[0].mxu0
        %3081 = vmatprep.mubr.bf16.mxu0 %v1939
        %3082 = vmatmul.mubr.bf16.gmra.mrb[0].mxu0 %v1664
        %v3083 = vpop.f32.mrb[0].mxu0
        %v3084 = vadd.f32 %v2375, %v3083
        %v3085 = vpop.f32.mrb[0].mxu0
        %v3086 = vpop.f32.mrb[0].mxu0
        %v3087 = vadd.f32 %v2375, %v3086
        %v3088 = vpop.f32.mrb[0].mxu0
        %3089 = vmatprep.mubr.bf16.mxu0 %v1947
        %3090 = vmatmul.mubr.bf16.gmra.mrb[0].mxu0 %v1665
        %v3091 = vpop.f32.mrb[0].mxu0
        %v3092 = vadd.f32 %v2375, %v3091
        %v3093 = vpop.f32.mrb[0].mxu0
        %v3094 = vpop.f32.mrb[0].mxu0
        %v3095 = vadd.f32 %v2375, %v3094
        %v3096 = vpop.f32.mrb[0].mxu0
        %3097 = vmatprep.mubr.bf16.mxu0 %v1955
        %3098 = vmatmul.mubr.bf16.gmra.mrb[0].mxu0 %v1666
        %v3099 = vpop.f32.mrb[0].mxu0
        %v3100 = vadd.f32 %v2375, %v3099
        %v3101 = vpop.f32.mrb[0].mxu0
        %v3102 = vpop.f32.mrb[0].mxu0
        %v3103 = vadd.f32 %v2375, %v3102
        %v3104 = vpop.f32.mrb[0].mxu0
        %3105 = vmatprep.mubr.bf16.mxu0 %v1963
        %3106 = vmatmul.mubr.bf16.gmra.mrb[0].mxu0 %v1667
        %v3107 = vpop.f32.mrb[0].mxu0
        %v3108 = vadd.f32 %v2375, %v3107
        %v3109 = vpop.f32.mrb[0].mxu0
        %v3110 = vpop.f32.mrb[0].mxu0
        %v3111 = vadd.f32 %v2375, %v3110
        %v3112 = vpop.f32.mrb[0].mxu0
        %3113 = vmatprep.mubr.bf16.mxu0 %v1971
        %3114 = vmatmul.mubr.bf16.gmra.mrb[0].mxu0 %v1668
        %v3115 = vpop.f32.mrb[0].mxu0
        %v3116 = vadd.f32 %v2375, %v3115
        %v3117 = vpop.f32.mrb[0].mxu0
        %v3118 = vpop.f32.mrb[0].mxu0
        %v3119 = vadd.f32 %v2375, %v3118
        %v3120 = vpop.f32.mrb[0].mxu0
        %3121 = vmatprep.mubr.bf16.mxu0 %v1979
        %3122 = vmatmul.mubr.bf16.gmra.mrb[0].mxu0 %v1669
        %v3123 = vpop.f32.mrb[0].mxu0
        %v3124 = vadd.f32 %v2375, %v3123
        %v3125 = vpop.f32.mrb[0].mxu0
        %v3126 = vpop.f32.mrb[0].mxu0
        %v3127 = vadd.f32 %v2375, %v3126
        %v3128 = vpop.f32.mrb[0].mxu0
        %3129 = vmatprep.mubr.bf16.mxu0 %v1987
        %3130 = vmatmul.mubr.bf16.gmra.mrb[0].mxu0 %v1670
        %v3131 = vpop.f32.mrb[0].mxu0
        %v3132 = vadd.f32 %v2375, %v3131
        %v3133 = vpop.f32.mrb[0].mxu0
        %v3134 = vpop.f32.mrb[0].mxu0
        %v3135 = vadd.f32 %v2375, %v3134
        %v3136 = vpop.f32.mrb[0].mxu0
        %3137 = vmatprep.mubr.bf16.mxu0 %v1995
        %3138 = vmatmul.mubr.bf16.gmra.mrb[0].mxu0 %v1671
        %v3139 = vpop.f32.mrb[0].mxu0
        %v3140 = vadd.f32 %v2375, %v3139
        %v3141 = vpop.f32.mrb[0].mxu0
        %v3142 = vpop.f32.mrb[0].mxu0
        %v3143 = vadd.f32 %v2375, %v3142
        %v3144 = vpop.f32.mrb[0].mxu0
        %3145 = vmatprep.mubr.bf16.mxu0 %v2003
        %3146 = vmatmul.mubr.bf16.gmra.mrb[0].mxu0 %v1672
        %v3147 = vpop.f32.mrb[0].mxu0
        %v3148 = vadd.f32 %v2375, %v3147
        %v3149 = vpop.f32.mrb[0].mxu0
        %v3150 = vpop.f32.mrb[0].mxu0
        %v3151 = vadd.f32 %v2375, %v3150
        %v3152 = vpop.f32.mrb[0].mxu0
        %3153 = vmatprep.mubr.bf16.mxu0 %v2011
        %3154 = vmatmul.mubr.bf16.gmra.mrb[0].mxu0 %v1673
        %v3155 = vpop.f32.mrb[0].mxu0
        %v3156 = vadd.f32 %v2375, %v3155
        %v3157 = vpop.f32.mrb[0].mxu0
        %v3158 = vpop.f32.mrb[0].mxu0
        %v3159 = vadd.f32 %v2375, %v3158
        %v3160 = vpop.f32.mrb[0].mxu0
        %3161 = vmatprep.mubr.bf16.mxu0 %v2019
        %3162 = vmatmul.mubr.bf16.gmra.mrb[0].mxu0 %v1674
        %v3163 = vpop.f32.mrb[0].mxu0
        %v3164 = vadd.f32 %v2375, %v3163
        %v3165 = vpop.f32.mrb[0].mxu0
        %v3166 = vpop.f32.mrb[0].mxu0
        %v3167 = vadd.f32 %v2375, %v3166
        %v3168 = vpop.f32.mrb[0].mxu0
        %3169 = vmatprep.mubr.bf16.mxu0 %v2027
        %3170 = vmatmul.mubr.bf16.gmra.mrb[0].mxu0 %v1675
        %v3171 = vpop.f32.mrb[0].mxu0
        %v3172 = vadd.f32 %v2375, %v3171
        %v3173 = vpop.f32.mrb[0].mxu0
        %v3174 = vpop.f32.mrb[0].mxu0
        %v3175 = vadd.f32 %v2375, %v3174
        %v3176 = vpop.f32.mrb[0].mxu0
        %3177 = vmatprep.mubr.bf16.mxu0 %v2035
        %3178 = vmatmul.mubr.bf16.gmra.mrb[0].mxu0 %v1676
        %v3179 = vpop.f32.mrb[0].mxu0
        %v3180 = vadd.f32 %v2375, %v3179
        %v3181 = vpop.f32.mrb[0].mxu0
        %v3182 = vpop.f32.mrb[0].mxu0
        %v3183 = vadd.f32 %v2375, %v3182
        %v3184 = vpop.f32.mrb[0].mxu0
        %3185 = vmatprep.mubr.bf16.mxu0 %v2043
        %3186 = vmatmul.mubr.bf16.gmra.mrb[0].mxu0 %v1677
        %v3187 = vpop.f32.mrb[0].mxu0
        %v3188 = vadd.f32 %v2375, %v3187
        %v3189 = vpop.f32.mrb[0].mxu0
        %v3190 = vpop.f32.mrb[0].mxu0
        %v3191 = vadd.f32 %v2375, %v3190
        %v3192 = vpop.f32.mrb[0].mxu0
        %3193 = vmatprep.mubr.bf16.mxu0 %v2051
        %3194 = vmatmul.mubr.bf16.gmra.mrb[0].mxu0 %v1678
        %v3195 = vpop.f32.mrb[0].mxu0
        %v3196 = vadd.f32 %v2375, %v3195
        %v3197 = vpop.f32.mrb[0].mxu0
        %v3198 = vpop.f32.mrb[0].mxu0
        %v3199 = vadd.f32 %v2375, %v3198
        %v3200 = vpop.f32.mrb[0].mxu0
        %3201 = vmatprep.mubr.bf16.mxu0 %v2059
        %3202 = vmatmul.mubr.bf16.gmra.mrb[0].mxu0 %v1679
        %v3203 = vpop.f32.mrb[0].mxu0
        %v3204 = vadd.f32 %v2375, %v3203
        %v3205 = vpop.f32.mrb[0].mxu0
        %v3206 = vpop.f32.mrb[0].mxu0
        %v3207 = vadd.f32 %v2375, %v3206
        %v3208 = vpop.f32.mrb[0].mxu0
        %3209 = vmatprep.mubr.bf16.mxu0 %v2067
        %3210 = vmatmul.mubr.bf16.gmra.mrb[0].mxu0 %v1680
        %v3211 = vpop.f32.mrb[0].mxu0
        %v3212 = vadd.f32 %v2375, %v3211
        %v3213 = vpop.f32.mrb[0].mxu0
        %v3214 = vpop.f32.mrb[0].mxu0
        %v3215 = vadd.f32 %v2375, %v3214
        %v3216 = vpop.f32.mrb[0].mxu0
        %3217 = vmatprep.mubr.bf16.mxu0 %v2075
        %3218 = vmatmul.mubr.bf16.gmra.mrb[0].mxu0 %v1681
        %v3219 = vpop.f32.mrb[0].mxu0
        %v3220 = vadd.f32 %v2375, %v3219
        %v3221 = vpop.f32.mrb[0].mxu0
        %v3222 = vpop.f32.mrb[0].mxu0
        %v3223 = vadd.f32 %v2375, %v3222
        %v3224 = vpop.f32.mrb[0].mxu0
        %3225 = vdwg.mxu0
        %3226 = vmatprep.subr.bf16.mxu0 0
        %3227 = vmatpush1.bf16.msra.mxu0 %v2681
        %3228 = vmatprep.subr.bf16.mxu0 0
        %3229 = vmatpush1.bf16.msra.mxu0 %v2682
        %3230 = vmatprep.subr.bf16.mxu0 0
        %3231 = vmatpush1.bf16.msra.mxu0 %v2683
        %3232 = vmatprep.subr.bf16.mxu0 0
        %3233 = vmatpush1.bf16.msra.mxu0 %v2684
        %3234 = vmatprep.subr.bf16.mxu0 0
        %3235 = vmatpush1.bf16.msra.mxu0 %v2685
        %3236 = vmatprep.subr.bf16.mxu0 0
        %3237 = vmatpush1.bf16.msra.mxu0 %v2686
        %3238 = vmatprep.subr.bf16.mxu0 0
        %3239 = vmatpush1.bf16.msra.mxu0 %v2687
        %3240 = vmatprep.subr.bf16.mxu0 0
        %3241 = vmatpush1.bf16.msra.mxu0 %v2688
        %3242 = vmatprep.subr.bf16.mxu0 0
        %3243 = vmatpush1.bf16.msra.mxu0 %v2689
        %3244 = vmatprep.subr.bf16.mxu0 0
        %3245 = vmatpush1.bf16.msra.mxu0 %v2690
        %3246 = vmatprep.subr.bf16.mxu0 0
        %3247 = vmatpush1.bf16.msra.mxu0 %v2691
        %3248 = vmatprep.subr.bf16.mxu0 0
        %3249 = vmatpush1.bf16.msra.mxu0 %v2692
        %3250 = vmatprep.subr.bf16.mxu0 0
        %3251 = vmatpush1.bf16.msra.mxu0 %v2693
        %3252 = vmatprep.subr.bf16.mxu0 0
        %3253 = vmatpush1.bf16.msra.mxu0 %v2694
        %3254 = vmatprep.subr.bf16.mxu0 0
        %3255 = vmatpush1.bf16.msra.mxu0 %v2695
        %3256 = vmatprep.subr.bf16.mxu0 0
        %3257 = vmatpush1.bf16.msra.mxu0 %v2696
        %3258 = vmatprep.mubr.bf16.mxu0 %v1636
        %3259 = vmatmul.mubr.bf16.gmra.mrb[0].mxu0 %v2176
        %v3260 = vpop.f32.mrb[0].mxu0
        %v3261 = vadd.f32 %v2844, %v3260
        %v3262 = vpop.f32.mrb[0].mxu0
        %v3263 = vpop.f32.mrb[0].mxu0
        %v3264 = vadd.f32 %v2847, %v3263
        %v3265 = vpop.f32.mrb[0].mxu0
        %3266 = vmatprep.mubr.bf16.mxu0 %v1637
        %3267 = vmatmul.mubr.bf16.gmra.mrb[0].mxu0 %v2178
        %v3268 = vpop.f32.mrb[0].mxu0
        %v3269 = vadd.f32 %v2852, %v3268
        %v3270 = vpop.f32.mrb[0].mxu0
        %v3271 = vpop.f32.mrb[0].mxu0
        %v3272 = vadd.f32 %v2855, %v3271
        %v3273 = vpop.f32.mrb[0].mxu0
        %3274 = vmatprep.mubr.bf16.mxu0 %v1638
        %3275 = vmatmul.mubr.bf16.gmra.mrb[0].mxu0 %v2180
        %v3276 = vpop.f32.mrb[0].mxu0
        %v3277 = vadd.f32 %v2860, %v3276
        %v3278 = vpop.f32.mrb[0].mxu0
        %v3279 = vpop.f32.mrb[0].mxu0
        %v3280 = vadd.f32 %v2863, %v3279
        %v3281 = vpop.f32.mrb[0].mxu0
        %3282 = vmatprep.mubr.bf16.mxu0 %v1639
        %3283 = vmatmul.mubr.bf16.gmra.mrb[0].mxu0 %v2182
        %v3284 = vpop.f32.mrb[0].mxu0
        %v3285 = vadd.f32 %v2868, %v3284
        %v3286 = vpop.f32.mrb[0].mxu0
        %v3287 = vpop.f32.mrb[0].mxu0
        %v3288 = vadd.f32 %v2871, %v3287
        %v3289 = vpop.f32.mrb[0].mxu0
        %3290 = vmatprep.mubr.bf16.mxu0 %v1640
        %3291 = vmatmul.mubr.bf16.gmra.mrb[0].mxu0 %v2184
        %v3292 = vpop.f32.mrb[0].mxu0
        %v3293 = vadd.f32 %v2876, %v3292
        %v3294 = vpop.f32.mrb[0].mxu0
        %v3295 = vpop.f32.mrb[0].mxu0
        %v3296 = vadd.f32 %v2879, %v3295
        %v3297 = vpop.f32.mrb[0].mxu0
        %3298 = vmatprep.mubr.bf16.mxu0 %v1641
        %3299 = vmatmul.mubr.bf16.gmra.mrb[0].mxu0 %v2186
        %v3300 = vpop.f32.mrb[0].mxu0
        %v3301 = vadd.f32 %v2884, %v3300
        %v3302 = vpop.f32.mrb[0].mxu0
        %v3303 = vpop.f32.mrb[0].mxu0
        %v3304 = vadd.f32 %v2887, %v3303
        %v3305 = vpop.f32.mrb[0].mxu0
        %3306 = vmatprep.mubr.bf16.mxu0 %v1642
        %3307 = vmatmul.mubr.bf16.gmra.mrb[0].mxu0 %v2188
        %v3308 = vpop.f32.mrb[0].mxu0
        %v3309 = vadd.f32 %v2892, %v3308
        %v3310 = vpop.f32.mrb[0].mxu0
        %v3311 = vpop.f32.mrb[0].mxu0
        %v3312 = vadd.f32 %v2895, %v3311
        %v3313 = vpop.f32.mrb[0].mxu0
        %3314 = vmatprep.mubr.bf16.mxu0 %v1643
        %3315 = vmatmul.mubr.bf16.gmra.mrb[0].mxu0 %v2190
        %v3316 = vpop.f32.mrb[0].mxu0
        %v3317 = vadd.f32 %v2900, %v3316
        %v3318 = vpop.f32.mrb[0].mxu0
        %v3319 = vpop.f32.mrb[0].mxu0
        %v3320 = vadd.f32 %v2903, %v3319
        %v3321 = vpop.f32.mrb[0].mxu0
        %3322 = vmatprep.mubr.bf16.mxu0 %v1644
        %3323 = vmatmul.mubr.bf16.gmra.mrb[0].mxu0 %v2192
        %v3324 = vpop.f32.mrb[0].mxu0
        %v3325 = vadd.f32 %v2908, %v3324
        %v3326 = vpop.f32.mrb[0].mxu0
        %v3327 = vpop.f32.mrb[0].mxu0
        %v3328 = vadd.f32 %v2911, %v3327
        %v3329 = vpop.f32.mrb[0].mxu0
        %3330 = vmatprep.mubr.bf16.mxu0 %v1645
        %3331 = vmatmul.mubr.bf16.gmra.mrb[0].mxu0 %v2194
        %v3332 = vpop.f32.mrb[0].mxu0
        %v3333 = vadd.f32 %v2916, %v3332
        %v3334 = vpop.f32.mrb[0].mxu0
        %v3335 = vpop.f32.mrb[0].mxu0
        %v3336 = vadd.f32 %v2919, %v3335
        %v3337 = vpop.f32.mrb[0].mxu0
        %3338 = vmatprep.mubr.bf16.mxu0 %v1646
        %3339 = vmatmul.mubr.bf16.gmra.mrb[0].mxu0 %v2196
        %v3340 = vpop.f32.mrb[0].mxu0
        %v3341 = vadd.f32 %v2924, %v3340
        %v3342 = vpop.f32.mrb[0].mxu0
        %v3343 = vpop.f32.mrb[0].mxu0
        %v3344 = vadd.f32 %v2927, %v3343
        %v3345 = vpop.f32.mrb[0].mxu0
        %3346 = vmatprep.mubr.bf16.mxu0 %v1647
        %3347 = vmatmul.mubr.bf16.gmra.mrb[0].mxu0 %v2198
        %v3348 = vpop.f32.mrb[0].mxu0
        %v3349 = vadd.f32 %v2932, %v3348
        %v3350 = vpop.f32.mrb[0].mxu0
        %v3351 = vpop.f32.mrb[0].mxu0
        %v3352 = vadd.f32 %v2935, %v3351
        %v3353 = vpop.f32.mrb[0].mxu0
        %3354 = vmatprep.mubr.bf16.mxu0 %v1648
        %3355 = vmatmul.mubr.bf16.gmra.mrb[0].mxu0 %v2200
        %v3356 = vpop.f32.mrb[0].mxu0
        %v3357 = vadd.f32 %v2940, %v3356
        %v3358 = vpop.f32.mrb[0].mxu0
        %v3359 = vpop.f32.mrb[0].mxu0
        %v3360 = vadd.f32 %v2943, %v3359
        %v3361 = vpop.f32.mrb[0].mxu0
        %3362 = vmatprep.mubr.bf16.mxu0 %v1649
        %3363 = vmatmul.mubr.bf16.gmra.mrb[0].mxu0 %v2202
        %v3364 = vpop.f32.mrb[0].mxu0
        %v3365 = vadd.f32 %v2948, %v3364
        %v3366 = vpop.f32.mrb[0].mxu0
        %v3367 = vpop.f32.mrb[0].mxu0
        %v3368 = vadd.f32 %v2951, %v3367
        %v3369 = vpop.f32.mrb[0].mxu0
        %3370 = vmatprep.mubr.bf16.mxu0 %v1650
        %3371 = vmatmul.mubr.bf16.gmra.mrb[0].mxu0 %v2204
        %v3372 = vpop.f32.mrb[0].mxu0
        %v3373 = vadd.f32 %v2956, %v3372
        %v3374 = vpop.f32.mrb[0].mxu0
        %v3375 = vpop.f32.mrb[0].mxu0
        %v3376 = vadd.f32 %v2959, %v3375
        %v3377 = vpop.f32.mrb[0].mxu0
        %3378 = vmatprep.mubr.bf16.mxu0 %v1651
        %3379 = vmatmul.mubr.bf16.gmra.mrb[0].mxu0 %v2206
        %v3380 = vpop.f32.mrb[0].mxu0
        %v3381 = vadd.f32 %v2964, %v3380
        %v3382 = vpop.f32.mrb[0].mxu0
        %v3383 = vpop.f32.mrb[0].mxu0
        %v3384 = vadd.f32 %v2967, %v3383
        %v3385 = vpop.f32.mrb[0].mxu0
        %3386 = vmatprep.mubr.bf16.mxu0 %v1652
        %3387 = vmatmul.mubr.bf16.gmra.mrb[0].mxu0 %v2208
        %v3388 = vpop.f32.mrb[0].mxu0
        %v3389 = vadd.f32 %v2972, %v3388
        %v3390 = vpop.f32.mrb[0].mxu0
        %v3391 = vpop.f32.mrb[0].mxu0
        %v3392 = vadd.f32 %v2975, %v3391
        %v3393 = vpop.f32.mrb[0].mxu0
        %3394 = vmatprep.mubr.bf16.mxu0 %v1653
        %3395 = vmatmul.mubr.bf16.gmra.mrb[0].mxu0 %v2210
        %v3396 = vpop.f32.mrb[0].mxu0
        %v3397 = vadd.f32 %v2980, %v3396
        %v3398 = vpop.f32.mrb[0].mxu0
        %v3399 = vpop.f32.mrb[0].mxu0
        %v3400 = vadd.f32 %v2983, %v3399
        %v3401 = vpop.f32.mrb[0].mxu0
        %3402 = vmatprep.mubr.bf16.mxu0 %v1654
        %3403 = vmatmul.mubr.bf16.gmra.mrb[0].mxu0 %v2212
        %v3404 = vpop.f32.mrb[0].mxu0
        %v3405 = vadd.f32 %v2988, %v3404
        %v3406 = vpop.f32.mrb[0].mxu0
        %v3407 = vpop.f32.mrb[0].mxu0
        %v3408 = vadd.f32 %v2991, %v3407
        %v3409 = vpop.f32.mrb[0].mxu0
        %3410 = vmatprep.mubr.bf16.mxu0 %v1655
        %3411 = vmatmul.mubr.bf16.gmra.mrb[0].mxu0 %v2214
        %v3412 = vpop.f32.mrb[0].mxu0
        %v3413 = vadd.f32 %v2996, %v3412
        %v3414 = vpop.f32.mrb[0].mxu0
        %v3415 = vpop.f32.mrb[0].mxu0
        %v3416 = vadd.f32 %v2999, %v3415
        %v3417 = vpop.f32.mrb[0].mxu0
        %3418 = vmatprep.mubr.bf16.mxu0 %v1656
        %3419 = vmatmul.mubr.bf16.gmra.mrb[0].mxu0 %v2216
        %v3420 = vpop.f32.mrb[0].mxu0
        %v3421 = vadd.f32 %v3004, %v3420
        %v3422 = vpop.f32.mrb[0].mxu0
        %v3423 = vpop.f32.mrb[0].mxu0
        %v3424 = vadd.f32 %v3007, %v3423
        %v3425 = vpop.f32.mrb[0].mxu0
        %3426 = vmatprep.mubr.bf16.mxu0 %v1657
        %3427 = vmatmul.mubr.bf16.gmra.mrb[0].mxu0 %v2218
        %v3428 = vpop.f32.mrb[0].mxu0
        %v3429 = vadd.f32 %v3012, %v3428
        %v3430 = vpop.f32.mrb[0].mxu0
        %v3431 = vpop.f32.mrb[0].mxu0
        %v3432 = vadd.f32 %v3015, %v3431
        %v3433 = vpop.f32.mrb[0].mxu0
        %3434 = vmatprep.mubr.bf16.mxu0 %v1658
        %3435 = vmatmul.mubr.bf16.gmra.mrb[0].mxu0 %v2220
        %v3436 = vpop.f32.mrb[0].mxu0
        %v3437 = vadd.f32 %v3020, %v3436
        %v3438 = vpop.f32.mrb[0].mxu0
        %v3439 = vpop.f32.mrb[0].mxu0
        %v3440 = vadd.f32 %v3023, %v3439
        %v3441 = vpop.f32.mrb[0].mxu0
        %3442 = vmatprep.mubr.bf16.mxu0 %v1659
        %3443 = vmatmul.mubr.bf16.gmra.mrb[0].mxu0 %v2222
        %v3444 = vpop.f32.mrb[0].mxu0
        %v3445 = vadd.f32 %v3028, %v3444
        %v3446 = vpop.f32.mrb[0].mxu0
        %v3447 = vpop.f32.mrb[0].mxu0
        %v3448 = vadd.f32 %v3031, %v3447
        %v3449 = vpop.f32.mrb[0].mxu0
        %3450 = vmatprep.mubr.bf16.mxu0 %v1660
        %3451 = vmatmul.mubr.bf16.gmra.mrb[0].mxu0 %v2224
        %v3452 = vpop.f32.mrb[0].mxu0
        %v3453 = vadd.f32 %v3036, %v3452
        %v3454 = vpop.f32.mrb[0].mxu0
        %v3455 = vpop.f32.mrb[0].mxu0
        %v3456 = vadd.f32 %v3039, %v3455
        %v3457 = vpop.f32.mrb[0].mxu0
        %3458 = vmatprep.mubr.bf16.mxu0 %v1661
        %3459 = vmatmul.mubr.bf16.gmra.mrb[0].mxu0 %v2226
        %v3460 = vpop.f32.mrb[0].mxu0
        %v3461 = vadd.f32 %v3044, %v3460
        %v3462 = vpop.f32.mrb[0].mxu0
        %v3463 = vpop.f32.mrb[0].mxu0
        %v3464 = vadd.f32 %v3047, %v3463
        %v3465 = vpop.f32.mrb[0].mxu0
        %3466 = vmatprep.mubr.bf16.mxu0 %v1662
        %3467 = vmatmul.mubr.bf16.gmra.mrb[0].mxu0 %v2228
        %v3468 = vpop.f32.mrb[0].mxu0
        %v3469 = vadd.f32 %v3052, %v3468
        %v3470 = vpop.f32.mrb[0].mxu0
        %v3471 = vpop.f32.mrb[0].mxu0
        %v3472 = vadd.f32 %v3055, %v3471
        %v3473 = vpop.f32.mrb[0].mxu0
        %3474 = vmatprep.mubr.bf16.mxu0 %v1663
        %3475 = vmatmul.mubr.bf16.gmra.mrb[0].mxu0 %v2230
        %v3476 = vpop.f32.mrb[0].mxu0
        %v3477 = vadd.f32 %v3060, %v3476
        %v3478 = vpop.f32.mrb[0].mxu0
        %v3479 = vpop.f32.mrb[0].mxu0
        %v3480 = vadd.f32 %v3063, %v3479
        %v3481 = vpop.f32.mrb[0].mxu0
        %3482 = vmatprep.mubr.bf16.mxu0 %v1664
        %3483 = vmatmul.mubr.bf16.gmra.mrb[0].mxu0 %v2232
        %v3484 = vpop.f32.mrb[0].mxu0
        %v3485 = vadd.f32 %v3068, %v3484
        %v3486 = vpop.f32.mrb[0].mxu0
        %v3487 = vpop.f32.mrb[0].mxu0
        %v3488 = vadd.f32 %v3071, %v3487
        %v3489 = vpop.f32.mrb[0].mxu0
        %3490 = vmatprep.mubr.bf16.mxu0 %v1665
        %3491 = vmatmul.mubr.bf16.gmra.mrb[0].mxu0 %v2234
        %v3492 = vpop.f32.mrb[0].mxu0
        %v3493 = vadd.f32 %v3076, %v3492
        %v3494 = vpop.f32.mrb[0].mxu0
        %v3495 = vpop.f32.mrb[0].mxu0
        %v3496 = vadd.f32 %v3079, %v3495
        %v3497 = vpop.f32.mrb[0].mxu0
        %3498 = vmatprep.mubr.bf16.mxu0 %v1666
        %3499 = vmatmul.mubr.bf16.gmra.mrb[0].mxu0 %v2236
        %v3500 = vpop.f32.mrb[0].mxu0
        %v3501 = vadd.f32 %v3084, %v3500
        %v3502 = vpop.f32.mrb[0].mxu0
        %v3503 = vpop.f32.mrb[0].mxu0
        %v3504 = vadd.f32 %v3087, %v3503
        %v3505 = vpop.f32.mrb[0].mxu0
        %3506 = vmatprep.mubr.bf16.mxu0 %v1667
        %3507 = vmatmul.mubr.bf16.gmra.mrb[0].mxu0 %v2238
        %v3508 = vpop.f32.mrb[0].mxu0
        %v3509 = vadd.f32 %v3092, %v3508
        %v3510 = vpop.f32.mrb[0].mxu0
        %v3511 = vpop.f32.mrb[0].mxu0
        %v3512 = vadd.f32 %v3095, %v3511
        %v3513 = vpop.f32.mrb[0].mxu0
        %3514 = vmatprep.mubr.bf16.mxu0 %v1668
        %3515 = vmatmul.mubr.bf16.gmra.mrb[0].mxu0 %v2240
        %v3516 = vpop.f32.mrb[0].mxu0
        %v3517 = vadd.f32 %v3100, %v3516
        %v3518 = vpop.f32.mrb[0].mxu0
        %v3519 = vpop.f32.mrb[0].mxu0
        %v3520 = vadd.f32 %v3103, %v3519
        %v3521 = vpop.f32.mrb[0].mxu0
        %3522 = vmatprep.mubr.bf16.mxu0 %v1669
        %3523 = vmatmul.mubr.bf16.gmra.mrb[0].mxu0 %v2242
        %v3524 = vpop.f32.mrb[0].mxu0
        %v3525 = vadd.f32 %v3108, %v3524
        %v3526 = vpop.f32.mrb[0].mxu0
        %v3527 = vpop.f32.mrb[0].mxu0
        %v3528 = vadd.f32 %v3111, %v3527
        %v3529 = vpop.f32.mrb[0].mxu0
        %3530 = vmatprep.mubr.bf16.mxu0 %v1670
        %3531 = vmatmul.mubr.bf16.gmra.mrb[0].mxu0 %v2244
        %v3532 = vpop.f32.mrb[0].mxu0
        %v3533 = vadd.f32 %v3116, %v3532
        %v3534 = vpop.f32.mrb[0].mxu0
        %v3535 = vpop.f32.mrb[0].mxu0
        %v3536 = vadd.f32 %v3119, %v3535
        %v3537 = vpop.f32.mrb[0].mxu0
        %3538 = vmatprep.mubr.bf16.mxu0 %v1671
        %3539 = vmatmul.mubr.bf16.gmra.mrb[0].mxu0 %v2246
        %v3540 = vpop.f32.mrb[0].mxu0
        %v3541 = vadd.f32 %v3124, %v3540
        %v3542 = vpop.f32.mrb[0].mxu0
        %v3543 = vpop.f32.mrb[0].mxu0
        %v3544 = vadd.f32 %v3127, %v3543
        %v3545 = vpop.f32.mrb[0].mxu0
        %3546 = vmatprep.mubr.bf16.mxu0 %v1672
        %3547 = vmatmul.mubr.bf16.gmra.mrb[0].mxu0 %v2248
        %v3548 = vpop.f32.mrb[0].mxu0
        %v3549 = vadd.f32 %v3132, %v3548
        %v3550 = vpop.f32.mrb[0].mxu0
        %v3551 = vpop.f32.mrb[0].mxu0
        %v3552 = vadd.f32 %v3135, %v3551
        %v3553 = vpop.f32.mrb[0].mxu0
        %3554 = vmatprep.mubr.bf16.mxu0 %v1673
        %3555 = vmatmul.mubr.bf16.gmra.mrb[0].mxu0 %v2250
        %v3556 = vpop.f32.mrb[0].mxu0
        %v3557 = vadd.f32 %v3140, %v3556
        %v3558 = vpop.f32.mrb[0].mxu0
        %v3559 = vpop.f32.mrb[0].mxu0
        %v3560 = vadd.f32 %v3143, %v3559
        %v3561 = vpop.f32.mrb[0].mxu0
        %3562 = vmatprep.mubr.bf16.mxu0 %v1674
        %3563 = vmatmul.mubr.bf16.gmra.mrb[0].mxu0 %v2252
        %v3564 = vpop.f32.mrb[0].mxu0
        %v3565 = vadd.f32 %v3148, %v3564
        %v3566 = vpop.f32.mrb[0].mxu0
        %v3567 = vpop.f32.mrb[0].mxu0
        %v3568 = vadd.f32 %v3151, %v3567
        %v3569 = vpop.f32.mrb[0].mxu0
        %3570 = vmatprep.mubr.bf16.mxu0 %v1675
        %3571 = vmatmul.mubr.bf16.gmra.mrb[0].mxu0 %v2254
        %v3572 = vpop.f32.mrb[0].mxu0
        %v3573 = vadd.f32 %v3156, %v3572
        %v3574 = vpop.f32.mrb[0].mxu0
        %v3575 = vpop.f32.mrb[0].mxu0
        %v3576 = vadd.f32 %v3159, %v3575
        %v3577 = vpop.f32.mrb[0].mxu0
        %3578 = vmatprep.mubr.bf16.mxu0 %v1676
        %3579 = vmatmul.mubr.bf16.gmra.mrb[0].mxu0 %v2256
        %v3580 = vpop.f32.mrb[0].mxu0
        %v3581 = vadd.f32 %v3164, %v3580
        %v3582 = vpop.f32.mrb[0].mxu0
        %v3583 = vpop.f32.mrb[0].mxu0
        %v3584 = vadd.f32 %v3167, %v3583
        %v3585 = vpop.f32.mrb[0].mxu0
        %3586 = vmatprep.mubr.bf16.mxu0 %v1677
        %3587 = vmatmul.mubr.bf16.gmra.mrb[0].mxu0 %v2258
        %v3588 = vpop.f32.mrb[0].mxu0
        %v3589 = vadd.f32 %v3172, %v3588
        %v3590 = vpop.f32.mrb[0].mxu0
        %v3591 = vpop.f32.mrb[0].mxu0
        %v3592 = vadd.f32 %v3175, %v3591
        %v3593 = vpop.f32.mrb[0].mxu0
        %3594 = vmatprep.mubr.bf16.mxu0 %v1678
        %3595 = vmatmul.mubr.bf16.gmra.mrb[0].mxu0 %v2260
        %v3596 = vpop.f32.mrb[0].mxu0
        %v3597 = vadd.f32 %v3180, %v3596
        %v3598 = vpop.f32.mrb[0].mxu0
        %v3599 = vpop.f32.mrb[0].mxu0
        %v3600 = vadd.f32 %v3183, %v3599
        %v3601 = vpop.f32.mrb[0].mxu0
        %3602 = vmatprep.mubr.bf16.mxu0 %v1679
        %3603 = vmatmul.mubr.bf16.gmra.mrb[0].mxu0 %v2262
        %v3604 = vpop.f32.mrb[0].mxu0
        %v3605 = vadd.f32 %v3188, %v3604
        %v3606 = vpop.f32.mrb[0].mxu0
        %v3607 = vpop.f32.mrb[0].mxu0
        %v3608 = vadd.f32 %v3191, %v3607
        %v3609 = vpop.f32.mrb[0].mxu0
        %3610 = vmatprep.mubr.bf16.mxu0 %v1680
        %3611 = vmatmul.mubr.bf16.gmra.mrb[0].mxu0 %v2264
        %v3612 = vpop.f32.mrb[0].mxu0
        %v3613 = vadd.f32 %v3196, %v3612
        %v3614 = vpop.f32.mrb[0].mxu0
        %v3615 = vpop.f32.mrb[0].mxu0
        %v3616 = vadd.f32 %v3199, %v3615
        %v3617 = vpop.f32.mrb[0].mxu0
        %3618 = vmatprep.mubr.bf16.mxu0 %v1681
        %3619 = vmatmul.mubr.bf16.gmra.mrb[0].mxu0 %v2266
        %v3620 = vpop.f32.mrb[0].mxu0
        %v3621 = vadd.f32 %v3204, %v3620
        %v3622 = vpop.f32.mrb[0].mxu0
        %v3623 = vpop.f32.mrb[0].mxu0
        %v3624 = vadd.f32 %v3207, %v3623
        %v3625 = vpop.f32.mrb[0].mxu0
        %3626 = vmatprep.mubr.bf16.mxu0 %v1682
        %3627 = vmatmul.mubr.bf16.gmra.mrb[0].mxu0 %v2268
        %v3628 = vpop.f32.mrb[0].mxu0
        %v3629 = vadd.f32 %v3212, %v3628
        %v3630 = vpop.f32.mrb[0].mxu0
        %v3631 = vpop.f32.mrb[0].mxu0
        %v3632 = vadd.f32 %v3215, %v3631
        %v3633 = vpop.f32.mrb[0].mxu0
        %3634 = vmatprep.mubr.bf16.mxu0 %v1683
        %3635 = vmatmul.mubr.bf16.gmra.mrb[0].mxu0 %v2270
        %v3636 = vpop.f32.mrb[0].mxu0
        %v3637 = vadd.f32 %v3220, %v3636
        %v3638 = vpop.f32.mrb[0].mxu0
        %v3639 = vpop.f32.mrb[0].mxu0
        %v3640 = vadd.f32 %v3223, %v3639
        %v3641 = vpop.f32.mrb[0].mxu0
        %3642 = vdwg.mxu0
        %3643 = vmatprep.subr.bf16.mxu0 0
        %3644 = vmatpush1.bf16.msra.mxu0 %v2697
        %3645 = vmatprep.subr.bf16.mxu0 0
        %3646 = vmatpush1.bf16.msra.mxu0 %v2698
        %3647 = vmatprep.subr.bf16.mxu0 0
        %3648 = vmatpush1.bf16.msra.mxu0 %v2699
        %3649 = vmatprep.subr.bf16.mxu0 0
        %3650 = vmatpush1.bf16.msra.mxu0 %v2700
        %3651 = vmatprep.subr.bf16.mxu0 0
        %3652 = vmatpush1.bf16.msra.mxu0 %v2701
        %3653 = vmatprep.subr.bf16.mxu0 0
        %3654 = vmatpush1.bf16.msra.mxu0 %v2702
        %3655 = vmatprep.subr.bf16.mxu0 0
        %3656 = vmatpush1.bf16.msra.mxu0 %v2703
        %3657 = vmatprep.subr.bf16.mxu0 0
        %3658 = vmatpush1.bf16.msra.mxu0 %v2704
        %3659 = vmatprep.subr.bf16.mxu0 0
        %3660 = vmatpush1.bf16.msra.mxu0 %v2705
        %3661 = vmatprep.subr.bf16.mxu0 0
        %3662 = vmatpush1.bf16.msra.mxu0 %v2706
        %3663 = vmatprep.subr.bf16.mxu0 0
        %3664 = vmatpush1.bf16.msra.mxu0 %v2707
        %3665 = vmatprep.subr.bf16.mxu0 0
        %3666 = vmatpush1.bf16.msra.mxu0 %v2708
        %3667 = vmatprep.subr.bf16.mxu0 0
        %3668 = vmatpush1.bf16.msra.mxu0 %v2709
        %3669 = vmatprep.subr.bf16.mxu0 0
        %3670 = vmatpush1.bf16.msra.mxu0 %v2710
        %3671 = vmatprep.subr.bf16.mxu0 0
        %3672 = vmatpush1.bf16.msra.mxu0 %v2711
        %3673 = vmatprep.subr.bf16.mxu0 0
        %3674 = vmatpush1.bf16.msra.mxu0 %v2712
        %3675 = vmatprep.mubr.bf16.mxu0 %v2180
        %3676 = vmatmul.mubr.bf16.gmra.mrb[0].mxu0 %v1715
        %v3677 = vpop.f32.mrb[0].mxu0
        %v3678 = vadd.f32 %v3261, %v3677
        %v3679 = vpop.f32.mrb[0].mxu0
        %v3680 = vpop.f32.mrb[0].mxu0
        %v3681 = vadd.f32 %v3264, %v3680
        %v3682 = vpop.f32.mrb[0].mxu0
        %3683 = vmatprep.mubr.bf16.mxu0 %v2182
        %3684 = vmatmul.mubr.bf16.gmra.mrb[0].mxu0 %v1723
        %v3685 = vpop.f32.mrb[0].mxu0
        %v3686 = vadd.f32 %v3269, %v3685
        %v3687 = vpop.f32.mrb[0].mxu0
        %v3688 = vpop.f32.mrb[0].mxu0
        %v3689 = vadd.f32 %v3272, %v3688
        %v3690 = vpop.f32.mrb[0].mxu0
        %3691 = vmatprep.mubr.bf16.mxu0 %v2184
        %3692 = vmatmul.mubr.bf16.gmra.mrb[0].mxu0 %v1731
        %v3693 = vpop.f32.mrb[0].mxu0
        %v3694 = vadd.f32 %v3277, %v3693
        %v3695 = vpop.f32.mrb[0].mxu0
        %v3696 = vpop.f32.mrb[0].mxu0
        %v3697 = vadd.f32 %v3280, %v3696
        %v3698 = vpop.f32.mrb[0].mxu0
        %3699 = vmatprep.mubr.bf16.mxu0 %v2186
        %3700 = vmatmul.mubr.bf16.gmra.mrb[0].mxu0 %v1739
        %v3701 = vpop.f32.mrb[0].mxu0
        %v3702 = vadd.f32 %v3285, %v3701
        %v3703 = vpop.f32.mrb[0].mxu0
        %v3704 = vpop.f32.mrb[0].mxu0
        %v3705 = vadd.f32 %v3288, %v3704
        %v3706 = vpop.f32.mrb[0].mxu0
        %3707 = vmatprep.mubr.bf16.mxu0 %v2188
        %3708 = vmatmul.mubr.bf16.gmra.mrb[0].mxu0 %v1747
        %v3709 = vpop.f32.mrb[0].mxu0
        %v3710 = vadd.f32 %v3293, %v3709
        %v3711 = vpop.f32.mrb[0].mxu0
        %v3712 = vpop.f32.mrb[0].mxu0
        %v3713 = vadd.f32 %v3296, %v3712
        %v3714 = vpop.f32.mrb[0].mxu0
        %3715 = vmatprep.mubr.bf16.mxu0 %v2190
        %3716 = vmatmul.mubr.bf16.gmra.mrb[0].mxu0 %v1755
        %v3717 = vpop.f32.mrb[0].mxu0
        %v3718 = vadd.f32 %v3301, %v3717
        %v3719 = vpop.f32.mrb[0].mxu0
        %v3720 = vpop.f32.mrb[0].mxu0
        %v3721 = vadd.f32 %v3304, %v3720
        %v3722 = vpop.f32.mrb[0].mxu0
        %3723 = vmatprep.mubr.bf16.mxu0 %v2192
        %3724 = vmatmul.mubr.bf16.gmra.mrb[0].mxu0 %v1763
        %v3725 = vpop.f32.mrb[0].mxu0
        %v3726 = vadd.f32 %v3309, %v3725
        %v3727 = vpop.f32.mrb[0].mxu0
        %v3728 = vpop.f32.mrb[0].mxu0
        %v3729 = vadd.f32 %v3312, %v3728
        %v3730 = vpop.f32.mrb[0].mxu0
        %3731 = vmatprep.mubr.bf16.mxu0 %v2194
        %3732 = vmatmul.mubr.bf16.gmra.mrb[0].mxu0 %v1771
        %v3733 = vpop.f32.mrb[0].mxu0
        %v3734 = vadd.f32 %v3317, %v3733
        %v3735 = vpop.f32.mrb[0].mxu0
        %v3736 = vpop.f32.mrb[0].mxu0
        %v3737 = vadd.f32 %v3320, %v3736
        %v3738 = vpop.f32.mrb[0].mxu0
        %3739 = vmatprep.mubr.bf16.mxu0 %v2196
        %3740 = vmatmul.mubr.bf16.gmra.mrb[0].mxu0 %v1779
        %v3741 = vpop.f32.mrb[0].mxu0
        %v3742 = vadd.f32 %v3325, %v3741
        %v3743 = vpop.f32.mrb[0].mxu0
        %v3744 = vpop.f32.mrb[0].mxu0
        %v3745 = vadd.f32 %v3328, %v3744
        %v3746 = vpop.f32.mrb[0].mxu0
        %3747 = vmatprep.mubr.bf16.mxu0 %v2198
        %3748 = vmatmul.mubr.bf16.gmra.mrb[0].mxu0 %v1787
        %v3749 = vpop.f32.mrb[0].mxu0
        %v3750 = vadd.f32 %v3333, %v3749
        %v3751 = vpop.f32.mrb[0].mxu0
        %v3752 = vpop.f32.mrb[0].mxu0
        %v3753 = vadd.f32 %v3336, %v3752
        %v3754 = vpop.f32.mrb[0].mxu0
        %3755 = vmatprep.mubr.bf16.mxu0 %v2200
        %3756 = vmatmul.mubr.bf16.gmra.mrb[0].mxu0 %v1795
        %v3757 = vpop.f32.mrb[0].mxu0
        %v3758 = vadd.f32 %v3341, %v3757
        %v3759 = vpop.f32.mrb[0].mxu0
        %v3760 = vpop.f32.mrb[0].mxu0
        %v3761 = vadd.f32 %v3344, %v3760
        %v3762 = vpop.f32.mrb[0].mxu0
        %3763 = vmatprep.mubr.bf16.mxu0 %v2202
        %3764 = vmatmul.mubr.bf16.gmra.mrb[0].mxu0 %v1803
        %v3765 = vpop.f32.mrb[0].mxu0
        %v3766 = vadd.f32 %v3349, %v3765
        %v3767 = vpop.f32.mrb[0].mxu0
        %v3768 = vpop.f32.mrb[0].mxu0
        %v3769 = vadd.f32 %v3352, %v3768
        %v3770 = vpop.f32.mrb[0].mxu0
        %3771 = vmatprep.mubr.bf16.mxu0 %v2204
        %3772 = vmatmul.mubr.bf16.gmra.mrb[0].mxu0 %v1811
        %v3773 = vpop.f32.mrb[0].mxu0
        %v3774 = vadd.f32 %v3357, %v3773
        %v3775 = vpop.f32.mrb[0].mxu0
        %v3776 = vpop.f32.mrb[0].mxu0
        %v3777 = vadd.f32 %v3360, %v3776
        %v3778 = vpop.f32.mrb[0].mxu0
        %3779 = vmatprep.mubr.bf16.mxu0 %v2206
        %3780 = vmatmul.mubr.bf16.gmra.mrb[0].mxu0 %v1819
        %v3781 = vpop.f32.mrb[0].mxu0
        %v3782 = vadd.f32 %v3365, %v3781
        %v3783 = vpop.f32.mrb[0].mxu0
        %v3784 = vpop.f32.mrb[0].mxu0
        %v3785 = vadd.f32 %v3368, %v3784
        %v3786 = vpop.f32.mrb[0].mxu0
        %3787 = vmatprep.mubr.bf16.mxu0 %v2208
        %3788 = vmatmul.mubr.bf16.gmra.mrb[0].mxu0 %v1827
        %v3789 = vpop.f32.mrb[0].mxu0
        %v3790 = vadd.f32 %v3373, %v3789
        %v3791 = vpop.f32.mrb[0].mxu0
        %v3792 = vpop.f32.mrb[0].mxu0
        %v3793 = vadd.f32 %v3376, %v3792
        %v3794 = vpop.f32.mrb[0].mxu0
        %3795 = vmatprep.mubr.bf16.mxu0 %v2210
        %3796 = vmatmul.mubr.bf16.gmra.mrb[0].mxu0 %v1835
        %v3797 = vpop.f32.mrb[0].mxu0
        %v3798 = vadd.f32 %v3381, %v3797
        %v3799 = vpop.f32.mrb[0].mxu0
        %v3800 = vpop.f32.mrb[0].mxu0
        %v3801 = vadd.f32 %v3384, %v3800
        %v3802 = vpop.f32.mrb[0].mxu0
        %3803 = vmatprep.mubr.bf16.mxu0 %v2212
        %3804 = vmatmul.mubr.bf16.gmra.mrb[0].mxu0 %v1843
        %v3805 = vpop.f32.mrb[0].mxu0
        %v3806 = vadd.f32 %v3389, %v3805
        %v3807 = vpop.f32.mrb[0].mxu0
        %v3808 = vpop.f32.mrb[0].mxu0
        %v3809 = vadd.f32 %v3392, %v3808
        %v3810 = vpop.f32.mrb[0].mxu0
        %3811 = vmatprep.mubr.bf16.mxu0 %v2214
        %3812 = vmatmul.mubr.bf16.gmra.mrb[0].mxu0 %v1851
        %v3813 = vpop.f32.mrb[0].mxu0
        %v3814 = vadd.f32 %v3397, %v3813
        %v3815 = vpop.f32.mrb[0].mxu0
        %v3816 = vpop.f32.mrb[0].mxu0
        %v3817 = vadd.f32 %v3400, %v3816
        %v3818 = vpop.f32.mrb[0].mxu0
        %3819 = vmatprep.mubr.bf16.mxu0 %v2216
        %3820 = vmatmul.mubr.bf16.gmra.mrb[0].mxu0 %v1859
        %v3821 = vpop.f32.mrb[0].mxu0
        %v3822 = vadd.f32 %v3405, %v3821
        %v3823 = vpop.f32.mrb[0].mxu0
        %v3824 = vpop.f32.mrb[0].mxu0
        %v3825 = vadd.f32 %v3408, %v3824
        %v3826 = vpop.f32.mrb[0].mxu0
        %3827 = vmatprep.mubr.bf16.mxu0 %v2218
        %3828 = vmatmul.mubr.bf16.gmra.mrb[0].mxu0 %v1867
        %v3829 = vpop.f32.mrb[0].mxu0
        %v3830 = vadd.f32 %v3413, %v3829
        %v3831 = vpop.f32.mrb[0].mxu0
        %v3832 = vpop.f32.mrb[0].mxu0
        %v3833 = vadd.f32 %v3416, %v3832
        %v3834 = vpop.f32.mrb[0].mxu0
        %3835 = vmatprep.mubr.bf16.mxu0 %v2220
        %3836 = vmatmul.mubr.bf16.gmra.mrb[0].mxu0 %v1875
        %v3837 = vpop.f32.mrb[0].mxu0
        %v3838 = vadd.f32 %v3421, %v3837
        %v3839 = vpop.f32.mrb[0].mxu0
        %v3840 = vpop.f32.mrb[0].mxu0
        %v3841 = vadd.f32 %v3424, %v3840
        %v3842 = vpop.f32.mrb[0].mxu0
        %3843 = vmatprep.mubr.bf16.mxu0 %v2222
        %3844 = vmatmul.mubr.bf16.gmra.mrb[0].mxu0 %v1883
        %v3845 = vpop.f32.mrb[0].mxu0
        %v3846 = vadd.f32 %v3429, %v3845
        %v3847 = vpop.f32.mrb[0].mxu0
        %v3848 = vpop.f32.mrb[0].mxu0
        %v3849 = vadd.f32 %v3432, %v3848
        %v3850 = vpop.f32.mrb[0].mxu0
        %3851 = vmatprep.mubr.bf16.mxu0 %v2224
        %3852 = vmatmul.mubr.bf16.gmra.mrb[0].mxu0 %v1891
        %v3853 = vpop.f32.mrb[0].mxu0
        %v3854 = vadd.f32 %v3437, %v3853
        %v3855 = vpop.f32.mrb[0].mxu0
        %v3856 = vpop.f32.mrb[0].mxu0
        %v3857 = vadd.f32 %v3440, %v3856
        %v3858 = vpop.f32.mrb[0].mxu0
        %3859 = vmatprep.mubr.bf16.mxu0 %v2226
        %3860 = vmatmul.mubr.bf16.gmra.mrb[0].mxu0 %v1899
        %v3861 = vpop.f32.mrb[0].mxu0
        %v3862 = vadd.f32 %v3445, %v3861
        %v3863 = vpop.f32.mrb[0].mxu0
        %v3864 = vpop.f32.mrb[0].mxu0
        %v3865 = vadd.f32 %v3448, %v3864
        %v3866 = vpop.f32.mrb[0].mxu0
        %3867 = vmatprep.mubr.bf16.mxu0 %v2228
        %3868 = vmatmul.mubr.bf16.gmra.mrb[0].mxu0 %v1907
        %v3869 = vpop.f32.mrb[0].mxu0
        %v3870 = vadd.f32 %v3453, %v3869
        %v3871 = vpop.f32.mrb[0].mxu0
        %v3872 = vpop.f32.mrb[0].mxu0
        %v3873 = vadd.f32 %v3456, %v3872
        %v3874 = vpop.f32.mrb[0].mxu0
        %3875 = vmatprep.mubr.bf16.mxu0 %v2230
        %3876 = vmatmul.mubr.bf16.gmra.mrb[0].mxu0 %v1915
        %v3877 = vpop.f32.mrb[0].mxu0
        %v3878 = vadd.f32 %v3461, %v3877
        %v3879 = vpop.f32.mrb[0].mxu0
        %v3880 = vpop.f32.mrb[0].mxu0
        %v3881 = vadd.f32 %v3464, %v3880
        %v3882 = vpop.f32.mrb[0].mxu0
        %3883 = vmatprep.mubr.bf16.mxu0 %v2232
        %3884 = vmatmul.mubr.bf16.gmra.mrb[0].mxu0 %v1923
        %v3885 = vpop.f32.mrb[0].mxu0
        %v3886 = vadd.f32 %v3469, %v3885
        %v3887 = vpop.f32.mrb[0].mxu0
        %v3888 = vpop.f32.mrb[0].mxu0
        %v3889 = vadd.f32 %v3472, %v3888
        %v3890 = vpop.f32.mrb[0].mxu0
        %3891 = vmatprep.mubr.bf16.mxu0 %v2234
        %3892 = vmatmul.mubr.bf16.gmra.mrb[0].mxu0 %v1931
        %v3893 = vpop.f32.mrb[0].mxu0
        %v3894 = vadd.f32 %v3477, %v3893
        %v3895 = vpop.f32.mrb[0].mxu0
        %v3896 = vpop.f32.mrb[0].mxu0
        %v3897 = vadd.f32 %v3480, %v3896
        %v3898 = vpop.f32.mrb[0].mxu0
        %3899 = vmatprep.mubr.bf16.mxu0 %v2236
        %3900 = vmatmul.mubr.bf16.gmra.mrb[0].mxu0 %v1939
        %v3901 = vpop.f32.mrb[0].mxu0
        %v3902 = vadd.f32 %v3485, %v3901
        %v3903 = vpop.f32.mrb[0].mxu0
        %v3904 = vpop.f32.mrb[0].mxu0
        %v3905 = vadd.f32 %v3488, %v3904
        %v3906 = vpop.f32.mrb[0].mxu0
        %3907 = vmatprep.mubr.bf16.mxu0 %v2238
        %3908 = vmatmul.mubr.bf16.gmra.mrb[0].mxu0 %v1947
        %v3909 = vpop.f32.mrb[0].mxu0
        %v3910 = vadd.f32 %v3493, %v3909
        %v3911 = vpop.f32.mrb[0].mxu0
        %v3912 = vpop.f32.mrb[0].mxu0
        %v3913 = vadd.f32 %v3496, %v3912
        %v3914 = vpop.f32.mrb[0].mxu0
        %3915 = vmatprep.mubr.bf16.mxu0 %v2240
        %3916 = vmatmul.mubr.bf16.gmra.mrb[0].mxu0 %v1955
        %v3917 = vpop.f32.mrb[0].mxu0
        %v3918 = vadd.f32 %v3501, %v3917
        %v3919 = vpop.f32.mrb[0].mxu0
        %v3920 = vpop.f32.mrb[0].mxu0
        %v3921 = vadd.f32 %v3504, %v3920
        %v3922 = vpop.f32.mrb[0].mxu0
        %3923 = vmatprep.mubr.bf16.mxu0 %v2242
        %3924 = vmatmul.mubr.bf16.gmra.mrb[0].mxu0 %v1963
        %v3925 = vpop.f32.mrb[0].mxu0
        %v3926 = vadd.f32 %v3509, %v3925
        %v3927 = vpop.f32.mrb[0].mxu0
        %v3928 = vpop.f32.mrb[0].mxu0
        %v3929 = vadd.f32 %v3512, %v3928
        %v3930 = vpop.f32.mrb[0].mxu0
        %3931 = vmatprep.mubr.bf16.mxu0 %v2244
        %3932 = vmatmul.mubr.bf16.gmra.mrb[0].mxu0 %v1971
        %v3933 = vpop.f32.mrb[0].mxu0
        %v3934 = vadd.f32 %v3517, %v3933
        %v3935 = vpop.f32.mrb[0].mxu0
        %v3936 = vpop.f32.mrb[0].mxu0
        %v3937 = vadd.f32 %v3520, %v3936
        %v3938 = vpop.f32.mrb[0].mxu0
        %3939 = vmatprep.mubr.bf16.mxu0 %v2246
        %3940 = vmatmul.mubr.bf16.gmra.mrb[0].mxu0 %v1979
        %v3941 = vpop.f32.mrb[0].mxu0
        %v3942 = vadd.f32 %v3525, %v3941
        %v3943 = vpop.f32.mrb[0].mxu0
        %v3944 = vpop.f32.mrb[0].mxu0
        %v3945 = vadd.f32 %v3528, %v3944
        %v3946 = vpop.f32.mrb[0].mxu0
        %3947 = vmatprep.mubr.bf16.mxu0 %v2248
        %3948 = vmatmul.mubr.bf16.gmra.mrb[0].mxu0 %v1987
        %v3949 = vpop.f32.mrb[0].mxu0
        %v3950 = vadd.f32 %v3533, %v3949
        %v3951 = vpop.f32.mrb[0].mxu0
        %v3952 = vpop.f32.mrb[0].mxu0
        %v3953 = vadd.f32 %v3536, %v3952
        %v3954 = vpop.f32.mrb[0].mxu0
        %3955 = vmatprep.mubr.bf16.mxu0 %v2250
        %3956 = vmatmul.mubr.bf16.gmra.mrb[0].mxu0 %v1995
        %v3957 = vpop.f32.mrb[0].mxu0
        %v3958 = vadd.f32 %v3541, %v3957
        %v3959 = vpop.f32.mrb[0].mxu0
        %v3960 = vpop.f32.mrb[0].mxu0
        %v3961 = vadd.f32 %v3544, %v3960
        %v3962 = vpop.f32.mrb[0].mxu0
        %3963 = vmatprep.mubr.bf16.mxu0 %v2252
        %3964 = vmatmul.mubr.bf16.gmra.mrb[0].mxu0 %v2003
        %v3965 = vpop.f32.mrb[0].mxu0
        %v3966 = vadd.f32 %v3549, %v3965
        %v3967 = vpop.f32.mrb[0].mxu0
        %v3968 = vpop.f32.mrb[0].mxu0
        %v3969 = vadd.f32 %v3552, %v3968
        %v3970 = vpop.f32.mrb[0].mxu0
        %3971 = vmatprep.mubr.bf16.mxu0 %v2254
        %3972 = vmatmul.mubr.bf16.gmra.mrb[0].mxu0 %v2011
        %v3973 = vpop.f32.mrb[0].mxu0
        %v3974 = vadd.f32 %v3557, %v3973
        %v3975 = vpop.f32.mrb[0].mxu0
        %v3976 = vpop.f32.mrb[0].mxu0
        %v3977 = vadd.f32 %v3560, %v3976
        %v3978 = vpop.f32.mrb[0].mxu0
        %3979 = vmatprep.mubr.bf16.mxu0 %v2256
        %3980 = vmatmul.mubr.bf16.gmra.mrb[0].mxu0 %v2019
        %v3981 = vpop.f32.mrb[0].mxu0
        %v3982 = vadd.f32 %v3565, %v3981
        %v3983 = vpop.f32.mrb[0].mxu0
        %v3984 = vpop.f32.mrb[0].mxu0
        %v3985 = vadd.f32 %v3568, %v3984
        %v3986 = vpop.f32.mrb[0].mxu0
        %3987 = vmatprep.mubr.bf16.mxu0 %v2258
        %3988 = vmatmul.mubr.bf16.gmra.mrb[0].mxu0 %v2027
        %v3989 = vpop.f32.mrb[0].mxu0
        %v3990 = vadd.f32 %v3573, %v3989
        %v3991 = vpop.f32.mrb[0].mxu0
        %v3992 = vpop.f32.mrb[0].mxu0
        %v3993 = vadd.f32 %v3576, %v3992
        %v3994 = vpop.f32.mrb[0].mxu0
        %3995 = vmatprep.mubr.bf16.mxu0 %v2260
        %3996 = vmatmul.mubr.bf16.gmra.mrb[0].mxu0 %v2035
        %v3997 = vpop.f32.mrb[0].mxu0
        %v3998 = vadd.f32 %v3581, %v3997
        %v3999 = vpop.f32.mrb[0].mxu0
        %v4000 = vpop.f32.mrb[0].mxu0
        %v4001 = vadd.f32 %v3584, %v4000
        %v4002 = vpop.f32.mrb[0].mxu0
        %4003 = vmatprep.mubr.bf16.mxu0 %v2262
        %4004 = vmatmul.mubr.bf16.gmra.mrb[0].mxu0 %v2043
        %v4005 = vpop.f32.mrb[0].mxu0
        %v4006 = vadd.f32 %v3589, %v4005
        %v4007 = vpop.f32.mrb[0].mxu0
        %v4008 = vpop.f32.mrb[0].mxu0
        %v4009 = vadd.f32 %v3592, %v4008
        %v4010 = vpop.f32.mrb[0].mxu0
        %4011 = vmatprep.mubr.bf16.mxu0 %v2264
        %4012 = vmatmul.mubr.bf16.gmra.mrb[0].mxu0 %v2051
        %v4013 = vpop.f32.mrb[0].mxu0
        %v4014 = vadd.f32 %v3597, %v4013
        %v4015 = vpop.f32.mrb[0].mxu0
        %v4016 = vpop.f32.mrb[0].mxu0
        %v4017 = vadd.f32 %v3600, %v4016
        %v4018 = vpop.f32.mrb[0].mxu0
        %4019 = vmatprep.mubr.bf16.mxu0 %v2266
        %4020 = vmatmul.mubr.bf16.gmra.mrb[0].mxu0 %v2059
        %v4021 = vpop.f32.mrb[0].mxu0
        %v4022 = vadd.f32 %v3605, %v4021
        %v4023 = vpop.f32.mrb[0].mxu0
        %v4024 = vpop.f32.mrb[0].mxu0
        %v4025 = vadd.f32 %v3608, %v4024
        %v4026 = vpop.f32.mrb[0].mxu0
        %4027 = vmatprep.mubr.bf16.mxu0 %v2268
        %4028 = vmatmul.mubr.bf16.gmra.mrb[0].mxu0 %v2067
        %v4029 = vpop.f32.mrb[0].mxu0
        %v4030 = vadd.f32 %v3613, %v4029
        %v4031 = vpop.f32.mrb[0].mxu0
        %v4032 = vpop.f32.mrb[0].mxu0
        %v4033 = vadd.f32 %v3616, %v4032
        %v4034 = vpop.f32.mrb[0].mxu0
        %4035 = vmatprep.mubr.bf16.mxu0 %v2270
        %4036 = vmatmul.mubr.bf16.gmra.mrb[0].mxu0 %v2075
        %v4037 = vpop.f32.mrb[0].mxu0
        %v4038 = vadd.f32 %v3621, %v4037
        %v4039 = vpop.f32.mrb[0].mxu0
        %v4040 = vpop.f32.mrb[0].mxu0
        %v4041 = vadd.f32 %v3624, %v4040
        %v4042 = vpop.f32.mrb[0].mxu0
        %4043 = vmatprep.mubr.bf16.mxu0 %v2340
        %4044 = vmatmul.mubr.bf16.gmra.mrb[0].mxu0 %v2326
        %v4045 = vpop.f32.mrb[0].mxu0
        %v4046 = vadd.f32 %v3629, %v4045
        %v4047 = vpop.f32.mrb[0].mxu0
        %v4048 = vpop.f32.mrb[0].mxu0
        %v4049 = vadd.f32 %v3632, %v4048
        %v4050 = vpop.f32.mrb[0].mxu0
        %4051 = vmatprep.mubr.bf16.mxu0 %v2342
        %4052 = vmatmul.mubr.bf16.gmra.mrb[0].mxu0 %v2334
        %v4053 = vpop.f32.mrb[0].mxu0
        %v4054 = vadd.f32 %v3637, %v4053
        %v4055 = vpop.f32.mrb[0].mxu0
        %v4056 = vpop.f32.mrb[0].mxu0
        %v4057 = vadd.f32 %v3640, %v4056
        %v4058 = vpop.f32.mrb[0].mxu0
        %4059 = vdwg.mxu0
        %4060 = vmatprep.subr.bf16.mxu0 0
        %4061 = vmatpush1.bf16.msra.mxu0 %v2713
        %4062 = vmatprep.subr.bf16.mxu0 0
        %4063 = vmatpush1.bf16.msra.mxu0 %v2714
        %4064 = vmatprep.subr.bf16.mxu0 0
        %4065 = vmatpush1.bf16.msra.mxu0 %v2715
        %4066 = vmatprep.subr.bf16.mxu0 0
        %4067 = vmatpush1.bf16.msra.mxu0 %v2716
        %4068 = vmatprep.subr.bf16.mxu0 0
        %4069 = vmatpush1.bf16.msra.mxu0 %v2717
        %4070 = vmatprep.subr.bf16.mxu0 0
        %4071 = vmatpush1.bf16.msra.mxu0 %v2718
        %4072 = vmatprep.subr.bf16.mxu0 0
        %4073 = vmatpush1.bf16.msra.mxu0 %v2719
        %4074 = vmatprep.subr.bf16.mxu0 0
        %4075 = vmatpush1.bf16.msra.mxu0 %v2720
        %4076 = vmatprep.subr.bf16.mxu0 0
        %4077 = vmatpush1.bf16.msra.mxu0 %v2721
        %4078 = vmatprep.subr.bf16.mxu0 0
        %4079 = vmatpush1.bf16.msra.mxu0 %v2722
        %4080 = vmatprep.subr.bf16.mxu0 0
        %4081 = vmatpush1.bf16.msra.mxu0 %v2723
        %4082 = vmatprep.subr.bf16.mxu0 0
        %4083 = vmatpush1.bf16.msra.mxu0 %v2724
        %4084 = vmatprep.subr.bf16.mxu0 0
        %4085 = vmatpush1.bf16.msra.mxu0 %v2725
        %4086 = vmatprep.subr.bf16.mxu0 0
        %4087 = vmatpush1.bf16.msra.mxu0 %v2726
        %4088 = vmatprep.subr.bf16.mxu0 0
        %4089 = vmatpush1.bf16.msra.mxu0 %v2727
        %4090 = vmatprep.subr.bf16.mxu0 0
        %4091 = vmatpush1.bf16.msra.mxu0 %v2728
        %4092 = vmatprep.mubr.bf16.mxu0 %v1731
        %4093 = vmatmul.mubr.bf16.gmra.mrb[0].mxu0 %v1638
        %v4094 = vpop.f32.mrb[0].mxu0
        %v4095 = vadd.f32 %v3678, %v4094
        %v4096 = vpop.f32.mrb[0].mxu0
        %v4097 = vpop.f32.mrb[0].mxu0
        %v4098 = vadd.f32 %v3681, %v4097
        %v4099 = vpop.f32.mrb[0].mxu0
        %4100 = vmatprep.mubr.bf16.mxu0 %v1739
        %4101 = vmatmul.mubr.bf16.gmra.mrb[0].mxu0 %v1639
        %v4102 = vpop.f32.mrb[0].mxu0
        %v4103 = vadd.f32 %v3686, %v4102
        %v4104 = vpop.f32.mrb[0].mxu0
        %v4105 = vpop.f32.mrb[0].mxu0
        %v4106 = vadd.f32 %v3689, %v4105
        %v4107 = vpop.f32.mrb[0].mxu0
        %4108 = vmatprep.mubr.bf16.mxu0 %v1747
        %4109 = vmatmul.mubr.bf16.gmra.mrb[0].mxu0 %v1640
        %v4110 = vpop.f32.mrb[0].mxu0
        %v4111 = vadd.f32 %v3694, %v4110
        %v4112 = vpop.f32.mrb[0].mxu0
        %v4113 = vpop.f32.mrb[0].mxu0
        %v4114 = vadd.f32 %v3697, %v4113
        %v4115 = vpop.f32.mrb[0].mxu0
        %4116 = vmatprep.mubr.bf16.mxu0 %v1755
        %4117 = vmatmul.mubr.bf16.gmra.mrb[0].mxu0 %v1641
        %v4118 = vpop.f32.mrb[0].mxu0
        %v4119 = vadd.f32 %v3702, %v4118
        %v4120 = vpop.f32.mrb[0].mxu0
        %v4121 = vpop.f32.mrb[0].mxu0
        %v4122 = vadd.f32 %v3705, %v4121
        %v4123 = vpop.f32.mrb[0].mxu0
        %4124 = vmatprep.mubr.bf16.mxu0 %v1763
        %4125 = vmatmul.mubr.bf16.gmra.mrb[0].mxu0 %v1642
        %v4126 = vpop.f32.mrb[0].mxu0
        %v4127 = vadd.f32 %v3710, %v4126
        %v4128 = vpop.f32.mrb[0].mxu0
        %v4129 = vpop.f32.mrb[0].mxu0
        %v4130 = vadd.f32 %v3713, %v4129
        %v4131 = vpop.f32.mrb[0].mxu0
        %4132 = vmatprep.mubr.bf16.mxu0 %v1771
        %4133 = vmatmul.mubr.bf16.gmra.mrb[0].mxu0 %v1643
        %v4134 = vpop.f32.mrb[0].mxu0
        %v4135 = vadd.f32 %v3718, %v4134
        %v4136 = vpop.f32.mrb[0].mxu0
        %v4137 = vpop.f32.mrb[0].mxu0
        %v4138 = vadd.f32 %v3721, %v4137
        %v4139 = vpop.f32.mrb[0].mxu0
        %4140 = vmatprep.mubr.bf16.mxu0 %v1779
        %4141 = vmatmul.mubr.bf16.gmra.mrb[0].mxu0 %v1644
        %v4142 = vpop.f32.mrb[0].mxu0
        %v4143 = vadd.f32 %v3726, %v4142
        %v4144 = vpop.f32.mrb[0].mxu0
        %v4145 = vpop.f32.mrb[0].mxu0
        %v4146 = vadd.f32 %v3729, %v4145
        %v4147 = vpop.f32.mrb[0].mxu0
        %4148 = vmatprep.mubr.bf16.mxu0 %v1787
        %4149 = vmatmul.mubr.bf16.gmra.mrb[0].mxu0 %v1645
        %v4150 = vpop.f32.mrb[0].mxu0
        %v4151 = vadd.f32 %v3734, %v4150
        %v4152 = vpop.f32.mrb[0].mxu0
        %v4153 = vpop.f32.mrb[0].mxu0
        %v4154 = vadd.f32 %v3737, %v4153
        %v4155 = vpop.f32.mrb[0].mxu0
        %4156 = vmatprep.mubr.bf16.mxu0 %v1795
        %4157 = vmatmul.mubr.bf16.gmra.mrb[0].mxu0 %v1646
        %v4158 = vpop.f32.mrb[0].mxu0
        %v4159 = vadd.f32 %v3742, %v4158
        %v4160 = vpop.f32.mrb[0].mxu0
        %v4161 = vpop.f32.mrb[0].mxu0
        %v4162 = vadd.f32 %v3745, %v4161
        %v4163 = vpop.f32.mrb[0].mxu0
        %4164 = vmatprep.mubr.bf16.mxu0 %v1803
        %4165 = vmatmul.mubr.bf16.gmra.mrb[0].mxu0 %v1647
        %v4166 = vpop.f32.mrb[0].mxu0
        %v4167 = vadd.f32 %v3750, %v4166
        %v4168 = vpop.f32.mrb[0].mxu0
        %v4169 = vpop.f32.mrb[0].mxu0
        %v4170 = vadd.f32 %v3753, %v4169
        %v4171 = vpop.f32.mrb[0].mxu0
        %4172 = vmatprep.mubr.bf16.mxu0 %v1811
        %4173 = vmatmul.mubr.bf16.gmra.mrb[0].mxu0 %v1648
        %v4174 = vpop.f32.mrb[0].mxu0
        %v4175 = vadd.f32 %v3758, %v4174
        %v4176 = vpop.f32.mrb[0].mxu0
        %v4177 = vpop.f32.mrb[0].mxu0
        %v4178 = vadd.f32 %v3761, %v4177
        %v4179 = vpop.f32.mrb[0].mxu0
        %4180 = vmatprep.mubr.bf16.mxu0 %v1819
        %4181 = vmatmul.mubr.bf16.gmra.mrb[0].mxu0 %v1649
        %v4182 = vpop.f32.mrb[0].mxu0
        %v4183 = vadd.f32 %v3766, %v4182
        %v4184 = vpop.f32.mrb[0].mxu0
        %v4185 = vpop.f32.mrb[0].mxu0
        %v4186 = vadd.f32 %v3769, %v4185
        %v4187 = vpop.f32.mrb[0].mxu0
        %4188 = vmatprep.mubr.bf16.mxu0 %v1827
        %4189 = vmatmul.mubr.bf16.gmra.mrb[0].mxu0 %v1650
        %v4190 = vpop.f32.mrb[0].mxu0
        %v4191 = vadd.f32 %v3774, %v4190
        %v4192 = vpop.f32.mrb[0].mxu0
        %v4193 = vpop.f32.mrb[0].mxu0
        %v4194 = vadd.f32 %v3777, %v4193
        %v4195 = vpop.f32.mrb[0].mxu0
        %4196 = vmatprep.mubr.bf16.mxu0 %v1835
        %4197 = vmatmul.mubr.bf16.gmra.mrb[0].mxu0 %v1651
        %v4198 = vpop.f32.mrb[0].mxu0
        %v4199 = vadd.f32 %v3782, %v4198
        %v4200 = vpop.f32.mrb[0].mxu0
        %v4201 = vpop.f32.mrb[0].mxu0
        %v4202 = vadd.f32 %v3785, %v4201
        %v4203 = vpop.f32.mrb[0].mxu0
        %4204 = vmatprep.mubr.bf16.mxu0 %v1843
        %4205 = vmatmul.mubr.bf16.gmra.mrb[0].mxu0 %v1652
        %v4206 = vpop.f32.mrb[0].mxu0
        %v4207 = vadd.f32 %v3790, %v4206
        %v4208 = vpop.f32.mrb[0].mxu0
        %v4209 = vpop.f32.mrb[0].mxu0
        %v4210 = vadd.f32 %v3793, %v4209
        %v4211 = vpop.f32.mrb[0].mxu0
        %4212 = vmatprep.mubr.bf16.mxu0 %v1851
        %4213 = vmatmul.mubr.bf16.gmra.mrb[0].mxu0 %v1653
        %v4214 = vpop.f32.mrb[0].mxu0
        %v4215 = vadd.f32 %v3798, %v4214
        %v4216 = vpop.f32.mrb[0].mxu0
        %v4217 = vpop.f32.mrb[0].mxu0
        %v4218 = vadd.f32 %v3801, %v4217
        %v4219 = vpop.f32.mrb[0].mxu0
        %4220 = vmatprep.mubr.bf16.mxu0 %v1859
        %4221 = vmatmul.mubr.bf16.gmra.mrb[0].mxu0 %v1654
        %v4222 = vpop.f32.mrb[0].mxu0
        %v4223 = vadd.f32 %v3806, %v4222
        %v4224 = vpop.f32.mrb[0].mxu0
        %v4225 = vpop.f32.mrb[0].mxu0
        %v4226 = vadd.f32 %v3809, %v4225
        %v4227 = vpop.f32.mrb[0].mxu0
        %4228 = vmatprep.mubr.bf16.mxu0 %v1867
        %4229 = vmatmul.mubr.bf16.gmra.mrb[0].mxu0 %v1655
        %v4230 = vpop.f32.mrb[0].mxu0
        %v4231 = vadd.f32 %v3814, %v4230
        %v4232 = vpop.f32.mrb[0].mxu0
        %v4233 = vpop.f32.mrb[0].mxu0
        %v4234 = vadd.f32 %v3817, %v4233
        %v4235 = vpop.f32.mrb[0].mxu0
        %4236 = vmatprep.mubr.bf16.mxu0 %v1875
        %4237 = vmatmul.mubr.bf16.gmra.mrb[0].mxu0 %v1656
        %v4238 = vpop.f32.mrb[0].mxu0
        %v4239 = vadd.f32 %v3822, %v4238
        %v4240 = vpop.f32.mrb[0].mxu0
        %v4241 = vpop.f32.mrb[0].mxu0
        %v4242 = vadd.f32 %v3825, %v4241
        %v4243 = vpop.f32.mrb[0].mxu0
        %4244 = vmatprep.mubr.bf16.mxu0 %v1883
        %4245 = vmatmul.mubr.bf16.gmra.mrb[0].mxu0 %v1657
        %v4246 = vpop.f32.mrb[0].mxu0
        %v4247 = vadd.f32 %v3830, %v4246
        %v4248 = vpop.f32.mrb[0].mxu0
        %v4249 = vpop.f32.mrb[0].mxu0
        %v4250 = vadd.f32 %v3833, %v4249
        %v4251 = vpop.f32.mrb[0].mxu0
        %4252 = vmatprep.mubr.bf16.mxu0 %v1891
        %4253 = vmatmul.mubr.bf16.gmra.mrb[0].mxu0 %v1658
        %v4254 = vpop.f32.mrb[0].mxu0
        %v4255 = vadd.f32 %v3838, %v4254
        %v4256 = vpop.f32.mrb[0].mxu0
        %v4257 = vpop.f32.mrb[0].mxu0
        %v4258 = vadd.f32 %v3841, %v4257
        %v4259 = vpop.f32.mrb[0].mxu0
        %4260 = vmatprep.mubr.bf16.mxu0 %v1899
        %4261 = vmatmul.mubr.bf16.gmra.mrb[0].mxu0 %v1659
        %v4262 = vpop.f32.mrb[0].mxu0
        %v4263 = vadd.f32 %v3846, %v4262
        %v4264 = vpop.f32.mrb[0].mxu0
        %v4265 = vpop.f32.mrb[0].mxu0
        %v4266 = vadd.f32 %v3849, %v4265
        %v4267 = vpop.f32.mrb[0].mxu0
        %4268 = vmatprep.mubr.bf16.mxu0 %v1907
        %4269 = vmatmul.mubr.bf16.gmra.mrb[0].mxu0 %v1660
        %v4270 = vpop.f32.mrb[0].mxu0
        %v4271 = vadd.f32 %v3854, %v4270
        %v4272 = vpop.f32.mrb[0].mxu0
        %v4273 = vpop.f32.mrb[0].mxu0
        %v4274 = vadd.f32 %v3857, %v4273
        %v4275 = vpop.f32.mrb[0].mxu0
        %4276 = vmatprep.mubr.bf16.mxu0 %v1915
        %4277 = vmatmul.mubr.bf16.gmra.mrb[0].mxu0 %v1661
        %v4278 = vpop.f32.mrb[0].mxu0
        %v4279 = vadd.f32 %v3862, %v4278
        %v4280 = vpop.f32.mrb[0].mxu0
        %v4281 = vpop.f32.mrb[0].mxu0
        %v4282 = vadd.f32 %v3865, %v4281
        %v4283 = vpop.f32.mrb[0].mxu0
        %4284 = vmatprep.mubr.bf16.mxu0 %v1923
        %4285 = vmatmul.mubr.bf16.gmra.mrb[0].mxu0 %v1662
        %v4286 = vpop.f32.mrb[0].mxu0
        %v4287 = vadd.f32 %v3870, %v4286
        %v4288 = vpop.f32.mrb[0].mxu0
        %v4289 = vpop.f32.mrb[0].mxu0
        %v4290 = vadd.f32 %v3873, %v4289
        %v4291 = vpop.f32.mrb[0].mxu0
        %4292 = vmatprep.mubr.bf16.mxu0 %v1931
        %4293 = vmatmul.mubr.bf16.gmra.mrb[0].mxu0 %v1663
        %v4294 = vpop.f32.mrb[0].mxu0
        %v4295 = vadd.f32 %v3878, %v4294
        %v4296 = vpop.f32.mrb[0].mxu0
        %v4297 = vpop.f32.mrb[0].mxu0
        %v4298 = vadd.f32 %v3881, %v4297
        %v4299 = vpop.f32.mrb[0].mxu0
        %4300 = vmatprep.mubr.bf16.mxu0 %v1939
        %4301 = vmatmul.mubr.bf16.gmra.mrb[0].mxu0 %v1664
        %v4302 = vpop.f32.mrb[0].mxu0
        %v4303 = vadd.f32 %v3886, %v4302
        %v4304 = vpop.f32.mrb[0].mxu0
        %v4305 = vpop.f32.mrb[0].mxu0
        %v4306 = vadd.f32 %v3889, %v4305
        %v4307 = vpop.f32.mrb[0].mxu0
        %4308 = vmatprep.mubr.bf16.mxu0 %v1947
        %4309 = vmatmul.mubr.bf16.gmra.mrb[0].mxu0 %v1665
        %v4310 = vpop.f32.mrb[0].mxu0
        %v4311 = vadd.f32 %v3894, %v4310
        %v4312 = vpop.f32.mrb[0].mxu0
        %v4313 = vpop.f32.mrb[0].mxu0
        %v4314 = vadd.f32 %v3897, %v4313
        %v4315 = vpop.f32.mrb[0].mxu0
        %4316 = vmatprep.mubr.bf16.mxu0 %v1955
        %4317 = vmatmul.mubr.bf16.gmra.mrb[0].mxu0 %v1666
        %v4318 = vpop.f32.mrb[0].mxu0
        %v4319 = vadd.f32 %v3902, %v4318
        %v4320 = vpop.f32.mrb[0].mxu0
        %v4321 = vpop.f32.mrb[0].mxu0
        %v4322 = vadd.f32 %v3905, %v4321
        %v4323 = vpop.f32.mrb[0].mxu0
        %4324 = vmatprep.mubr.bf16.mxu0 %v1963
        %4325 = vmatmul.mubr.bf16.gmra.mrb[0].mxu0 %v1667
        %v4326 = vpop.f32.mrb[0].mxu0
        %v4327 = vadd.f32 %v3910, %v4326
        %v4328 = vpop.f32.mrb[0].mxu0
        %v4329 = vpop.f32.mrb[0].mxu0
        %v4330 = vadd.f32 %v3913, %v4329
        %v4331 = vpop.f32.mrb[0].mxu0
        %4332 = vmatprep.mubr.bf16.mxu0 %v1971
        %4333 = vmatmul.mubr.bf16.gmra.mrb[0].mxu0 %v1668
        %v4334 = vpop.f32.mrb[0].mxu0
        %v4335 = vadd.f32 %v3918, %v4334
        %v4336 = vpop.f32.mrb[0].mxu0
        %v4337 = vpop.f32.mrb[0].mxu0
        %v4338 = vadd.f32 %v3921, %v4337
        %v4339 = vpop.f32.mrb[0].mxu0
        %4340 = vmatprep.mubr.bf16.mxu0 %v1979
        %4341 = vmatmul.mubr.bf16.gmra.mrb[0].mxu0 %v1669
        %v4342 = vpop.f32.mrb[0].mxu0
        %v4343 = vadd.f32 %v3926, %v4342
        %v4344 = vpop.f32.mrb[0].mxu0
        %v4345 = vpop.f32.mrb[0].mxu0
        %v4346 = vadd.f32 %v3929, %v4345
        %v4347 = vpop.f32.mrb[0].mxu0
        %4348 = vmatprep.mubr.bf16.mxu0 %v1987
        %4349 = vmatmul.mubr.bf16.gmra.mrb[0].mxu0 %v1670
        %v4350 = vpop.f32.mrb[0].mxu0
        %v4351 = vadd.f32 %v3934, %v4350
        %v4352 = vpop.f32.mrb[0].mxu0
        %v4353 = vpop.f32.mrb[0].mxu0
        %v4354 = vadd.f32 %v3937, %v4353
        %v4355 = vpop.f32.mrb[0].mxu0
        %4356 = vmatprep.mubr.bf16.mxu0 %v1995
        %4357 = vmatmul.mubr.bf16.gmra.mrb[0].mxu0 %v1671
        %v4358 = vpop.f32.mrb[0].mxu0
        %v4359 = vadd.f32 %v3942, %v4358
        %v4360 = vpop.f32.mrb[0].mxu0
        %v4361 = vpop.f32.mrb[0].mxu0
        %v4362 = vadd.f32 %v3945, %v4361
        %v4363 = vpop.f32.mrb[0].mxu0
        %4364 = vmatprep.mubr.bf16.mxu0 %v2003
        %4365 = vmatmul.mubr.bf16.gmra.mrb[0].mxu0 %v1672
        %v4366 = vpop.f32.mrb[0].mxu0
        %v4367 = vadd.f32 %v3950, %v4366
        %v4368 = vpop.f32.mrb[0].mxu0
        %v4369 = vpop.f32.mrb[0].mxu0
        %v4370 = vadd.f32 %v3953, %v4369
        %v4371 = vpop.f32.mrb[0].mxu0
        %4372 = vmatprep.mubr.bf16.mxu0 %v2011
        %4373 = vmatmul.mubr.bf16.gmra.mrb[0].mxu0 %v1673
        %v4374 = vpop.f32.mrb[0].mxu0
        %v4375 = vadd.f32 %v3958, %v4374
        %v4376 = vpop.f32.mrb[0].mxu0
        %v4377 = vpop.f32.mrb[0].mxu0
        %v4378 = vadd.f32 %v3961, %v4377
        %v4379 = vpop.f32.mrb[0].mxu0
        %4380 = vmatprep.mubr.bf16.mxu0 %v2019
        %4381 = vmatmul.mubr.bf16.gmra.mrb[0].mxu0 %v1674
        %v4382 = vpop.f32.mrb[0].mxu0
        %v4383 = vadd.f32 %v3966, %v4382
        %v4384 = vpop.f32.mrb[0].mxu0
        %v4385 = vpop.f32.mrb[0].mxu0
        %v4386 = vadd.f32 %v3969, %v4385
        %v4387 = vpop.f32.mrb[0].mxu0
        %4388 = vmatprep.mubr.bf16.mxu0 %v2027
        %4389 = vmatmul.mubr.bf16.gmra.mrb[0].mxu0 %v1675
        %v4390 = vpop.f32.mrb[0].mxu0
        %v4391 = vadd.f32 %v3974, %v4390
        %v4392 = vpop.f32.mrb[0].mxu0
        %v4393 = vpop.f32.mrb[0].mxu0
        %v4394 = vadd.f32 %v3977, %v4393
        %v4395 = vpop.f32.mrb[0].mxu0
        %4396 = vmatprep.mubr.bf16.mxu0 %v2035
        %4397 = vmatmul.mubr.bf16.gmra.mrb[0].mxu0 %v1676
        %v4398 = vpop.f32.mrb[0].mxu0
        %v4399 = vadd.f32 %v3982, %v4398
        %v4400 = vpop.f32.mrb[0].mxu0
        %v4401 = vpop.f32.mrb[0].mxu0
        %v4402 = vadd.f32 %v3985, %v4401
        %v4403 = vpop.f32.mrb[0].mxu0
        %4404 = vmatprep.mubr.bf16.mxu0 %v2043
        %4405 = vmatmul.mubr.bf16.gmra.mrb[0].mxu0 %v1677
        %v4406 = vpop.f32.mrb[0].mxu0
        %v4407 = vadd.f32 %v3990, %v4406
        %v4408 = vpop.f32.mrb[0].mxu0
        %v4409 = vpop.f32.mrb[0].mxu0
        %v4410 = vadd.f32 %v3993, %v4409
        %v4411 = vpop.f32.mrb[0].mxu0
        %4412 = vmatprep.mubr.bf16.mxu0 %v2051
        %4413 = vmatmul.mubr.bf16.gmra.mrb[0].mxu0 %v1678
        %v4414 = vpop.f32.mrb[0].mxu0
        %v4415 = vadd.f32 %v3998, %v4414
        %v4416 = vpop.f32.mrb[0].mxu0
        %v4417 = vpop.f32.mrb[0].mxu0
        %v4418 = vadd.f32 %v4001, %v4417
        %v4419 = vpop.f32.mrb[0].mxu0
        %4420 = vmatprep.mubr.bf16.mxu0 %v2059
        %4421 = vmatmul.mubr.bf16.gmra.mrb[0].mxu0 %v1679
        %v4422 = vpop.f32.mrb[0].mxu0
        %v4423 = vadd.f32 %v4006, %v4422
        %v4424 = vpop.f32.mrb[0].mxu0
        %v4425 = vpop.f32.mrb[0].mxu0
        %v4426 = vadd.f32 %v4009, %v4425
        %v4427 = vpop.f32.mrb[0].mxu0
        %4428 = vmatprep.mubr.bf16.mxu0 %v2067
        %4429 = vmatmul.mubr.bf16.gmra.mrb[0].mxu0 %v1680
        %v4430 = vpop.f32.mrb[0].mxu0
        %v4431 = vadd.f32 %v4014, %v4430
        %v4432 = vpop.f32.mrb[0].mxu0
        %v4433 = vpop.f32.mrb[0].mxu0
        %v4434 = vadd.f32 %v4017, %v4433
        %v4435 = vpop.f32.mrb[0].mxu0
        %4436 = vmatprep.mubr.bf16.mxu0 %v2075
        %4437 = vmatmul.mubr.bf16.gmra.mrb[0].mxu0 %v1681
        %v4438 = vpop.f32.mrb[0].mxu0
        %v4439 = vadd.f32 %v4022, %v4438
        %v4440 = vpop.f32.mrb[0].mxu0
        %v4441 = vpop.f32.mrb[0].mxu0
        %v4442 = vadd.f32 %v4025, %v4441
        %v4443 = vpop.f32.mrb[0].mxu0
        %4444 = vmatprep.mubr.bf16.mxu0 %v2326
        %4445 = vmatmul.mubr.bf16.gmra.mrb[0].mxu0 %v1682
        %v4446 = vpop.f32.mrb[0].mxu0
        %v4447 = vadd.f32 %v4030, %v4446
        %v4448 = vpop.f32.mrb[0].mxu0
        %v4449 = vpop.f32.mrb[0].mxu0
        %v4450 = vadd.f32 %v4033, %v4449
        %v4451 = vpop.f32.mrb[0].mxu0
        %4452 = vmatprep.mubr.bf16.mxu0 %v2334
        %4453 = vmatmul.mubr.bf16.gmra.mrb[0].mxu0 %v1683
        %v4454 = vpop.f32.mrb[0].mxu0
        %v4455 = vadd.f32 %v4038, %v4454
        %v4456 = vpop.f32.mrb[0].mxu0
        %v4457 = vpop.f32.mrb[0].mxu0
        %v4458 = vadd.f32 %v4041, %v4457
        %v4459 = vpop.f32.mrb[0].mxu0
        %4460 = vmatprep.mubr.bf16.mxu0 %v2352
        %4461 = vmatmul.mubr.bf16.gmra.mrb[0].mxu0 %v1684
        %v4462 = vpop.f32.mrb[0].mxu0
        %v4463 = vadd.f32 %v4046, %v4462
        %v4464 = vpop.f32.mrb[0].mxu0
        %v4465 = vpop.f32.mrb[0].mxu0
        %v4466 = vadd.f32 %v4049, %v4465
        %v4467 = vpop.f32.mrb[0].mxu0
        %4468 = vmatprep.mubr.bf16.mxu0 %v2360
        %4469 = vmatmul.mubr.bf16.gmra.mrb[0].mxu0 %v1685
        %v4470 = vpop.f32.mrb[0].mxu0
        %v4471 = vadd.f32 %v4054, %v4470
        %v4472 = vpop.f32.mrb[0].mxu0
        %v4473 = vpop.f32.mrb[0].mxu0
        %v4474 = vadd.f32 %v4057, %v4473
        %v4475 = vpop.f32.mrb[0].mxu0
        %4476 = vdwg.mxu0
        %4477 = vmatprep.subr.bf16.mxu0 0
        %4478 = vmatpush1.bf16.msra.mxu0 %v2729
        %4479 = vmatprep.subr.bf16.mxu0 0
        %4480 = vmatpush1.bf16.msra.mxu0 %v2730
        %4481 = vmatprep.subr.bf16.mxu0 0
        %4482 = vmatpush1.bf16.msra.mxu0 %v2731
        %4483 = vmatprep.subr.bf16.mxu0 0
        %4484 = vmatpush1.bf16.msra.mxu0 %v2732
        %4485 = vmatprep.subr.bf16.mxu0 0
        %4486 = vmatpush1.bf16.msra.mxu0 %v2733
        %4487 = vmatprep.subr.bf16.mxu0 0
        %4488 = vmatpush1.bf16.msra.mxu0 %v2734
        %4489 = vmatprep.subr.bf16.mxu0 0
        %4490 = vmatpush1.bf16.msra.mxu0 %v2735
        %4491 = vmatprep.subr.bf16.mxu0 0
        %4492 = vmatpush1.bf16.msra.mxu0 %v2736
        %4493 = vmatprep.subr.bf16.mxu0 0
        %4494 = vmatpush1.bf16.msra.mxu0 0
        %4495 = vmatprep.subr.bf16.mxu0 0
        %4496 = vmatpush1.bf16.msra.mxu0 0
        %4497 = vmatprep.subr.bf16.mxu0 0
        %4498 = vmatpush1.bf16.msra.mxu0 0
        %4499 = vmatprep.subr.bf16.mxu0 0
        %4500 = vmatpush1.bf16.msra.mxu0 0
        %4501 = vmatprep.subr.bf16.mxu0 0
        %4502 = vmatpush1.bf16.msra.mxu0 0
        %4503 = vmatprep.subr.bf16.mxu0 0
        %4504 = vmatpush1.bf16.msra.mxu0 0
        %4505 = vmatprep.subr.bf16.mxu0 0
        %4506 = vmatpush1.bf16.msra.mxu0 0
        %4507 = vmatprep.subr.bf16.mxu0 0
        %4508 = vmatpush1.bf16.msra.mxu0 0
        %4509 = vmatprep.mubr.bf16.mxu0 0
        %4510 = vmatmul.mubr.bf16.gmra.mrb[0].mxu0 %v2184
        %v4511 = vpop.f32.mrb[0].mxu0
        %v4512 = vadd.f32 %v4095, %v4511
        %v4513 = vpop.f32.mrb[0].mxu0
        %v4514 = vpop.f32.mrb[0].mxu0
        %v4515 = vadd.f32 %v4098, %v4514
        %v4516 = vpop.f32.mrb[0].mxu0
        %4517 = vmatprep.mubr.bf16.mxu0 0
        %4518 = vmatmul.mubr.bf16.gmra.mrb[0].mxu0 %v2186
        %v4519 = vpop.f32.mrb[0].mxu0
        %v4520 = vadd.f32 %v4103, %v4519
        %v4521 = vpop.f32.mrb[0].mxu0
        %v4522 = vpop.f32.mrb[0].mxu0
        %v4523 = vadd.f32 %v4106, %v4522
        %v4524 = vpop.f32.mrb[0].mxu0
        %4525 = vmatprep.mubr.bf16.mxu0 0
        %4526 = vmatmul.mubr.bf16.gmra.mrb[0].mxu0 %v2188
        %v4527 = vpop.f32.mrb[0].mxu0
        %v4528 = vadd.f32 %v4111, %v4527
        %v4529 = vpop.f32.mrb[0].mxu0
        %v4530 = vpop.f32.mrb[0].mxu0
        %v4531 = vadd.f32 %v4114, %v4530
        %v4532 = vpop.f32.mrb[0].mxu0
        %4533 = vmatprep.mubr.bf16.mxu0 0
        %4534 = vmatmul.mubr.bf16.gmra.mrb[0].mxu0 %v2190
        %v4535 = vpop.f32.mrb[0].mxu0
        %v4536 = vadd.f32 %v4119, %v4535
        %v4537 = vpop.f32.mrb[0].mxu0
        %v4538 = vpop.f32.mrb[0].mxu0
        %v4539 = vadd.f32 %v4122, %v4538
        %v4540 = vpop.f32.mrb[0].mxu0
        %4541 = vmatprep.mubr.bf16.mxu0 0
        %4542 = vmatmul.mubr.bf16.gmra.mrb[0].mxu0 %v2192
        %v4543 = vpop.f32.mrb[0].mxu0
        %v4544 = vadd.f32 %v4127, %v4543
        %v4545 = vpop.f32.mrb[0].mxu0
        %v4546 = vpop.f32.mrb[0].mxu0
        %v4547 = vadd.f32 %v4130, %v4546
        %v4548 = vpop.f32.mrb[0].mxu0
        %4549 = vmatprep.mubr.bf16.mxu0 0
        %4550 = vmatmul.mubr.bf16.gmra.mrb[0].mxu0 %v2194
        %v4551 = vpop.f32.mrb[0].mxu0
        %v4552 = vadd.f32 %v4135, %v4551
        %v4553 = vpop.f32.mrb[0].mxu0
        %v4554 = vpop.f32.mrb[0].mxu0
        %v4555 = vadd.f32 %v4138, %v4554
        %v4556 = vpop.f32.mrb[0].mxu0
        %4557 = vmatprep.mubr.bf16.mxu0 0
        %4558 = vmatmul.mubr.bf16.gmra.mrb[0].mxu0 %v2196
        %v4559 = vpop.f32.mrb[0].mxu0
        %v4560 = vadd.f32 %v4143, %v4559
        %v4561 = vpop.f32.mrb[0].mxu0
        %v4562 = vpop.f32.mrb[0].mxu0
        %v4563 = vadd.f32 %v4146, %v4562
        %v4564 = vpop.f32.mrb[0].mxu0
        %4565 = vmatprep.mubr.bf16.mxu0 0
        %4566 = vmatmul.mubr.bf16.gmra.mrb[0].mxu0 %v2198
        %v4567 = vpop.f32.mrb[0].mxu0
        %v4568 = vadd.f32 %v4151, %v4567
        %v4569 = vpop.f32.mrb[0].mxu0
        %v4570 = vpop.f32.mrb[0].mxu0
        %v4571 = vadd.f32 %v4154, %v4570
        %v4572 = vpop.f32.mrb[0].mxu0
        %4573 = vmatprep.mubr.bf16.mxu0 0
        %4574 = vmatmul.mubr.bf16.gmra.mrb[0].mxu0 %v2200
        %v4575 = vpop.f32.mrb[0].mxu0
        %v4576 = vadd.f32 %v4159, %v4575
        %v4577 = vpop.f32.mrb[0].mxu0
        %v4578 = vpop.f32.mrb[0].mxu0
        %v4579 = vadd.f32 %v4162, %v4578
        %v4580 = vpop.f32.mrb[0].mxu0
        %4581 = vmatprep.mubr.bf16.mxu0 0
        %4582 = vmatmul.mubr.bf16.gmra.mrb[0].mxu0 %v2202
        %v4583 = vpop.f32.mrb[0].mxu0
        %v4584 = vadd.f32 %v4167, %v4583
        %v4585 = vpop.f32.mrb[0].mxu0
        %v4586 = vpop.f32.mrb[0].mxu0
        %v4587 = vadd.f32 %v4170, %v4586
        %v4588 = vpop.f32.mrb[0].mxu0
        %4589 = vmatprep.mubr.bf16.mxu0 0
        %4590 = vmatmul.mubr.bf16.gmra.mrb[0].mxu0 %v2204
        %v4591 = vpop.f32.mrb[0].mxu0
        %v4592 = vadd.f32 %v4175, %v4591
        %v4593 = vpop.f32.mrb[0].mxu0
        %v4594 = vpop.f32.mrb[0].mxu0
        %v4595 = vadd.f32 %v4178, %v4594
        %v4596 = vpop.f32.mrb[0].mxu0
        %4597 = vmatprep.mubr.bf16.mxu0 0
        %4598 = vmatmul.mubr.bf16.gmra.mrb[0].mxu0 %v2206
        %v4599 = vpop.f32.mrb[0].mxu0
        %v4600 = vadd.f32 %v4183, %v4599
        %v4601 = vpop.f32.mrb[0].mxu0
        %v4602 = vpop.f32.mrb[0].mxu0
        %v4603 = vadd.f32 %v4186, %v4602
        %v4604 = vpop.f32.mrb[0].mxu0
        %4605 = vmatprep.mubr.bf16.mxu0 0
        %4606 = vmatmul.mubr.bf16.gmra.mrb[0].mxu0 %v2208
        %v4607 = vpop.f32.mrb[0].mxu0
        %v4608 = vadd.f32 %v4191, %v4607
        %v4609 = vpop.f32.mrb[0].mxu0
        %v4610 = vpop.f32.mrb[0].mxu0
        %v4611 = vadd.f32 %v4194, %v4610
        %v4612 = vpop.f32.mrb[0].mxu0
        %4613 = vmatprep.mubr.bf16.mxu0 0
        %4614 = vmatmul.mubr.bf16.gmra.mrb[0].mxu0 %v2210
        %v4615 = vpop.f32.mrb[0].mxu0
        %v4616 = vadd.f32 %v4199, %v4615
        %v4617 = vpop.f32.mrb[0].mxu0
        %v4618 = vpop.f32.mrb[0].mxu0
        %v4619 = vadd.f32 %v4202, %v4618
        %v4620 = vpop.f32.mrb[0].mxu0
        %4621 = vmatprep.mubr.bf16.mxu0 0
        %4622 = vmatmul.mubr.bf16.gmra.mrb[0].mxu0 %v2212
        %v4623 = vpop.f32.mrb[0].mxu0
        %v4624 = vadd.f32 %v4207, %v4623
        %v4625 = vpop.f32.mrb[0].mxu0
        %v4626 = vpop.f32.mrb[0].mxu0
        %v4627 = vadd.f32 %v4210, %v4626
        %v4628 = vpop.f32.mrb[0].mxu0
        %4629 = vmatprep.mubr.bf16.mxu0 0
        %4630 = vmatmul.mubr.bf16.gmra.mrb[0].mxu0 %v2214
        %v4631 = vpop.f32.mrb[0].mxu0
        %v4632 = vadd.f32 %v4215, %v4631
        %v4633 = vpop.f32.mrb[0].mxu0
        %v4634 = vpop.f32.mrb[0].mxu0
        %v4635 = vadd.f32 %v4218, %v4634
        %v4636 = vpop.f32.mrb[0].mxu0
        %4637 = vmatprep.mubr.bf16.mxu0 0
        %4638 = vmatmul.mubr.bf16.gmra.mrb[0].mxu0 %v2216
        %v4639 = vpop.f32.mrb[0].mxu0
        %v4640 = vadd.f32 %v4223, %v4639
        %v4641 = vpop.f32.mrb[0].mxu0
        %v4642 = vpop.f32.mrb[0].mxu0
        %v4643 = vadd.f32 %v4226, %v4642
        %v4644 = vpop.f32.mrb[0].mxu0
        %4645 = vmatprep.mubr.bf16.mxu0 0
        %4646 = vmatmul.mubr.bf16.gmra.mrb[0].mxu0 %v2218
        %v4647 = vpop.f32.mrb[0].mxu0
        %v4648 = vadd.f32 %v4231, %v4647
        %v4649 = vpop.f32.mrb[0].mxu0
        %v4650 = vpop.f32.mrb[0].mxu0
        %v4651 = vadd.f32 %v4234, %v4650
        %v4652 = vpop.f32.mrb[0].mxu0
        %4653 = vmatprep.mubr.bf16.mxu0 0
        %4654 = vmatmul.mubr.bf16.gmra.mrb[0].mxu0 %v2220
        %v4655 = vpop.f32.mrb[0].mxu0
        %v4656 = vadd.f32 %v4239, %v4655
        %v4657 = vpop.f32.mrb[0].mxu0
        %v4658 = vpop.f32.mrb[0].mxu0
        %v4659 = vadd.f32 %v4242, %v4658
        %v4660 = vpop.f32.mrb[0].mxu0
        %4661 = vmatprep.mubr.bf16.mxu0 0
        %4662 = vmatmul.mubr.bf16.gmra.mrb[0].mxu0 %v2222
        %v4663 = vpop.f32.mrb[0].mxu0
        %v4664 = vadd.f32 %v4247, %v4663
        %v4665 = vpop.f32.mrb[0].mxu0
        %v4666 = vpop.f32.mrb[0].mxu0
        %v4667 = vadd.f32 %v4250, %v4666
        %v4668 = vpop.f32.mrb[0].mxu0
        %4669 = vmatprep.mubr.bf16.mxu0 0
        %4670 = vmatmul.mubr.bf16.gmra.mrb[0].mxu0 %v2224
        %v4671 = vpop.f32.mrb[0].mxu0
        %v4672 = vadd.f32 %v4255, %v4671
        %v4673 = vpop.f32.mrb[0].mxu0
        %v4674 = vpop.f32.mrb[0].mxu0
        %v4675 = vadd.f32 %v4258, %v4674
        %v4676 = vpop.f32.mrb[0].mxu0
        %4677 = vmatprep.mubr.bf16.mxu0 0
        %4678 = vmatmul.mubr.bf16.gmra.mrb[0].mxu0 %v2226
        %v4679 = vpop.f32.mrb[0].mxu0
        %v4680 = vadd.f32 %v4263, %v4679
        %v4681 = vpop.f32.mrb[0].mxu0
        %v4682 = vpop.f32.mrb[0].mxu0
        %v4683 = vadd.f32 %v4266, %v4682
        %v4684 = vpop.f32.mrb[0].mxu0
        %4685 = vmatprep.mubr.bf16.mxu0 0
        %4686 = vmatmul.mubr.bf16.gmra.mrb[0].mxu0 %v2228
        %v4687 = vpop.f32.mrb[0].mxu0
        %v4688 = vadd.f32 %v4271, %v4687
        %v4689 = vpop.f32.mrb[0].mxu0
        %v4690 = vpop.f32.mrb[0].mxu0
        %v4691 = vadd.f32 %v4274, %v4690
        %v4692 = vpop.f32.mrb[0].mxu0
        %4693 = vmatprep.mubr.bf16.mxu0 0
        %4694 = vmatmul.mubr.bf16.gmra.mrb[0].mxu0 %v2230
        %v4695 = vpop.f32.mrb[0].mxu0
        %v4696 = vadd.f32 %v4279, %v4695
        %v4697 = vpop.f32.mrb[0].mxu0
        %v4698 = vpop.f32.mrb[0].mxu0
        %v4699 = vadd.f32 %v4282, %v4698
        %v4700 = vpop.f32.mrb[0].mxu0
        %4701 = vmatprep.mubr.bf16.mxu0 0
        %4702 = vmatmul.mubr.bf16.gmra.mrb[0].mxu0 %v2232
        %v4703 = vpop.f32.mrb[0].mxu0
        %v4704 = vadd.f32 %v4287, %v4703
        %v4705 = vpop.f32.mrb[0].mxu0
        %v4706 = vpop.f32.mrb[0].mxu0
        %v4707 = vadd.f32 %v4290, %v4706
        %v4708 = vpop.f32.mrb[0].mxu0
        %4709 = vmatprep.mubr.bf16.mxu0 0
        %4710 = vmatmul.mubr.bf16.gmra.mrb[0].mxu0 %v2234
        %v4711 = vpop.f32.mrb[0].mxu0
        %v4712 = vadd.f32 %v4295, %v4711
        %v4713 = vpop.f32.mrb[0].mxu0
        %v4714 = vpop.f32.mrb[0].mxu0
        %v4715 = vadd.f32 %v4298, %v4714
        %v4716 = vpop.f32.mrb[0].mxu0
        %4717 = vmatprep.mubr.bf16.mxu0 0
        %4718 = vmatmul.mubr.bf16.gmra.mrb[0].mxu0 %v2236
        %v4719 = vpop.f32.mrb[0].mxu0
        %v4720 = vadd.f32 %v4303, %v4719
        %v4721 = vpop.f32.mrb[0].mxu0
        %v4722 = vpop.f32.mrb[0].mxu0
        %v4723 = vadd.f32 %v4306, %v4722
        %v4724 = vpop.f32.mrb[0].mxu0
        %4725 = vmatprep.mubr.bf16.mxu0 0
        %4726 = vmatmul.mubr.bf16.gmra.mrb[0].mxu0 %v2238
        %v4727 = vpop.f32.mrb[0].mxu0
        %v4728 = vadd.f32 %v4311, %v4727
        %v4729 = vpop.f32.mrb[0].mxu0
        %v4730 = vpop.f32.mrb[0].mxu0
        %v4731 = vadd.f32 %v4314, %v4730
        %v4732 = vpop.f32.mrb[0].mxu0
        %4733 = vmatprep.mubr.bf16.mxu0 0
        %4734 = vmatmul.mubr.bf16.gmra.mrb[0].mxu0 %v2240
        %v4735 = vpop.f32.mrb[0].mxu0
        %v4736 = vadd.f32 %v4319, %v4735
        %v4737 = vpop.f32.mrb[0].mxu0
        %v4738 = vpop.f32.mrb[0].mxu0
        %v4739 = vadd.f32 %v4322, %v4738
        %v4740 = vpop.f32.mrb[0].mxu0
        %4741 = vmatprep.mubr.bf16.mxu0 0
        %4742 = vmatmul.mubr.bf16.gmra.mrb[0].mxu0 %v2242
        %v4743 = vpop.f32.mrb[0].mxu0
        %v4744 = vadd.f32 %v4327, %v4743
        %v4745 = vpop.f32.mrb[0].mxu0
        %v4746 = vpop.f32.mrb[0].mxu0
        %v4747 = vadd.f32 %v4330, %v4746
        %v4748 = vpop.f32.mrb[0].mxu0
        %4749 = vmatprep.mubr.bf16.mxu0 0
        %4750 = vmatmul.mubr.bf16.gmra.mrb[0].mxu0 %v2244
        %v4751 = vpop.f32.mrb[0].mxu0
        %v4752 = vadd.f32 %v4335, %v4751
        %v4753 = vpop.f32.mrb[0].mxu0
        %v4754 = vpop.f32.mrb[0].mxu0
        %v4755 = vadd.f32 %v4338, %v4754
        %v4756 = vpop.f32.mrb[0].mxu0
        %4757 = vmatprep.mubr.bf16.mxu0 0
        %4758 = vmatmul.mubr.bf16.gmra.mrb[0].mxu0 %v2246
        %v4759 = vpop.f32.mrb[0].mxu0
        %v4760 = vadd.f32 %v4343, %v4759
        %v4761 = vpop.f32.mrb[0].mxu0
        %v4762 = vpop.f32.mrb[0].mxu0
        %v4763 = vadd.f32 %v4346, %v4762
        %v4764 = vpop.f32.mrb[0].mxu0
        %4765 = vmatprep.mubr.bf16.mxu0 0
        %4766 = vmatmul.mubr.bf16.gmra.mrb[0].mxu0 %v2248
        %v4767 = vpop.f32.mrb[0].mxu0
        %v4768 = vadd.f32 %v4351, %v4767
        %v4769 = vpop.f32.mrb[0].mxu0
        %v4770 = vpop.f32.mrb[0].mxu0
        %v4771 = vadd.f32 %v4354, %v4770
        %v4772 = vpop.f32.mrb[0].mxu0
        %4773 = vmatprep.mubr.bf16.mxu0 0
        %4774 = vmatmul.mubr.bf16.gmra.mrb[0].mxu0 %v2250
        %v4775 = vpop.f32.mrb[0].mxu0
        %v4776 = vadd.f32 %v4359, %v4775
        %v4777 = vpop.f32.mrb[0].mxu0
        %v4778 = vpop.f32.mrb[0].mxu0
        %v4779 = vadd.f32 %v4362, %v4778
        %v4780 = vpop.f32.mrb[0].mxu0
        %4781 = vmatprep.mubr.bf16.mxu0 0
        %4782 = vmatmul.mubr.bf16.gmra.mrb[0].mxu0 %v2252
        %v4783 = vpop.f32.mrb[0].mxu0
        %v4784 = vadd.f32 %v4367, %v4783
        %v4785 = vpop.f32.mrb[0].mxu0
        %v4786 = vpop.f32.mrb[0].mxu0
        %v4787 = vadd.f32 %v4370, %v4786
        %v4788 = vpop.f32.mrb[0].mxu0
        %4789 = vmatprep.mubr.bf16.mxu0 0
        %4790 = vmatmul.mubr.bf16.gmra.mrb[0].mxu0 %v2254
        %v4791 = vpop.f32.mrb[0].mxu0
        %v4792 = vadd.f32 %v4375, %v4791
        %v4793 = vpop.f32.mrb[0].mxu0
        %v4794 = vpop.f32.mrb[0].mxu0
        %v4795 = vadd.f32 %v4378, %v4794
        %v4796 = vpop.f32.mrb[0].mxu0
        %4797 = vmatprep.mubr.bf16.mxu0 0
        %4798 = vmatmul.mubr.bf16.gmra.mrb[0].mxu0 %v2256
        %v4799 = vpop.f32.mrb[0].mxu0
        %v4800 = vadd.f32 %v4383, %v4799
        %v4801 = vpop.f32.mrb[0].mxu0
        %v4802 = vpop.f32.mrb[0].mxu0
        %v4803 = vadd.f32 %v4386, %v4802
        %v4804 = vpop.f32.mrb[0].mxu0
        %4805 = vmatprep.mubr.bf16.mxu0 0
        %4806 = vmatmul.mubr.bf16.gmra.mrb[0].mxu0 %v2258
        %v4807 = vpop.f32.mrb[0].mxu0
        %v4808 = vadd.f32 %v4391, %v4807
        %v4809 = vpop.f32.mrb[0].mxu0
        %v4810 = vpop.f32.mrb[0].mxu0
        %v4811 = vadd.f32 %v4394, %v4810
        %v4812 = vpop.f32.mrb[0].mxu0
        %4813 = vmatprep.mubr.bf16.mxu0 0
        %4814 = vmatmul.mubr.bf16.gmra.mrb[0].mxu0 %v2260
        %v4815 = vpop.f32.mrb[0].mxu0
        %v4816 = vadd.f32 %v4399, %v4815
        %v4817 = vpop.f32.mrb[0].mxu0
        %v4818 = vpop.f32.mrb[0].mxu0
        %v4819 = vadd.f32 %v4402, %v4818
        %v4820 = vpop.f32.mrb[0].mxu0
        %4821 = vmatprep.mubr.bf16.mxu0 0
        %4822 = vmatmul.mubr.bf16.gmra.mrb[0].mxu0 %v2262
        %v4823 = vpop.f32.mrb[0].mxu0
        %v4824 = vadd.f32 %v4407, %v4823
        %v4825 = vpop.f32.mrb[0].mxu0
        %v4826 = vpop.f32.mrb[0].mxu0
        %v4827 = vadd.f32 %v4410, %v4826
        %v4828 = vpop.f32.mrb[0].mxu0
        %4829 = vmatprep.mubr.bf16.mxu0 0
        %4830 = vmatmul.mubr.bf16.gmra.mrb[0].mxu0 %v2264
        %v4831 = vpop.f32.mrb[0].mxu0
        %v4832 = vadd.f32 %v4415, %v4831
        %v4833 = vpop.f32.mrb[0].mxu0
        %v4834 = vpop.f32.mrb[0].mxu0
        %v4835 = vadd.f32 %v4418, %v4834
        %v4836 = vpop.f32.mrb[0].mxu0
        %4837 = vmatprep.mubr.bf16.mxu0 0
        %4838 = vmatmul.mubr.bf16.gmra.mrb[0].mxu0 %v2266
        %v4839 = vpop.f32.mrb[0].mxu0
        %v4840 = vadd.f32 %v4423, %v4839
        %v4841 = vpop.f32.mrb[0].mxu0
        %v4842 = vpop.f32.mrb[0].mxu0
        %v4843 = vadd.f32 %v4426, %v4842
        %v4844 = vpop.f32.mrb[0].mxu0
        %4845 = vmatprep.mubr.bf16.mxu0 0
        %4846 = vmatmul.mubr.bf16.gmra.mrb[0].mxu0 %v2268
        %v4847 = vpop.f32.mrb[0].mxu0
        %v4848 = vadd.f32 %v4431, %v4847
        %v4849 = vpop.f32.mrb[0].mxu0
        %v4850 = vpop.f32.mrb[0].mxu0
        %v4851 = vadd.f32 %v4434, %v4850
        %v4852 = vpop.f32.mrb[0].mxu0
        %4853 = vmatprep.mubr.bf16.mxu0 0
        %4854 = vmatmul.mubr.bf16.gmra.mrb[0].mxu0 %v2270
        %v4855 = vpop.f32.mrb[0].mxu0
        %v4856 = vadd.f32 %v4439, %v4855
        %v4857 = vpop.f32.mrb[0].mxu0
        %v4858 = vpop.f32.mrb[0].mxu0
        %v4859 = vadd.f32 %v4442, %v4858
        %v4860 = vpop.f32.mrb[0].mxu0
        %4861 = vmatprep.mubr.bf16.mxu0 0
        %4862 = vmatmul.mubr.bf16.gmra.mrb[0].mxu0 %v2340
        %v4863 = vpop.f32.mrb[0].mxu0
        %v4864 = vadd.f32 %v4447, %v4863
        %v4865 = vpop.f32.mrb[0].mxu0
        %v4866 = vpop.f32.mrb[0].mxu0
        %v4867 = vadd.f32 %v4450, %v4866
        %v4868 = vpop.f32.mrb[0].mxu0
        %4869 = vmatprep.mubr.bf16.mxu0 0
        %4870 = vmatmul.mubr.bf16.gmra.mrb[0].mxu0 %v2342
        %v4871 = vpop.f32.mrb[0].mxu0
        %v4872 = vadd.f32 %v4455, %v4871
        %v4873 = vpop.f32.mrb[0].mxu0
        %v4874 = vpop.f32.mrb[0].mxu0
        %v4875 = vadd.f32 %v4458, %v4874
        %v4876 = vpop.f32.mrb[0].mxu0
        %4877 = vmatprep.mubr.bf16.mxu0 0
        %4878 = vmatmul.mubr.bf16.gmra.mrb[0].mxu0 %v2366
        %v4879 = vpop.f32.mrb[0].mxu0
        %v4880 = vadd.f32 %v4463, %v4879
        %v4881 = vpop.f32.mrb[0].mxu0
        %v4882 = vpop.f32.mrb[0].mxu0
        %v4883 = vadd.f32 %v4466, %v4882
        %v4884 = vpop.f32.mrb[0].mxu0
        %4885 = vmatprep.mubr.bf16.mxu0 0
        %4886 = vmatmul.mubr.bf16.gmra.mrb[0].mxu0 %v2368
        %v4887 = vpop.f32.mrb[0].mxu0
        %v4888 = vadd.f32 %v4471, %v4887
        %v4889 = vpop.f32.mrb[0].mxu0
        %v4890 = vpop.f32.mrb[0].mxu0
        %v4891 = vadd.f32 %v4474, %v4890
        %v4892 = vpop.f32.mrb[0].mxu0
        %4893 = vdwg.mxu0
        %v4894 = vmax.f32 %v4512, 0.0
        %v4895 = vmax.f32 %v4515, 0.0
        %v4896 = vmax.f32 %v4520, 0.0
        %v4897 = vmax.f32 %v4523, 0.0
        %v4898 = vmax.f32 %v4528, 0.0
        %v4899 = vmax.f32 %v4531, 0.0
        %v4900 = vmax.f32 %v4536, 0.0
        %v4901 = vmax.f32 %v4539, 0.0
        %v4902 = vmax.f32 %v4544, 0.0
        %v4903 = vmax.f32 %v4547, 0.0
        %v4904 = vmax.f32 %v4552, 0.0
        %v4905 = vmax.f32 %v4555, 0.0
        %v4906 = vmax.f32 %v4560, 0.0
        %v4907 = vmax.f32 %v4563, 0.0
        %v4908 = vmax.f32 %v4568, 0.0
        %v4909 = vmax.f32 %v4571, 0.0
        %v4910 = vmax.f32 %v4576, 0.0
        %v4911 = vmax.f32 %v4579, 0.0
        %v4912 = vmax.f32 %v4584, 0.0
        %v4913 = vmax.f32 %v4587, 0.0
        %v4914 = vmax.f32 %v4592, 0.0
        %v4915 = vmax.f32 %v4595, 0.0
        %v4916 = vmax.f32 %v4600, 0.0
        %v4917 = vmax.f32 %v4603, 0.0
        %v4918 = vmax.f32 %v4608, 0.0
        %v4919 = vmax.f32 %v4611, 0.0
        %v4920 = vmax.f32 %v4616, 0.0
        %v4921 = vmax.f32 %v4619, 0.0
        %v4922 = vmax.f32 %v4624, 0.0
        %v4923 = vmax.f32 %v4627, 0.0
        %v4924 = vmax.f32 %v4632, 0.0
        %v4925 = vmax.f32 %v4635, 0.0
        %v4926 = vmax.f32 %v4640, 0.0
        %v4927 = vmax.f32 %v4643, 0.0
        %v4928 = vmax.f32 %v4648, 0.0
        %v4929 = vmax.f32 %v4651, 0.0
        %v4930 = vmax.f32 %v4656, 0.0
        %v4931 = vmax.f32 %v4659, 0.0
        %v4932 = vmax.f32 %v4664, 0.0
        %v4933 = vmax.f32 %v4667, 0.0
        %v4934 = vmax.f32 %v4672, 0.0
        %v4935 = vmax.f32 %v4675, 0.0
        %v4936 = vmax.f32 %v4680, 0.0
        %v4937 = vmax.f32 %v4683, 0.0
        %v4938 = vmax.f32 %v4688, 0.0
        %v4939 = vmax.f32 %v4691, 0.0
        %v4940 = vmax.f32 %v4696, 0.0
        %v4941 = vmax.f32 %v4699, 0.0
        %v4942 = vmax.f32 %v4704, 0.0
        %v4943 = vmax.f32 %v4707, 0.0
        %v4944 = vmax.f32 %v4712, 0.0
        %v4945 = vmax.f32 %v4715, 0.0
        %v4946 = vmax.f32 %v4720, 0.0
        %v4947 = vmax.f32 %v4723, 0.0
        %v4948 = vmax.f32 %v4728, 0.0
        %v4949 = vmax.f32 %v4731, 0.0
        %v4950 = vmax.f32 %v4736, 0.0
        %v4951 = vmax.f32 %v4739, 0.0
        %v4952 = vmax.f32 %v4744, 0.0
        %v4953 = vmax.f32 %v4747, 0.0
        %v4954 = vmax.f32 %v4752, 0.0
        %v4955 = vmax.f32 %v4755, 0.0
        %v4956 = vmax.f32 %v4760, 0.0
        %v4957 = vmax.f32 %v4763, 0.0
        %v4958 = vmax.f32 %v4768, 0.0
        %v4959 = vmax.f32 %v4771, 0.0
        %v4960 = vmax.f32 %v4776, 0.0
        %v4961 = vmax.f32 %v4779, 0.0
        %v4962 = vmax.f32 %v4784, 0.0
        %v4963 = vmax.f32 %v4787, 0.0
        %v4964 = vmax.f32 %v4792, 0.0
        %v4965 = vmax.f32 %v4795, 0.0
        %v4966 = vmax.f32 %v4800, 0.0
        %v4967 = vmax.f32 %v4803, 0.0
        %v4968 = vmax.f32 %v4808, 0.0
        %v4969 = vmax.f32 %v4811, 0.0
        %v4970 = vmax.f32 %v4816, 0.0
        %v4971 = vmax.f32 %v4819, 0.0
        %v4972 = vmax.f32 %v4824, 0.0
        %v4973 = vmax.f32 %v4827, 0.0
        %v4974 = vmax.f32 %v4832, 0.0
        %v4975 = vmax.f32 %v4835, 0.0
        %v4976 = vmax.f32 %v4840, 0.0
        %v4977 = vmax.f32 %v4843, 0.0
        %v4978 = vmax.f32 %v4848, 0.0
        %v4979 = vmax.f32 %v4851, 0.0
        %v4980 = vmax.f32 %v4856, 0.0
        %v4981 = vmax.f32 %v4859, 0.0
        %v4982 = vmax.f32 %v4864, 0.0
        %v4983 = vmax.f32 %v4867, 0.0
        %v4984 = vmax.f32 %v4872, 0.0
        %v4985 = vmax.f32 %v4875, 0.0
        %v4986 = vmax.f32 %v4880, 0.0
        %v4987 = vmax.f32 %v4883, 0.0
        %v4988 = vmax.f32 %v4888, 0.0
        %v4989 = vmax.f32 %v4891, 0.0
        %v4990 = vmax.f32 %v4894, %v4898
        %v4991 = vmax.f32 %v4895, %v4899
        %v4992 = vmax.f32 %v4896, %v4900
        %v4993 = vmax.f32 %v4897, %v4901
        %v4994 = vmax.f32 %v4902, %v4906
        %v4995 = vmax.f32 %v4903, %v4907
        %v4996 = vmax.f32 %v4904, %v4908
        %v4997 = vmax.f32 %v4905, %v4909
        %v4998 = vmax.f32 %v4910, %v4914
        %v4999 = vmax.f32 %v4911, %v4915
        %v5000 = vmax.f32 %v4912, %v4916
        %v5001 = vmax.f32 %v4913, %v4917
        %v5002 = vmax.f32 %v4918, %v4922
        %v5003 = vmax.f32 %v4919, %v4923
        %v5004 = vmax.f32 %v4920, %v4924
        %v5005 = vmax.f32 %v4921, %v4925
        %v5006 = vmax.f32 %v4926, %v4930
        %v5007 = vmax.f32 %v4927, %v4931
        %v5008 = vmax.f32 %v4928, %v4932
        %v5009 = vmax.f32 %v4929, %v4933
        %v5010 = vmax.f32 %v4934, %v4938
        %v5011 = vmax.f32 %v4935, %v4939
        %v5012 = vmax.f32 %v4936, %v4940
        %v5013 = vmax.f32 %v4937, %v4941
        %v5014 = vmax.f32 %v4942, %v4946
        %v5015 = vmax.f32 %v4943, %v4947
        %v5016 = vmax.f32 %v4944, %v4948
        %v5017 = vmax.f32 %v4945, %v4949
        %v5018 = vmax.f32 %v4950, %v4954
        %v5019 = vmax.f32 %v4951, %v4955
        %v5020 = vmax.f32 %v4952, %v4956
        %v5021 = vmax.f32 %v4953, %v4957
        %v5022 = vmax.f32 %v4958, %v4962
        %v5023 = vmax.f32 %v4959, %v4963
        %v5024 = vmax.f32 %v4960, %v4964
        %v5025 = vmax.f32 %v4961, %v4965
        %v5026 = vmax.f32 %v4966, %v4970
        %v5027 = vmax.f32 %v4967, %v4971
        %v5028 = vmax.f32 %v4968, %v4972
        %v5029 = vmax.f32 %v4969, %v4973
        %v5030 = vmax.f32 %v4974, %v4978
        %v5031 = vmax.f32 %v4975, %v4979
        %v5032 = vmax.f32 %v4976, %v4980
        %v5033 = vmax.f32 %v4977, %v4981
        %v5034 = vmax.f32 %v4982, %v4986
        %v5035 = vmax.f32 %v4983, %v4987
        %v5036 = vmax.f32 %v4984, %v4988
        %v5037 = vmax.f32 %v4985, %v4989
        %v5038 = vpack.c.bf16 %v4991, %v4990
        %v5039 = vpack.c.bf16 %v4993, %v4992
        %v5040 = vpack.c.bf16 %v4995, %v4994
        %v5041 = vpack.c.bf16 %v4997, %v4996
        %v5042 = vpack.c.bf16 %v4999, %v4998
        %v5043 = vpack.c.bf16 %v5001, %v5000
        %v5044 = vpack.c.bf16 %v5003, %v5002
        %v5045 = vpack.c.bf16 %v5005, %v5004
        %v5046 = vpack.c.bf16 %v5007, %v5006
        %v5047 = vpack.c.bf16 %v5009, %v5008
        %v5048 = vpack.c.bf16 %v5011, %v5010
        %v5049 = vpack.c.bf16 %v5013, %v5012
        %v5050 = vpack.c.bf16 %v5015, %v5014
        %v5051 = vpack.c.bf16 %v5017, %v5016
        %v5052 = vpack.c.bf16 %v5019, %v5018
        %v5053 = vpack.c.bf16 %v5021, %v5020
        %v5054 = vpack.c.bf16 %v5023, %v5022
        %v5055 = vpack.c.bf16 %v5025, %v5024
        %v5056 = vpack.c.bf16 %v5027, %v5026
        %v5057 = vpack.c.bf16 %v5029, %v5028
        %v5058 = vpack.c.bf16 %v5031, %v5030
        %v5059 = vpack.c.bf16 %v5033, %v5032
        %v5060 = vpack.c.bf16 %v5035, %v5034
        %v5061 = vpack.c.bf16 %v5037, %v5036
        %v5134 = vunpack.c.l.b16 %v436
        %v5135 = vunpack.c.h.b16 %v436
        %v5136 = vunpack.c.l.b16 %v437
        %v5137 = vunpack.c.l.b16 %v438
        %v5138 = vunpack.c.h.b16 %v438
        %v5139 = vunpack.c.l.b16 %v439
        %v5140 = vunpack.c.l.b16 %v440
        %v5141 = vunpack.c.h.b16 %v440
        %v5142 = vunpack.c.l.b16 %v441
        %v5143 = vunpack.c.l.b16 %v442
        %v5144 = vunpack.c.h.b16 %v442
        %v5145 = vunpack.c.l.b16 %v443
        %v5146 = vunpack.c.l.b16 %v444
        %v5147 = vunpack.c.h.b16 %v444
        %v5148 = vunpack.c.l.b16 %v445
        %v5149 = vunpack.c.l.b16 %v446
        %v5150 = vunpack.c.h.b16 %v446
        %v5151 = vunpack.c.l.b16 %v447
        %v5152 = vunpack.c.l.b16 %v448
        %v5153 = vunpack.c.h.b16 %v448
        %v5154 = vunpack.c.l.b16 %v449
        %v5155 = vunpack.c.l.b16 %v450
        %v5156 = vunpack.c.h.b16 %v450
        %v5157 = vunpack.c.l.b16 %v451
        %v5158 = vunpack.c.l.b16 %v452
        %v5159 = vunpack.c.h.b16 %v452
        %v5160 = vunpack.c.l.b16 %v453
        %v5161 = vunpack.c.l.b16 %v454
        %v5162 = vunpack.c.h.b16 %v454
        %v5163 = vunpack.c.l.b16 %v455
        %v5164 = vunpack.c.l.b16 %v456
        %v5165 = vunpack.c.h.b16 %v456
        %v5166 = vunpack.c.l.b16 %v457
        %v5167 = vunpack.c.l.b16 %v458
        %v5168 = vunpack.c.h.b16 %v458
        %v5169 = vunpack.c.l.b16 %v459
        %v5170 = vunpack.c.l.b16 %v460
        %v5171 = vunpack.c.h.b16 %v460
        %v5172 = vunpack.c.l.b16 %v461
        %v5173 = vunpack.c.l.b16 %v462
        %v5174 = vunpack.c.h.b16 %v462
        %v5175 = vunpack.c.l.b16 %v463
        %v5176 = vunpack.c.l.b16 %v464
        %v5177 = vunpack.c.h.b16 %v464
        %v5178 = vunpack.c.l.b16 %v465
        %v5179 = vunpack.c.l.b16 %v466
        %v5180 = vunpack.c.h.b16 %v466
        %v5181 = vunpack.c.l.b16 %v467
        %v5182 = vunpack.c.l.b16 %v468
        %v5183 = vunpack.c.h.b16 %v468
        %v5184 = vunpack.c.l.b16 %v469
        %v5185 = vunpack.c.l.b16 %v470
        %v5186 = vunpack.c.h.b16 %v470
        %v5187 = vunpack.c.l.b16 %v471
        %v5188 = vunpack.c.l.b16 %v472
        %v5189 = vunpack.c.h.b16 %v472
        %v5190 = vunpack.c.l.b16 %v473
        %v5191 = vunpack.c.l.b16 %v474
        %v5192 = vunpack.c.h.b16 %v474
        %v5193 = vunpack.c.l.b16 %v475
        %v5194 = vunpack.c.l.b16 %v476
        %v5195 = vunpack.c.h.b16 %v476
        %v5196 = vunpack.c.l.b16 %v477
        %v5197 = vunpack.c.l.b16 %v478
        %v5198 = vunpack.c.h.b16 %v478
        %v5199 = vunpack.c.l.b16 %v479
        %v5200 = vunpack.c.l.b16 %v480
        %v5201 = vunpack.c.h.b16 %v480
        %v5202 = vunpack.c.l.b16 %v481
        %v5203 = vunpack.c.l.b16 %v482
        %v5204 = vunpack.c.h.b16 %v482
        %v5205 = vunpack.c.l.b16 %v483
        %v5206 = vunpack.c.l.b16 %v484
        %v5207 = vunpack.c.h.b16 %v484
        %v5208 = vunpack.c.l.b16 %v485
        %v5209 = vunpack.c.l.b16 %v486
        %v5210 = vunpack.c.h.b16 %v486
        %v5211 = vunpack.c.l.b16 %v487
        %v5212 = vunpack.c.l.b16 %v488
        %v5213 = vunpack.c.h.b16 %v488
        %v5214 = vunpack.c.l.b16 %v489
        %v5215 = vunpack.c.l.b16 %v490
        %v5216 = vunpack.c.h.b16 %v490
        %v5217 = vunpack.c.l.b16 %v491
        %v5218 = vunpack.c.l.b16 %v492
        %v5219 = vunpack.c.h.b16 %v492
        %v5220 = vunpack.c.l.b16 %v493
        %v5221 = vunpack.c.l.b16 %v494
        %v5222 = vunpack.c.h.b16 %v494
        %v5223 = vunpack.c.l.b16 %v495
        %v5224 = vunpack.c.l.b16 %v496
        %v5225 = vunpack.c.h.b16 %v496
        %v5226 = vunpack.c.l.b16 %v497
        %v5227 = vunpack.c.l.b16 %v498
        %v5228 = vunpack.c.h.b16 %v498
        %v5229 = vunpack.c.l.b16 %v499
        %v5230 = vunpack.c.l.b16 %v500
        %v5231 = vunpack.c.h.b16 %v500
        %v5232 = vunpack.c.l.b16 %v501
        %v5233 = vunpack.c.l.b16 %v502
        %v5234 = vunpack.c.h.b16 %v502
        %v5235 = vunpack.c.l.b16 %v503
        %v5236 = vunpack.c.l.b16 %v504
        %v5237 = vunpack.c.h.b16 %v504
        %v5238 = vunpack.c.l.b16 %v505
        %v5239 = vunpack.c.l.b16 %v506
        %v5240 = vunpack.c.h.b16 %v506
        %v5241 = vunpack.c.l.b16 %v507
        %v5242 = vpack.c.b16 %v5137, %v5134
        %v5243 = vpack.c.b16 %v5138, %v5135
        %v5244 = vpack.c.b16 %v5139, %v5136
        %v5245 = vpack.c.b16 %v5143, %v5140
        %v5246 = vpack.c.b16 %v5144, %v5141
        %v5247 = vpack.c.b16 %v5145, %v5142
        %v5248 = vpack.c.b16 %v5149, %v5146
        %v5249 = vpack.c.b16 %v5150, %v5147
        %v5250 = vpack.c.b16 %v5151, %v5148
        %v5251 = vpack.c.b16 %v5155, %v5152
        %v5252 = vpack.c.b16 %v5156, %v5153
        %v5253 = vpack.c.b16 %v5157, %v5154
        %v5254 = vpack.c.b16 %v5161, %v5158
        %v5255 = vpack.c.b16 %v5162, %v5159
        %v5256 = vpack.c.b16 %v5163, %v5160
        %v5257 = vpack.c.b16 %v5167, %v5164
        %v5258 = vpack.c.b16 %v5168, %v5165
        %v5259 = vpack.c.b16 %v5169, %v5166
        %v5260 = vpack.c.b16 %v5173, %v5170
        %v5261 = vpack.c.b16 %v5174, %v5171
        %v5262 = vpack.c.b16 %v5175, %v5172
        %v5263 = vpack.c.b16 %v5179, %v5176
        %v5264 = vpack.c.b16 %v5180, %v5177
        %v5265 = vpack.c.b16 %v5181, %v5178
        %v5266 = vpack.c.b16 %v5185, %v5182
        %v5267 = vpack.c.b16 %v5186, %v5183
        %v5268 = vpack.c.b16 %v5187, %v5184
        %v5269 = vpack.c.b16 %v5191, %v5188
        %v5270 = vpack.c.b16 %v5192, %v5189
        %v5271 = vpack.c.b16 %v5193, %v5190
        %v5272 = vpack.c.b16 %v5197, %v5194
        %v5273 = vpack.c.b16 %v5198, %v5195
        %v5274 = vpack.c.b16 %v5199, %v5196
        %v5275 = vpack.c.b16 %v5203, %v5200
        %v5276 = vpack.c.b16 %v5204, %v5201
        %v5277 = vpack.c.b16 %v5205, %v5202
        %v5278 = vpack.c.b16 %v5209, %v5206
        %v5279 = vpack.c.b16 %v5210, %v5207
        %v5280 = vpack.c.b16 %v5211, %v5208
        %v5281 = vpack.c.b16 %v5215, %v5212
        %v5282 = vpack.c.b16 %v5216, %v5213
        %v5283 = vpack.c.b16 %v5217, %v5214
        %v5284 = vpack.c.b16 %v5221, %v5218
        %v5285 = vpack.c.b16 %v5222, %v5219
        %v5286 = vpack.c.b16 %v5223, %v5220
        %v5287 = vpack.c.b16 %v5227, %v5224
        %v5288 = vpack.c.b16 %v5228, %v5225
        %v5289 = vpack.c.b16 %v5229, %v5226
        %v5290 = vpack.c.b16 %v5233, %v5230
        %v5291 = vpack.c.b16 %v5234, %v5231
        %v5292 = vpack.c.b16 %v5235, %v5232
        %v5293 = vpack.c.b16 %v5239, %v5236
        %v5294 = vpack.c.b16 %v5240, %v5237
        %v5295 = vpack.c.b16 %v5241, %v5238
        %5350 = vmatprep.subr.bf16.mxu0 0
        %5351 = vmatpush1.bf16.msra.mxu0 %v5038
        %5352 = vmatprep.subr.bf16.mxu0 0
        %5353 = vmatpush1.bf16.msra.mxu0 %v5039
        %5354 = vmatprep.subr.bf16.mxu0 0
        %5355 = vmatpush1.bf16.msra.mxu0 %v5040
        %5356 = vmatprep.subr.bf16.mxu0 0
        %5357 = vmatpush1.bf16.msra.mxu0 %v5041
        %5358 = vmatprep.subr.bf16.mxu0 0
        %5359 = vmatpush1.bf16.msra.mxu0 %v5042
        %5360 = vmatprep.subr.bf16.mxu0 0
        %5361 = vmatpush1.bf16.msra.mxu0 %v5043
        %5362 = vmatprep.subr.bf16.mxu0 0
        %5363 = vmatpush1.bf16.msra.mxu0 %v5044
        %5364 = vmatprep.subr.bf16.mxu0 0
        %5365 = vmatpush1.bf16.msra.mxu0 %v5045
        %5366 = vmatprep.subr.bf16.mxu0 0
        %5367 = vmatpush1.bf16.msra.mxu0 %v5046
        %5368 = vmatprep.subr.bf16.mxu0 0
        %5369 = vmatpush1.bf16.msra.mxu0 %v5047
        %5370 = vmatprep.subr.bf16.mxu0 0
        %5371 = vmatpush1.bf16.msra.mxu0 %v5048
        %5372 = vmatprep.subr.bf16.mxu0 0
        %5373 = vmatpush1.bf16.msra.mxu0 %v5049
        %5374 = vmatprep.subr.bf16.mxu0 0
        %5375 = vmatpush1.bf16.msra.mxu0 %v5050
        %5376 = vmatprep.subr.bf16.mxu0 0
        %5377 = vmatpush1.bf16.msra.mxu0 %v5051
        %5378 = vmatprep.subr.bf16.mxu0 0
        %5379 = vmatpush1.bf16.msra.mxu0 %v5052
        %5380 = vmatprep.subr.bf16.mxu0 0
        %5381 = vmatpush1.bf16.msra.mxu0 %v5053
        %5382 = vmatprep.mubr.bf16.mxu0 %v5243
        %5383 = vmatmul.mubr.bf16.gmra.mrb[0].mxu0 %v5242
        %v5384 = vpop.f32.mrb[0].mxu0
        %v5385 = vadd.f32 0.0, %v5384
        %v5386 = vpop.f32.mrb[0].mxu0
        %v5387 = vpop.f32.mrb[0].mxu0
        %v5388 = vadd.f32 0.0, %v5387
        %v5389 = vpop.f32.mrb[0].mxu0
        %5390 = vmatprep.mubr.bf16.mxu0 %v5246
        %5391 = vmatmul.mubr.bf16.gmra.mrb[0].mxu0 %v5245
        %v5392 = vpop.f32.mrb[0].mxu0
        %v5393 = vadd.f32 0.0, %v5392
        %v5394 = vpop.f32.mrb[0].mxu0
        %v5395 = vpop.f32.mrb[0].mxu0
        %v5396 = vadd.f32 0.0, %v5395
        %v5397 = vpop.f32.mrb[0].mxu0
        %5398 = vmatprep.mubr.bf16.mxu0 %v5249
        %5399 = vmatmul.mubr.bf16.gmra.mrb[0].mxu0 %v5248
        %v5400 = vpop.f32.mrb[0].mxu0
        %v5401 = vadd.f32 0.0, %v5400
        %v5402 = vpop.f32.mrb[0].mxu0
        %v5403 = vpop.f32.mrb[0].mxu0
        %v5404 = vadd.f32 0.0, %v5403
        %v5405 = vpop.f32.mrb[0].mxu0
        %5406 = vmatprep.mubr.bf16.mxu0 %v5252
        %5407 = vmatmul.mubr.bf16.gmra.mrb[0].mxu0 %v5251
        %v5408 = vpop.f32.mrb[0].mxu0
        %v5409 = vadd.f32 0.0, %v5408
        %v5410 = vpop.f32.mrb[0].mxu0
        %v5411 = vpop.f32.mrb[0].mxu0
        %v5412 = vadd.f32 0.0, %v5411
        %v5413 = vpop.f32.mrb[0].mxu0
        %5414 = vmatprep.mubr.bf16.mxu0 %v5255
        %5415 = vmatmul.mubr.bf16.gmra.mrb[0].mxu0 %v5254
        %v5416 = vpop.f32.mrb[0].mxu0
        %v5417 = vadd.f32 0.0, %v5416
        %v5418 = vpop.f32.mrb[0].mxu0
        %v5419 = vpop.f32.mrb[0].mxu0
        %v5420 = vadd.f32 0.0, %v5419
        %v5421 = vpop.f32.mrb[0].mxu0
        %5422 = vmatprep.mubr.bf16.mxu0 %v5258
        %5423 = vmatmul.mubr.bf16.gmra.mrb[0].mxu0 %v5257
        %v5424 = vpop.f32.mrb[0].mxu0
        %v5425 = vadd.f32 0.0, %v5424
        %v5426 = vpop.f32.mrb[0].mxu0
        %v5427 = vpop.f32.mrb[0].mxu0
        %v5428 = vadd.f32 0.0, %v5427
        %v5429 = vpop.f32.mrb[0].mxu0
        %5430 = vmatprep.mubr.bf16.mxu0 %v5261
        %5431 = vmatmul.mubr.bf16.gmra.mrb[0].mxu0 %v5260
        %v5432 = vpop.f32.mrb[0].mxu0
        %v5433 = vadd.f32 0.0, %v5432
        %v5434 = vpop.f32.mrb[0].mxu0
        %v5435 = vpop.f32.mrb[0].mxu0
        %v5436 = vadd.f32 0.0, %v5435
        %v5437 = vpop.f32.mrb[0].mxu0
        %5438 = vmatprep.mubr.bf16.mxu0 %v5264
        %5439 = vmatmul.mubr.bf16.gmra.mrb[0].mxu0 %v5263
        %v5440 = vpop.f32.mrb[0].mxu0
        %v5441 = vadd.f32 0.0, %v5440
        %v5442 = vpop.f32.mrb[0].mxu0
        %v5443 = vpop.f32.mrb[0].mxu0
        %v5444 = vadd.f32 0.0, %v5443
        %v5445 = vpop.f32.mrb[0].mxu0
        %5446 = vmatprep.mubr.bf16.mxu0 %v5267
        %5447 = vmatmul.mubr.bf16.gmra.mrb[0].mxu0 %v5266
        %v5448 = vpop.f32.mrb[0].mxu0
        %v5449 = vadd.f32 0.0, %v5448
        %v5450 = vpop.f32.mrb[0].mxu0
        %v5451 = vpop.f32.mrb[0].mxu0
        %v5452 = vadd.f32 0.0, %v5451
        %v5453 = vpop.f32.mrb[0].mxu0
        %5454 = vmatprep.mubr.bf16.mxu0 %v5270
        %5455 = vmatmul.mubr.bf16.gmra.mrb[0].mxu0 %v5269
        %v5456 = vpop.f32.mrb[0].mxu0
        %v5457 = vadd.f32 0.0, %v5456
        %v5458 = vpop.f32.mrb[0].mxu0
        %v5459 = vpop.f32.mrb[0].mxu0
        %v5460 = vadd.f32 0.0, %v5459
        %v5461 = vpop.f32.mrb[0].mxu0
        %5462 = vmatprep.mubr.bf16.mxu0 %v5273
        %5463 = vmatmul.mubr.bf16.gmra.mrb[0].mxu0 %v5272
        %v5464 = vpop.f32.mrb[0].mxu0
        %v5465 = vadd.f32 0.0, %v5464
        %v5466 = vpop.f32.mrb[0].mxu0
        %v5467 = vpop.f32.mrb[0].mxu0
        %v5468 = vadd.f32 0.0, %v5467
        %v5469 = vpop.f32.mrb[0].mxu0
        %5470 = vmatprep.mubr.bf16.mxu0 %v5276
        %5471 = vmatmul.mubr.bf16.gmra.mrb[0].mxu0 %v5275
        %v5472 = vpop.f32.mrb[0].mxu0
        %v5473 = vadd.f32 0.0, %v5472
        %v5474 = vpop.f32.mrb[0].mxu0
        %v5475 = vpop.f32.mrb[0].mxu0
        %v5476 = vadd.f32 0.0, %v5475
        %v5477 = vpop.f32.mrb[0].mxu0
        %5478 = vmatprep.mubr.bf16.mxu0 %v5279
        %5479 = vmatmul.mubr.bf16.gmra.mrb[0].mxu0 %v5278
        %v5480 = vpop.f32.mrb[0].mxu0
        %v5481 = vadd.f32 0.0, %v5480
        %v5482 = vpop.f32.mrb[0].mxu0
        %v5483 = vpop.f32.mrb[0].mxu0
        %v5484 = vadd.f32 0.0, %v5483
        %v5485 = vpop.f32.mrb[0].mxu0
        %5486 = vmatprep.mubr.bf16.mxu0 %v5282
        %5487 = vmatmul.mubr.bf16.gmra.mrb[0].mxu0 %v5281
        %v5488 = vpop.f32.mrb[0].mxu0
        %v5489 = vadd.f32 0.0, %v5488
        %v5490 = vpop.f32.mrb[0].mxu0
        %v5491 = vpop.f32.mrb[0].mxu0
        %v5492 = vadd.f32 0.0, %v5491
        %v5493 = vpop.f32.mrb[0].mxu0
        %5494 = vmatprep.mubr.bf16.mxu0 %v5285
        %5495 = vmatmul.mubr.bf16.gmra.mrb[0].mxu0 %v5284
        %v5496 = vpop.f32.mrb[0].mxu0
        %v5497 = vadd.f32 0.0, %v5496
        %v5498 = vpop.f32.mrb[0].mxu0
        %v5499 = vpop.f32.mrb[0].mxu0
        %v5500 = vadd.f32 0.0, %v5499
        %v5501 = vpop.f32.mrb[0].mxu0
        %5502 = vmatprep.mubr.bf16.mxu0 %v5288
        %5503 = vmatmul.mubr.bf16.gmra.mrb[0].mxu0 %v5287
        %v5504 = vpop.f32.mrb[0].mxu0
        %v5505 = vadd.f32 0.0, %v5504
        %v5506 = vpop.f32.mrb[0].mxu0
        %v5507 = vpop.f32.mrb[0].mxu0
        %v5508 = vadd.f32 0.0, %v5507
        %v5509 = vpop.f32.mrb[0].mxu0
        %5510 = vmatprep.mubr.bf16.mxu0 %v5291
        %5511 = vmatmul.mubr.bf16.gmra.mrb[0].mxu0 %v5290
        %v5512 = vpop.f32.mrb[0].mxu0
        %v5513 = vadd.f32 0.0, %v5512
        %v5514 = vpop.f32.mrb[0].mxu0
        %v5515 = vpop.f32.mrb[0].mxu0
        %v5516 = vadd.f32 0.0, %v5515
        %v5517 = vpop.f32.mrb[0].mxu0
        %5518 = vmatprep.mubr.bf16.mxu0 %v5294
        %5519 = vmatmul.mubr.bf16.gmra.mrb[0].mxu0 %v5293
        %v5520 = vpop.f32.mrb[0].mxu0
        %v5521 = vadd.f32 0.0, %v5520
        %v5522 = vpop.f32.mrb[0].mxu0
        %v5523 = vpop.f32.mrb[0].mxu0
        %v5524 = vadd.f32 0.0, %v5523
        %v5525 = vpop.f32.mrb[0].mxu0
        %5526 = vdwg.mxu0
        %5527 = vmatprep.subr.bf16.mxu0 0
        %5528 = vmatpush1.bf16.msra.mxu0 %v5054
        %5529 = vmatprep.subr.bf16.mxu0 0
        %5530 = vmatpush1.bf16.msra.mxu0 %v5055
        %5531 = vmatprep.subr.bf16.mxu0 0
        %5532 = vmatpush1.bf16.msra.mxu0 %v5056
        %5533 = vmatprep.subr.bf16.mxu0 0
        %5534 = vmatpush1.bf16.msra.mxu0 %v5057
        %5535 = vmatprep.subr.bf16.mxu0 0
        %5536 = vmatpush1.bf16.msra.mxu0 %v5058
        %5537 = vmatprep.subr.bf16.mxu0 0
        %5538 = vmatpush1.bf16.msra.mxu0 %v5059
        %5539 = vmatprep.subr.bf16.mxu0 0
        %5540 = vmatpush1.bf16.msra.mxu0 %v5060
        %5541 = vmatprep.subr.bf16.mxu0 0
        %5542 = vmatpush1.bf16.msra.mxu0 %v5061
        %5543 = vmatprep.subr.bf16.mxu0 0
        %5544 = vmatpush1.bf16.msra.mxu0 0
        %5545 = vmatprep.subr.bf16.mxu0 0
        %5546 = vmatpush1.bf16.msra.mxu0 0
        %5547 = vmatprep.subr.bf16.mxu0 0
        %5548 = vmatpush1.bf16.msra.mxu0 0
        %5549 = vmatprep.subr.bf16.mxu0 0
        %5550 = vmatpush1.bf16.msra.mxu0 0
        %5551 = vmatprep.subr.bf16.mxu0 0
        %5552 = vmatpush1.bf16.msra.mxu0 0
        %5553 = vmatprep.subr.bf16.mxu0 0
        %5554 = vmatpush1.bf16.msra.mxu0 0
        %5555 = vmatprep.subr.bf16.mxu0 0
        %5556 = vmatpush1.bf16.msra.mxu0 0
        %5557 = vmatprep.subr.bf16.mxu0 0
        %5558 = vmatpush1.bf16.msra.mxu0 0
        %5559 = vmatprep.mubr.bf16.mxu0 0
        %5560 = vmatmul.mubr.bf16.gmra.mrb[0].mxu0 %v5244
        %v5561 = vpop.f32.mrb[0].mxu0
        %v5562 = vadd.f32 %v5385, %v5561
        %v5563 = vpop.f32.mrb[0].mxu0
        %v5564 = vpop.f32.mrb[0].mxu0
        %v5565 = vadd.f32 %v5388, %v5564
        %v5566 = vpop.f32.mrb[0].mxu0
        %5567 = vmatprep.mubr.bf16.mxu0 0
        %5568 = vmatmul.mubr.bf16.gmra.mrb[0].mxu0 %v5247
        %v5569 = vpop.f32.mrb[0].mxu0
        %v5570 = vadd.f32 %v5393, %v5569
        %v5571 = vpop.f32.mrb[0].mxu0
        %v5572 = vpop.f32.mrb[0].mxu0
        %v5573 = vadd.f32 %v5396, %v5572
        %v5574 = vpop.f32.mrb[0].mxu0
        %5575 = vmatprep.mubr.bf16.mxu0 0
        %5576 = vmatmul.mubr.bf16.gmra.mrb[0].mxu0 %v5250
        %v5577 = vpop.f32.mrb[0].mxu0
        %v5578 = vadd.f32 %v5401, %v5577
        %v5579 = vpop.f32.mrb[0].mxu0
        %v5580 = vpop.f32.mrb[0].mxu0
        %v5581 = vadd.f32 %v5404, %v5580
        %v5582 = vpop.f32.mrb[0].mxu0
        %5583 = vmatprep.mubr.bf16.mxu0 0
        %5584 = vmatmul.mubr.bf16.gmra.mrb[0].mxu0 %v5253
        %v5585 = vpop.f32.mrb[0].mxu0
        %v5586 = vadd.f32 %v5409, %v5585
        %v5587 = vpop.f32.mrb[0].mxu0
        %v5588 = vpop.f32.mrb[0].mxu0
        %v5589 = vadd.f32 %v5412, %v5588
        %v5590 = vpop.f32.mrb[0].mxu0
        %5591 = vmatprep.mubr.bf16.mxu0 0
        %5592 = vmatmul.mubr.bf16.gmra.mrb[0].mxu0 %v5256
        %v5593 = vpop.f32.mrb[0].mxu0
        %v5594 = vadd.f32 %v5417, %v5593
        %v5595 = vpop.f32.mrb[0].mxu0
        %v5596 = vpop.f32.mrb[0].mxu0
        %v5597 = vadd.f32 %v5420, %v5596
        %v5598 = vpop.f32.mrb[0].mxu0
        %5599 = vmatprep.mubr.bf16.mxu0 0
        %5600 = vmatmul.mubr.bf16.gmra.mrb[0].mxu0 %v5259
        %v5601 = vpop.f32.mrb[0].mxu0
        %v5602 = vadd.f32 %v5425, %v5601
        %v5603 = vpop.f32.mrb[0].mxu0
        %v5604 = vpop.f32.mrb[0].mxu0
        %v5605 = vadd.f32 %v5428, %v5604
        %v5606 = vpop.f32.mrb[0].mxu0
        %5607 = vmatprep.mubr.bf16.mxu0 0
        %5608 = vmatmul.mubr.bf16.gmra.mrb[0].mxu0 %v5262
        %v5609 = vpop.f32.mrb[0].mxu0
        %v5610 = vadd.f32 %v5433, %v5609
        %v5611 = vpop.f32.mrb[0].mxu0
        %v5612 = vpop.f32.mrb[0].mxu0
        %v5613 = vadd.f32 %v5436, %v5612
        %v5614 = vpop.f32.mrb[0].mxu0
        %5615 = vmatprep.mubr.bf16.mxu0 0
        %5616 = vmatmul.mubr.bf16.gmra.mrb[0].mxu0 %v5265
        %v5617 = vpop.f32.mrb[0].mxu0
        %v5618 = vadd.f32 %v5441, %v5617
        %v5619 = vpop.f32.mrb[0].mxu0
        %v5620 = vpop.f32.mrb[0].mxu0
        %v5621 = vadd.f32 %v5444, %v5620
        %v5622 = vpop.f32.mrb[0].mxu0
        %5623 = vmatprep.mubr.bf16.mxu0 0
        %5624 = vmatmul.mubr.bf16.gmra.mrb[0].mxu0 %v5268
        %v5625 = vpop.f32.mrb[0].mxu0
        %v5626 = vadd.f32 %v5449, %v5625
        %v5627 = vpop.f32.mrb[0].mxu0
        %v5628 = vpop.f32.mrb[0].mxu0
        %v5629 = vadd.f32 %v5452, %v5628
        %v5630 = vpop.f32.mrb[0].mxu0
        %5631 = vmatprep.mubr.bf16.mxu0 0
        %5632 = vmatmul.mubr.bf16.gmra.mrb[0].mxu0 %v5271
        %v5633 = vpop.f32.mrb[0].mxu0
        %v5634 = vadd.f32 %v5457, %v5633
        %v5635 = vpop.f32.mrb[0].mxu0
        %v5636 = vpop.f32.mrb[0].mxu0
        %v5637 = vadd.f32 %v5460, %v5636
        %v5638 = vpop.f32.mrb[0].mxu0
        %5639 = vmatprep.mubr.bf16.mxu0 0
        %5640 = vmatmul.mubr.bf16.gmra.mrb[0].mxu0 %v5274
        %v5641 = vpop.f32.mrb[0].mxu0
        %v5642 = vadd.f32 %v5465, %v5641
        %v5643 = vpop.f32.mrb[0].mxu0
        %v5644 = vpop.f32.mrb[0].mxu0
        %v5645 = vadd.f32 %v5468, %v5644
        %v5646 = vpop.f32.mrb[0].mxu0
        %5647 = vmatprep.mubr.bf16.mxu0 0
        %5648 = vmatmul.mubr.bf16.gmra.mrb[0].mxu0 %v5277
        %v5649 = vpop.f32.mrb[0].mxu0
        %v5650 = vadd.f32 %v5473, %v5649
        %v5651 = vpop.f32.mrb[0].mxu0
        %v5652 = vpop.f32.mrb[0].mxu0
        %v5653 = vadd.f32 %v5476, %v5652
        %v5654 = vpop.f32.mrb[0].mxu0
        %5655 = vmatprep.mubr.bf16.mxu0 0
        %5656 = vmatmul.mubr.bf16.gmra.mrb[0].mxu0 %v5280
        %v5657 = vpop.f32.mrb[0].mxu0
        %v5658 = vadd.f32 %v5481, %v5657
        %v5659 = vpop.f32.mrb[0].mxu0
        %v5660 = vpop.f32.mrb[0].mxu0
        %v5661 = vadd.f32 %v5484, %v5660
        %v5662 = vpop.f32.mrb[0].mxu0
        %5663 = vmatprep.mubr.bf16.mxu0 0
        %5664 = vmatmul.mubr.bf16.gmra.mrb[0].mxu0 %v5283
        %v5665 = vpop.f32.mrb[0].mxu0
        %v5666 = vadd.f32 %v5489, %v5665
        %v5667 = vpop.f32.mrb[0].mxu0
        %v5668 = vpop.f32.mrb[0].mxu0
        %v5669 = vadd.f32 %v5492, %v5668
        %v5670 = vpop.f32.mrb[0].mxu0
        %5671 = vmatprep.mubr.bf16.mxu0 0
        %5672 = vmatmul.mubr.bf16.gmra.mrb[0].mxu0 %v5286
        %v5673 = vpop.f32.mrb[0].mxu0
        %v5674 = vadd.f32 %v5497, %v5673
        %v5675 = vpop.f32.mrb[0].mxu0
        %v5676 = vpop.f32.mrb[0].mxu0
        %v5677 = vadd.f32 %v5500, %v5676
        %v5678 = vpop.f32.mrb[0].mxu0
        %5679 = vmatprep.mubr.bf16.mxu0 0
        %5680 = vmatmul.mubr.bf16.gmra.mrb[0].mxu0 %v5289
        %v5681 = vpop.f32.mrb[0].mxu0
        %v5682 = vadd.f32 %v5505, %v5681
        %v5683 = vpop.f32.mrb[0].mxu0
        %v5684 = vpop.f32.mrb[0].mxu0
        %v5685 = vadd.f32 %v5508, %v5684
        %v5686 = vpop.f32.mrb[0].mxu0
        %5687 = vmatprep.mubr.bf16.mxu0 0
        %5688 = vmatmul.mubr.bf16.gmra.mrb[0].mxu0 %v5292
        %v5689 = vpop.f32.mrb[0].mxu0
        %v5690 = vadd.f32 %v5513, %v5689
        %v5691 = vpop.f32.mrb[0].mxu0
        %v5692 = vpop.f32.mrb[0].mxu0
        %v5693 = vadd.f32 %v5516, %v5692
        %v5694 = vpop.f32.mrb[0].mxu0
        %5695 = vmatprep.mubr.bf16.mxu0 0
        %5696 = vmatmul.mubr.bf16.gmra.mrb[0].mxu0 %v5295
        %v5697 = vpop.f32.mrb[0].mxu0
        %v5698 = vadd.f32 %v5521, %v5697
        %v5699 = vpop.f32.mrb[0].mxu0
        %v5700 = vpop.f32.mrb[0].mxu0
        %v5701 = vadd.f32 %v5524, %v5700
        %v5702 = vpop.f32.mrb[0].mxu0
        %5703 = vdwg.mxu0
        %v5704 = vmax.f32 %v5562, %v5597
        %v5705 = vmax.f32 %v5565, %v5602
        %v5706 = vmax.f32 %v5570, %v5605
        %v5707 = vmax.f32 %v5573, %v5610
        %v5708 = vmax.f32 %v5578, %v5613
        %v5709 = vmax.f32 %v5581, %v5618
        %v5710 = vmax.f32 %v5586, %v5621
        %v5711 = vmax.f32 %v5589, %v5626
        %v5712 = vmax.f32 %v5594, %v5629
        %v5713 = vmax.f32 %v5634, %v5669
        %v5714 = vmax.f32 %v5637, %v5674
        %v5715 = vmax.f32 %v5642, %v5677
        %v5716 = vmax.f32 %v5645, %v5682
        %v5717 = vmax.f32 %v5650, %v5685
        %v5718 = vmax.f32 %v5653, %v5690
        %v5719 = vmax.f32 %v5658, %v5693
        %v5720 = vmax.f32 %v5661, %v5698
        %v5721 = vmax.f32 %v5666, %v5701
        %v5722 = vpack.c.bf16 %v5714, %v5713
        %v5723 = vpack.c.bf16 %v5716, %v5715
        %v5724 = vpack.c.bf16 %v5718, %v5717
        %v5725 = vpack.c.bf16 %v5720, %v5719
        %v5726 = vpack.c.bf16 %v5721, %v5721
        %v5743 = vunpack.c.l.b16 %v508
        %v5744 = vunpack.c.l.b16 %v509
        %v5745 = vunpack.c.l.b16 %v510
        %v5746 = vunpack.c.l.b16 %v511
        %v5747 = vunpack.c.l.b16 %v512
        %v5748 = vunpack.c.l.b16 %v513
        %v5749 = vunpack.c.l.b16 %v514
        %v5750 = vunpack.c.l.b16 %v515
        %v5751 = vunpack.c.l.b16 %v516
        %v5752 = vunpack.c.l.b16 %v517
        %v5753 = vunpack.c.l.b16 %v518
        %v5754 = vunpack.c.l.b16 %v519
        %v5755 = vunpack.c.l.b16 %v520
        %v5756 = vunpack.c.l.b16 %v521
        %v5757 = vunpack.c.l.b16 %v522
        %v5758 = vunpack.c.l.b16 %v523
        %v5759 = vpack.c.b16 %v5744, %v5743
        %v5760 = vpack.c.b16 %v5746, %v5745
        %v5761 = vpack.c.b16 %v5748, %v5747
        %v5762 = vpack.c.b16 %v5750, %v5749
        %v5763 = vpack.c.b16 %v5752, %v5751
        %v5764 = vpack.c.b16 %v5754, %v5753
        %v5765 = vpack.c.b16 %v5756, %v5755
        %v5766 = vpack.c.b16 %v5758, %v5757
        %5775 = vmatprep.subr.bf16.mxu0 0
        %5776 = vmatpush1.bf16.msra.mxu0 %v5759
        %5777 = vmatprep.subr.bf16.mxu0 0
        %5778 = vmatpush1.bf16.msra.mxu0 %v5760
        %5779 = vmatprep.subr.bf16.mxu0 0
        %5780 = vmatpush1.bf16.msra.mxu0 %v5761
        %5781 = vmatprep.subr.bf16.mxu0 0
        %5782 = vmatpush1.bf16.msra.mxu0 %v5762
        %5783 = vmatprep.subr.bf16.mxu0 0
        %5784 = vmatpush1.bf16.msra.mxu0 %v5763
        %5785 = vmatprep.subr.bf16.mxu0 0
        %5786 = vmatpush1.bf16.msra.mxu0 %v5764
        %5787 = vmatprep.subr.bf16.mxu0 0
        %5788 = vmatpush1.bf16.msra.mxu0 %v5765
        %5789 = vmatprep.subr.bf16.mxu0 0
        %5790 = vmatpush1.bf16.msra.mxu0 %v5766
        %5791 = vmatprep.subr.bf16.mxu0 0
        %5792 = vmatpush1.bf16.msra.mxu0 0
        %5793 = vmatprep.subr.bf16.mxu0 0
        %5794 = vmatpush1.bf16.msra.mxu0 0
        %5795 = vmatprep.subr.bf16.mxu0 0
        %5796 = vmatpush1.bf16.msra.mxu0 0
        %5797 = vmatprep.subr.bf16.mxu0 0
        %5798 = vmatpush1.bf16.msra.mxu0 0
        %5799 = vmatprep.subr.bf16.mxu0 0
        %5800 = vmatpush1.bf16.msra.mxu0 0
        %5801 = vmatprep.subr.bf16.mxu0 0
        %5802 = vmatpush1.bf16.msra.mxu0 0
        %5803 = vmatprep.subr.bf16.mxu0 0
        %5804 = vmatpush1.bf16.msra.mxu0 0
        %5805 = vmatprep.subr.bf16.mxu0 0
        %5806 = vmatpush1.bf16.msra.mxu0 0
        %5807 = vmatprep.mubr.bf16.mxu0 0
        %5808 = vmatmul.mubr.bf16.gmra.mrb[0].mxu0 %v5722
        %v5809 = vpop.f32.mrb[0].mxu0
        %v5810 = vadd.f32 0.0, %v5809
        %v5811 = vpop.f32.mrb[0].mxu0
        %v5812 = vpop.f32.mrb[0].mxu0
        %v5813 = vadd.f32 0.0, %v5812
        %v5814 = vpop.f32.mrb[0].mxu0
        %5815 = vmatprep.mubr.bf16.mxu0 0
        %5816 = vmatmul.mubr.bf16.gmra.mrb[0].mxu0 %v5723
        %v5817 = vpop.f32.mrb[0].mxu0
        %v5818 = vadd.f32 0.0, %v5817
        %v5819 = vpop.f32.mrb[0].mxu0
        %v5820 = vpop.f32.mrb[0].mxu0
        %v5821 = vadd.f32 0.0, %v5820
        %v5822 = vpop.f32.mrb[0].mxu0
        %5823 = vmatprep.mubr.bf16.mxu0 0
        %5824 = vmatmul.mubr.bf16.gmra.mrb[0].mxu0 %v5724
        %v5825 = vpop.f32.mrb[0].mxu0
        %v5826 = vadd.f32 0.0, %v5825
        %v5827 = vpop.f32.mrb[0].mxu0
        %v5828 = vpop.f32.mrb[0].mxu0
        %v5829 = vadd.f32 0.0, %v5828
        %v5830 = vpop.f32.mrb[0].mxu0
        %5831 = vmatprep.mubr.bf16.mxu0 0
        %5832 = vmatmul.mubr.bf16.gmra.mrb[0].mxu0 %v5725
        %v5833 = vpop.f32.mrb[0].mxu0
        %v5834 = vadd.f32 0.0, %v5833
        %v5835 = vpop.f32.mrb[0].mxu0
        %v5836 = vpop.f32.mrb[0].mxu0
        %v5837 = vadd.f32 0.0, %v5836
        %v5838 = vpop.f32.mrb[0].mxu0
        %5839 = vmatprep.mubr.bf16.mxu0 0
        %5840 = vmatmul.mubr.bf16.gmra.mrb[0].mxu0 %v5726
        %v5841 = vpop.f32.mrb[0].mxu0
        %v5842 = vadd.f32 0.0, %v5841
        %v5843 = vpop.f32.mrb[0].mxu0
        %v5844 = vpop.f32.mrb[0].mxu0
        %v5845 = vpop.f32.mrb[0].mxu0
        %5846 = vdwg.mxu0
        %v5847 = vadd.f32 %v5704, %v5810
        %v5848 = vadd.f32 %v5705, %v5813
        %v5849 = vadd.f32 %v5706, %v5818
        %v5850 = vadd.f32 %v5707, %v5821
        %v5851 = vadd.f32 %v5708, %v5826
        %v5852 = vadd.f32 %v5709, %v5829
        %v5853 = vadd.f32 %v5710, %v5834
        %v5854 = vadd.f32 %v5711, %v5837
        %v5855 = vadd.f32 %v5712, %v5842
        %v5856 = vpack.c.bf16 %v5848, %v5847
        %v5857 = vpack.c.bf16 %v5850, %v5849
        %v5858 = vpack.c.bf16 %v5852, %v5851
        %v5859 = vpack.c.bf16 %v5854, %v5853
        %v5860 = vpack.c.bf16 %v5855, %v5855
        %v5866 = vunpack.c.l.b16 %v5856
        %v5867 = vunpack.c.h.b16 %v5856
        %v5868 = vunpack.c.l.b16 %v5857
        %v5869 = vunpack.c.h.b16 %v5857
        %v5870 = vunpack.c.l.b16 %v5858
        %v5871 = vunpack.c.h.b16 %v5858
        %v5872 = vunpack.c.l.b16 %v5859
        %v5873 = vunpack.c.h.b16 %v5859
        %v5874 = vunpack.c.l.b16 %v5860
        %v5875 = vpack.c.b16 %v5866, %v5866
        %v5876 = vpack.c.b16 %v5867, %v5867
        %v5877 = vpack.c.b16 %v5868, %v5868
        %v5878 = vpack.c.b16 %v5869, %v5869
        %v5879 = vpack.c.b16 %v5870, %v5870
        %v5880 = vpack.c.b16 %v5871, %v5871
        %v5881 = vpack.c.b16 %v5872, %v5872
        %v5882 = vpack.c.b16 %v5873, %v5873
        %v5883 = vpack.c.b16 %v5874, %v5874
        %s5893 = smul.u32 %s525, 9
        %s5894 = smul.addr %s5893, 4
        %s5895 = scalar_lea.vmem %s285, %s5894
        %5896 = vst [vmem:[%s5895] sm:$0xf] %v5875
        %5897 = vst [vmem:[%s5895 + $0x4] sm:$0xf] %v5876
        %5898 = vst [vmem:[%s5895 + $0x8] sm:$0xf] %v5877
        %5899 = vst [vmem:[%s5895 + $0xc] sm:$0xf] %v5878
        %5900 = vst [vmem:[%s5895 + $0x10] sm:$0xf] %v5879
        %5901 = vst [vmem:[%s5895 + $0x14] sm:$0xf] %v5880
        %5902 = vst [vmem:[%s5895 + $0x18] sm:$0xf] %v5881
        %5903 = vst [vmem:[%s5895 + $0x1c] sm:$0xf] %v5882
        %5904 = vst [vmem:[%s5895 + $0x20] sm:$0xf] %v5883
      $region53: #{cnn_forward.2} parent=47 // loop_footer
        %s529 = sadd.s32 1, %s525
      $region54: #{cnn_forward.2} parent=47 // loop_footer_branch
        %524 = sbr.rel target = $region50
      $region55: #{cnn_forward.2} parent=47 // loop_exit
        _
      %s5905 = smul.u32 4, %s18
      %p5906 = scmp.lt.s32.totalorder %s5905, 7
      %s5907 = scalar_select %p5906, %s5905, 7
      %s5908 = smul.addr %s5907, 9
      %s5909 = smul.addr %s5908, 4
      %s5910 = scalar_lea.vmem %s7, %s5909
      // Predicated region
      $region56: #{cnn_forward.2} parent=47 // pred_check
        %p5911 = pneg %p188
      $region57: #{cnn_forward.2} parent=47 // pred_check_branch
        %5913 = sbr.rel (%p5911) target = $region59
      $region58: #{cnn_forward.2} parent=47 // pred_region
        %s5914 = smul.u32 4, %s18
      $region59: #{cnn_forward.2} parent=47 // pred_fallthru
        _
    $region48: #{cnn_forward.2} parent=5 // pred_fallthru
      _
    %p5915 = scmp.le.s32.totalorder 2, %s13
    // Predicated region
    $region60: #{cnn_forward.2} parent=5 // pred_check
      %p5916 = pneg %p5915
    $region61: #{cnn_forward.2} parent=5 // pred_check_branch
      %5918 = sbr.rel (%p5916) target = $region63
    $region62: #{cnn_forward.2} parent=5 // pred_region
      %s5919 = ssub.s32 %s13, 2
      // Predicated region
      $region64: #{cnn_forward.2} parent=62 // pred_check
        %p5920 = pneg %p194
      $region65: #{cnn_forward.2} parent=62 // pred_check_branch
        %5922 = sbr.rel (%p5920) target = $region67
      $region66: #{cnn_forward.2} parent=62 // pred_region
        %s5923 = smul.u32 4, %s19
        %p5924 = scmp.lt.s32.totalorder %s5923, 7
        %s5925 = scalar_select %p5924, %s5923, 7
        %s5926 = smul.addr %s5925, 9
        %s5927 = smul.addr %s5926, 4
        %s5928 = scalar_lea.vmem %s7, %s5927
      $region67: #{cnn_forward.2} parent=62 // pred_fallthru
        _
    $region63: #{cnn_forward.2} parent=5 // pred_fallthru
      _
  $region6: #{cnn_forward.2} parent=0 // loop_footer
    %s17 = sadd.s32 1, %s13
  $region7: #{cnn_forward.2} parent=0 // loop_footer_branch
    %12 = sbr.rel target = $region3
  $region8: #{cnn_forward.2} parent=0 // loop_exit
    _

// kernel: cnn_forward.3
$region0: #{cnn_forward.3}
  #allocation0 [shape = 'u32[]', space=smem, size = 0x4, offset = 0x4, fixed_abs, tag = 'smem constant byte address 0x4 - core index']
  #allocation1 [shape = 'u32[144,128]{1,0:T(1,128)}', space=vmem, size = 0x12000, scoped, tag = 'internal scratch']
  %s0 = inlined_call_operand.vmem [shape: bf16[8,9216], index: 0, kind: input, shape index: {}]
  %s1 = inlined_call_operand.vmem [shape: bf16[9216,128], index: 1, kind: input, shape index: {}]
  %s2 = inlined_call_operand.vmem [shape: f32[1,128], index: 2, kind: input, shape index: {}]
  %s3 = inlined_call_operand.vmem [shape: f32[128,10], index: 3, kind: input, shape index: {}]
  %s4 = inlined_call_operand.vmem [shape: f32[1,10], index: 4, kind: input, shape index: {}]
  %s5 = inlined_call_operand.vmem [shape: f32[8,10], index: 5, kind: output, shape index: {}]
  %s6 = sld [smem:[#allocation0]]
  $region30: #{cnn_forward.3} parent=0
    _
  %s8 = ssub.s32 1, %s6
  %s9 = scalar_select 0, %s8, %s6
  // Predicated region
  $region2: #{cnn_forward.3} parent=0 // pred_check
    _
  $region3: #{cnn_forward.3} parent=0 // pred_check_branch
    %11 = sbr.rel (0) target = $region5
  $region4: #{cnn_forward.3} parent=0 // pred_region
    _
  $region5: #{cnn_forward.3} parent=0 // pred_fallthru
    _
  // Predicated region
  $region6: #{cnn_forward.3} parent=0 // pred_check
    _
  $region7: #{cnn_forward.3} parent=0 // pred_check_branch
    %13 = sbr.rel (0) target = $region9
  $region8: #{cnn_forward.3} parent=0 // pred_region
    _
  $region9: #{cnn_forward.3} parent=0 // pred_fallthru
    _
  // Predicated region
  $region10: #{cnn_forward.3} parent=0 // pred_check
    _
  $region11: #{cnn_forward.3} parent=0 // pred_check_branch
    %15 = sbr.rel (0) target = $region13
  $region12: #{cnn_forward.3} parent=0 // pred_region
    _
  $region13: #{cnn_forward.3} parent=0 // pred_fallthru
    _
  // Predicated region
  $region14: #{cnn_forward.3} parent=0 // pred_check
    _
  $region15: #{cnn_forward.3} parent=0 // pred_check_branch
    %17 = sbr.rel (0) target = $region17
  $region16: #{cnn_forward.3} parent=0 // pred_region
    _
  $region17: #{cnn_forward.3} parent=0 // pred_fallthru
    _
  // Predicated region
  $region18: #{cnn_forward.3} parent=0 // pred_check
    _
  $region19: #{cnn_forward.3} parent=0 // pred_check_branch
    %19 = sbr.rel (0) target = $region21
  $region20: #{cnn_forward.3} parent=0 // pred_region
    _
  $region21: #{cnn_forward.3} parent=0 // pred_fallthru
    _
  %v21 = vld [vmem:[%s0] sm:$0xff]
  %v22 = vld [vmem:[%s0 + $0x8] sm:$0xff]
  %v23 = vld [vmem:[%s0 + $0x10] sm:$0xff]
  %v24 = vld [vmem:[%s0 + $0x18] sm:$0xff]
  %v25 = vld [vmem:[%s0 + $0x20] sm:$0xff]
  %v26 = vld [vmem:[%s0 + $0x28] sm:$0xff]
  %v27 = vld [vmem:[%s0 + $0x30] sm:$0xff]
  %v28 = vld [vmem:[%s0 + $0x38] sm:$0xff]
  %v29 = vld [vmem:[%s0 + $0x40] sm:$0xff]
  %v30 = vld [vmem:[%s0 + $0x48] sm:$0xff]
  %v31 = vld [vmem:[%s0 + $0x50] sm:$0xff]
  %v32 = vld [vmem:[%s0 + $0x58] sm:$0xff]
  %v33 = vld [vmem:[%s0 + $0x60] sm:$0xff]
  %v34 = vld [vmem:[%s0 + $0x68] sm:$0xff]
  %v35 = vld [vmem:[%s0 + $0x70] sm:$0xff]
  %v36 = vld [vmem:[%s0 + $0x78] sm:$0xff]
  %v37 = vld [vmem:[%s0 + $0x80] sm:$0xff]
  %v38 = vld [vmem:[%s0 + $0x88] sm:$0xff]
  %v39 = vld [vmem:[%s0 + $0x90] sm:$0xff]
  %v40 = vld [vmem:[%s0 + $0x98] sm:$0xff]
  %v41 = vld [vmem:[%s0 + $0xa0] sm:$0xff]
  %v42 = vld [vmem:[%s0 + $0xa8] sm:$0xff]
  %v43 = vld [vmem:[%s0 + $0xb0] sm:$0xff]
  %v44 = vld [vmem:[%s0 + $0xb8] sm:$0xff]
  %v45 = vld [vmem:[%s0 + $0xc0] sm:$0xff]
  %v46 = vld [vmem:[%s0 + $0xc8] sm:$0xff]
  %v47 = vld [vmem:[%s0 + $0xd0] sm:$0xff]
  %v48 = vld [vmem:[%s0 + $0xd8] sm:$0xff]
  %v49 = vld [vmem:[%s0 + $0xe0] sm:$0xff]
  %v50 = vld [vmem:[%s0 + $0xe8] sm:$0xff]
  %v51 = vld [vmem:[%s0 + $0xf0] sm:$0xff]
  %v52 = vld [vmem:[%s0 + $0xf8] sm:$0xff]
  %v53 = vld [vmem:[%s0 + $0x100] sm:$0xff]
  %v54 = vld [vmem:[%s0 + $0x108] sm:$0xff]
  %v55 = vld [vmem:[%s0 + $0x110] sm:$0xff]
  %v56 = vld [vmem:[%s0 + $0x118] sm:$0xff]
  %v57 = vld [vmem:[%s1] sm:$0xf]
  %v58 = vld [vmem:[%s1 + $0x4] sm:$0xf]
  %v59 = vld [vmem:[%s1 + $0x8] sm:$0xf]
  %v60 = vld [vmem:[%s1 + $0xc] sm:$0xf]
  %v61 = vld [vmem:[%s1 + $0x10] sm:$0xf]
  %v62 = vld [vmem:[%s1 + $0x14] sm:$0xf]
  %v63 = vld [vmem:[%s1 + $0x18] sm:$0xf]
  %v64 = vld [vmem:[%s1 + $0x1c] sm:$0xf]
  %v65 = vld [vmem:[%s1 + $0x20] sm:$0xf]
  %v66 = vld [vmem:[%s1 + $0x24] sm:$0xf]
  %v67 = vld [vmem:[%s1 + $0x28] sm:$0xf]
  %v68 = vld [vmem:[%s1 + $0x2c] sm:$0xf]
  %v69 = vld [vmem:[%s1 + $0x30] sm:$0xf]
  %v70 = vld [vmem:[%s1 + $0x34] sm:$0xf]
  %v71 = vld [vmem:[%s1 + $0x38] sm:$0xf]
  %v72 = vld [vmem:[%s1 + $0x3c] sm:$0xf]
  %v73 = vld [vmem:[%s1 + $0x40] sm:$0xf]
  %v74 = vld [vmem:[%s1 + $0x44] sm:$0xf]
  %v75 = vld [vmem:[%s1 + $0x48] sm:$0xf]
  %v76 = vld [vmem:[%s1 + $0x4c] sm:$0xf]
  %v77 = vld [vmem:[%s1 + $0x50] sm:$0xf]
  %v78 = vld [vmem:[%s1 + $0x54] sm:$0xf]
  %v79 = vld [vmem:[%s1 + $0x58] sm:$0xf]
  %v80 = vld [vmem:[%s1 + $0x5c] sm:$0xf]
  %v81 = vld [vmem:[%s1 + $0x60] sm:$0xf]
  %v82 = vld [vmem:[%s1 + $0x64] sm:$0xf]
  %v83 = vld [vmem:[%s1 + $0x68] sm:$0xf]
  %v84 = vld [vmem:[%s1 + $0x6c] sm:$0xf]
  %v85 = vld [vmem:[%s1 + $0x70] sm:$0xf]
  %v86 = vld [vmem:[%s1 + $0x74] sm:$0xf]
  %v87 = vld [vmem:[%s1 + $0x78] sm:$0xf]
  %v88 = vld [vmem:[%s1 + $0x7c] sm:$0xf]
  %v89 = vld [vmem:[%s1 + $0x80] sm:$0xf]
  %v90 = vld [vmem:[%s1 + $0x84] sm:$0xf]
  %v91 = vld [vmem:[%s1 + $0x88] sm:$0xf]
  %v92 = vld [vmem:[%s1 + $0x8c] sm:$0xf]
  %v93 = vld [vmem:[%s1 + $0x90] sm:$0xf]
  %v94 = vld [vmem:[%s1 + $0x94] sm:$0xf]
  %v95 = vld [vmem:[%s1 + $0x98] sm:$0xf]
  %v96 = vld [vmem:[%s1 + $0x9c] sm:$0xf]
  %v97 = vld [vmem:[%s1 + $0xa0] sm:$0xf]
  %v98 = vld [vmem:[%s1 + $0xa4] sm:$0xf]
  %v99 = vld [vmem:[%s1 + $0xa8] sm:$0xf]
  %v100 = vld [vmem:[%s1 + $0xac] sm:$0xf]
  %v101 = vld [vmem:[%s1 + $0xb0] sm:$0xf]
  %v102 = vld [vmem:[%s1 + $0xb4] sm:$0xf]
  %v103 = vld [vmem:[%s1 + $0xb8] sm:$0xf]
  %v104 = vld [vmem:[%s1 + $0xbc] sm:$0xf]
  %v105 = vld [vmem:[%s1 + $0xc0] sm:$0xf]
  %v106 = vld [vmem:[%s1 + $0xc4] sm:$0xf]
  %v107 = vld [vmem:[%s1 + $0xc8] sm:$0xf]
  %v108 = vld [vmem:[%s1 + $0xcc] sm:$0xf]
  %v109 = vld [vmem:[%s1 + $0xd0] sm:$0xf]
  %v110 = vld [vmem:[%s1 + $0xd4] sm:$0xf]
  %v111 = vld [vmem:[%s1 + $0xd8] sm:$0xf]
  %v112 = vld [vmem:[%s1 + $0xdc] sm:$0xf]
  %v113 = vld [vmem:[%s1 + $0xe0] sm:$0xf]
  %v114 = vld [vmem:[%s1 + $0xe4] sm:$0xf]
  %v115 = vld [vmem:[%s1 + $0xe8] sm:$0xf]
  %v116 = vld [vmem:[%s1 + $0xec] sm:$0xf]
  %v117 = vld [vmem:[%s1 + $0xf0] sm:$0xf]
  %v118 = vld [vmem:[%s1 + $0xf4] sm:$0xf]
  %v119 = vld [vmem:[%s1 + $0xf8] sm:$0xf]
  %v120 = vld [vmem:[%s1 + $0xfc] sm:$0xf]
  %v121 = vld [vmem:[%s1 + $0x100] sm:$0xf]
  %v122 = vld [vmem:[%s1 + $0x104] sm:$0xf]
  %v123 = vld [vmem:[%s1 + $0x108] sm:$0xf]
  %v124 = vld [vmem:[%s1 + $0x10c] sm:$0xf]
  %v125 = vld [vmem:[%s1 + $0x110] sm:$0xf]
  %v126 = vld [vmem:[%s1 + $0x114] sm:$0xf]
  %v127 = vld [vmem:[%s1 + $0x118] sm:$0xf]
  %v128 = vld [vmem:[%s1 + $0x11c] sm:$0xf]
  %v129 = vld [vmem:[%s1 + $0x120] sm:$0xf]
  %v130 = vld [vmem:[%s1 + $0x124] sm:$0xf]
  %v131 = vld [vmem:[%s1 + $0x128] sm:$0xf]
  %v132 = vld [vmem:[%s1 + $0x12c] sm:$0xf]
  %v133 = vld [vmem:[%s1 + $0x130] sm:$0xf]
  %v134 = vld [vmem:[%s1 + $0x134] sm:$0xf]
  %v135 = vld [vmem:[%s1 + $0x138] sm:$0xf]
  %v136 = vld [vmem:[%s1 + $0x13c] sm:$0xf]
  %v137 = vld [vmem:[%s1 + $0x140] sm:$0xf]
  %v138 = vld [vmem:[%s1 + $0x144] sm:$0xf]
  %v139 = vld [vmem:[%s1 + $0x148] sm:$0xf]
  %v140 = vld [vmem:[%s1 + $0x14c] sm:$0xf]
  %v141 = vld [vmem:[%s1 + $0x150] sm:$0xf]
  %v142 = vld [vmem:[%s1 + $0x154] sm:$0xf]
  %v143 = vld [vmem:[%s1 + $0x158] sm:$0xf]
  %v144 = vld [vmem:[%s1 + $0x15c] sm:$0xf]
  %v145 = vld [vmem:[%s1 + $0x160] sm:$0xf]
  %v146 = vld [vmem:[%s1 + $0x164] sm:$0xf]
  %v147 = vld [vmem:[%s1 + $0x168] sm:$0xf]
  %v148 = vld [vmem:[%s1 + $0x16c] sm:$0xf]
  %v149 = vld [vmem:[%s1 + $0x170] sm:$0xf]
  %v150 = vld [vmem:[%s1 + $0x174] sm:$0xf]
  %v151 = vld [vmem:[%s1 + $0x178] sm:$0xf]
  %v152 = vld [vmem:[%s1 + $0x17c] sm:$0xf]
  %v153 = vld [vmem:[%s1 + $0x180] sm:$0xf]
  %v154 = vld [vmem:[%s1 + $0x184] sm:$0xf]
  %v155 = vld [vmem:[%s1 + $0x188] sm:$0xf]
  %v156 = vld [vmem:[%s1 + $0x18c] sm:$0xf]
  %v157 = vld [vmem:[%s1 + $0x190] sm:$0xf]
  %v158 = vld [vmem:[%s1 + $0x194] sm:$0xf]
  %v159 = vld [vmem:[%s1 + $0x198] sm:$0xf]
  %v160 = vld [vmem:[%s1 + $0x19c] sm:$0xf]
  %v161 = vld [vmem:[%s1 + $0x1a0] sm:$0xf]
  %v162 = vld [vmem:[%s1 + $0x1a4] sm:$0xf]
  %v163 = vld [vmem:[%s1 + $0x1a8] sm:$0xf]
  %v164 = vld [vmem:[%s1 + $0x1ac] sm:$0xf]
  %v165 = vld [vmem:[%s1 + $0x1b0] sm:$0xf]
  %v166 = vld [vmem:[%s1 + $0x1b4] sm:$0xf]
  %v167 = vld [vmem:[%s1 + $0x1b8] sm:$0xf]
  %v168 = vld [vmem:[%s1 + $0x1bc] sm:$0xf]
  %v169 = vld [vmem:[%s1 + $0x1c0] sm:$0xf]
  %v170 = vld [vmem:[%s1 + $0x1c4] sm:$0xf]
  %v171 = vld [vmem:[%s1 + $0x1c8] sm:$0xf]
  %v172 = vld [vmem:[%s1 + $0x1cc] sm:$0xf]
  %v173 = vld [vmem:[%s1 + $0x1d0] sm:$0xf]
  %v174 = vld [vmem:[%s1 + $0x1d4] sm:$0xf]
  %v175 = vld [vmem:[%s1 + $0x1d8] sm:$0xf]
  %v176 = vld [vmem:[%s1 + $0x1dc] sm:$0xf]
  %v177 = vld [vmem:[%s1 + $0x1e0] sm:$0xf]
  %v178 = vld [vmem:[%s1 + $0x1e4] sm:$0xf]
  %v179 = vld [vmem:[%s1 + $0x1e8] sm:$0xf]
  %v180 = vld [vmem:[%s1 + $0x1ec] sm:$0xf]
  %v181 = vld [vmem:[%s1 + $0x1f0] sm:$0xf]
  %v182 = vld [vmem:[%s1 + $0x1f4] sm:$0xf]
  %v183 = vld [vmem:[%s1 + $0x1f8] sm:$0xf]
  %v184 = vld [vmem:[%s1 + $0x1fc] sm:$0xf]
  %v185 = vld [vmem:[%s1 + $0x200] sm:$0xf]
  %v186 = vld [vmem:[%s1 + $0x204] sm:$0xf]
  %v187 = vld [vmem:[%s1 + $0x208] sm:$0xf]
  %v188 = vld [vmem:[%s1 + $0x20c] sm:$0xf]
  %v189 = vld [vmem:[%s1 + $0x210] sm:$0xf]
  %v190 = vld [vmem:[%s1 + $0x214] sm:$0xf]
  %v191 = vld [vmem:[%s1 + $0x218] sm:$0xf]
  %v192 = vld [vmem:[%s1 + $0x21c] sm:$0xf]
  %v193 = vld [vmem:[%s1 + $0x220] sm:$0xf]
  %v194 = vld [vmem:[%s1 + $0x224] sm:$0xf]
  %v195 = vld [vmem:[%s1 + $0x228] sm:$0xf]
  %v196 = vld [vmem:[%s1 + $0x22c] sm:$0xf]
  %v197 = vld [vmem:[%s1 + $0x230] sm:$0xf]
  %v198 = vld [vmem:[%s1 + $0x234] sm:$0xf]
  %v199 = vld [vmem:[%s1 + $0x238] sm:$0xf]
  %v200 = vld [vmem:[%s1 + $0x23c] sm:$0xf]
  %v201 = vld [vmem:[%s1 + $0x240] sm:$0xf]
  %v202 = vld [vmem:[%s1 + $0x244] sm:$0xf]
  %v203 = vld [vmem:[%s1 + $0x248] sm:$0xf]
  %v204 = vld [vmem:[%s1 + $0x24c] sm:$0xf]
  %v205 = vld [vmem:[%s1 + $0x250] sm:$0xf]
  %v206 = vld [vmem:[%s1 + $0x254] sm:$0xf]
  %v207 = vld [vmem:[%s1 + $0x258] sm:$0xf]
  %v208 = vld [vmem:[%s1 + $0x25c] sm:$0xf]
  %v209 = vld [vmem:[%s1 + $0x260] sm:$0xf]
  %v210 = vld [vmem:[%s1 + $0x264] sm:$0xf]
  %v211 = vld [vmem:[%s1 + $0x268] sm:$0xf]
  %v212 = vld [vmem:[%s1 + $0x26c] sm:$0xf]
  %v213 = vld [vmem:[%s1 + $0x270] sm:$0xf]
  %v214 = vld [vmem:[%s1 + $0x274] sm:$0xf]
  %v215 = vld [vmem:[%s1 + $0x278] sm:$0xf]
  %v216 = vld [vmem:[%s1 + $0x27c] sm:$0xf]
  %v217 = vld [vmem:[%s1 + $0x280] sm:$0xf]
  %v218 = vld [vmem:[%s1 + $0x284] sm:$0xf]
  %v219 = vld [vmem:[%s1 + $0x288] sm:$0xf]
  %v220 = vld [vmem:[%s1 + $0x28c] sm:$0xf]
  %v221 = vld [vmem:[%s1 + $0x290] sm:$0xf]
  %v222 = vld [vmem:[%s1 + $0x294] sm:$0xf]
  %v223 = vld [vmem:[%s1 + $0x298] sm:$0xf]
  %v224 = vld [vmem:[%s1 + $0x29c] sm:$0xf]
  %v225 = vld [vmem:[%s1 + $0x2a0] sm:$0xf]
  %v226 = vld [vmem:[%s1 + $0x2a4] sm:$0xf]
  %v227 = vld [vmem:[%s1 + $0x2a8] sm:$0xf]
  %v228 = vld [vmem:[%s1 + $0x2ac] sm:$0xf]
  %v229 = vld [vmem:[%s1 + $0x2b0] sm:$0xf]
  %v230 = vld [vmem:[%s1 + $0x2b4] sm:$0xf]
  %v231 = vld [vmem:[%s1 + $0x2b8] sm:$0xf]
  %v232 = vld [vmem:[%s1 + $0x2bc] sm:$0xf]
  %v233 = vld [vmem:[%s1 + $0x2c0] sm:$0xf]
  %v234 = vld [vmem:[%s1 + $0x2c4] sm:$0xf]
  %v235 = vld [vmem:[%s1 + $0x2c8] sm:$0xf]
  %v236 = vld [vmem:[%s1 + $0x2cc] sm:$0xf]
  %v237 = vld [vmem:[%s1 + $0x2d0] sm:$0xf]
  %v238 = vld [vmem:[%s1 + $0x2d4] sm:$0xf]
  %v239 = vld [vmem:[%s1 + $0x2d8] sm:$0xf]
  %v240 = vld [vmem:[%s1 + $0x2dc] sm:$0xf]
  %v241 = vld [vmem:[%s1 + $0x2e0] sm:$0xf]
  %v242 = vld [vmem:[%s1 + $0x2e4] sm:$0xf]
  %v243 = vld [vmem:[%s1 + $0x2e8] sm:$0xf]
  %v244 = vld [vmem:[%s1 + $0x2ec] sm:$0xf]
  %v245 = vld [vmem:[%s1 + $0x2f0] sm:$0xf]
  %v246 = vld [vmem:[%s1 + $0x2f4] sm:$0xf]
  %v247 = vld [vmem:[%s1 + $0x2f8] sm:$0xf]
  %v248 = vld [vmem:[%s1 + $0x2fc] sm:$0xf]
  %v249 = vld [vmem:[%s1 + $0x300] sm:$0xf]
  %v250 = vld [vmem:[%s1 + $0x304] sm:$0xf]
  %v251 = vld [vmem:[%s1 + $0x308] sm:$0xf]
  %v252 = vld [vmem:[%s1 + $0x30c] sm:$0xf]
  %v253 = vld [vmem:[%s1 + $0x310] sm:$0xf]
  %v254 = vld [vmem:[%s1 + $0x314] sm:$0xf]
  %v255 = vld [vmem:[%s1 + $0x318] sm:$0xf]
  %v256 = vld [vmem:[%s1 + $0x31c] sm:$0xf]
  %v257 = vld [vmem:[%s1 + $0x320] sm:$0xf]
  %v258 = vld [vmem:[%s1 + $0x324] sm:$0xf]
  %v259 = vld [vmem:[%s1 + $0x328] sm:$0xf]
  %v260 = vld [vmem:[%s1 + $0x32c] sm:$0xf]
  %v261 = vld [vmem:[%s1 + $0x330] sm:$0xf]
  %v262 = vld [vmem:[%s1 + $0x334] sm:$0xf]
  %v263 = vld [vmem:[%s1 + $0x338] sm:$0xf]
  %v264 = vld [vmem:[%s1 + $0x33c] sm:$0xf]
  %v265 = vld [vmem:[%s1 + $0x340] sm:$0xf]
  %v266 = vld [vmem:[%s1 + $0x344] sm:$0xf]
  %v267 = vld [vmem:[%s1 + $0x348] sm:$0xf]
  %v268 = vld [vmem:[%s1 + $0x34c] sm:$0xf]
  %v269 = vld [vmem:[%s1 + $0x350] sm:$0xf]
  %v270 = vld [vmem:[%s1 + $0x354] sm:$0xf]
  %v271 = vld [vmem:[%s1 + $0x358] sm:$0xf]
  %v272 = vld [vmem:[%s1 + $0x35c] sm:$0xf]
  %v273 = vld [vmem:[%s1 + $0x360] sm:$0xf]
  %v274 = vld [vmem:[%s1 + $0x364] sm:$0xf]
  %v275 = vld [vmem:[%s1 + $0x368] sm:$0xf]
  %v276 = vld [vmem:[%s1 + $0x36c] sm:$0xf]
  %v277 = vld [vmem:[%s1 + $0x370] sm:$0xf]
  %v278 = vld [vmem:[%s1 + $0x374] sm:$0xf]
  %v279 = vld [vmem:[%s1 + $0x378] sm:$0xf]
  %v280 = vld [vmem:[%s1 + $0x37c] sm:$0xf]
  %v281 = vld [vmem:[%s1 + $0x380] sm:$0xf]
  %v282 = vld [vmem:[%s1 + $0x384] sm:$0xf]
  %v283 = vld [vmem:[%s1 + $0x388] sm:$0xf]
  %v284 = vld [vmem:[%s1 + $0x38c] sm:$0xf]
  %v285 = vld [vmem:[%s1 + $0x390] sm:$0xf]
  %v286 = vld [vmem:[%s1 + $0x394] sm:$0xf]
  %v287 = vld [vmem:[%s1 + $0x398] sm:$0xf]
  %v288 = vld [vmem:[%s1 + $0x39c] sm:$0xf]
  %v289 = vld [vmem:[%s1 + $0x3a0] sm:$0xf]
  %v290 = vld [vmem:[%s1 + $0x3a4] sm:$0xf]
  %v291 = vld [vmem:[%s1 + $0x3a8] sm:$0xf]
  %v292 = vld [vmem:[%s1 + $0x3ac] sm:$0xf]
  %v293 = vld [vmem:[%s1 + $0x3b0] sm:$0xf]
  %v294 = vld [vmem:[%s1 + $0x3b4] sm:$0xf]
  %v295 = vld [vmem:[%s1 + $0x3b8] sm:$0xf]
  %v296 = vld [vmem:[%s1 + $0x3bc] sm:$0xf]
  %v297 = vld [vmem:[%s1 + $0x3c0] sm:$0xf]
  %v298 = vld [vmem:[%s1 + $0x3c4] sm:$0xf]
  %v299 = vld [vmem:[%s1 + $0x3c8] sm:$0xf]
  %v300 = vld [vmem:[%s1 + $0x3cc] sm:$0xf]
  %v301 = vld [vmem:[%s1 + $0x3d0] sm:$0xf]
  %v302 = vld [vmem:[%s1 + $0x3d4] sm:$0xf]
  %v303 = vld [vmem:[%s1 + $0x3d8] sm:$0xf]
  %v304 = vld [vmem:[%s1 + $0x3dc] sm:$0xf]
  %v305 = vld [vmem:[%s1 + $0x3e0] sm:$0xf]
  %v306 = vld [vmem:[%s1 + $0x3e4] sm:$0xf]
  %v307 = vld [vmem:[%s1 + $0x3e8] sm:$0xf]
  %v308 = vld [vmem:[%s1 + $0x3ec] sm:$0xf]
  %v309 = vld [vmem:[%s1 + $0x3f0] sm:$0xf]
  %v310 = vld [vmem:[%s1 + $0x3f4] sm:$0xf]
  %v311 = vld [vmem:[%s1 + $0x3f8] sm:$0xf]
  %v312 = vld [vmem:[%s1 + $0x3fc] sm:$0xf]
  %v313 = vld [vmem:[%s1 + $0x400] sm:$0xf]
  %v314 = vld [vmem:[%s1 + $0x404] sm:$0xf]
  %v315 = vld [vmem:[%s1 + $0x408] sm:$0xf]
  %v316 = vld [vmem:[%s1 + $0x40c] sm:$0xf]
  %v317 = vld [vmem:[%s1 + $0x410] sm:$0xf]
  %v318 = vld [vmem:[%s1 + $0x414] sm:$0xf]
  %v319 = vld [vmem:[%s1 + $0x418] sm:$0xf]
  %v320 = vld [vmem:[%s1 + $0x41c] sm:$0xf]
  %v321 = vld [vmem:[%s1 + $0x420] sm:$0xf]
  %v322 = vld [vmem:[%s1 + $0x424] sm:$0xf]
  %v323 = vld [vmem:[%s1 + $0x428] sm:$0xf]
  %v324 = vld [vmem:[%s1 + $0x42c] sm:$0xf]
  %v325 = vld [vmem:[%s1 + $0x430] sm:$0xf]
  %v326 = vld [vmem:[%s1 + $0x434] sm:$0xf]
  %v327 = vld [vmem:[%s1 + $0x438] sm:$0xf]
  %v328 = vld [vmem:[%s1 + $0x43c] sm:$0xf]
  %v329 = vld [vmem:[%s1 + $0x440] sm:$0xf]
  %v330 = vld [vmem:[%s1 + $0x444] sm:$0xf]
  %v331 = vld [vmem:[%s1 + $0x448] sm:$0xf]
  %v332 = vld [vmem:[%s1 + $0x44c] sm:$0xf]
  %v333 = vld [vmem:[%s1 + $0x450] sm:$0xf]
  %v334 = vld [vmem:[%s1 + $0x454] sm:$0xf]
  %v335 = vld [vmem:[%s1 + $0x458] sm:$0xf]
  %v336 = vld [vmem:[%s1 + $0x45c] sm:$0xf]
  %v337 = vld [vmem:[%s1 + $0x460] sm:$0xf]
  %v338 = vld [vmem:[%s1 + $0x464] sm:$0xf]
  %v339 = vld [vmem:[%s1 + $0x468] sm:$0xf]
  %v340 = vld [vmem:[%s1 + $0x46c] sm:$0xf]
  %v341 = vld [vmem:[%s1 + $0x470] sm:$0xf]
  %v342 = vld [vmem:[%s1 + $0x474] sm:$0xf]
  %v343 = vld [vmem:[%s1 + $0x478] sm:$0xf]
  %v344 = vld [vmem:[%s1 + $0x47c] sm:$0xf]
  %v345 = vld [vmem:[%s1 + $0x480] sm:$0xf]
  %v346 = vld [vmem:[%s1 + $0x484] sm:$0xf]
  %v347 = vld [vmem:[%s1 + $0x488] sm:$0xf]
  %v348 = vld [vmem:[%s1 + $0x48c] sm:$0xf]
  %v349 = vld [vmem:[%s1 + $0x490] sm:$0xf]
  %v350 = vld [vmem:[%s1 + $0x494] sm:$0xf]
  %v351 = vld [vmem:[%s1 + $0x498] sm:$0xf]
  %v352 = vld [vmem:[%s1 + $0x49c] sm:$0xf]
  %v353 = vld [vmem:[%s1 + $0x4a0] sm:$0xf]
  %v354 = vld [vmem:[%s1 + $0x4a4] sm:$0xf]
  %v355 = vld [vmem:[%s1 + $0x4a8] sm:$0xf]
  %v356 = vld [vmem:[%s1 + $0x4ac] sm:$0xf]
  %v357 = vld [vmem:[%s1 + $0x4b0] sm:$0xf]
  %v358 = vld [vmem:[%s1 + $0x4b4] sm:$0xf]
  %v359 = vld [vmem:[%s1 + $0x4b8] sm:$0xf]
  %v360 = vld [vmem:[%s1 + $0x4bc] sm:$0xf]
  %v361 = vld [vmem:[%s1 + $0x4c0] sm:$0xf]
  %v362 = vld [vmem:[%s1 + $0x4c4] sm:$0xf]
  %v363 = vld [vmem:[%s1 + $0x4c8] sm:$0xf]
  %v364 = vld [vmem:[%s1 + $0x4cc] sm:$0xf]
  %v365 = vld [vmem:[%s1 + $0x4d0] sm:$0xf]
  %v366 = vld [vmem:[%s1 + $0x4d4] sm:$0xf]
  %v367 = vld [vmem:[%s1 + $0x4d8] sm:$0xf]
  %v368 = vld [vmem:[%s1 + $0x4dc] sm:$0xf]
  %v369 = vld [vmem:[%s1 + $0x4e0] sm:$0xf]
  %v370 = vld [vmem:[%s1 + $0x4e4] sm:$0xf]
  %v371 = vld [vmem:[%s1 + $0x4e8] sm:$0xf]
  %v372 = vld [vmem:[%s1 + $0x4ec] sm:$0xf]
  %v373 = vld [vmem:[%s1 + $0x4f0] sm:$0xf]
  %v374 = vld [vmem:[%s1 + $0x4f4] sm:$0xf]
  %v375 = vld [vmem:[%s1 + $0x4f8] sm:$0xf]
  %v376 = vld [vmem:[%s1 + $0x4fc] sm:$0xf]
  %v377 = vld [vmem:[%s1 + $0x500] sm:$0xf]
  %v378 = vld [vmem:[%s1 + $0x504] sm:$0xf]
  %v379 = vld [vmem:[%s1 + $0x508] sm:$0xf]
  %v380 = vld [vmem:[%s1 + $0x50c] sm:$0xf]
  %v381 = vld [vmem:[%s1 + $0x510] sm:$0xf]
  %v382 = vld [vmem:[%s1 + $0x514] sm:$0xf]
  %v383 = vld [vmem:[%s1 + $0x518] sm:$0xf]
  %v384 = vld [vmem:[%s1 + $0x51c] sm:$0xf]
  %v385 = vld [vmem:[%s1 + $0x520] sm:$0xf]
  %v386 = vld [vmem:[%s1 + $0x524] sm:$0xf]
  %v387 = vld [vmem:[%s1 + $0x528] sm:$0xf]
  %v388 = vld [vmem:[%s1 + $0x52c] sm:$0xf]
  %v389 = vld [vmem:[%s1 + $0x530] sm:$0xf]
  %v390 = vld [vmem:[%s1 + $0x534] sm:$0xf]
  %v391 = vld [vmem:[%s1 + $0x538] sm:$0xf]
  %v392 = vld [vmem:[%s1 + $0x53c] sm:$0xf]
  %v393 = vld [vmem:[%s1 + $0x540] sm:$0xf]
  %v394 = vld [vmem:[%s1 + $0x544] sm:$0xf]
  %v395 = vld [vmem:[%s1 + $0x548] sm:$0xf]
  %v396 = vld [vmem:[%s1 + $0x54c] sm:$0xf]
  %v397 = vld [vmem:[%s1 + $0x550] sm:$0xf]
  %v398 = vld [vmem:[%s1 + $0x554] sm:$0xf]
  %v399 = vld [vmem:[%s1 + $0x558] sm:$0xf]
  %v400 = vld [vmem:[%s1 + $0x55c] sm:$0xf]
  %v401 = vld [vmem:[%s1 + $0x560] sm:$0xf]
  %v402 = vld [vmem:[%s1 + $0x564] sm:$0xf]
  %v403 = vld [vmem:[%s1 + $0x568] sm:$0xf]
  %v404 = vld [vmem:[%s1 + $0x56c] sm:$0xf]
  %v405 = vld [vmem:[%s1 + $0x570] sm:$0xf]
  %v406 = vld [vmem:[%s1 + $0x574] sm:$0xf]
  %v407 = vld [vmem:[%s1 + $0x578] sm:$0xf]
  %v408 = vld [vmem:[%s1 + $0x57c] sm:$0xf]
  %v409 = vld [vmem:[%s1 + $0x580] sm:$0xf]
  %v410 = vld [vmem:[%s1 + $0x584] sm:$0xf]
  %v411 = vld [vmem:[%s1 + $0x588] sm:$0xf]
  %v412 = vld [vmem:[%s1 + $0x58c] sm:$0xf]
  %v413 = vld [vmem:[%s1 + $0x590] sm:$0xf]
  %v414 = vld [vmem:[%s1 + $0x594] sm:$0xf]
  %v415 = vld [vmem:[%s1 + $0x598] sm:$0xf]
  %v416 = vld [vmem:[%s1 + $0x59c] sm:$0xf]
  %v417 = vld [vmem:[%s1 + $0x5a0] sm:$0xf]
  %v418 = vld [vmem:[%s1 + $0x5a4] sm:$0xf]
  %v419 = vld [vmem:[%s1 + $0x5a8] sm:$0xf]
  %v420 = vld [vmem:[%s1 + $0x5ac] sm:$0xf]
  %v421 = vld [vmem:[%s1 + $0x5b0] sm:$0xf]
  %v422 = vld [vmem:[%s1 + $0x5b4] sm:$0xf]
  %v423 = vld [vmem:[%s1 + $0x5b8] sm:$0xf]
  %v424 = vld [vmem:[%s1 + $0x5bc] sm:$0xf]
  %v425 = vld [vmem:[%s1 + $0x5c0] sm:$0xf]
  %v426 = vld [vmem:[%s1 + $0x5c4] sm:$0xf]
  %v427 = vld [vmem:[%s1 + $0x5c8] sm:$0xf]
  %v428 = vld [vmem:[%s1 + $0x5cc] sm:$0xf]
  %v429 = vld [vmem:[%s1 + $0x5d0] sm:$0xf]
  %v430 = vld [vmem:[%s1 + $0x5d4] sm:$0xf]
  %v431 = vld [vmem:[%s1 + $0x5d8] sm:$0xf]
  %v432 = vld [vmem:[%s1 + $0x5dc] sm:$0xf]
  %v433 = vld [vmem:[%s1 + $0x5e0] sm:$0xf]
  %v434 = vld [vmem:[%s1 + $0x5e4] sm:$0xf]
  %v435 = vld [vmem:[%s1 + $0x5e8] sm:$0xf]
  %v436 = vld [vmem:[%s1 + $0x5ec] sm:$0xf]
  %v437 = vld [vmem:[%s1 + $0x5f0] sm:$0xf]
  %v438 = vld [vmem:[%s1 + $0x5f4] sm:$0xf]
  %v439 = vld [vmem:[%s1 + $0x5f8] sm:$0xf]
  %v440 = vld [vmem:[%s1 + $0x5fc] sm:$0xf]
  %v441 = vld [vmem:[%s1 + $0x600] sm:$0xf]
  %v442 = vld [vmem:[%s1 + $0x604] sm:$0xf]
  %v443 = vld [vmem:[%s1 + $0x608] sm:$0xf]
  %v444 = vld [vmem:[%s1 + $0x60c] sm:$0xf]
  %v445 = vld [vmem:[%s1 + $0x610] sm:$0xf]
  %v446 = vld [vmem:[%s1 + $0x614] sm:$0xf]
  %v447 = vld [vmem:[%s1 + $0x618] sm:$0xf]
  %v448 = vld [vmem:[%s1 + $0x61c] sm:$0xf]
  %v449 = vld [vmem:[%s1 + $0x620] sm:$0xf]
  %v450 = vld [vmem:[%s1 + $0x624] sm:$0xf]
  %v451 = vld [vmem:[%s1 + $0x628] sm:$0xf]
  %v452 = vld [vmem:[%s1 + $0x62c] sm:$0xf]
  %v453 = vld [vmem:[%s1 + $0x630] sm:$0xf]
  %v454 = vld [vmem:[%s1 + $0x634] sm:$0xf]
  %v455 = vld [vmem:[%s1 + $0x638] sm:$0xf]
  %v456 = vld [vmem:[%s1 + $0x63c] sm:$0xf]
  %v457 = vld [vmem:[%s1 + $0x640] sm:$0xf]
  %v458 = vld [vmem:[%s1 + $0x644] sm:$0xf]
  %v459 = vld [vmem:[%s1 + $0x648] sm:$0xf]
  %v460 = vld [vmem:[%s1 + $0x64c] sm:$0xf]
  %v461 = vld [vmem:[%s1 + $0x650] sm:$0xf]
  %v462 = vld [vmem:[%s1 + $0x654] sm:$0xf]
  %v463 = vld [vmem:[%s1 + $0x658] sm:$0xf]
  %v464 = vld [vmem:[%s1 + $0x65c] sm:$0xf]
  %v465 = vld [vmem:[%s1 + $0x660] sm:$0xf]
  %v466 = vld [vmem:[%s1 + $0x664] sm:$0xf]
  %v467 = vld [vmem:[%s1 + $0x668] sm:$0xf]
  %v468 = vld [vmem:[%s1 + $0x66c] sm:$0xf]
  %v469 = vld [vmem:[%s1 + $0x670] sm:$0xf]
  %v470 = vld [vmem:[%s1 + $0x674] sm:$0xf]
  %v471 = vld [vmem:[%s1 + $0x678] sm:$0xf]
  %v472 = vld [vmem:[%s1 + $0x67c] sm:$0xf]
  %v473 = vld [vmem:[%s1 + $0x680] sm:$0xf]
  %v474 = vld [vmem:[%s1 + $0x684] sm:$0xf]
  %v475 = vld [vmem:[%s1 + $0x688] sm:$0xf]
  %v476 = vld [vmem:[%s1 + $0x68c] sm:$0xf]
  %v477 = vld [vmem:[%s1 + $0x690] sm:$0xf]
  %v478 = vld [vmem:[%s1 + $0x694] sm:$0xf]
  %v479 = vld [vmem:[%s1 + $0x698] sm:$0xf]
  %v480 = vld [vmem:[%s1 + $0x69c] sm:$0xf]
  %v481 = vld [vmem:[%s1 + $0x6a0] sm:$0xf]
  %v482 = vld [vmem:[%s1 + $0x6a4] sm:$0xf]
  %v483 = vld [vmem:[%s1 + $0x6a8] sm:$0xf]
  %v484 = vld [vmem:[%s1 + $0x6ac] sm:$0xf]
  %v485 = vld [vmem:[%s1 + $0x6b0] sm:$0xf]
  %v486 = vld [vmem:[%s1 + $0x6b4] sm:$0xf]
  %v487 = vld [vmem:[%s1 + $0x6b8] sm:$0xf]
  %v488 = vld [vmem:[%s1 + $0x6bc] sm:$0xf]
  %v489 = vld [vmem:[%s1 + $0x6c0] sm:$0xf]
  %v490 = vld [vmem:[%s1 + $0x6c4] sm:$0xf]
  %v491 = vld [vmem:[%s1 + $0x6c8] sm:$0xf]
  %v492 = vld [vmem:[%s1 + $0x6cc] sm:$0xf]
  %v493 = vld [vmem:[%s1 + $0x6d0] sm:$0xf]
  %v494 = vld [vmem:[%s1 + $0x6d4] sm:$0xf]
  %v495 = vld [vmem:[%s1 + $0x6d8] sm:$0xf]
  %v496 = vld [vmem:[%s1 + $0x6dc] sm:$0xf]
  %v497 = vld [vmem:[%s1 + $0x6e0] sm:$0xf]
  %v498 = vld [vmem:[%s1 + $0x6e4] sm:$0xf]
  %v499 = vld [vmem:[%s1 + $0x6e8] sm:$0xf]
  %v500 = vld [vmem:[%s1 + $0x6ec] sm:$0xf]
  %v501 = vld [vmem:[%s1 + $0x6f0] sm:$0xf]
  %v502 = vld [vmem:[%s1 + $0x6f4] sm:$0xf]
  %v503 = vld [vmem:[%s1 + $0x6f8] sm:$0xf]
  %v504 = vld [vmem:[%s1 + $0x6fc] sm:$0xf]
  %v505 = vld [vmem:[%s1 + $0x700] sm:$0xf]
  %v506 = vld [vmem:[%s1 + $0x704] sm:$0xf]
  %v507 = vld [vmem:[%s1 + $0x708] sm:$0xf]
  %v508 = vld [vmem:[%s1 + $0x70c] sm:$0xf]
  %v509 = vld [vmem:[%s1 + $0x710] sm:$0xf]
  %v510 = vld [vmem:[%s1 + $0x714] sm:$0xf]
  %v511 = vld [vmem:[%s1 + $0x718] sm:$0xf]
  %v512 = vld [vmem:[%s1 + $0x71c] sm:$0xf]
  %v513 = vld [vmem:[%s1 + $0x720] sm:$0xf]
  %v514 = vld [vmem:[%s1 + $0x724] sm:$0xf]
  %v515 = vld [vmem:[%s1 + $0x728] sm:$0xf]
  %v516 = vld [vmem:[%s1 + $0x72c] sm:$0xf]
  %v517 = vld [vmem:[%s1 + $0x730] sm:$0xf]
  %v518 = vld [vmem:[%s1 + $0x734] sm:$0xf]
  %v519 = vld [vmem:[%s1 + $0x738] sm:$0xf]
  %v520 = vld [vmem:[%s1 + $0x73c] sm:$0xf]
  %v521 = vld [vmem:[%s1 + $0x740] sm:$0xf]
  %v522 = vld [vmem:[%s1 + $0x744] sm:$0xf]
  %v523 = vld [vmem:[%s1 + $0x748] sm:$0xf]
  %v524 = vld [vmem:[%s1 + $0x74c] sm:$0xf]
  %v525 = vld [vmem:[%s1 + $0x750] sm:$0xf]
  %v526 = vld [vmem:[%s1 + $0x754] sm:$0xf]
  %v527 = vld [vmem:[%s1 + $0x758] sm:$0xf]
  %v528 = vld [vmem:[%s1 + $0x75c] sm:$0xf]
  %v529 = vld [vmem:[%s1 + $0x760] sm:$0xf]
  %v530 = vld [vmem:[%s1 + $0x764] sm:$0xf]
  %v531 = vld [vmem:[%s1 + $0x768] sm:$0xf]
  %v532 = vld [vmem:[%s1 + $0x76c] sm:$0xf]
  %v533 = vld [vmem:[%s1 + $0x770] sm:$0xf]
  %v534 = vld [vmem:[%s1 + $0x774] sm:$0xf]
  %v535 = vld [vmem:[%s1 + $0x778] sm:$0xf]
  %v536 = vld [vmem:[%s1 + $0x77c] sm:$0xf]
  %v537 = vld [vmem:[%s1 + $0x780] sm:$0xf]
  %v538 = vld [vmem:[%s1 + $0x784] sm:$0xf]
  %v539 = vld [vmem:[%s1 + $0x788] sm:$0xf]
  %v540 = vld [vmem:[%s1 + $0x78c] sm:$0xf]
  %v541 = vld [vmem:[%s1 + $0x790] sm:$0xf]
  %v542 = vld [vmem:[%s1 + $0x794] sm:$0xf]
  %v543 = vld [vmem:[%s1 + $0x798] sm:$0xf]
  %v544 = vld [vmem:[%s1 + $0x79c] sm:$0xf]
  %v545 = vld [vmem:[%s1 + $0x7a0] sm:$0xf]
  %v546 = vld [vmem:[%s1 + $0x7a4] sm:$0xf]
  %v547 = vld [vmem:[%s1 + $0x7a8] sm:$0xf]
  %v548 = vld [vmem:[%s1 + $0x7ac] sm:$0xf]
  %v549 = vld [vmem:[%s1 + $0x7b0] sm:$0xf]
  %v550 = vld [vmem:[%s1 + $0x7b4] sm:$0xf]
  %v551 = vld [vmem:[%s1 + $0x7b8] sm:$0xf]
  %v552 = vld [vmem:[%s1 + $0x7bc] sm:$0xf]
  %v553 = vld [vmem:[%s1 + $0x7c0] sm:$0xf]
  %v554 = vld [vmem:[%s1 + $0x7c4] sm:$0xf]
  %v555 = vld [vmem:[%s1 + $0x7c8] sm:$0xf]
  %v556 = vld [vmem:[%s1 + $0x7cc] sm:$0xf]
  %v557 = vld [vmem:[%s1 + $0x7d0] sm:$0xf]
  %v558 = vld [vmem:[%s1 + $0x7d4] sm:$0xf]
  %v559 = vld [vmem:[%s1 + $0x7d8] sm:$0xf]
  %v560 = vld [vmem:[%s1 + $0x7dc] sm:$0xf]
  %v561 = vld [vmem:[%s1 + $0x7e0] sm:$0xf]
  %v562 = vld [vmem:[%s1 + $0x7e4] sm:$0xf]
  %v563 = vld [vmem:[%s1 + $0x7e8] sm:$0xf]
  %v564 = vld [vmem:[%s1 + $0x7ec] sm:$0xf]
  %v565 = vld [vmem:[%s1 + $0x7f0] sm:$0xf]
  %v566 = vld [vmem:[%s1 + $0x7f4] sm:$0xf]
  %v567 = vld [vmem:[%s1 + $0x7f8] sm:$0xf]
  %v568 = vld [vmem:[%s1 + $0x7fc] sm:$0xf]
  %v569 = vld [vmem:[%s1 + $0x800] sm:$0xf]
  %v570 = vld [vmem:[%s1 + $0x804] sm:$0xf]
  %v571 = vld [vmem:[%s1 + $0x808] sm:$0xf]
  %v572 = vld [vmem:[%s1 + $0x80c] sm:$0xf]
  %v573 = vld [vmem:[%s1 + $0x810] sm:$0xf]
  %v574 = vld [vmem:[%s1 + $0x814] sm:$0xf]
  %v575 = vld [vmem:[%s1 + $0x818] sm:$0xf]
  %v576 = vld [vmem:[%s1 + $0x81c] sm:$0xf]
  %v577 = vld [vmem:[%s1 + $0x820] sm:$0xf]
  %v578 = vld [vmem:[%s1 + $0x824] sm:$0xf]
  %v579 = vld [vmem:[%s1 + $0x828] sm:$0xf]
  %v580 = vld [vmem:[%s1 + $0x82c] sm:$0xf]
  %v581 = vld [vmem:[%s1 + $0x830] sm:$0xf]
  %v582 = vld [vmem:[%s1 + $0x834] sm:$0xf]
  %v583 = vld [vmem:[%s1 + $0x838] sm:$0xf]
  %v584 = vld [vmem:[%s1 + $0x83c] sm:$0xf]
  %v585 = vld [vmem:[%s1 + $0x840] sm:$0xf]
  %v586 = vld [vmem:[%s1 + $0x844] sm:$0xf]
  %v587 = vld [vmem:[%s1 + $0x848] sm:$0xf]
  %v588 = vld [vmem:[%s1 + $0x84c] sm:$0xf]
  %v589 = vld [vmem:[%s1 + $0x850] sm:$0xf]
  %v590 = vld [vmem:[%s1 + $0x854] sm:$0xf]
  %v591 = vld [vmem:[%s1 + $0x858] sm:$0xf]
  %v592 = vld [vmem:[%s1 + $0x85c] sm:$0xf]
  %v593 = vld [vmem:[%s1 + $0x860] sm:$0xf]
  %v594 = vld [vmem:[%s1 + $0x864] sm:$0xf]
  %v595 = vld [vmem:[%s1 + $0x868] sm:$0xf]
  %v596 = vld [vmem:[%s1 + $0x86c] sm:$0xf]
  %v597 = vld [vmem:[%s1 + $0x870] sm:$0xf]
  %v598 = vld [vmem:[%s1 + $0x874] sm:$0xf]
  %v599 = vld [vmem:[%s1 + $0x878] sm:$0xf]
  %v600 = vld [vmem:[%s1 + $0x87c] sm:$0xf]
  %v601 = vld [vmem:[%s1 + $0x880] sm:$0xf]
  %v602 = vld [vmem:[%s1 + $0x884] sm:$0xf]
  %v603 = vld [vmem:[%s1 + $0x888] sm:$0xf]
  %v604 = vld [vmem:[%s1 + $0x88c] sm:$0xf]
  %v605 = vld [vmem:[%s1 + $0x890] sm:$0xf]
  %v606 = vld [vmem:[%s1 + $0x894] sm:$0xf]
  %v607 = vld [vmem:[%s1 + $0x898] sm:$0xf]
  %v608 = vld [vmem:[%s1 + $0x89c] sm:$0xf]
  %v609 = vld [vmem:[%s1 + $0x8a0] sm:$0xf]
  %v610 = vld [vmem:[%s1 + $0x8a4] sm:$0xf]
  %v611 = vld [vmem:[%s1 + $0x8a8] sm:$0xf]
  %v612 = vld [vmem:[%s1 + $0x8ac] sm:$0xf]
  %v613 = vld [vmem:[%s1 + $0x8b0] sm:$0xf]
  %v614 = vld [vmem:[%s1 + $0x8b4] sm:$0xf]
  %v615 = vld [vmem:[%s1 + $0x8b8] sm:$0xf]
  %v616 = vld [vmem:[%s1 + $0x8bc] sm:$0xf]
  %v617 = vld [vmem:[%s1 + $0x8c0] sm:$0xf]
  %v618 = vld [vmem:[%s1 + $0x8c4] sm:$0xf]
  %v619 = vld [vmem:[%s1 + $0x8c8] sm:$0xf]
  %v620 = vld [vmem:[%s1 + $0x8cc] sm:$0xf]
  %v621 = vld [vmem:[%s1 + $0x8d0] sm:$0xf]
  %v622 = vld [vmem:[%s1 + $0x8d4] sm:$0xf]
  %v623 = vld [vmem:[%s1 + $0x8d8] sm:$0xf]
  %v624 = vld [vmem:[%s1 + $0x8dc] sm:$0xf]
  %v625 = vld [vmem:[%s1 + $0x8e0] sm:$0xf]
  %v626 = vld [vmem:[%s1 + $0x8e4] sm:$0xf]
  %v627 = vld [vmem:[%s1 + $0x8e8] sm:$0xf]
  %v628 = vld [vmem:[%s1 + $0x8ec] sm:$0xf]
  %v629 = vld [vmem:[%s1 + $0x8f0] sm:$0xf]
  %v630 = vld [vmem:[%s1 + $0x8f4] sm:$0xf]
  %v631 = vld [vmem:[%s1 + $0x8f8] sm:$0xf]
  %v632 = vld [vmem:[%s1 + $0x8fc] sm:$0xf]
  %v633 = vld [vmem:[%s1 + $0x900] sm:$0xf]
  %v634 = vld [vmem:[%s1 + $0x904] sm:$0xf]
  %v635 = vld [vmem:[%s1 + $0x908] sm:$0xf]
  %v636 = vld [vmem:[%s1 + $0x90c] sm:$0xf]
  %v637 = vld [vmem:[%s1 + $0x910] sm:$0xf]
  %v638 = vld [vmem:[%s1 + $0x914] sm:$0xf]
  %v639 = vld [vmem:[%s1 + $0x918] sm:$0xf]
  %v640 = vld [vmem:[%s1 + $0x91c] sm:$0xf]
  %v641 = vld [vmem:[%s1 + $0x920] sm:$0xf]
  %v642 = vld [vmem:[%s1 + $0x924] sm:$0xf]
  %v643 = vld [vmem:[%s1 + $0x928] sm:$0xf]
  %v644 = vld [vmem:[%s1 + $0x92c] sm:$0xf]
  %v645 = vld [vmem:[%s1 + $0x930] sm:$0xf]
  %v646 = vld [vmem:[%s1 + $0x934] sm:$0xf]
  %v647 = vld [vmem:[%s1 + $0x938] sm:$0xf]
  %v648 = vld [vmem:[%s1 + $0x93c] sm:$0xf]
  %v649 = vld [vmem:[%s1 + $0x940] sm:$0xf]
  %v650 = vld [vmem:[%s1 + $0x944] sm:$0xf]
  %v651 = vld [vmem:[%s1 + $0x948] sm:$0xf]
  %v652 = vld [vmem:[%s1 + $0x94c] sm:$0xf]
  %v653 = vld [vmem:[%s1 + $0x950] sm:$0xf]
  %v654 = vld [vmem:[%s1 + $0x954] sm:$0xf]
  %v655 = vld [vmem:[%s1 + $0x958] sm:$0xf]
  %v656 = vld [vmem:[%s1 + $0x95c] sm:$0xf]
  %v657 = vld [vmem:[%s1 + $0x960] sm:$0xf]
  %v658 = vld [vmem:[%s1 + $0x964] sm:$0xf]
  %v659 = vld [vmem:[%s1 + $0x968] sm:$0xf]
  %v660 = vld [vmem:[%s1 + $0x96c] sm:$0xf]
  %v661 = vld [vmem:[%s1 + $0x970] sm:$0xf]
  %v662 = vld [vmem:[%s1 + $0x974] sm:$0xf]
  %v663 = vld [vmem:[%s1 + $0x978] sm:$0xf]
  %v664 = vld [vmem:[%s1 + $0x97c] sm:$0xf]
  %v665 = vld [vmem:[%s1 + $0x980] sm:$0xf]
  %v666 = vld [vmem:[%s1 + $0x984] sm:$0xf]
  %v667 = vld [vmem:[%s1 + $0x988] sm:$0xf]
  %v668 = vld [vmem:[%s1 + $0x98c] sm:$0xf]
  %v669 = vld [vmem:[%s1 + $0x990] sm:$0xf]
  %v670 = vld [vmem:[%s1 + $0x994] sm:$0xf]
  %v671 = vld [vmem:[%s1 + $0x998] sm:$0xf]
  %v672 = vld [vmem:[%s1 + $0x99c] sm:$0xf]
  %v673 = vld [vmem:[%s1 + $0x9a0] sm:$0xf]
  %v674 = vld [vmem:[%s1 + $0x9a4] sm:$0xf]
  %v675 = vld [vmem:[%s1 + $0x9a8] sm:$0xf]
  %v676 = vld [vmem:[%s1 + $0x9ac] sm:$0xf]
  %v677 = vld [vmem:[%s1 + $0x9b0] sm:$0xf]
  %v678 = vld [vmem:[%s1 + $0x9b4] sm:$0xf]
  %v679 = vld [vmem:[%s1 + $0x9b8] sm:$0xf]
  %v680 = vld [vmem:[%s1 + $0x9bc] sm:$0xf]
  %v681 = vld [vmem:[%s1 + $0x9c0] sm:$0xf]
  %v682 = vld [vmem:[%s1 + $0x9c4] sm:$0xf]
  %v683 = vld [vmem:[%s1 + $0x9c8] sm:$0xf]
  %v684 = vld [vmem:[%s1 + $0x9cc] sm:$0xf]
  %v685 = vld [vmem:[%s1 + $0x9d0] sm:$0xf]
  %v686 = vld [vmem:[%s1 + $0x9d4] sm:$0xf]
  %v687 = vld [vmem:[%s1 + $0x9d8] sm:$0xf]
  %v688 = vld [vmem:[%s1 + $0x9dc] sm:$0xf]
  %v689 = vld [vmem:[%s1 + $0x9e0] sm:$0xf]
  %v690 = vld [vmem:[%s1 + $0x9e4] sm:$0xf]
  %v691 = vld [vmem:[%s1 + $0x9e8] sm:$0xf]
  %v692 = vld [vmem:[%s1 + $0x9ec] sm:$0xf]
  %v693 = vld [vmem:[%s1 + $0x9f0] sm:$0xf]
  %v694 = vld [vmem:[%s1 + $0x9f4] sm:$0xf]
  %v695 = vld [vmem:[%s1 + $0x9f8] sm:$0xf]
  %v696 = vld [vmem:[%s1 + $0x9fc] sm:$0xf]
  %v697 = vld [vmem:[%s1 + $0xa00] sm:$0xf]
  %v698 = vld [vmem:[%s1 + $0xa04] sm:$0xf]
  %v699 = vld [vmem:[%s1 + $0xa08] sm:$0xf]
  %v700 = vld [vmem:[%s1 + $0xa0c] sm:$0xf]
  %v701 = vld [vmem:[%s1 + $0xa10] sm:$0xf]
  %v702 = vld [vmem:[%s1 + $0xa14] sm:$0xf]
  %v703 = vld [vmem:[%s1 + $0xa18] sm:$0xf]
  %v704 = vld [vmem:[%s1 + $0xa1c] sm:$0xf]
  %v705 = vld [vmem:[%s1 + $0xa20] sm:$0xf]
  %v706 = vld [vmem:[%s1 + $0xa24] sm:$0xf]
  %v707 = vld [vmem:[%s1 + $0xa28] sm:$0xf]
  %v708 = vld [vmem:[%s1 + $0xa2c] sm:$0xf]
  %v709 = vld [vmem:[%s1 + $0xa30] sm:$0xf]
  %v710 = vld [vmem:[%s1 + $0xa34] sm:$0xf]
  %v711 = vld [vmem:[%s1 + $0xa38] sm:$0xf]
  %v712 = vld [vmem:[%s1 + $0xa3c] sm:$0xf]
  %v713 = vld [vmem:[%s1 + $0xa40] sm:$0xf]
  %v714 = vld [vmem:[%s1 + $0xa44] sm:$0xf]
  %v715 = vld [vmem:[%s1 + $0xa48] sm:$0xf]
  %v716 = vld [vmem:[%s1 + $0xa4c] sm:$0xf]
  %v717 = vld [vmem:[%s1 + $0xa50] sm:$0xf]
  %v718 = vld [vmem:[%s1 + $0xa54] sm:$0xf]
  %v719 = vld [vmem:[%s1 + $0xa58] sm:$0xf]
  %v720 = vld [vmem:[%s1 + $0xa5c] sm:$0xf]
  %v721 = vld [vmem:[%s1 + $0xa60] sm:$0xf]
  %v722 = vld [vmem:[%s1 + $0xa64] sm:$0xf]
  %v723 = vld [vmem:[%s1 + $0xa68] sm:$0xf]
  %v724 = vld [vmem:[%s1 + $0xa6c] sm:$0xf]
  %v725 = vld [vmem:[%s1 + $0xa70] sm:$0xf]
  %v726 = vld [vmem:[%s1 + $0xa74] sm:$0xf]
  %v727 = vld [vmem:[%s1 + $0xa78] sm:$0xf]
  %v728 = vld [vmem:[%s1 + $0xa7c] sm:$0xf]
  %v729 = vld [vmem:[%s1 + $0xa80] sm:$0xf]
  %v730 = vld [vmem:[%s1 + $0xa84] sm:$0xf]
  %v731 = vld [vmem:[%s1 + $0xa88] sm:$0xf]
  %v732 = vld [vmem:[%s1 + $0xa8c] sm:$0xf]
  %v733 = vld [vmem:[%s1 + $0xa90] sm:$0xf]
  %v734 = vld [vmem:[%s1 + $0xa94] sm:$0xf]
  %v735 = vld [vmem:[%s1 + $0xa98] sm:$0xf]
  %v736 = vld [vmem:[%s1 + $0xa9c] sm:$0xf]
  %v737 = vld [vmem:[%s1 + $0xaa0] sm:$0xf]
  %v738 = vld [vmem:[%s1 + $0xaa4] sm:$0xf]
  %v739 = vld [vmem:[%s1 + $0xaa8] sm:$0xf]
  %v740 = vld [vmem:[%s1 + $0xaac] sm:$0xf]
  %v741 = vld [vmem:[%s1 + $0xab0] sm:$0xf]
  %v742 = vld [vmem:[%s1 + $0xab4] sm:$0xf]
  %v743 = vld [vmem:[%s1 + $0xab8] sm:$0xf]
  %v744 = vld [vmem:[%s1 + $0xabc] sm:$0xf]
  %v745 = vld [vmem:[%s1 + $0xac0] sm:$0xf]
  %v746 = vld [vmem:[%s1 + $0xac4] sm:$0xf]
  %v747 = vld [vmem:[%s1 + $0xac8] sm:$0xf]
  %v748 = vld [vmem:[%s1 + $0xacc] sm:$0xf]
  %v749 = vld [vmem:[%s1 + $0xad0] sm:$0xf]
  %v750 = vld [vmem:[%s1 + $0xad4] sm:$0xf]
  %v751 = vld [vmem:[%s1 + $0xad8] sm:$0xf]
  %v752 = vld [vmem:[%s1 + $0xadc] sm:$0xf]
  %v753 = vld [vmem:[%s1 + $0xae0] sm:$0xf]
  %v754 = vld [vmem:[%s1 + $0xae4] sm:$0xf]
  %v755 = vld [vmem:[%s1 + $0xae8] sm:$0xf]
  %v756 = vld [vmem:[%s1 + $0xaec] sm:$0xf]
  %v757 = vld [vmem:[%s1 + $0xaf0] sm:$0xf]
  %v758 = vld [vmem:[%s1 + $0xaf4] sm:$0xf]
  %v759 = vld [vmem:[%s1 + $0xaf8] sm:$0xf]
  %v760 = vld [vmem:[%s1 + $0xafc] sm:$0xf]
  %v761 = vld [vmem:[%s1 + $0xb00] sm:$0xf]
  %v762 = vld [vmem:[%s1 + $0xb04] sm:$0xf]
  %v763 = vld [vmem:[%s1 + $0xb08] sm:$0xf]
  %v764 = vld [vmem:[%s1 + $0xb0c] sm:$0xf]
  %v765 = vld [vmem:[%s1 + $0xb10] sm:$0xf]
  %v766 = vld [vmem:[%s1 + $0xb14] sm:$0xf]
  %v767 = vld [vmem:[%s1 + $0xb18] sm:$0xf]
  %v768 = vld [vmem:[%s1 + $0xb1c] sm:$0xf]
  %v769 = vld [vmem:[%s1 + $0xb20] sm:$0xf]
  %v770 = vld [vmem:[%s1 + $0xb24] sm:$0xf]
  %v771 = vld [vmem:[%s1 + $0xb28] sm:$0xf]
  %v772 = vld [vmem:[%s1 + $0xb2c] sm:$0xf]
  %v773 = vld [vmem:[%s1 + $0xb30] sm:$0xf]
  %v774 = vld [vmem:[%s1 + $0xb34] sm:$0xf]
  %v775 = vld [vmem:[%s1 + $0xb38] sm:$0xf]
  %v776 = vld [vmem:[%s1 + $0xb3c] sm:$0xf]
  %v777 = vld [vmem:[%s1 + $0xb40] sm:$0xf]
  %v778 = vld [vmem:[%s1 + $0xb44] sm:$0xf]
  %v779 = vld [vmem:[%s1 + $0xb48] sm:$0xf]
  %v780 = vld [vmem:[%s1 + $0xb4c] sm:$0xf]
  %v781 = vld [vmem:[%s1 + $0xb50] sm:$0xf]
  %v782 = vld [vmem:[%s1 + $0xb54] sm:$0xf]
  %v783 = vld [vmem:[%s1 + $0xb58] sm:$0xf]
  %v784 = vld [vmem:[%s1 + $0xb5c] sm:$0xf]
  %v785 = vld [vmem:[%s1 + $0xb60] sm:$0xf]
  %v786 = vld [vmem:[%s1 + $0xb64] sm:$0xf]
  %v787 = vld [vmem:[%s1 + $0xb68] sm:$0xf]
  %v788 = vld [vmem:[%s1 + $0xb6c] sm:$0xf]
  %v789 = vld [vmem:[%s1 + $0xb70] sm:$0xf]
  %v790 = vld [vmem:[%s1 + $0xb74] sm:$0xf]
  %v791 = vld [vmem:[%s1 + $0xb78] sm:$0xf]
  %v792 = vld [vmem:[%s1 + $0xb7c] sm:$0xf]
  %v793 = vld [vmem:[%s1 + $0xb80] sm:$0xf]
  %v794 = vld [vmem:[%s1 + $0xb84] sm:$0xf]
  %v795 = vld [vmem:[%s1 + $0xb88] sm:$0xf]
  %v796 = vld [vmem:[%s1 + $0xb8c] sm:$0xf]
  %v797 = vld [vmem:[%s1 + $0xb90] sm:$0xf]
  %v798 = vld [vmem:[%s1 + $0xb94] sm:$0xf]
  %v799 = vld [vmem:[%s1 + $0xb98] sm:$0xf]
  %v800 = vld [vmem:[%s1 + $0xb9c] sm:$0xf]
  %v801 = vld [vmem:[%s1 + $0xba0] sm:$0xf]
  %v802 = vld [vmem:[%s1 + $0xba4] sm:$0xf]
  %v803 = vld [vmem:[%s1 + $0xba8] sm:$0xf]
  %v804 = vld [vmem:[%s1 + $0xbac] sm:$0xf]
  %v805 = vld [vmem:[%s1 + $0xbb0] sm:$0xf]
  %v806 = vld [vmem:[%s1 + $0xbb4] sm:$0xf]
  %v807 = vld [vmem:[%s1 + $0xbb8] sm:$0xf]
  %v808 = vld [vmem:[%s1 + $0xbbc] sm:$0xf]
  %v809 = vld [vmem:[%s1 + $0xbc0] sm:$0xf]
  %v810 = vld [vmem:[%s1 + $0xbc4] sm:$0xf]
  %v811 = vld [vmem:[%s1 + $0xbc8] sm:$0xf]
  %v812 = vld [vmem:[%s1 + $0xbcc] sm:$0xf]
  %v813 = vld [vmem:[%s1 + $0xbd0] sm:$0xf]
  %v814 = vld [vmem:[%s1 + $0xbd4] sm:$0xf]
  %v815 = vld [vmem:[%s1 + $0xbd8] sm:$0xf]
  %v816 = vld [vmem:[%s1 + $0xbdc] sm:$0xf]
  %v817 = vld [vmem:[%s1 + $0xbe0] sm:$0xf]
  %v818 = vld [vmem:[%s1 + $0xbe4] sm:$0xf]
  %v819 = vld [vmem:[%s1 + $0xbe8] sm:$0xf]
  %v820 = vld [vmem:[%s1 + $0xbec] sm:$0xf]
  %v821 = vld [vmem:[%s1 + $0xbf0] sm:$0xf]
  %v822 = vld [vmem:[%s1 + $0xbf4] sm:$0xf]
  %v823 = vld [vmem:[%s1 + $0xbf8] sm:$0xf]
  %v824 = vld [vmem:[%s1 + $0xbfc] sm:$0xf]
  %v825 = vld [vmem:[%s1 + $0xc00] sm:$0xf]
  %v826 = vld [vmem:[%s1 + $0xc04] sm:$0xf]
  %v827 = vld [vmem:[%s1 + $0xc08] sm:$0xf]
  %v828 = vld [vmem:[%s1 + $0xc0c] sm:$0xf]
  %v829 = vld [vmem:[%s1 + $0xc10] sm:$0xf]
  %v830 = vld [vmem:[%s1 + $0xc14] sm:$0xf]
  %v831 = vld [vmem:[%s1 + $0xc18] sm:$0xf]
  %v832 = vld [vmem:[%s1 + $0xc1c] sm:$0xf]
  %v833 = vld [vmem:[%s1 + $0xc20] sm:$0xf]
  %v834 = vld [vmem:[%s1 + $0xc24] sm:$0xf]
  %v835 = vld [vmem:[%s1 + $0xc28] sm:$0xf]
  %v836 = vld [vmem:[%s1 + $0xc2c] sm:$0xf]
  %v837 = vld [vmem:[%s1 + $0xc30] sm:$0xf]
  %v838 = vld [vmem:[%s1 + $0xc34] sm:$0xf]
  %v839 = vld [vmem:[%s1 + $0xc38] sm:$0xf]
  %v840 = vld [vmem:[%s1 + $0xc3c] sm:$0xf]
  %v841 = vld [vmem:[%s1 + $0xc40] sm:$0xf]
  %v842 = vld [vmem:[%s1 + $0xc44] sm:$0xf]
  %v843 = vld [vmem:[%s1 + $0xc48] sm:$0xf]
  %v844 = vld [vmem:[%s1 + $0xc4c] sm:$0xf]
  %v845 = vld [vmem:[%s1 + $0xc50] sm:$0xf]
  %v846 = vld [vmem:[%s1 + $0xc54] sm:$0xf]
  %v847 = vld [vmem:[%s1 + $0xc58] sm:$0xf]
  %v848 = vld [vmem:[%s1 + $0xc5c] sm:$0xf]
  %v849 = vld [vmem:[%s1 + $0xc60] sm:$0xf]
  %v850 = vld [vmem:[%s1 + $0xc64] sm:$0xf]
  %v851 = vld [vmem:[%s1 + $0xc68] sm:$0xf]
  %v852 = vld [vmem:[%s1 + $0xc6c] sm:$0xf]
  %v853 = vld [vmem:[%s1 + $0xc70] sm:$0xf]
  %v854 = vld [vmem:[%s1 + $0xc74] sm:$0xf]
  %v855 = vld [vmem:[%s1 + $0xc78] sm:$0xf]
  %v856 = vld [vmem:[%s1 + $0xc7c] sm:$0xf]
  %v857 = vld [vmem:[%s1 + $0xc80] sm:$0xf]
  %v858 = vld [vmem:[%s1 + $0xc84] sm:$0xf]
  %v859 = vld [vmem:[%s1 + $0xc88] sm:$0xf]
  %v860 = vld [vmem:[%s1 + $0xc8c] sm:$0xf]
  %v861 = vld [vmem:[%s1 + $0xc90] sm:$0xf]
  %v862 = vld [vmem:[%s1 + $0xc94] sm:$0xf]
  %v863 = vld [vmem:[%s1 + $0xc98] sm:$0xf]
  %v864 = vld [vmem:[%s1 + $0xc9c] sm:$0xf]
  %v865 = vld [vmem:[%s1 + $0xca0] sm:$0xf]
  %v866 = vld [vmem:[%s1 + $0xca4] sm:$0xf]
  %v867 = vld [vmem:[%s1 + $0xca8] sm:$0xf]
  %v868 = vld [vmem:[%s1 + $0xcac] sm:$0xf]
  %v869 = vld [vmem:[%s1 + $0xcb0] sm:$0xf]
  %v870 = vld [vmem:[%s1 + $0xcb4] sm:$0xf]
  %v871 = vld [vmem:[%s1 + $0xcb8] sm:$0xf]
  %v872 = vld [vmem:[%s1 + $0xcbc] sm:$0xf]
  %v873 = vld [vmem:[%s1 + $0xcc0] sm:$0xf]
  %v874 = vld [vmem:[%s1 + $0xcc4] sm:$0xf]
  %v875 = vld [vmem:[%s1 + $0xcc8] sm:$0xf]
  %v876 = vld [vmem:[%s1 + $0xccc] sm:$0xf]
  %v877 = vld [vmem:[%s1 + $0xcd0] sm:$0xf]
  %v878 = vld [vmem:[%s1 + $0xcd4] sm:$0xf]
  %v879 = vld [vmem:[%s1 + $0xcd8] sm:$0xf]
  %v880 = vld [vmem:[%s1 + $0xcdc] sm:$0xf]
  %v881 = vld [vmem:[%s1 + $0xce0] sm:$0xf]
  %v882 = vld [vmem:[%s1 + $0xce4] sm:$0xf]
  %v883 = vld [vmem:[%s1 + $0xce8] sm:$0xf]
  %v884 = vld [vmem:[%s1 + $0xcec] sm:$0xf]
  %v885 = vld [vmem:[%s1 + $0xcf0] sm:$0xf]
  %v886 = vld [vmem:[%s1 + $0xcf4] sm:$0xf]
  %v887 = vld [vmem:[%s1 + $0xcf8] sm:$0xf]
  %v888 = vld [vmem:[%s1 + $0xcfc] sm:$0xf]
  %v889 = vld [vmem:[%s1 + $0xd00] sm:$0xf]
  %v890 = vld [vmem:[%s1 + $0xd04] sm:$0xf]
  %v891 = vld [vmem:[%s1 + $0xd08] sm:$0xf]
  %v892 = vld [vmem:[%s1 + $0xd0c] sm:$0xf]
  %v893 = vld [vmem:[%s1 + $0xd10] sm:$0xf]
  %v894 = vld [vmem:[%s1 + $0xd14] sm:$0xf]
  %v895 = vld [vmem:[%s1 + $0xd18] sm:$0xf]
  %v896 = vld [vmem:[%s1 + $0xd1c] sm:$0xf]
  %v897 = vld [vmem:[%s1 + $0xd20] sm:$0xf]
  %v898 = vld [vmem:[%s1 + $0xd24] sm:$0xf]
  %v899 = vld [vmem:[%s1 + $0xd28] sm:$0xf]
  %v900 = vld [vmem:[%s1 + $0xd2c] sm:$0xf]
  %v901 = vld [vmem:[%s1 + $0xd30] sm:$0xf]
  %v902 = vld [vmem:[%s1 + $0xd34] sm:$0xf]
  %v903 = vld [vmem:[%s1 + $0xd38] sm:$0xf]
  %v904 = vld [vmem:[%s1 + $0xd3c] sm:$0xf]
  %v905 = vld [vmem:[%s1 + $0xd40] sm:$0xf]
  %v906 = vld [vmem:[%s1 + $0xd44] sm:$0xf]
  %v907 = vld [vmem:[%s1 + $0xd48] sm:$0xf]
  %v908 = vld [vmem:[%s1 + $0xd4c] sm:$0xf]
  %v909 = vld [vmem:[%s1 + $0xd50] sm:$0xf]
  %v910 = vld [vmem:[%s1 + $0xd54] sm:$0xf]
  %v911 = vld [vmem:[%s1 + $0xd58] sm:$0xf]
  %v912 = vld [vmem:[%s1 + $0xd5c] sm:$0xf]
  %v913 = vld [vmem:[%s1 + $0xd60] sm:$0xf]
  %v914 = vld [vmem:[%s1 + $0xd64] sm:$0xf]
  %v915 = vld [vmem:[%s1 + $0xd68] sm:$0xf]
  %v916 = vld [vmem:[%s1 + $0xd6c] sm:$0xf]
  %v917 = vld [vmem:[%s1 + $0xd70] sm:$0xf]
  %v918 = vld [vmem:[%s1 + $0xd74] sm:$0xf]
  %v919 = vld [vmem:[%s1 + $0xd78] sm:$0xf]
  %v920 = vld [vmem:[%s1 + $0xd7c] sm:$0xf]
  %v921 = vld [vmem:[%s1 + $0xd80] sm:$0xf]
  %v922 = vld [vmem:[%s1 + $0xd84] sm:$0xf]
  %v923 = vld [vmem:[%s1 + $0xd88] sm:$0xf]
  %v924 = vld [vmem:[%s1 + $0xd8c] sm:$0xf]
  %v925 = vld [vmem:[%s1 + $0xd90] sm:$0xf]
  %v926 = vld [vmem:[%s1 + $0xd94] sm:$0xf]
  %v927 = vld [vmem:[%s1 + $0xd98] sm:$0xf]
  %v928 = vld [vmem:[%s1 + $0xd9c] sm:$0xf]
  %v929 = vld [vmem:[%s1 + $0xda0] sm:$0xf]
  %v930 = vld [vmem:[%s1 + $0xda4] sm:$0xf]
  %v931 = vld [vmem:[%s1 + $0xda8] sm:$0xf]
  %v932 = vld [vmem:[%s1 + $0xdac] sm:$0xf]
  %v933 = vld [vmem:[%s1 + $0xdb0] sm:$0xf]
  %v934 = vld [vmem:[%s1 + $0xdb4] sm:$0xf]
  %v935 = vld [vmem:[%s1 + $0xdb8] sm:$0xf]
  %v936 = vld [vmem:[%s1 + $0xdbc] sm:$0xf]
  %v937 = vld [vmem:[%s1 + $0xdc0] sm:$0xf]
  %v938 = vld [vmem:[%s1 + $0xdc4] sm:$0xf]
  %v939 = vld [vmem:[%s1 + $0xdc8] sm:$0xf]
  %v940 = vld [vmem:[%s1 + $0xdcc] sm:$0xf]
  %v941 = vld [vmem:[%s1 + $0xdd0] sm:$0xf]
  %v942 = vld [vmem:[%s1 + $0xdd4] sm:$0xf]
  %v943 = vld [vmem:[%s1 + $0xdd8] sm:$0xf]
  %v944 = vld [vmem:[%s1 + $0xddc] sm:$0xf]
  %v945 = vld [vmem:[%s1 + $0xde0] sm:$0xf]
  %v946 = vld [vmem:[%s1 + $0xde4] sm:$0xf]
  %v947 = vld [vmem:[%s1 + $0xde8] sm:$0xf]
  %v948 = vld [vmem:[%s1 + $0xdec] sm:$0xf]
  %v949 = vld [vmem:[%s1 + $0xdf0] sm:$0xf]
  %v950 = vld [vmem:[%s1 + $0xdf4] sm:$0xf]
  %v951 = vld [vmem:[%s1 + $0xdf8] sm:$0xf]
  %v952 = vld [vmem:[%s1 + $0xdfc] sm:$0xf]
  %v953 = vld [vmem:[%s1 + $0xe00] sm:$0xf]
  %v954 = vld [vmem:[%s1 + $0xe04] sm:$0xf]
  %v955 = vld [vmem:[%s1 + $0xe08] sm:$0xf]
  %v956 = vld [vmem:[%s1 + $0xe0c] sm:$0xf]
  %v957 = vld [vmem:[%s1 + $0xe10] sm:$0xf]
  %v958 = vld [vmem:[%s1 + $0xe14] sm:$0xf]
  %v959 = vld [vmem:[%s1 + $0xe18] sm:$0xf]
  %v960 = vld [vmem:[%s1 + $0xe1c] sm:$0xf]
  %v961 = vld [vmem:[%s1 + $0xe20] sm:$0xf]
  %v962 = vld [vmem:[%s1 + $0xe24] sm:$0xf]
  %v963 = vld [vmem:[%s1 + $0xe28] sm:$0xf]
  %v964 = vld [vmem:[%s1 + $0xe2c] sm:$0xf]
  %v965 = vld [vmem:[%s1 + $0xe30] sm:$0xf]
  %v966 = vld [vmem:[%s1 + $0xe34] sm:$0xf]
  %v967 = vld [vmem:[%s1 + $0xe38] sm:$0xf]
  %v968 = vld [vmem:[%s1 + $0xe3c] sm:$0xf]
  %v969 = vld [vmem:[%s1 + $0xe40] sm:$0xf]
  %v970 = vld [vmem:[%s1 + $0xe44] sm:$0xf]
  %v971 = vld [vmem:[%s1 + $0xe48] sm:$0xf]
  %v972 = vld [vmem:[%s1 + $0xe4c] sm:$0xf]
  %v973 = vld [vmem:[%s1 + $0xe50] sm:$0xf]
  %v974 = vld [vmem:[%s1 + $0xe54] sm:$0xf]
  %v975 = vld [vmem:[%s1 + $0xe58] sm:$0xf]
  %v976 = vld [vmem:[%s1 + $0xe5c] sm:$0xf]
  %v977 = vld [vmem:[%s1 + $0xe60] sm:$0xf]
  %v978 = vld [vmem:[%s1 + $0xe64] sm:$0xf]
  %v979 = vld [vmem:[%s1 + $0xe68] sm:$0xf]
  %v980 = vld [vmem:[%s1 + $0xe6c] sm:$0xf]
  %v981 = vld [vmem:[%s1 + $0xe70] sm:$0xf]
  %v982 = vld [vmem:[%s1 + $0xe74] sm:$0xf]
  %v983 = vld [vmem:[%s1 + $0xe78] sm:$0xf]
  %v984 = vld [vmem:[%s1 + $0xe7c] sm:$0xf]
  %v985 = vld [vmem:[%s1 + $0xe80] sm:$0xf]
  %v986 = vld [vmem:[%s1 + $0xe84] sm:$0xf]
  %v987 = vld [vmem:[%s1 + $0xe88] sm:$0xf]
  %v988 = vld [vmem:[%s1 + $0xe8c] sm:$0xf]
  %v989 = vld [vmem:[%s1 + $0xe90] sm:$0xf]
  %v990 = vld [vmem:[%s1 + $0xe94] sm:$0xf]
  %v991 = vld [vmem:[%s1 + $0xe98] sm:$0xf]
  %v992 = vld [vmem:[%s1 + $0xe9c] sm:$0xf]
  %v993 = vld [vmem:[%s1 + $0xea0] sm:$0xf]
  %v994 = vld [vmem:[%s1 + $0xea4] sm:$0xf]
  %v995 = vld [vmem:[%s1 + $0xea8] sm:$0xf]
  %v996 = vld [vmem:[%s1 + $0xeac] sm:$0xf]
  %v997 = vld [vmem:[%s1 + $0xeb0] sm:$0xf]
  %v998 = vld [vmem:[%s1 + $0xeb4] sm:$0xf]
  %v999 = vld [vmem:[%s1 + $0xeb8] sm:$0xf]
  %v1000 = vld [vmem:[%s1 + $0xebc] sm:$0xf]
  %v1001 = vld [vmem:[%s1 + $0xec0] sm:$0xf]
  %v1002 = vld [vmem:[%s1 + $0xec4] sm:$0xf]
  %v1003 = vld [vmem:[%s1 + $0xec8] sm:$0xf]
  %v1004 = vld [vmem:[%s1 + $0xecc] sm:$0xf]
  %v1005 = vld [vmem:[%s1 + $0xed0] sm:$0xf]
  %v1006 = vld [vmem:[%s1 + $0xed4] sm:$0xf]
  %v1007 = vld [vmem:[%s1 + $0xed8] sm:$0xf]
  %v1008 = vld [vmem:[%s1 + $0xedc] sm:$0xf]
  %v1009 = vld [vmem:[%s1 + $0xee0] sm:$0xf]
  %v1010 = vld [vmem:[%s1 + $0xee4] sm:$0xf]
  %v1011 = vld [vmem:[%s1 + $0xee8] sm:$0xf]
  %v1012 = vld [vmem:[%s1 + $0xeec] sm:$0xf]
  %v1013 = vld [vmem:[%s1 + $0xef0] sm:$0xf]
  %v1014 = vld [vmem:[%s1 + $0xef4] sm:$0xf]
  %v1015 = vld [vmem:[%s1 + $0xef8] sm:$0xf]
  %v1016 = vld [vmem:[%s1 + $0xefc] sm:$0xf]
  %v1017 = vld [vmem:[%s1 + $0xf00] sm:$0xf]
  %v1018 = vld [vmem:[%s1 + $0xf04] sm:$0xf]
  %v1019 = vld [vmem:[%s1 + $0xf08] sm:$0xf]
  %v1020 = vld [vmem:[%s1 + $0xf0c] sm:$0xf]
  %v1021 = vld [vmem:[%s1 + $0xf10] sm:$0xf]
  %v1022 = vld [vmem:[%s1 + $0xf14] sm:$0xf]
  %v1023 = vld [vmem:[%s1 + $0xf18] sm:$0xf]
  %v1024 = vld [vmem:[%s1 + $0xf1c] sm:$0xf]
  %v1025 = vld [vmem:[%s1 + $0xf20] sm:$0xf]
  %v1026 = vld [vmem:[%s1 + $0xf24] sm:$0xf]
  %v1027 = vld [vmem:[%s1 + $0xf28] sm:$0xf]
  %v1028 = vld [vmem:[%s1 + $0xf2c] sm:$0xf]
  %v1029 = vld [vmem:[%s1 + $0xf30] sm:$0xf]
  %v1030 = vld [vmem:[%s1 + $0xf34] sm:$0xf]
  %v1031 = vld [vmem:[%s1 + $0xf38] sm:$0xf]
  %v1032 = vld [vmem:[%s1 + $0xf3c] sm:$0xf]
  %v1033 = vld [vmem:[%s1 + $0xf40] sm:$0xf]
  %v1034 = vld [vmem:[%s1 + $0xf44] sm:$0xf]
  %v1035 = vld [vmem:[%s1 + $0xf48] sm:$0xf]
  %v1036 = vld [vmem:[%s1 + $0xf4c] sm:$0xf]
  %v1037 = vld [vmem:[%s1 + $0xf50] sm:$0xf]
  %v1038 = vld [vmem:[%s1 + $0xf54] sm:$0xf]
  %v1039 = vld [vmem:[%s1 + $0xf58] sm:$0xf]
  %v1040 = vld [vmem:[%s1 + $0xf5c] sm:$0xf]
  %v1041 = vld [vmem:[%s1 + $0xf60] sm:$0xf]
  %v1042 = vld [vmem:[%s1 + $0xf64] sm:$0xf]
  %v1043 = vld [vmem:[%s1 + $0xf68] sm:$0xf]
  %v1044 = vld [vmem:[%s1 + $0xf6c] sm:$0xf]
  %v1045 = vld [vmem:[%s1 + $0xf70] sm:$0xf]
  %v1046 = vld [vmem:[%s1 + $0xf74] sm:$0xf]
  %v1047 = vld [vmem:[%s1 + $0xf78] sm:$0xf]
  %v1048 = vld [vmem:[%s1 + $0xf7c] sm:$0xf]
  %v1049 = vld [vmem:[%s1 + $0xf80] sm:$0xf]
  %v1050 = vld [vmem:[%s1 + $0xf84] sm:$0xf]
  %v1051 = vld [vmem:[%s1 + $0xf88] sm:$0xf]
  %v1052 = vld [vmem:[%s1 + $0xf8c] sm:$0xf]
  %v1053 = vld [vmem:[%s1 + $0xf90] sm:$0xf]
  %v1054 = vld [vmem:[%s1 + $0xf94] sm:$0xf]
  %v1055 = vld [vmem:[%s1 + $0xf98] sm:$0xf]
  %v1056 = vld [vmem:[%s1 + $0xf9c] sm:$0xf]
  %v1057 = vld [vmem:[%s1 + $0xfa0] sm:$0xf]
  %v1058 = vld [vmem:[%s1 + $0xfa4] sm:$0xf]
  %v1059 = vld [vmem:[%s1 + $0xfa8] sm:$0xf]
  %v1060 = vld [vmem:[%s1 + $0xfac] sm:$0xf]
  %v1061 = vld [vmem:[%s1 + $0xfb0] sm:$0xf]
  %v1062 = vld [vmem:[%s1 + $0xfb4] sm:$0xf]
  %v1063 = vld [vmem:[%s1 + $0xfb8] sm:$0xf]
  %v1064 = vld [vmem:[%s1 + $0xfbc] sm:$0xf]
  %v1065 = vld [vmem:[%s1 + $0xfc0] sm:$0xf]
  %v1066 = vld [vmem:[%s1 + $0xfc4] sm:$0xf]
  %v1067 = vld [vmem:[%s1 + $0xfc8] sm:$0xf]
  %v1068 = vld [vmem:[%s1 + $0xfcc] sm:$0xf]
  %v1069 = vld [vmem:[%s1 + $0xfd0] sm:$0xf]
  %v1070 = vld [vmem:[%s1 + $0xfd4] sm:$0xf]
  %v1071 = vld [vmem:[%s1 + $0xfd8] sm:$0xf]
  %v1072 = vld [vmem:[%s1 + $0xfdc] sm:$0xf]
  %v1073 = vld [vmem:[%s1 + $0xfe0] sm:$0xf]
  %v1074 = vld [vmem:[%s1 + $0xfe4] sm:$0xf]
  %v1075 = vld [vmem:[%s1 + $0xfe8] sm:$0xf]
  %v1076 = vld [vmem:[%s1 + $0xfec] sm:$0xf]
  %v1077 = vld [vmem:[%s1 + $0xff0] sm:$0xf]
  %v1078 = vld [vmem:[%s1 + $0xff4] sm:$0xf]
  %v1079 = vld [vmem:[%s1 + $0xff8] sm:$0xf]
  %v1080 = vld [vmem:[%s1 + $0xffc] sm:$0xf]
  %v1081 = vld [vmem:[%s1 + $0x1000] sm:$0xf]
  %v1082 = vld [vmem:[%s1 + $0x1004] sm:$0xf]
  %v1083 = vld [vmem:[%s1 + $0x1008] sm:$0xf]
  %v1084 = vld [vmem:[%s1 + $0x100c] sm:$0xf]
  %v1085 = vld [vmem:[%s1 + $0x1010] sm:$0xf]
  %v1086 = vld [vmem:[%s1 + $0x1014] sm:$0xf]
  %v1087 = vld [vmem:[%s1 + $0x1018] sm:$0xf]
  %v1088 = vld [vmem:[%s1 + $0x101c] sm:$0xf]
  %v1089 = vld [vmem:[%s1 + $0x1020] sm:$0xf]
  %v1090 = vld [vmem:[%s1 + $0x1024] sm:$0xf]
  %v1091 = vld [vmem:[%s1 + $0x1028] sm:$0xf]
  %v1092 = vld [vmem:[%s1 + $0x102c] sm:$0xf]
  %v1093 = vld [vmem:[%s1 + $0x1030] sm:$0xf]
  %v1094 = vld [vmem:[%s1 + $0x1034] sm:$0xf]
  %v1095 = vld [vmem:[%s1 + $0x1038] sm:$0xf]
  %v1096 = vld [vmem:[%s1 + $0x103c] sm:$0xf]
  %v1097 = vld [vmem:[%s1 + $0x1040] sm:$0xf]
  %v1098 = vld [vmem:[%s1 + $0x1044] sm:$0xf]
  %v1099 = vld [vmem:[%s1 + $0x1048] sm:$0xf]
  %v1100 = vld [vmem:[%s1 + $0x104c] sm:$0xf]
  %v1101 = vld [vmem:[%s1 + $0x1050] sm:$0xf]
  %v1102 = vld [vmem:[%s1 + $0x1054] sm:$0xf]
  %v1103 = vld [vmem:[%s1 + $0x1058] sm:$0xf]
  %v1104 = vld [vmem:[%s1 + $0x105c] sm:$0xf]
  %v1105 = vld [vmem:[%s1 + $0x1060] sm:$0xf]
  %v1106 = vld [vmem:[%s1 + $0x1064] sm:$0xf]
  %v1107 = vld [vmem:[%s1 + $0x1068] sm:$0xf]
  %v1108 = vld [vmem:[%s1 + $0x106c] sm:$0xf]
  %v1109 = vld [vmem:[%s1 + $0x1070] sm:$0xf]
  %v1110 = vld [vmem:[%s1 + $0x1074] sm:$0xf]
  %v1111 = vld [vmem:[%s1 + $0x1078] sm:$0xf]
  %v1112 = vld [vmem:[%s1 + $0x107c] sm:$0xf]
  %v1113 = vld [vmem:[%s1 + $0x1080] sm:$0xf]
  %v1114 = vld [vmem:[%s1 + $0x1084] sm:$0xf]
  %v1115 = vld [vmem:[%s1 + $0x1088] sm:$0xf]
  %v1116 = vld [vmem:[%s1 + $0x108c] sm:$0xf]
  %v1117 = vld [vmem:[%s1 + $0x1090] sm:$0xf]
  %v1118 = vld [vmem:[%s1 + $0x1094] sm:$0xf]
  %v1119 = vld [vmem:[%s1 + $0x1098] sm:$0xf]
  %v1120 = vld [vmem:[%s1 + $0x109c] sm:$0xf]
  %v1121 = vld [vmem:[%s1 + $0x10a0] sm:$0xf]
  %v1122 = vld [vmem:[%s1 + $0x10a4] sm:$0xf]
  %v1123 = vld [vmem:[%s1 + $0x10a8] sm:$0xf]
  %v1124 = vld [vmem:[%s1 + $0x10ac] sm:$0xf]
  %v1125 = vld [vmem:[%s1 + $0x10b0] sm:$0xf]
  %v1126 = vld [vmem:[%s1 + $0x10b4] sm:$0xf]
  %v1127 = vld [vmem:[%s1 + $0x10b8] sm:$0xf]
  %v1128 = vld [vmem:[%s1 + $0x10bc] sm:$0xf]
  %v1129 = vld [vmem:[%s1 + $0x10c0] sm:$0xf]
  %v1130 = vld [vmem:[%s1 + $0x10c4] sm:$0xf]
  %v1131 = vld [vmem:[%s1 + $0x10c8] sm:$0xf]
  %v1132 = vld [vmem:[%s1 + $0x10cc] sm:$0xf]
  %v1133 = vld [vmem:[%s1 + $0x10d0] sm:$0xf]
  %v1134 = vld [vmem:[%s1 + $0x10d4] sm:$0xf]
  %v1135 = vld [vmem:[%s1 + $0x10d8] sm:$0xf]
  %v1136 = vld [vmem:[%s1 + $0x10dc] sm:$0xf]
  %v1137 = vld [vmem:[%s1 + $0x10e0] sm:$0xf]
  %v1138 = vld [vmem:[%s1 + $0x10e4] sm:$0xf]
  %v1139 = vld [vmem:[%s1 + $0x10e8] sm:$0xf]
  %v1140 = vld [vmem:[%s1 + $0x10ec] sm:$0xf]
  %v1141 = vld [vmem:[%s1 + $0x10f0] sm:$0xf]
  %v1142 = vld [vmem:[%s1 + $0x10f4] sm:$0xf]
  %v1143 = vld [vmem:[%s1 + $0x10f8] sm:$0xf]
  %v1144 = vld [vmem:[%s1 + $0x10fc] sm:$0xf]
  %v1145 = vld [vmem:[%s1 + $0x1100] sm:$0xf]
  %v1146 = vld [vmem:[%s1 + $0x1104] sm:$0xf]
  %v1147 = vld [vmem:[%s1 + $0x1108] sm:$0xf]
  %v1148 = vld [vmem:[%s1 + $0x110c] sm:$0xf]
  %v1149 = vld [vmem:[%s1 + $0x1110] sm:$0xf]
  %v1150 = vld [vmem:[%s1 + $0x1114] sm:$0xf]
  %v1151 = vld [vmem:[%s1 + $0x1118] sm:$0xf]
  %v1152 = vld [vmem:[%s1 + $0x111c] sm:$0xf]
  %v1153 = vld [vmem:[%s1 + $0x1120] sm:$0xf]
  %v1154 = vld [vmem:[%s1 + $0x1124] sm:$0xf]
  %v1155 = vld [vmem:[%s1 + $0x1128] sm:$0xf]
  %v1156 = vld [vmem:[%s1 + $0x112c] sm:$0xf]
  %v1157 = vld [vmem:[%s1 + $0x1130] sm:$0xf]
  %v1158 = vld [vmem:[%s1 + $0x1134] sm:$0xf]
  %v1159 = vld [vmem:[%s1 + $0x1138] sm:$0xf]
  %v1160 = vld [vmem:[%s1 + $0x113c] sm:$0xf]
  %v1161 = vld [vmem:[%s1 + $0x1140] sm:$0xf]
  %v1162 = vld [vmem:[%s1 + $0x1144] sm:$0xf]
  %v1163 = vld [vmem:[%s1 + $0x1148] sm:$0xf]
  %v1164 = vld [vmem:[%s1 + $0x114c] sm:$0xf]
  %v1165 = vld [vmem:[%s1 + $0x1150] sm:$0xf]
  %v1166 = vld [vmem:[%s1 + $0x1154] sm:$0xf]
  %v1167 = vld [vmem:[%s1 + $0x1158] sm:$0xf]
  %v1168 = vld [vmem:[%s1 + $0x115c] sm:$0xf]
  %v1169 = vld [vmem:[%s1 + $0x1160] sm:$0xf]
  %v1170 = vld [vmem:[%s1 + $0x1164] sm:$0xf]
  %v1171 = vld [vmem:[%s1 + $0x1168] sm:$0xf]
  %v1172 = vld [vmem:[%s1 + $0x116c] sm:$0xf]
  %v1173 = vld [vmem:[%s1 + $0x1170] sm:$0xf]
  %v1174 = vld [vmem:[%s1 + $0x1174] sm:$0xf]
  %v1175 = vld [vmem:[%s1 + $0x1178] sm:$0xf]
  %v1176 = vld [vmem:[%s1 + $0x117c] sm:$0xf]
  %v1177 = vld [vmem:[%s1 + $0x1180] sm:$0xf]
  %v1178 = vld [vmem:[%s1 + $0x1184] sm:$0xf]
  %v1179 = vld [vmem:[%s1 + $0x1188] sm:$0xf]
  %v1180 = vld [vmem:[%s1 + $0x118c] sm:$0xf]
  %v1181 = vld [vmem:[%s1 + $0x1190] sm:$0xf]
  %v1182 = vld [vmem:[%s1 + $0x1194] sm:$0xf]
  %v1183 = vld [vmem:[%s1 + $0x1198] sm:$0xf]
  %v1184 = vld [vmem:[%s1 + $0x119c] sm:$0xf]
  %v1185 = vld [vmem:[%s1 + $0x11a0] sm:$0xf]
  %v1186 = vld [vmem:[%s1 + $0x11a4] sm:$0xf]
  %v1187 = vld [vmem:[%s1 + $0x11a8] sm:$0xf]
  %v1188 = vld [vmem:[%s1 + $0x11ac] sm:$0xf]
  %v1189 = vld [vmem:[%s1 + $0x11b0] sm:$0xf]
  %v1190 = vld [vmem:[%s1 + $0x11b4] sm:$0xf]
  %v1191 = vld [vmem:[%s1 + $0x11b8] sm:$0xf]
  %v1192 = vld [vmem:[%s1 + $0x11bc] sm:$0xf]
  %v1193 = vld [vmem:[%s1 + $0x11c0] sm:$0xf]
  %v1194 = vld [vmem:[%s1 + $0x11c4] sm:$0xf]
  %v1195 = vld [vmem:[%s1 + $0x11c8] sm:$0xf]
  %v1196 = vld [vmem:[%s1 + $0x11cc] sm:$0xf]
  %v1197 = vld [vmem:[%s1 + $0x11d0] sm:$0xf]
  %v1198 = vld [vmem:[%s1 + $0x11d4] sm:$0xf]
  %v1199 = vld [vmem:[%s1 + $0x11d8] sm:$0xf]
  %v1200 = vld [vmem:[%s1 + $0x11dc] sm:$0xf]
  %v1201 = vld [vmem:[%s1 + $0x11e0] sm:$0xf]
  %v1202 = vld [vmem:[%s1 + $0x11e4] sm:$0xf]
  %v1203 = vld [vmem:[%s1 + $0x11e8] sm:$0xf]
  %v1204 = vld [vmem:[%s1 + $0x11ec] sm:$0xf]
  %v1205 = vld [vmem:[%s1 + $0x11f0] sm:$0xf]
  %v1206 = vld [vmem:[%s1 + $0x11f4] sm:$0xf]
  %v1207 = vld [vmem:[%s1 + $0x11f8] sm:$0xf]
  %v1208 = vld [vmem:[%s1 + $0x11fc] sm:$0xf]
  %v1209 = vld [vmem:[%s2] sm:$0x1]
  %v1211 = vlaneseq
  %v1212 = vshrl.u32 %v1211, 7
  %v1213 = vsub.s32 0, %v1212
  %v1214 = vrot.slane %v1209, %v1213
  %v1252 = vunpack.c.l.b16 %v21
  %v1253 = vunpack.c.h.b16 %v21
  %v1254 = vunpack.c.l.b16 %v22
  %v1255 = vunpack.c.h.b16 %v22
  %v1256 = vunpack.c.l.b16 %v23
  %v1257 = vunpack.c.h.b16 %v23
  %v1258 = vunpack.c.l.b16 %v24
  %v1259 = vunpack.c.h.b16 %v24
  %v1260 = vunpack.c.l.b16 %v25
  %v1261 = vunpack.c.h.b16 %v25
  %v1262 = vunpack.c.l.b16 %v26
  %v1263 = vunpack.c.h.b16 %v26
  %v1264 = vunpack.c.l.b16 %v27
  %v1265 = vunpack.c.h.b16 %v27
  %v1266 = vunpack.c.l.b16 %v28
  %v1267 = vunpack.c.h.b16 %v28
  %v1268 = vunpack.c.l.b16 %v29
  %v1269 = vunpack.c.h.b16 %v29
  %v1270 = vunpack.c.l.b16 %v30
  %v1271 = vunpack.c.h.b16 %v30
  %v1272 = vunpack.c.l.b16 %v31
  %v1273 = vunpack.c.h.b16 %v31
  %v1274 = vunpack.c.l.b16 %v32
  %v1275 = vunpack.c.h.b16 %v32
  %v1276 = vunpack.c.l.b16 %v33
  %v1277 = vunpack.c.h.b16 %v33
  %v1278 = vunpack.c.l.b16 %v34
  %v1279 = vunpack.c.h.b16 %v34
  %v1280 = vunpack.c.l.b16 %v35
  %v1281 = vunpack.c.h.b16 %v35
  %v1282 = vunpack.c.l.b16 %v36
  %v1283 = vunpack.c.h.b16 %v36
  %v1284 = vunpack.c.l.b16 %v37
  %v1285 = vunpack.c.h.b16 %v37
  %v1286 = vunpack.c.l.b16 %v38
  %v1287 = vunpack.c.h.b16 %v38
  %v1288 = vunpack.c.l.b16 %v39
  %v1289 = vunpack.c.h.b16 %v39
  %v1290 = vunpack.c.l.b16 %v40
  %v1291 = vunpack.c.h.b16 %v40
  %v1292 = vunpack.c.l.b16 %v41
  %v1293 = vunpack.c.h.b16 %v41
  %v1294 = vunpack.c.l.b16 %v42
  %v1295 = vunpack.c.h.b16 %v42
  %v1296 = vunpack.c.l.b16 %v43
  %v1297 = vunpack.c.h.b16 %v43
  %v1298 = vunpack.c.l.b16 %v44
  %v1299 = vunpack.c.h.b16 %v44
  %v1300 = vunpack.c.l.b16 %v45
  %v1301 = vunpack.c.h.b16 %v45
  %v1302 = vunpack.c.l.b16 %v46
  %v1303 = vunpack.c.h.b16 %v46
  %v1304 = vunpack.c.l.b16 %v47
  %v1305 = vunpack.c.h.b16 %v47
  %v1306 = vunpack.c.l.b16 %v48
  %v1307 = vunpack.c.h.b16 %v48
  %v1308 = vunpack.c.l.b16 %v49
  %v1309 = vunpack.c.h.b16 %v49
  %v1310 = vunpack.c.l.b16 %v50
  %v1311 = vunpack.c.h.b16 %v50
  %v1312 = vunpack.c.l.b16 %v51
  %v1313 = vunpack.c.h.b16 %v51
  %v1314 = vunpack.c.l.b16 %v52
  %v1315 = vunpack.c.h.b16 %v52
  %v1316 = vunpack.c.l.b16 %v53
  %v1317 = vunpack.c.h.b16 %v53
  %v1318 = vunpack.c.l.b16 %v54
  %v1319 = vunpack.c.h.b16 %v54
  %v1320 = vunpack.c.l.b16 %v55
  %v1321 = vunpack.c.h.b16 %v55
  %v1322 = vunpack.c.l.b16 %v56
  %v1323 = vunpack.c.h.b16 %v56
  %v1324 = vpack.c.b16 %v1252, %v1252
  %v1325 = vpack.c.b16 %v1253, %v1253
  %v1326 = vpack.c.b16 %v1254, %v1254
  %v1327 = vpack.c.b16 %v1255, %v1255
  %v1328 = vpack.c.b16 %v1256, %v1256
  %v1329 = vpack.c.b16 %v1257, %v1257
  %v1330 = vpack.c.b16 %v1258, %v1258
  %v1331 = vpack.c.b16 %v1259, %v1259
  %v1332 = vpack.c.b16 %v1260, %v1260
  %v1333 = vpack.c.b16 %v1261, %v1261
  %v1334 = vpack.c.b16 %v1262, %v1262
  %v1335 = vpack.c.b16 %v1263, %v1263
  %v1336 = vpack.c.b16 %v1264, %v1264
  %v1337 = vpack.c.b16 %v1265, %v1265
  %v1338 = vpack.c.b16 %v1266, %v1266
  %v1339 = vpack.c.b16 %v1267, %v1267
  %v1340 = vpack.c.b16 %v1268, %v1268
  %v1341 = vpack.c.b16 %v1269, %v1269
  %v1342 = vpack.c.b16 %v1270, %v1270
  %v1343 = vpack.c.b16 %v1271, %v1271
  %v1344 = vpack.c.b16 %v1272, %v1272
  %v1345 = vpack.c.b16 %v1273, %v1273
  %v1346 = vpack.c.b16 %v1274, %v1274
  %v1347 = vpack.c.b16 %v1275, %v1275
  %v1348 = vpack.c.b16 %v1276, %v1276
  %v1349 = vpack.c.b16 %v1277, %v1277
  %v1350 = vpack.c.b16 %v1278, %v1278
  %v1351 = vpack.c.b16 %v1279, %v1279
  %v1352 = vpack.c.b16 %v1280, %v1280
  %v1353 = vpack.c.b16 %v1281, %v1281
  %v1354 = vpack.c.b16 %v1282, %v1282
  %v1355 = vpack.c.b16 %v1283, %v1283
  %v1356 = vpack.c.b16 %v1284, %v1284
  %v1357 = vpack.c.b16 %v1285, %v1285
  %v1358 = vpack.c.b16 %v1286, %v1286
  %v1359 = vpack.c.b16 %v1287, %v1287
  %v1360 = vpack.c.b16 %v1288, %v1288
  %v1361 = vpack.c.b16 %v1289, %v1289
  %v1362 = vpack.c.b16 %v1290, %v1290
  %v1363 = vpack.c.b16 %v1291, %v1291
  %v1364 = vpack.c.b16 %v1292, %v1292
  %v1365 = vpack.c.b16 %v1293, %v1293
  %v1366 = vpack.c.b16 %v1294, %v1294
  %v1367 = vpack.c.b16 %v1295, %v1295
  %v1368 = vpack.c.b16 %v1296, %v1296
  %v1369 = vpack.c.b16 %v1297, %v1297
  %v1370 = vpack.c.b16 %v1298, %v1298
  %v1371 = vpack.c.b16 %v1299, %v1299
  %v1372 = vpack.c.b16 %v1300, %v1300
  %v1373 = vpack.c.b16 %v1301, %v1301
  %v1374 = vpack.c.b16 %v1302, %v1302
  %v1375 = vpack.c.b16 %v1303, %v1303
  %v1376 = vpack.c.b16 %v1304, %v1304
  %v1377 = vpack.c.b16 %v1305, %v1305
  %v1378 = vpack.c.b16 %v1306, %v1306
  %v1379 = vpack.c.b16 %v1307, %v1307
  %v1380 = vpack.c.b16 %v1308, %v1308
  %v1381 = vpack.c.b16 %v1309, %v1309
  %v1382 = vpack.c.b16 %v1310, %v1310
  %v1383 = vpack.c.b16 %v1311, %v1311
  %v1384 = vpack.c.b16 %v1312, %v1312
  %v1385 = vpack.c.b16 %v1313, %v1313
  %v1386 = vpack.c.b16 %v1314, %v1314
  %v1387 = vpack.c.b16 %v1315, %v1315
  %v1388 = vpack.c.b16 %v1316, %v1316
  %v1389 = vpack.c.b16 %v1317, %v1317
  %v1390 = vpack.c.b16 %v1318, %v1318
  %v1391 = vpack.c.b16 %v1319, %v1319
  %v1392 = vpack.c.b16 %v1320, %v1320
  %v1393 = vpack.c.b16 %v1321, %v1321
  %v1394 = vpack.c.b16 %v1322, %v1322
  %v1395 = vpack.c.b16 %v1323, %v1323
  %v2620 = vunpack.c.l.b16 %v57
  %v2621 = vunpack.c.l.b16 %v58
  %v2622 = vunpack.c.l.b16 %v59
  %v2623 = vunpack.c.l.b16 %v60
  %v2624 = vunpack.c.l.b16 %v61
  %v2625 = vunpack.c.l.b16 %v62
  %v2626 = vunpack.c.l.b16 %v63
  %v2627 = vunpack.c.l.b16 %v64
  %v2628 = vunpack.c.l.b16 %v65
  %v2629 = vunpack.c.l.b16 %v66
  %v2630 = vunpack.c.l.b16 %v67
  %v2631 = vunpack.c.l.b16 %v68
  %v2632 = vunpack.c.l.b16 %v69
  %v2633 = vunpack.c.l.b16 %v70
  %v2634 = vunpack.c.l.b16 %v71
  %v2635 = vunpack.c.l.b16 %v72
  %v2636 = vunpack.c.l.b16 %v73
  %v2637 = vunpack.c.l.b16 %v74
  %v2638 = vunpack.c.l.b16 %v75
  %v2639 = vunpack.c.l.b16 %v76
  %v2640 = vunpack.c.l.b16 %v77
  %v2641 = vunpack.c.l.b16 %v78
  %v2642 = vunpack.c.l.b16 %v79
  %v2643 = vunpack.c.l.b16 %v80
  %v2644 = vunpack.c.l.b16 %v81
  %v2645 = vunpack.c.l.b16 %v82
  %v2646 = vunpack.c.l.b16 %v83
  %v2647 = vunpack.c.l.b16 %v84
  %v2648 = vunpack.c.l.b16 %v85
  %v2649 = vunpack.c.l.b16 %v86
  %v2650 = vunpack.c.l.b16 %v87
  %v2651 = vunpack.c.l.b16 %v88
  %v2652 = vunpack.c.l.b16 %v89
  %v2653 = vunpack.c.l.b16 %v90
  %v2654 = vunpack.c.l.b16 %v91
  %v2655 = vunpack.c.l.b16 %v92
  %v2656 = vunpack.c.l.b16 %v93
  %v2657 = vunpack.c.l.b16 %v94
  %v2658 = vunpack.c.l.b16 %v95
  %v2659 = vunpack.c.l.b16 %v96
  %v2660 = vunpack.c.l.b16 %v97
  %v2661 = vunpack.c.l.b16 %v98
  %v2662 = vunpack.c.l.b16 %v99
  %v2663 = vunpack.c.l.b16 %v100
  %v2664 = vunpack.c.l.b16 %v101
  %v2665 = vunpack.c.l.b16 %v102
  %v2666 = vunpack.c.l.b16 %v103
  %v2667 = vunpack.c.l.b16 %v104
  %v2668 = vunpack.c.l.b16 %v105
  %v2669 = vunpack.c.l.b16 %v106
  %v2670 = vunpack.c.l.b16 %v107
  %v2671 = vunpack.c.l.b16 %v108
  %v2672 = vunpack.c.l.b16 %v109
  %v2673 = vunpack.c.l.b16 %v110
  %v2674 = vunpack.c.l.b16 %v111
  %v2675 = vunpack.c.l.b16 %v112
  %v2676 = vunpack.c.l.b16 %v113
  %v2677 = vunpack.c.l.b16 %v114
  %v2678 = vunpack.c.l.b16 %v115
  %v2679 = vunpack.c.l.b16 %v116
  %v2680 = vunpack.c.l.b16 %v117
  %v2681 = vunpack.c.l.b16 %v118
  %v2682 = vunpack.c.l.b16 %v119
  %v2683 = vunpack.c.l.b16 %v120
  %v2684 = vunpack.c.l.b16 %v121
  %v2685 = vunpack.c.l.b16 %v122
  %v2686 = vunpack.c.l.b16 %v123
  %v2687 = vunpack.c.l.b16 %v124
  %v2688 = vunpack.c.l.b16 %v125
  %v2689 = vunpack.c.l.b16 %v126
  %v2690 = vunpack.c.l.b16 %v127
  %v2691 = vunpack.c.l.b16 %v128
  %v2692 = vunpack.c.l.b16 %v129
  %v2693 = vunpack.c.l.b16 %v130
  %v2694 = vunpack.c.l.b16 %v131
  %v2695 = vunpack.c.l.b16 %v132
  %v2696 = vunpack.c.l.b16 %v133
  %v2697 = vunpack.c.l.b16 %v134
  %v2698 = vunpack.c.l.b16 %v135
  %v2699 = vunpack.c.l.b16 %v136
  %v2700 = vunpack.c.l.b16 %v137
  %v2701 = vunpack.c.l.b16 %v138
  %v2702 = vunpack.c.l.b16 %v139
  %v2703 = vunpack.c.l.b16 %v140
  %v2704 = vunpack.c.l.b16 %v141
  %v2705 = vunpack.c.l.b16 %v142
  %v2706 = vunpack.c.l.b16 %v143
  %v2707 = vunpack.c.l.b16 %v144
  %v2708 = vunpack.c.l.b16 %v145
  %v2709 = vunpack.c.l.b16 %v146
  %v2710 = vunpack.c.l.b16 %v147
  %v2711 = vunpack.c.l.b16 %v148
  %v2712 = vunpack.c.l.b16 %v149
  %v2713 = vunpack.c.l.b16 %v150
  %v2714 = vunpack.c.l.b16 %v151
  %v2715 = vunpack.c.l.b16 %v152
  %v2716 = vunpack.c.l.b16 %v153
  %v2717 = vunpack.c.l.b16 %v154
  %v2718 = vunpack.c.l.b16 %v155
  %v2719 = vunpack.c.l.b16 %v156
  %v2720 = vunpack.c.l.b16 %v157
  %v2721 = vunpack.c.l.b16 %v158
  %v2722 = vunpack.c.l.b16 %v159
  %v2723 = vunpack.c.l.b16 %v160
  %v2724 = vunpack.c.l.b16 %v161
  %v2725 = vunpack.c.l.b16 %v162
  %v2726 = vunpack.c.l.b16 %v163
  %v2727 = vunpack.c.l.b16 %v164
  %v2728 = vunpack.c.l.b16 %v165
  %v2729 = vunpack.c.l.b16 %v166
  %v2730 = vunpack.c.l.b16 %v167
  %v2731 = vunpack.c.l.b16 %v168
  %v2732 = vunpack.c.l.b16 %v169
  %v2733 = vunpack.c.l.b16 %v170
  %v2734 = vunpack.c.l.b16 %v171
  %v2735 = vunpack.c.l.b16 %v172
  %v2736 = vunpack.c.l.b16 %v173
  %v2737 = vunpack.c.l.b16 %v174
  %v2738 = vunpack.c.l.b16 %v175
  %v2739 = vunpack.c.l.b16 %v176
  %v2740 = vunpack.c.l.b16 %v177
  %v2741 = vunpack.c.l.b16 %v178
  %v2742 = vunpack.c.l.b16 %v179
  %v2743 = vunpack.c.l.b16 %v180
  %v2744 = vunpack.c.l.b16 %v181
  %v2745 = vunpack.c.l.b16 %v182
  %v2746 = vunpack.c.l.b16 %v183
  %v2747 = vunpack.c.l.b16 %v184
  %v2748 = vunpack.c.l.b16 %v185
  %v2749 = vunpack.c.l.b16 %v186
  %v2750 = vunpack.c.l.b16 %v187
  %v2751 = vunpack.c.l.b16 %v188
  %v2752 = vunpack.c.l.b16 %v189
  %v2753 = vunpack.c.l.b16 %v190
  %v2754 = vunpack.c.l.b16 %v191
  %v2755 = vunpack.c.l.b16 %v192
  %v2756 = vunpack.c.l.b16 %v193
  %v2757 = vunpack.c.l.b16 %v194
  %v2758 = vunpack.c.l.b16 %v195
  %v2759 = vunpack.c.l.b16 %v196
  %v2760 = vunpack.c.l.b16 %v197
  %v2761 = vunpack.c.l.b16 %v198
  %v2762 = vunpack.c.l.b16 %v199
  %v2763 = vunpack.c.l.b16 %v200
  %v2764 = vunpack.c.l.b16 %v201
  %v2765 = vunpack.c.l.b16 %v202
  %v2766 = vunpack.c.l.b16 %v203
  %v2767 = vunpack.c.l.b16 %v204
  %v2768 = vunpack.c.l.b16 %v205
  %v2769 = vunpack.c.l.b16 %v206
  %v2770 = vunpack.c.l.b16 %v207
  %v2771 = vunpack.c.l.b16 %v208
  %v2772 = vunpack.c.l.b16 %v209
  %v2773 = vunpack.c.l.b16 %v210
  %v2774 = vunpack.c.l.b16 %v211
  %v2775 = vunpack.c.l.b16 %v212
  %v2776 = vunpack.c.l.b16 %v213
  %v2777 = vunpack.c.l.b16 %v214
  %v2778 = vunpack.c.l.b16 %v215
  %v2779 = vunpack.c.l.b16 %v216
  %v2780 = vunpack.c.l.b16 %v217
  %v2781 = vunpack.c.l.b16 %v218
  %v2782 = vunpack.c.l.b16 %v219
  %v2783 = vunpack.c.l.b16 %v220
  %v2784 = vunpack.c.l.b16 %v221
  %v2785 = vunpack.c.l.b16 %v222
  %v2786 = vunpack.c.l.b16 %v223
  %v2787 = vunpack.c.l.b16 %v224
  %v2788 = vunpack.c.l.b16 %v225
  %v2789 = vunpack.c.l.b16 %v226
  %v2790 = vunpack.c.l.b16 %v227
  %v2791 = vunpack.c.l.b16 %v228
  %v2792 = vunpack.c.l.b16 %v229
  %v2793 = vunpack.c.l.b16 %v230
  %v2794 = vunpack.c.l.b16 %v231
  %v2795 = vunpack.c.l.b16 %v232
  %v2796 = vunpack.c.l.b16 %v233
  %v2797 = vunpack.c.l.b16 %v234
  %v2798 = vunpack.c.l.b16 %v235
  %v2799 = vunpack.c.l.b16 %v236
  %v2800 = vunpack.c.l.b16 %v237
  %v2801 = vunpack.c.l.b16 %v238
  %v2802 = vunpack.c.l.b16 %v239
  %v2803 = vunpack.c.l.b16 %v240
  %v2804 = vunpack.c.l.b16 %v241
  %v2805 = vunpack.c.l.b16 %v242
  %v2806 = vunpack.c.l.b16 %v243
  %v2807 = vunpack.c.l.b16 %v244
  %v2808 = vunpack.c.l.b16 %v245
  %v2809 = vunpack.c.l.b16 %v246
  %v2810 = vunpack.c.l.b16 %v247
  %v2811 = vunpack.c.l.b16 %v248
  %v2812 = vunpack.c.l.b16 %v249
  %v2813 = vunpack.c.l.b16 %v250
  %v2814 = vunpack.c.l.b16 %v251
  %v2815 = vunpack.c.l.b16 %v252
  %v2816 = vunpack.c.l.b16 %v253
  %v2817 = vunpack.c.l.b16 %v254
  %v2818 = vunpack.c.l.b16 %v255
  %v2819 = vunpack.c.l.b16 %v256
  %v2820 = vunpack.c.l.b16 %v257
  %v2821 = vunpack.c.l.b16 %v258
  %v2822 = vunpack.c.l.b16 %v259
  %v2823 = vunpack.c.l.b16 %v260
  %v2824 = vunpack.c.l.b16 %v261
  %v2825 = vunpack.c.l.b16 %v262
  %v2826 = vunpack.c.l.b16 %v263
  %v2827 = vunpack.c.l.b16 %v264
  %v2828 = vunpack.c.l.b16 %v265
  %v2829 = vunpack.c.l.b16 %v266
  %v2830 = vunpack.c.l.b16 %v267
  %v2831 = vunpack.c.l.b16 %v268
  %v2832 = vunpack.c.l.b16 %v269
  %v2833 = vunpack.c.l.b16 %v270
  %v2834 = vunpack.c.l.b16 %v271
  %v2835 = vunpack.c.l.b16 %v272
  %v2836 = vunpack.c.l.b16 %v273
  %v2837 = vunpack.c.l.b16 %v274
  %v2838 = vunpack.c.l.b16 %v275
  %v2839 = vunpack.c.l.b16 %v276
  %v2840 = vunpack.c.l.b16 %v277
  %v2841 = vunpack.c.l.b16 %v278
  %v2842 = vunpack.c.l.b16 %v279
  %v2843 = vunpack.c.l.b16 %v280
  %v2844 = vunpack.c.l.b16 %v281
  %v2845 = vunpack.c.l.b16 %v282
  %v2846 = vunpack.c.l.b16 %v283
  %v2847 = vunpack.c.l.b16 %v284
  %v2848 = vunpack.c.l.b16 %v285
  %v2849 = vunpack.c.l.b16 %v286
  %v2850 = vunpack.c.l.b16 %v287
  %v2851 = vunpack.c.l.b16 %v288
  %v2852 = vunpack.c.l.b16 %v289
  %v2853 = vunpack.c.l.b16 %v290
  %v2854 = vunpack.c.l.b16 %v291
  %v2855 = vunpack.c.l.b16 %v292
  %v2856 = vunpack.c.l.b16 %v293
  %v2857 = vunpack.c.l.b16 %v294
  %v2858 = vunpack.c.l.b16 %v295
  %v2859 = vunpack.c.l.b16 %v296
  %v2860 = vunpack.c.l.b16 %v297
  %v2861 = vunpack.c.l.b16 %v298
  %v2862 = vunpack.c.l.b16 %v299
  %v2863 = vunpack.c.l.b16 %v300
  %v2864 = vunpack.c.l.b16 %v301
  %v2865 = vunpack.c.l.b16 %v302
  %v2866 = vunpack.c.l.b16 %v303
  %v2867 = vunpack.c.l.b16 %v304
  %v2868 = vunpack.c.l.b16 %v305
  %v2869 = vunpack.c.l.b16 %v306
  %v2870 = vunpack.c.l.b16 %v307
  %v2871 = vunpack.c.l.b16 %v308
  %v2872 = vunpack.c.l.b16 %v309
  %v2873 = vunpack.c.l.b16 %v310
  %v2874 = vunpack.c.l.b16 %v311
  %v2875 = vunpack.c.l.b16 %v312
  %v2876 = vunpack.c.l.b16 %v313
  %v2877 = vunpack.c.l.b16 %v314
  %v2878 = vunpack.c.l.b16 %v315
  %v2879 = vunpack.c.l.b16 %v316
  %v2880 = vunpack.c.l.b16 %v317
  %v2881 = vunpack.c.l.b16 %v318
  %v2882 = vunpack.c.l.b16 %v319
  %v2883 = vunpack.c.l.b16 %v320
  %v2884 = vunpack.c.l.b16 %v321
  %v2885 = vunpack.c.l.b16 %v322
  %v2886 = vunpack.c.l.b16 %v323
  %v2887 = vunpack.c.l.b16 %v324
  %v2888 = vunpack.c.l.b16 %v325
  %v2889 = vunpack.c.l.b16 %v326
  %v2890 = vunpack.c.l.b16 %v327
  %v2891 = vunpack.c.l.b16 %v328
  %v2892 = vunpack.c.l.b16 %v329
  %v2893 = vunpack.c.l.b16 %v330
  %v2894 = vunpack.c.l.b16 %v331
  %v2895 = vunpack.c.l.b16 %v332
  %v2896 = vunpack.c.l.b16 %v333
  %v2897 = vunpack.c.l.b16 %v334
  %v2898 = vunpack.c.l.b16 %v335
  %v2899 = vunpack.c.l.b16 %v336
  %v2900 = vunpack.c.l.b16 %v337
  %v2901 = vunpack.c.l.b16 %v338
  %v2902 = vunpack.c.l.b16 %v339
  %v2903 = vunpack.c.l.b16 %v340
  %v2904 = vunpack.c.l.b16 %v341
  %v2905 = vunpack.c.l.b16 %v342
  %v2906 = vunpack.c.l.b16 %v343
  %v2907 = vunpack.c.l.b16 %v344
  %v2908 = vunpack.c.l.b16 %v345
  %v2909 = vunpack.c.l.b16 %v346
  %v2910 = vunpack.c.l.b16 %v347
  %v2911 = vunpack.c.l.b16 %v348
  %v2912 = vunpack.c.l.b16 %v349
  %v2913 = vunpack.c.l.b16 %v350
  %v2914 = vunpack.c.l.b16 %v351
  %v2915 = vunpack.c.l.b16 %v352
  %v2916 = vunpack.c.l.b16 %v353
  %v2917 = vunpack.c.l.b16 %v354
  %v2918 = vunpack.c.l.b16 %v355
  %v2919 = vunpack.c.l.b16 %v356
  %v2920 = vunpack.c.l.b16 %v357
  %v2921 = vunpack.c.l.b16 %v358
  %v2922 = vunpack.c.l.b16 %v359
  %v2923 = vunpack.c.l.b16 %v360
  %v2924 = vunpack.c.l.b16 %v361
  %v2925 = vunpack.c.l.b16 %v362
  %v2926 = vunpack.c.l.b16 %v363
  %v2927 = vunpack.c.l.b16 %v364
  %v2928 = vunpack.c.l.b16 %v365
  %v2929 = vunpack.c.l.b16 %v366
  %v2930 = vunpack.c.l.b16 %v367
  %v2931 = vunpack.c.l.b16 %v368
  %v2932 = vunpack.c.l.b16 %v369
  %v2933 = vunpack.c.l.b16 %v370
  %v2934 = vunpack.c.l.b16 %v371
  %v2935 = vunpack.c.l.b16 %v372
  %v2936 = vunpack.c.l.b16 %v373
  %v2937 = vunpack.c.l.b16 %v374
  %v2938 = vunpack.c.l.b16 %v375
  %v2939 = vunpack.c.l.b16 %v376
  %v2940 = vunpack.c.l.b16 %v377
  %v2941 = vunpack.c.l.b16 %v378
  %v2942 = vunpack.c.l.b16 %v379
  %v2943 = vunpack.c.l.b16 %v380
  %v2944 = vunpack.c.l.b16 %v381
  %v2945 = vunpack.c.l.b16 %v382
  %v2946 = vunpack.c.l.b16 %v383
  %v2947 = vunpack.c.l.b16 %v384
  %v2948 = vunpack.c.l.b16 %v385
  %v2949 = vunpack.c.l.b16 %v386
  %v2950 = vunpack.c.l.b16 %v387
  %v2951 = vunpack.c.l.b16 %v388
  %v2952 = vunpack.c.l.b16 %v389
  %v2953 = vunpack.c.l.b16 %v390
  %v2954 = vunpack.c.l.b16 %v391
  %v2955 = vunpack.c.l.b16 %v392
  %v2956 = vunpack.c.l.b16 %v393
  %v2957 = vunpack.c.l.b16 %v394
  %v2958 = vunpack.c.l.b16 %v395
  %v2959 = vunpack.c.l.b16 %v396
  %v2960 = vunpack.c.l.b16 %v397
  %v2961 = vunpack.c.l.b16 %v398
  %v2962 = vunpack.c.l.b16 %v399
  %v2963 = vunpack.c.l.b16 %v400
  %v2964 = vunpack.c.l.b16 %v401
  %v2965 = vunpack.c.l.b16 %v402
  %v2966 = vunpack.c.l.b16 %v403
  %v2967 = vunpack.c.l.b16 %v404
  %v2968 = vunpack.c.l.b16 %v405
  %v2969 = vunpack.c.l.b16 %v406
  %v2970 = vunpack.c.l.b16 %v407
  %v2971 = vunpack.c.l.b16 %v408
  %v2972 = vunpack.c.l.b16 %v409
  %v2973 = vunpack.c.l.b16 %v410
  %v2974 = vunpack.c.l.b16 %v411
  %v2975 = vunpack.c.l.b16 %v412
  %v2976 = vunpack.c.l.b16 %v413
  %v2977 = vunpack.c.l.b16 %v414
  %v2978 = vunpack.c.l.b16 %v415
  %v2979 = vunpack.c.l.b16 %v416
  %v2980 = vunpack.c.l.b16 %v417
  %v2981 = vunpack.c.l.b16 %v418
  %v2982 = vunpack.c.l.b16 %v419
  %v2983 = vunpack.c.l.b16 %v420
  %v2984 = vunpack.c.l.b16 %v421
  %v2985 = vunpack.c.l.b16 %v422
  %v2986 = vunpack.c.l.b16 %v423
  %v2987 = vunpack.c.l.b16 %v424
  %v2988 = vunpack.c.l.b16 %v425
  %v2989 = vunpack.c.l.b16 %v426
  %v2990 = vunpack.c.l.b16 %v427
  %v2991 = vunpack.c.l.b16 %v428
  %v2992 = vunpack.c.l.b16 %v429
  %v2993 = vunpack.c.l.b16 %v430
  %v2994 = vunpack.c.l.b16 %v431
  %v2995 = vunpack.c.l.b16 %v432
  %v2996 = vunpack.c.l.b16 %v433
  %v2997 = vunpack.c.l.b16 %v434
  %v2998 = vunpack.c.l.b16 %v435
  %v2999 = vunpack.c.l.b16 %v436
  %v3000 = vunpack.c.l.b16 %v437
  %v3001 = vunpack.c.l.b16 %v438
  %v3002 = vunpack.c.l.b16 %v439
  %v3003 = vunpack.c.l.b16 %v440
  %v3004 = vunpack.c.l.b16 %v441
  %v3005 = vunpack.c.l.b16 %v442
  %v3006 = vunpack.c.l.b16 %v443
  %v3007 = vunpack.c.l.b16 %v444
  %v3008 = vunpack.c.l.b16 %v445
  %v3009 = vunpack.c.l.b16 %v446
  %v3010 = vunpack.c.l.b16 %v447
  %v3011 = vunpack.c.l.b16 %v448
  %v3012 = vunpack.c.l.b16 %v449
  %v3013 = vunpack.c.l.b16 %v450
  %v3014 = vunpack.c.l.b16 %v451
  %v3015 = vunpack.c.l.b16 %v452
  %v3016 = vunpack.c.l.b16 %v453
  %v3017 = vunpack.c.l.b16 %v454
  %v3018 = vunpack.c.l.b16 %v455
  %v3019 = vunpack.c.l.b16 %v456
  %v3020 = vunpack.c.l.b16 %v457
  %v3021 = vunpack.c.l.b16 %v458
  %v3022 = vunpack.c.l.b16 %v459
  %v3023 = vunpack.c.l.b16 %v460
  %v3024 = vunpack.c.l.b16 %v461
  %v3025 = vunpack.c.l.b16 %v462
  %v3026 = vunpack.c.l.b16 %v463
  %v3027 = vunpack.c.l.b16 %v464
  %v3028 = vunpack.c.l.b16 %v465
  %v3029 = vunpack.c.l.b16 %v466
  %v3030 = vunpack.c.l.b16 %v467
  %v3031 = vunpack.c.l.b16 %v468
  %v3032 = vunpack.c.l.b16 %v469
  %v3033 = vunpack.c.l.b16 %v470
  %v3034 = vunpack.c.l.b16 %v471
  %v3035 = vunpack.c.l.b16 %v472
  %v3036 = vunpack.c.l.b16 %v473
  %v3037 = vunpack.c.l.b16 %v474
  %v3038 = vunpack.c.l.b16 %v475
  %v3039 = vunpack.c.l.b16 %v476
  %v3040 = vunpack.c.l.b16 %v477
  %v3041 = vunpack.c.l.b16 %v478
  %v3042 = vunpack.c.l.b16 %v479
  %v3043 = vunpack.c.l.b16 %v480
  %v3044 = vunpack.c.l.b16 %v481
  %v3045 = vunpack.c.l.b16 %v482
  %v3046 = vunpack.c.l.b16 %v483
  %v3047 = vunpack.c.l.b16 %v484
  %v3048 = vunpack.c.l.b16 %v485
  %v3049 = vunpack.c.l.b16 %v486
  %v3050 = vunpack.c.l.b16 %v487
  %v3051 = vunpack.c.l.b16 %v488
  %v3052 = vunpack.c.l.b16 %v489
  %v3053 = vunpack.c.l.b16 %v490
  %v3054 = vunpack.c.l.b16 %v491
  %v3055 = vunpack.c.l.b16 %v492
  %v3056 = vunpack.c.l.b16 %v493
  %v3057 = vunpack.c.l.b16 %v494
  %v3058 = vunpack.c.l.b16 %v495
  %v3059 = vunpack.c.l.b16 %v496
  %v3060 = vunpack.c.l.b16 %v497
  %v3061 = vunpack.c.l.b16 %v498
  %v3062 = vunpack.c.l.b16 %v499
  %v3063 = vunpack.c.l.b16 %v500
  %v3064 = vunpack.c.l.b16 %v501
  %v3065 = vunpack.c.l.b16 %v502
  %v3066 = vunpack.c.l.b16 %v503
  %v3067 = vunpack.c.l.b16 %v504
  %v3068 = vunpack.c.l.b16 %v505
  %v3069 = vunpack.c.l.b16 %v506
  %v3070 = vunpack.c.l.b16 %v507
  %v3071 = vunpack.c.l.b16 %v508
  %v3072 = vunpack.c.l.b16 %v509
  %v3073 = vunpack.c.l.b16 %v510
  %v3074 = vunpack.c.l.b16 %v511
  %v3075 = vunpack.c.l.b16 %v512
  %v3076 = vunpack.c.l.b16 %v513
  %v3077 = vunpack.c.l.b16 %v514
  %v3078 = vunpack.c.l.b16 %v515
  %v3079 = vunpack.c.l.b16 %v516
  %v3080 = vunpack.c.l.b16 %v517
  %v3081 = vunpack.c.l.b16 %v518
  %v3082 = vunpack.c.l.b16 %v519
  %v3083 = vunpack.c.l.b16 %v520
  %v3084 = vunpack.c.l.b16 %v521
  %v3085 = vunpack.c.l.b16 %v522
  %v3086 = vunpack.c.l.b16 %v523
  %v3087 = vunpack.c.l.b16 %v524
  %v3088 = vunpack.c.l.b16 %v525
  %v3089 = vunpack.c.l.b16 %v526
  %v3090 = vunpack.c.l.b16 %v527
  %v3091 = vunpack.c.l.b16 %v528
  %v3092 = vunpack.c.l.b16 %v529
  %v3093 = vunpack.c.l.b16 %v530
  %v3094 = vunpack.c.l.b16 %v531
  %v3095 = vunpack.c.l.b16 %v532
  %v3096 = vunpack.c.l.b16 %v533
  %v3097 = vunpack.c.l.b16 %v534
  %v3098 = vunpack.c.l.b16 %v535
  %v3099 = vunpack.c.l.b16 %v536
  %v3100 = vunpack.c.l.b16 %v537
  %v3101 = vunpack.c.l.b16 %v538
  %v3102 = vunpack.c.l.b16 %v539
  %v3103 = vunpack.c.l.b16 %v540
  %v3104 = vunpack.c.l.b16 %v541
  %v3105 = vunpack.c.l.b16 %v542
  %v3106 = vunpack.c.l.b16 %v543
  %v3107 = vunpack.c.l.b16 %v544
  %v3108 = vunpack.c.l.b16 %v545
  %v3109 = vunpack.c.l.b16 %v546
  %v3110 = vunpack.c.l.b16 %v547
  %v3111 = vunpack.c.l.b16 %v548
  %v3112 = vunpack.c.l.b16 %v549
  %v3113 = vunpack.c.l.b16 %v550
  %v3114 = vunpack.c.l.b16 %v551
  %v3115 = vunpack.c.l.b16 %v552
  %v3116 = vunpack.c.l.b16 %v553
  %v3117 = vunpack.c.l.b16 %v554
  %v3118 = vunpack.c.l.b16 %v555
  %v3119 = vunpack.c.l.b16 %v556
  %v3120 = vunpack.c.l.b16 %v557
  %v3121 = vunpack.c.l.b16 %v558
  %v3122 = vunpack.c.l.b16 %v559
  %v3123 = vunpack.c.l.b16 %v560
  %v3124 = vunpack.c.l.b16 %v561
  %v3125 = vunpack.c.l.b16 %v562
  %v3126 = vunpack.c.l.b16 %v563
  %v3127 = vunpack.c.l.b16 %v564
  %v3128 = vunpack.c.l.b16 %v565
  %v3129 = vunpack.c.l.b16 %v566
  %v3130 = vunpack.c.l.b16 %v567
  %v3131 = vunpack.c.l.b16 %v568
  %v3132 = vunpack.c.l.b16 %v569
  %v3133 = vunpack.c.l.b16 %v570
  %v3134 = vunpack.c.l.b16 %v571
  %v3135 = vunpack.c.l.b16 %v572
  %v3136 = vunpack.c.l.b16 %v573
  %v3137 = vunpack.c.l.b16 %v574
  %v3138 = vunpack.c.l.b16 %v575
  %v3139 = vunpack.c.l.b16 %v576
  %v3140 = vunpack.c.l.b16 %v577
  %v3141 = vunpack.c.l.b16 %v578
  %v3142 = vunpack.c.l.b16 %v579
  %v3143 = vunpack.c.l.b16 %v580
  %v3144 = vunpack.c.l.b16 %v581
  %v3145 = vunpack.c.l.b16 %v582
  %v3146 = vunpack.c.l.b16 %v583
  %v3147 = vunpack.c.l.b16 %v584
  %v3148 = vunpack.c.l.b16 %v585
  %v3149 = vunpack.c.l.b16 %v586
  %v3150 = vunpack.c.l.b16 %v587
  %v3151 = vunpack.c.l.b16 %v588
  %v3152 = vunpack.c.l.b16 %v589
  %v3153 = vunpack.c.l.b16 %v590
  %v3154 = vunpack.c.l.b16 %v591
  %v3155 = vunpack.c.l.b16 %v592
  %v3156 = vunpack.c.l.b16 %v593
  %v3157 = vunpack.c.l.b16 %v594
  %v3158 = vunpack.c.l.b16 %v595
  %v3159 = vunpack.c.l.b16 %v596
  %v3160 = vunpack.c.l.b16 %v597
  %v3161 = vunpack.c.l.b16 %v598
  %v3162 = vunpack.c.l.b16 %v599
  %v3163 = vunpack.c.l.b16 %v600
  %v3164 = vunpack.c.l.b16 %v601
  %v3165 = vunpack.c.l.b16 %v602
  %v3166 = vunpack.c.l.b16 %v603
  %v3167 = vunpack.c.l.b16 %v604
  %v3168 = vunpack.c.l.b16 %v605
  %v3169 = vunpack.c.l.b16 %v606
  %v3170 = vunpack.c.l.b16 %v607
  %v3171 = vunpack.c.l.b16 %v608
  %v3172 = vunpack.c.l.b16 %v609
  %v3173 = vunpack.c.l.b16 %v610
  %v3174 = vunpack.c.l.b16 %v611
  %v3175 = vunpack.c.l.b16 %v612
  %v3176 = vunpack.c.l.b16 %v613
  %v3177 = vunpack.c.l.b16 %v614
  %v3178 = vunpack.c.l.b16 %v615
  %v3179 = vunpack.c.l.b16 %v616
  %v3180 = vunpack.c.l.b16 %v617
  %v3181 = vunpack.c.l.b16 %v618
  %v3182 = vunpack.c.l.b16 %v619
  %v3183 = vunpack.c.l.b16 %v620
  %v3184 = vunpack.c.l.b16 %v621
  %v3185 = vunpack.c.l.b16 %v622
  %v3186 = vunpack.c.l.b16 %v623
  %v3187 = vunpack.c.l.b16 %v624
  %v3188 = vunpack.c.l.b16 %v625
  %v3189 = vunpack.c.l.b16 %v626
  %v3190 = vunpack.c.l.b16 %v627
  %v3191 = vunpack.c.l.b16 %v628
  %v3192 = vunpack.c.l.b16 %v629
  %v3193 = vunpack.c.l.b16 %v630
  %v3194 = vunpack.c.l.b16 %v631
  %v3195 = vunpack.c.l.b16 %v632
  %v3196 = vunpack.c.l.b16 %v633
  %v3197 = vunpack.c.l.b16 %v634
  %v3198 = vunpack.c.l.b16 %v635
  %v3199 = vunpack.c.l.b16 %v636
  %v3200 = vunpack.c.l.b16 %v637
  %v3201 = vunpack.c.l.b16 %v638
  %v3202 = vunpack.c.l.b16 %v639
  %v3203 = vunpack.c.l.b16 %v640
  %v3204 = vunpack.c.l.b16 %v641
  %v3205 = vunpack.c.l.b16 %v642
  %v3206 = vunpack.c.l.b16 %v643
  %v3207 = vunpack.c.l.b16 %v644
  %v3208 = vunpack.c.l.b16 %v645
  %v3209 = vunpack.c.l.b16 %v646
  %v3210 = vunpack.c.l.b16 %v647
  %v3211 = vunpack.c.l.b16 %v648
  %v3212 = vunpack.c.l.b16 %v649
  %v3213 = vunpack.c.l.b16 %v650
  %v3214 = vunpack.c.l.b16 %v651
  %v3215 = vunpack.c.l.b16 %v652
  %v3216 = vunpack.c.l.b16 %v653
  %v3217 = vunpack.c.l.b16 %v654
  %v3218 = vunpack.c.l.b16 %v655
  %v3219 = vunpack.c.l.b16 %v656
  %v3220 = vunpack.c.l.b16 %v657
  %v3221 = vunpack.c.l.b16 %v658
  %v3222 = vunpack.c.l.b16 %v659
  %v3223 = vunpack.c.l.b16 %v660
  %v3224 = vunpack.c.l.b16 %v661
  %v3225 = vunpack.c.l.b16 %v662
  %v3226 = vunpack.c.l.b16 %v663
  %v3227 = vunpack.c.l.b16 %v664
  %v3228 = vunpack.c.l.b16 %v665
  %v3229 = vunpack.c.l.b16 %v666
  %v3230 = vunpack.c.l.b16 %v667
  %v3231 = vunpack.c.l.b16 %v668
  %v3232 = vunpack.c.l.b16 %v669
  %v3233 = vunpack.c.l.b16 %v670
  %v3234 = vunpack.c.l.b16 %v671
  %v3235 = vunpack.c.l.b16 %v672
  %v3236 = vunpack.c.l.b16 %v673
  %v3237 = vunpack.c.l.b16 %v674
  %v3238 = vunpack.c.l.b16 %v675
  %v3239 = vunpack.c.l.b16 %v676
  %v3240 = vunpack.c.l.b16 %v677
  %v3241 = vunpack.c.l.b16 %v678
  %v3242 = vunpack.c.l.b16 %v679
  %v3243 = vunpack.c.l.b16 %v680
  %v3244 = vunpack.c.l.b16 %v681
  %v3245 = vunpack.c.l.b16 %v682
  %v3246 = vunpack.c.l.b16 %v683
  %v3247 = vunpack.c.l.b16 %v684
  %v3248 = vunpack.c.l.b16 %v685
  %v3249 = vunpack.c.l.b16 %v686
  %v3250 = vunpack.c.l.b16 %v687
  %v3251 = vunpack.c.l.b16 %v688
  %v3252 = vunpack.c.l.b16 %v689
  %v3253 = vunpack.c.l.b16 %v690
  %v3254 = vunpack.c.l.b16 %v691
  %v3255 = vunpack.c.l.b16 %v692
  %v3256 = vunpack.c.l.b16 %v693
  %v3257 = vunpack.c.l.b16 %v694
  %v3258 = vunpack.c.l.b16 %v695
  %v3259 = vunpack.c.l.b16 %v696
  %v3260 = vunpack.c.l.b16 %v697
  %v3261 = vunpack.c.l.b16 %v698
  %v3262 = vunpack.c.l.b16 %v699
  %v3263 = vunpack.c.l.b16 %v700
  %v3264 = vunpack.c.l.b16 %v701
  %v3265 = vunpack.c.l.b16 %v702
  %v3266 = vunpack.c.l.b16 %v703
  %v3267 = vunpack.c.l.b16 %v704
  %v3268 = vunpack.c.l.b16 %v705
  %v3269 = vunpack.c.l.b16 %v706
  %v3270 = vunpack.c.l.b16 %v707
  %v3271 = vunpack.c.l.b16 %v708
  %v3272 = vunpack.c.l.b16 %v709
  %v3273 = vunpack.c.l.b16 %v710
  %v3274 = vunpack.c.l.b16 %v711
  %v3275 = vunpack.c.l.b16 %v712
  %v3276 = vunpack.c.l.b16 %v713
  %v3277 = vunpack.c.l.b16 %v714
  %v3278 = vunpack.c.l.b16 %v715
  %v3279 = vunpack.c.l.b16 %v716
  %v3280 = vunpack.c.l.b16 %v717
  %v3281 = vunpack.c.l.b16 %v718
  %v3282 = vunpack.c.l.b16 %v719
  %v3283 = vunpack.c.l.b16 %v720
  %v3284 = vunpack.c.l.b16 %v721
  %v3285 = vunpack.c.l.b16 %v722
  %v3286 = vunpack.c.l.b16 %v723
  %v3287 = vunpack.c.l.b16 %v724
  %v3288 = vunpack.c.l.b16 %v725
  %v3289 = vunpack.c.l.b16 %v726
  %v3290 = vunpack.c.l.b16 %v727
  %v3291 = vunpack.c.l.b16 %v728
  %v3292 = vunpack.c.l.b16 %v729
  %v3293 = vunpack.c.l.b16 %v730
  %v3294 = vunpack.c.l.b16 %v731
  %v3295 = vunpack.c.l.b16 %v732
  %v3296 = vunpack.c.l.b16 %v733
  %v3297 = vunpack.c.l.b16 %v734
  %v3298 = vunpack.c.l.b16 %v735
  %v3299 = vunpack.c.l.b16 %v736
  %v3300 = vunpack.c.l.b16 %v737
  %v3301 = vunpack.c.l.b16 %v738
  %v3302 = vunpack.c.l.b16 %v739
  %v3303 = vunpack.c.l.b16 %v740
  %v3304 = vunpack.c.l.b16 %v741
  %v3305 = vunpack.c.l.b16 %v742
  %v3306 = vunpack.c.l.b16 %v743
  %v3307 = vunpack.c.l.b16 %v744
  %v3308 = vunpack.c.l.b16 %v745
  %v3309 = vunpack.c.l.b16 %v746
  %v3310 = vunpack.c.l.b16 %v747
  %v3311 = vunpack.c.l.b16 %v748
  %v3312 = vunpack.c.l.b16 %v749
  %v3313 = vunpack.c.l.b16 %v750
  %v3314 = vunpack.c.l.b16 %v751
  %v3315 = vunpack.c.l.b16 %v752
  %v3316 = vunpack.c.l.b16 %v753
  %v3317 = vunpack.c.l.b16 %v754
  %v3318 = vunpack.c.l.b16 %v755
  %v3319 = vunpack.c.l.b16 %v756
  %v3320 = vunpack.c.l.b16 %v757
  %v3321 = vunpack.c.l.b16 %v758
  %v3322 = vunpack.c.l.b16 %v759
  %v3323 = vunpack.c.l.b16 %v760
  %v3324 = vunpack.c.l.b16 %v761
  %v3325 = vunpack.c.l.b16 %v762
  %v3326 = vunpack.c.l.b16 %v763
  %v3327 = vunpack.c.l.b16 %v764
  %v3328 = vunpack.c.l.b16 %v765
  %v3329 = vunpack.c.l.b16 %v766
  %v3330 = vunpack.c.l.b16 %v767
  %v3331 = vunpack.c.l.b16 %v768
  %v3332 = vunpack.c.l.b16 %v769
  %v3333 = vunpack.c.l.b16 %v770
  %v3334 = vunpack.c.l.b16 %v771
  %v3335 = vunpack.c.l.b16 %v772
  %v3336 = vunpack.c.l.b16 %v773
  %v3337 = vunpack.c.l.b16 %v774
  %v3338 = vunpack.c.l.b16 %v775
  %v3339 = vunpack.c.l.b16 %v776
  %v3340 = vunpack.c.l.b16 %v777
  %v3341 = vunpack.c.l.b16 %v778
  %v3342 = vunpack.c.l.b16 %v779
  %v3343 = vunpack.c.l.b16 %v780
  %v3344 = vunpack.c.l.b16 %v781
  %v3345 = vunpack.c.l.b16 %v782
  %v3346 = vunpack.c.l.b16 %v783
  %v3347 = vunpack.c.l.b16 %v784
  %v3348 = vunpack.c.l.b16 %v785
  %v3349 = vunpack.c.l.b16 %v786
  %v3350 = vunpack.c.l.b16 %v787
  %v3351 = vunpack.c.l.b16 %v788
  %v3352 = vunpack.c.l.b16 %v789
  %v3353 = vunpack.c.l.b16 %v790
  %v3354 = vunpack.c.l.b16 %v791
  %v3355 = vunpack.c.l.b16 %v792
  %v3356 = vunpack.c.l.b16 %v793
  %v3357 = vunpack.c.l.b16 %v794
  %v3358 = vunpack.c.l.b16 %v795
  %v3359 = vunpack.c.l.b16 %v796
  %v3360 = vunpack.c.l.b16 %v797
  %v3361 = vunpack.c.l.b16 %v798
  %v3362 = vunpack.c.l.b16 %v799
  %v3363 = vunpack.c.l.b16 %v800
  %v3364 = vunpack.c.l.b16 %v801
  %v3365 = vunpack.c.l.b16 %v802
  %v3366 = vunpack.c.l.b16 %v803
  %v3367 = vunpack.c.l.b16 %v804
  %v3368 = vunpack.c.l.b16 %v805
  %v3369 = vunpack.c.l.b16 %v806
  %v3370 = vunpack.c.l.b16 %v807
  %v3371 = vunpack.c.l.b16 %v808
  %v3372 = vunpack.c.l.b16 %v809
  %v3373 = vunpack.c.l.b16 %v810
  %v3374 = vunpack.c.l.b16 %v811
  %v3375 = vunpack.c.l.b16 %v812
  %v3376 = vunpack.c.l.b16 %v813
  %v3377 = vunpack.c.l.b16 %v814
  %v3378 = vunpack.c.l.b16 %v815
  %v3379 = vunpack.c.l.b16 %v816
  %v3380 = vunpack.c.l.b16 %v817
  %v3381 = vunpack.c.l.b16 %v818
  %v3382 = vunpack.c.l.b16 %v819
  %v3383 = vunpack.c.l.b16 %v820
  %v3384 = vunpack.c.l.b16 %v821
  %v3385 = vunpack.c.l.b16 %v822
  %v3386 = vunpack.c.l.b16 %v823
  %v3387 = vunpack.c.l.b16 %v824
  %v3388 = vunpack.c.l.b16 %v825
  %v3389 = vunpack.c.l.b16 %v826
  %v3390 = vunpack.c.l.b16 %v827
  %v3391 = vunpack.c.l.b16 %v828
  %v3392 = vunpack.c.l.b16 %v829
  %v3393 = vunpack.c.l.b16 %v830
  %v3394 = vunpack.c.l.b16 %v831
  %v3395 = vunpack.c.l.b16 %v832
  %v3396 = vunpack.c.l.b16 %v833
  %v3397 = vunpack.c.l.b16 %v834
  %v3398 = vunpack.c.l.b16 %v835
  %v3399 = vunpack.c.l.b16 %v836
  %v3400 = vunpack.c.l.b16 %v837
  %v3401 = vunpack.c.l.b16 %v838
  %v3402 = vunpack.c.l.b16 %v839
  %v3403 = vunpack.c.l.b16 %v840
  %v3404 = vunpack.c.l.b16 %v841
  %v3405 = vunpack.c.l.b16 %v842
  %v3406 = vunpack.c.l.b16 %v843
  %v3407 = vunpack.c.l.b16 %v844
  %v3408 = vunpack.c.l.b16 %v845
  %v3409 = vunpack.c.l.b16 %v846
  %v3410 = vunpack.c.l.b16 %v847
  %v3411 = vunpack.c.l.b16 %v848
  %v3412 = vunpack.c.l.b16 %v849
  %v3413 = vunpack.c.l.b16 %v850
  %v3414 = vunpack.c.l.b16 %v851
  %v3415 = vunpack.c.l.b16 %v852
  %v3416 = vunpack.c.l.b16 %v853
  %v3417 = vunpack.c.l.b16 %v854
  %v3418 = vunpack.c.l.b16 %v855
  %v3419 = vunpack.c.l.b16 %v856
  %v3420 = vunpack.c.l.b16 %v857
  %v3421 = vunpack.c.l.b16 %v858
  %v3422 = vunpack.c.l.b16 %v859
  %v3423 = vunpack.c.l.b16 %v860
  %v3424 = vunpack.c.l.b16 %v861
  %v3425 = vunpack.c.l.b16 %v862
  %v3426 = vunpack.c.l.b16 %v863
  %v3427 = vunpack.c.l.b16 %v864
  %v3428 = vunpack.c.l.b16 %v865
  %v3429 = vunpack.c.l.b16 %v866
  %v3430 = vunpack.c.l.b16 %v867
  %v3431 = vunpack.c.l.b16 %v868
  %v3432 = vunpack.c.l.b16 %v869
  %v3433 = vunpack.c.l.b16 %v870
  %v3434 = vunpack.c.l.b16 %v871
  %v3435 = vunpack.c.l.b16 %v872
  %v3436 = vunpack.c.l.b16 %v873
  %v3437 = vunpack.c.l.b16 %v874
  %v3438 = vunpack.c.l.b16 %v875
  %v3439 = vunpack.c.l.b16 %v876
  %v3440 = vunpack.c.l.b16 %v877
  %v3441 = vunpack.c.l.b16 %v878
  %v3442 = vunpack.c.l.b16 %v879
  %v3443 = vunpack.c.l.b16 %v880
  %v3444 = vunpack.c.l.b16 %v881
  %v3445 = vunpack.c.l.b16 %v882
  %v3446 = vunpack.c.l.b16 %v883
  %v3447 = vunpack.c.l.b16 %v884
  %v3448 = vunpack.c.l.b16 %v885
  %v3449 = vunpack.c.l.b16 %v886
  %v3450 = vunpack.c.l.b16 %v887
  %v3451 = vunpack.c.l.b16 %v888
  %v3452 = vunpack.c.l.b16 %v889
  %v3453 = vunpack.c.l.b16 %v890
  %v3454 = vunpack.c.l.b16 %v891
  %v3455 = vunpack.c.l.b16 %v892
  %v3456 = vunpack.c.l.b16 %v893
  %v3457 = vunpack.c.l.b16 %v894
  %v3458 = vunpack.c.l.b16 %v895
  %v3459 = vunpack.c.l.b16 %v896
  %v3460 = vunpack.c.l.b16 %v897
  %v3461 = vunpack.c.l.b16 %v898
  %v3462 = vunpack.c.l.b16 %v899
  %v3463 = vunpack.c.l.b16 %v900
  %v3464 = vunpack.c.l.b16 %v901
  %v3465 = vunpack.c.l.b16 %v902
  %v3466 = vunpack.c.l.b16 %v903
  %v3467 = vunpack.c.l.b16 %v904
  %v3468 = vunpack.c.l.b16 %v905
  %v3469 = vunpack.c.l.b16 %v906
  %v3470 = vunpack.c.l.b16 %v907
  %v3471 = vunpack.c.l.b16 %v908
  %v3472 = vunpack.c.l.b16 %v909
  %v3473 = vunpack.c.l.b16 %v910
  %v3474 = vunpack.c.l.b16 %v911
  %v3475 = vunpack.c.l.b16 %v912
  %v3476 = vunpack.c.l.b16 %v913
  %v3477 = vunpack.c.l.b16 %v914
  %v3478 = vunpack.c.l.b16 %v915
  %v3479 = vunpack.c.l.b16 %v916
  %v3480 = vunpack.c.l.b16 %v917
  %v3481 = vunpack.c.l.b16 %v918
  %v3482 = vunpack.c.l.b16 %v919
  %v3483 = vunpack.c.l.b16 %v920
  %v3484 = vunpack.c.l.b16 %v921
  %v3485 = vunpack.c.l.b16 %v922
  %v3486 = vunpack.c.l.b16 %v923
  %v3487 = vunpack.c.l.b16 %v924
  %v3488 = vunpack.c.l.b16 %v925
  %v3489 = vunpack.c.l.b16 %v926
  %v3490 = vunpack.c.l.b16 %v927
  %v3491 = vunpack.c.l.b16 %v928
  %v3492 = vunpack.c.l.b16 %v929
  %v3493 = vunpack.c.l.b16 %v930
  %v3494 = vunpack.c.l.b16 %v931
  %v3495 = vunpack.c.l.b16 %v932
  %v3496 = vunpack.c.l.b16 %v933
  %v3497 = vunpack.c.l.b16 %v934
  %v3498 = vunpack.c.l.b16 %v935
  %v3499 = vunpack.c.l.b16 %v936
  %v3500 = vunpack.c.l.b16 %v937
  %v3501 = vunpack.c.l.b16 %v938
  %v3502 = vunpack.c.l.b16 %v939
  %v3503 = vunpack.c.l.b16 %v940
  %v3504 = vunpack.c.l.b16 %v941
  %v3505 = vunpack.c.l.b16 %v942
  %v3506 = vunpack.c.l.b16 %v943
  %v3507 = vunpack.c.l.b16 %v944
  %v3508 = vunpack.c.l.b16 %v945
  %v3509 = vunpack.c.l.b16 %v946
  %v3510 = vunpack.c.l.b16 %v947
  %v3511 = vunpack.c.l.b16 %v948
  %v3512 = vunpack.c.l.b16 %v949
  %v3513 = vunpack.c.l.b16 %v950
  %v3514 = vunpack.c.l.b16 %v951
  %v3515 = vunpack.c.l.b16 %v952
  %v3516 = vunpack.c.l.b16 %v953
  %v3517 = vunpack.c.l.b16 %v954
  %v3518 = vunpack.c.l.b16 %v955
  %v3519 = vunpack.c.l.b16 %v956
  %v3520 = vunpack.c.l.b16 %v957
  %v3521 = vunpack.c.l.b16 %v958
  %v3522 = vunpack.c.l.b16 %v959
  %v3523 = vunpack.c.l.b16 %v960
  %v3524 = vunpack.c.l.b16 %v961
  %v3525 = vunpack.c.l.b16 %v962
  %v3526 = vunpack.c.l.b16 %v963
  %v3527 = vunpack.c.l.b16 %v964
  %v3528 = vunpack.c.l.b16 %v965
  %v3529 = vunpack.c.l.b16 %v966
  %v3530 = vunpack.c.l.b16 %v967
  %v3531 = vunpack.c.l.b16 %v968
  %v3532 = vunpack.c.l.b16 %v969
  %v3533 = vunpack.c.l.b16 %v970
  %v3534 = vunpack.c.l.b16 %v971
  %v3535 = vunpack.c.l.b16 %v972
  %v3536 = vunpack.c.l.b16 %v973
  %v3537 = vunpack.c.l.b16 %v974
  %v3538 = vunpack.c.l.b16 %v975
  %v3539 = vunpack.c.l.b16 %v976
  %v3540 = vunpack.c.l.b16 %v977
  %v3541 = vunpack.c.l.b16 %v978
  %v3542 = vunpack.c.l.b16 %v979
  %v3543 = vunpack.c.l.b16 %v980
  %v3544 = vunpack.c.l.b16 %v981
  %v3545 = vunpack.c.l.b16 %v982
  %v3546 = vunpack.c.l.b16 %v983
  %v3547 = vunpack.c.l.b16 %v984
  %v3548 = vunpack.c.l.b16 %v985
  %v3549 = vunpack.c.l.b16 %v986
  %v3550 = vunpack.c.l.b16 %v987
  %v3551 = vunpack.c.l.b16 %v988
  %v3552 = vunpack.c.l.b16 %v989
  %v3553 = vunpack.c.l.b16 %v990
  %v3554 = vunpack.c.l.b16 %v991
  %v3555 = vunpack.c.l.b16 %v992
  %v3556 = vunpack.c.l.b16 %v993
  %v3557 = vunpack.c.l.b16 %v994
  %v3558 = vunpack.c.l.b16 %v995
  %v3559 = vunpack.c.l.b16 %v996
  %v3560 = vunpack.c.l.b16 %v997
  %v3561 = vunpack.c.l.b16 %v998
  %v3562 = vunpack.c.l.b16 %v999
  %v3563 = vunpack.c.l.b16 %v1000
  %v3564 = vunpack.c.l.b16 %v1001
  %v3565 = vunpack.c.l.b16 %v1002
  %v3566 = vunpack.c.l.b16 %v1003
  %v3567 = vunpack.c.l.b16 %v1004
  %v3568 = vunpack.c.l.b16 %v1005
  %v3569 = vunpack.c.l.b16 %v1006
  %v3570 = vunpack.c.l.b16 %v1007
  %v3571 = vunpack.c.l.b16 %v1008
  %v3572 = vunpack.c.l.b16 %v1009
  %v3573 = vunpack.c.l.b16 %v1010
  %v3574 = vunpack.c.l.b16 %v1011
  %v3575 = vunpack.c.l.b16 %v1012
  %v3576 = vunpack.c.l.b16 %v1013
  %v3577 = vunpack.c.l.b16 %v1014
  %v3578 = vunpack.c.l.b16 %v1015
  %v3579 = vunpack.c.l.b16 %v1016
  %v3580 = vunpack.c.l.b16 %v1017
  %v3581 = vunpack.c.l.b16 %v1018
  %v3582 = vunpack.c.l.b16 %v1019
  %v3583 = vunpack.c.l.b16 %v1020
  %v3584 = vunpack.c.l.b16 %v1021
  %v3585 = vunpack.c.l.b16 %v1022
  %v3586 = vunpack.c.l.b16 %v1023
  %v3587 = vunpack.c.l.b16 %v1024
  %v3588 = vunpack.c.l.b16 %v1025
  %v3589 = vunpack.c.l.b16 %v1026
  %v3590 = vunpack.c.l.b16 %v1027
  %v3591 = vunpack.c.l.b16 %v1028
  %v3592 = vunpack.c.l.b16 %v1029
  %v3593 = vunpack.c.l.b16 %v1030
  %v3594 = vunpack.c.l.b16 %v1031
  %v3595 = vunpack.c.l.b16 %v1032
  %v3596 = vunpack.c.l.b16 %v1033
  %v3597 = vunpack.c.l.b16 %v1034
  %v3598 = vunpack.c.l.b16 %v1035
  %v3599 = vunpack.c.l.b16 %v1036
  %v3600 = vunpack.c.l.b16 %v1037
  %v3601 = vunpack.c.l.b16 %v1038
  %v3602 = vunpack.c.l.b16 %v1039
  %v3603 = vunpack.c.l.b16 %v1040
  %v3604 = vunpack.c.l.b16 %v1041
  %v3605 = vunpack.c.l.b16 %v1042
  %v3606 = vunpack.c.l.b16 %v1043
  %v3607 = vunpack.c.l.b16 %v1044
  %v3608 = vunpack.c.l.b16 %v1045
  %v3609 = vunpack.c.l.b16 %v1046
  %v3610 = vunpack.c.l.b16 %v1047
  %v3611 = vunpack.c.l.b16 %v1048
  %v3612 = vunpack.c.l.b16 %v1049
  %v3613 = vunpack.c.l.b16 %v1050
  %v3614 = vunpack.c.l.b16 %v1051
  %v3615 = vunpack.c.l.b16 %v1052
  %v3616 = vunpack.c.l.b16 %v1053
  %v3617 = vunpack.c.l.b16 %v1054
  %v3618 = vunpack.c.l.b16 %v1055
  %v3619 = vunpack.c.l.b16 %v1056
  %v3620 = vunpack.c.l.b16 %v1057
  %v3621 = vunpack.c.l.b16 %v1058
  %v3622 = vunpack.c.l.b16 %v1059
  %v3623 = vunpack.c.l.b16 %v1060
  %v3624 = vunpack.c.l.b16 %v1061
  %v3625 = vunpack.c.l.b16 %v1062
  %v3626 = vunpack.c.l.b16 %v1063
  %v3627 = vunpack.c.l.b16 %v1064
  %v3628 = vunpack.c.l.b16 %v1065
  %v3629 = vunpack.c.l.b16 %v1066
  %v3630 = vunpack.c.l.b16 %v1067
  %v3631 = vunpack.c.l.b16 %v1068
  %v3632 = vunpack.c.l.b16 %v1069
  %v3633 = vunpack.c.l.b16 %v1070
  %v3634 = vunpack.c.l.b16 %v1071
  %v3635 = vunpack.c.l.b16 %v1072
  %v3636 = vunpack.c.l.b16 %v1073
  %v3637 = vunpack.c.l.b16 %v1074
  %v3638 = vunpack.c.l.b16 %v1075
  %v3639 = vunpack.c.l.b16 %v1076
  %v3640 = vunpack.c.l.b16 %v1077
  %v3641 = vunpack.c.l.b16 %v1078
  %v3642 = vunpack.c.l.b16 %v1079
  %v3643 = vunpack.c.l.b16 %v1080
  %v3644 = vunpack.c.l.b16 %v1081
  %v3645 = vunpack.c.l.b16 %v1082
  %v3646 = vunpack.c.l.b16 %v1083
  %v3647 = vunpack.c.l.b16 %v1084
  %v3648 = vunpack.c.l.b16 %v1085
  %v3649 = vunpack.c.l.b16 %v1086
  %v3650 = vunpack.c.l.b16 %v1087
  %v3651 = vunpack.c.l.b16 %v1088
  %v3652 = vunpack.c.l.b16 %v1089
  %v3653 = vunpack.c.l.b16 %v1090
  %v3654 = vunpack.c.l.b16 %v1091
  %v3655 = vunpack.c.l.b16 %v1092
  %v3656 = vunpack.c.l.b16 %v1093
  %v3657 = vunpack.c.l.b16 %v1094
  %v3658 = vunpack.c.l.b16 %v1095
  %v3659 = vunpack.c.l.b16 %v1096
  %v3660 = vunpack.c.l.b16 %v1097
  %v3661 = vunpack.c.l.b16 %v1098
  %v3662 = vunpack.c.l.b16 %v1099
  %v3663 = vunpack.c.l.b16 %v1100
  %v3664 = vunpack.c.l.b16 %v1101
  %v3665 = vunpack.c.l.b16 %v1102
  %v3666 = vunpack.c.l.b16 %v1103
  %v3667 = vunpack.c.l.b16 %v1104
  %v3668 = vunpack.c.l.b16 %v1105
  %v3669 = vunpack.c.l.b16 %v1106
  %v3670 = vunpack.c.l.b16 %v1107
  %v3671 = vunpack.c.l.b16 %v1108
  %v3672 = vunpack.c.l.b16 %v1109
  %v3673 = vunpack.c.l.b16 %v1110
  %v3674 = vunpack.c.l.b16 %v1111
  %v3675 = vunpack.c.l.b16 %v1112
  %v3676 = vunpack.c.l.b16 %v1113
  %v3677 = vunpack.c.l.b16 %v1114
  %v3678 = vunpack.c.l.b16 %v1115
  %v3679 = vunpack.c.l.b16 %v1116
  %v3680 = vunpack.c.l.b16 %v1117
  %v3681 = vunpack.c.l.b16 %v1118
  %v3682 = vunpack.c.l.b16 %v1119
  %v3683 = vunpack.c.l.b16 %v1120
  %v3684 = vunpack.c.l.b16 %v1121
  %v3685 = vunpack.c.l.b16 %v1122
  %v3686 = vunpack.c.l.b16 %v1123
  %v3687 = vunpack.c.l.b16 %v1124
  %v3688 = vunpack.c.l.b16 %v1125
  %v3689 = vunpack.c.l.b16 %v1126
  %v3690 = vunpack.c.l.b16 %v1127
  %v3691 = vunpack.c.l.b16 %v1128
  %v3692 = vunpack.c.l.b16 %v1129
  %v3693 = vunpack.c.l.b16 %v1130
  %v3694 = vunpack.c.l.b16 %v1131
  %v3695 = vunpack.c.l.b16 %v1132
  %v3696 = vunpack.c.l.b16 %v1133
  %v3697 = vunpack.c.l.b16 %v1134
  %v3698 = vunpack.c.l.b16 %v1135
  %v3699 = vunpack.c.l.b16 %v1136
  %v3700 = vunpack.c.l.b16 %v1137
  %v3701 = vunpack.c.l.b16 %v1138
  %v3702 = vunpack.c.l.b16 %v1139
  %v3703 = vunpack.c.l.b16 %v1140
  %v3704 = vunpack.c.l.b16 %v1141
  %v3705 = vunpack.c.l.b16 %v1142
  %v3706 = vunpack.c.l.b16 %v1143
  %v3707 = vunpack.c.l.b16 %v1144
  %v3708 = vunpack.c.l.b16 %v1145
  %v3709 = vunpack.c.l.b16 %v1146
  %v3710 = vunpack.c.l.b16 %v1147
  %v3711 = vunpack.c.l.b16 %v1148
  %v3712 = vunpack.c.l.b16 %v1149
  %v3713 = vunpack.c.l.b16 %v1150
  %v3714 = vunpack.c.l.b16 %v1151
  %v3715 = vunpack.c.l.b16 %v1152
  %v3716 = vunpack.c.l.b16 %v1153
  %v3717 = vunpack.c.l.b16 %v1154
  %v3718 = vunpack.c.l.b16 %v1155
  %v3719 = vunpack.c.l.b16 %v1156
  %v3720 = vunpack.c.l.b16 %v1157
  %v3721 = vunpack.c.l.b16 %v1158
  %v3722 = vunpack.c.l.b16 %v1159
  %v3723 = vunpack.c.l.b16 %v1160
  %v3724 = vunpack.c.l.b16 %v1161
  %v3725 = vunpack.c.l.b16 %v1162
  %v3726 = vunpack.c.l.b16 %v1163
  %v3727 = vunpack.c.l.b16 %v1164
  %v3728 = vunpack.c.l.b16 %v1165
  %v3729 = vunpack.c.l.b16 %v1166
  %v3730 = vunpack.c.l.b16 %v1167
  %v3731 = vunpack.c.l.b16 %v1168
  %v3732 = vunpack.c.l.b16 %v1169
  %v3733 = vunpack.c.l.b16 %v1170
  %v3734 = vunpack.c.l.b16 %v1171
  %v3735 = vunpack.c.l.b16 %v1172
  %v3736 = vunpack.c.l.b16 %v1173
  %v3737 = vunpack.c.l.b16 %v1174
  %v3738 = vunpack.c.l.b16 %v1175
  %v3739 = vunpack.c.l.b16 %v1176
  %v3740 = vunpack.c.l.b16 %v1177
  %v3741 = vunpack.c.l.b16 %v1178
  %v3742 = vunpack.c.l.b16 %v1179
  %v3743 = vunpack.c.l.b16 %v1180
  %v3744 = vunpack.c.l.b16 %v1181
  %v3745 = vunpack.c.l.b16 %v1182
  %v3746 = vunpack.c.l.b16 %v1183
  %v3747 = vunpack.c.l.b16 %v1184
  %v3748 = vunpack.c.l.b16 %v1185
  %v3749 = vunpack.c.l.b16 %v1186
  %v3750 = vunpack.c.l.b16 %v1187
  %v3751 = vunpack.c.l.b16 %v1188
  %v3752 = vunpack.c.l.b16 %v1189
  %v3753 = vunpack.c.l.b16 %v1190
  %v3754 = vunpack.c.l.b16 %v1191
  %v3755 = vunpack.c.l.b16 %v1192
  %v3756 = vunpack.c.l.b16 %v1193
  %v3757 = vunpack.c.l.b16 %v1194
  %v3758 = vunpack.c.l.b16 %v1195
  %v3759 = vunpack.c.l.b16 %v1196
  %v3760 = vunpack.c.l.b16 %v1197
  %v3761 = vunpack.c.l.b16 %v1198
  %v3762 = vunpack.c.l.b16 %v1199
  %v3763 = vunpack.c.l.b16 %v1200
  %v3764 = vunpack.c.l.b16 %v1201
  %v3765 = vunpack.c.l.b16 %v1202
  %v3766 = vunpack.c.l.b16 %v1203
  %v3767 = vunpack.c.l.b16 %v1204
  %v3768 = vunpack.c.l.b16 %v1205
  %v3769 = vunpack.c.l.b16 %v1206
  %v3770 = vunpack.c.l.b16 %v1207
  %v3771 = vunpack.c.l.b16 %v1208
  %v3772 = vpack.c.b16 %v2621, %v2620
  %v3773 = vpack.c.b16 %v2623, %v2622
  %v3774 = vpack.c.b16 %v2625, %v2624
  %v3775 = vpack.c.b16 %v2627, %v2626
  %v3776 = vpack.c.b16 %v2629, %v2628
  %v3777 = vpack.c.b16 %v2631, %v2630
  %v3778 = vpack.c.b16 %v2633, %v2632
  %v3779 = vpack.c.b16 %v2635, %v2634
  %v3780 = vpack.c.b16 %v2637, %v2636
  %v3781 = vpack.c.b16 %v2639, %v2638
  %v3782 = vpack.c.b16 %v2641, %v2640
  %v3783 = vpack.c.b16 %v2643, %v2642
  %v3784 = vpack.c.b16 %v2645, %v2644
  %v3785 = vpack.c.b16 %v2647, %v2646
  %v3786 = vpack.c.b16 %v2649, %v2648
  %v3787 = vpack.c.b16 %v2651, %v2650
  %v3788 = vpack.c.b16 %v2653, %v2652
  %v3789 = vpack.c.b16 %v2655, %v2654
  %v3790 = vpack.c.b16 %v2657, %v2656
  %v3791 = vpack.c.b16 %v2659, %v2658
  %v3792 = vpack.c.b16 %v2661, %v2660
  %v3793 = vpack.c.b16 %v2663, %v2662
  %v3794 = vpack.c.b16 %v2665, %v2664
  %v3795 = vpack.c.b16 %v2667, %v2666
  %v3796 = vpack.c.b16 %v2669, %v2668
  %v3797 = vpack.c.b16 %v2671, %v2670
  %v3798 = vpack.c.b16 %v2673, %v2672
  %v3799 = vpack.c.b16 %v2675, %v2674
  %v3800 = vpack.c.b16 %v2677, %v2676
  %v3801 = vpack.c.b16 %v2679, %v2678
  %v3802 = vpack.c.b16 %v2681, %v2680
  %v3803 = vpack.c.b16 %v2683, %v2682
  %v3804 = vpack.c.b16 %v2685, %v2684
  %v3805 = vpack.c.b16 %v2687, %v2686
  %v3806 = vpack.c.b16 %v2689, %v2688
  %v3807 = vpack.c.b16 %v2691, %v2690
  %v3808 = vpack.c.b16 %v2693, %v2692
  %v3809 = vpack.c.b16 %v2695, %v2694
  %v3810 = vpack.c.b16 %v2697, %v2696
  %v3811 = vpack.c.b16 %v2699, %v2698
  %v3812 = vpack.c.b16 %v2701, %v2700
  %v3813 = vpack.c.b16 %v2703, %v2702
  %v3814 = vpack.c.b16 %v2705, %v2704
  %v3815 = vpack.c.b16 %v2707, %v2706
  %v3816 = vpack.c.b16 %v2709, %v2708
  %v3817 = vpack.c.b16 %v2711, %v2710
  %v3818 = vpack.c.b16 %v2713, %v2712
  %v3819 = vpack.c.b16 %v2715, %v2714
  %v3820 = vpack.c.b16 %v2717, %v2716
  %v3821 = vpack.c.b16 %v2719, %v2718
  %v3822 = vpack.c.b16 %v2721, %v2720
  %v3823 = vpack.c.b16 %v2723, %v2722
  %v3824 = vpack.c.b16 %v2725, %v2724
  %v3825 = vpack.c.b16 %v2727, %v2726
  %v3826 = vpack.c.b16 %v2729, %v2728
  %v3827 = vpack.c.b16 %v2731, %v2730
  %v3828 = vpack.c.b16 %v2733, %v2732
  %v3829 = vpack.c.b16 %v2735, %v2734
  %v3830 = vpack.c.b16 %v2737, %v2736
  %v3831 = vpack.c.b16 %v2739, %v2738
  %v3832 = vpack.c.b16 %v2741, %v2740
  %v3833 = vpack.c.b16 %v2743, %v2742
  %v3834 = vpack.c.b16 %v2745, %v2744
  %v3835 = vpack.c.b16 %v2747, %v2746
  %v3836 = vpack.c.b16 %v2749, %v2748
  %v3837 = vpack.c.b16 %v2751, %v2750
  %v3838 = vpack.c.b16 %v2753, %v2752
  %v3839 = vpack.c.b16 %v2755, %v2754
  %v3840 = vpack.c.b16 %v2757, %v2756
  %v3841 = vpack.c.b16 %v2759, %v2758
  %v3842 = vpack.c.b16 %v2761, %v2760
  %v3843 = vpack.c.b16 %v2763, %v2762
  %v3844 = vpack.c.b16 %v2765, %v2764
  %v3845 = vpack.c.b16 %v2767, %v2766
  %v3846 = vpack.c.b16 %v2769, %v2768
  %v3847 = vpack.c.b16 %v2771, %v2770
  %v3848 = vpack.c.b16 %v2773, %v2772
  %v3849 = vpack.c.b16 %v2775, %v2774
  %v3850 = vpack.c.b16 %v2777, %v2776
  %v3851 = vpack.c.b16 %v2779, %v2778
  %v3852 = vpack.c.b16 %v2781, %v2780
  %v3853 = vpack.c.b16 %v2783, %v2782
  %v3854 = vpack.c.b16 %v2785, %v2784
  %v3855 = vpack.c.b16 %v2787, %v2786
  %v3856 = vpack.c.b16 %v2789, %v2788
  %v3857 = vpack.c.b16 %v2791, %v2790
  %v3858 = vpack.c.b16 %v2793, %v2792
  %v3859 = vpack.c.b16 %v2795, %v2794
  %v3860 = vpack.c.b16 %v2797, %v2796
  %v3861 = vpack.c.b16 %v2799, %v2798
  %v3862 = vpack.c.b16 %v2801, %v2800
  %v3863 = vpack.c.b16 %v2803, %v2802
  %v3864 = vpack.c.b16 %v2805, %v2804
  %v3865 = vpack.c.b16 %v2807, %v2806
  %v3866 = vpack.c.b16 %v2809, %v2808
  %v3867 = vpack.c.b16 %v2811, %v2810
  %v3868 = vpack.c.b16 %v2813, %v2812
  %v3869 = vpack.c.b16 %v2815, %v2814
  %v3870 = vpack.c.b16 %v2817, %v2816
  %v3871 = vpack.c.b16 %v2819, %v2818
  %v3872 = vpack.c.b16 %v2821, %v2820
  %v3873 = vpack.c.b16 %v2823, %v2822
  %v3874 = vpack.c.b16 %v2825, %v2824
  %v3875 = vpack.c.b16 %v2827, %v2826
  %v3876 = vpack.c.b16 %v2829, %v2828
  %v3877 = vpack.c.b16 %v2831, %v2830
  %v3878 = vpack.c.b16 %v2833, %v2832
  %v3879 = vpack.c.b16 %v2835, %v2834
  %v3880 = vpack.c.b16 %v2837, %v2836
  %v3881 = vpack.c.b16 %v2839, %v2838
  %v3882 = vpack.c.b16 %v2841, %v2840
  %v3883 = vpack.c.b16 %v2843, %v2842
  %v3884 = vpack.c.b16 %v2845, %v2844
  %v3885 = vpack.c.b16 %v2847, %v2846
  %v3886 = vpack.c.b16 %v2849, %v2848
  %v3887 = vpack.c.b16 %v2851, %v2850
  %v3888 = vpack.c.b16 %v2853, %v2852
  %v3889 = vpack.c.b16 %v2855, %v2854
  %v3890 = vpack.c.b16 %v2857, %v2856
  %v3891 = vpack.c.b16 %v2859, %v2858
  %v3892 = vpack.c.b16 %v2861, %v2860
  %v3893 = vpack.c.b16 %v2863, %v2862
  %v3894 = vpack.c.b16 %v2865, %v2864
  %v3895 = vpack.c.b16 %v2867, %v2866
  %v3896 = vpack.c.b16 %v2869, %v2868
  %v3897 = vpack.c.b16 %v2871, %v2870
  %v3898 = vpack.c.b16 %v2873, %v2872
  %v3899 = vpack.c.b16 %v2875, %v2874
  %v3900 = vpack.c.b16 %v2877, %v2876
  %v3901 = vpack.c.b16 %v2879, %v2878
  %v3902 = vpack.c.b16 %v2881, %v2880
  %v3903 = vpack.c.b16 %v2883, %v2882
  %v3904 = vpack.c.b16 %v2885, %v2884
  %v3905 = vpack.c.b16 %v2887, %v2886
  %v3906 = vpack.c.b16 %v2889, %v2888
  %v3907 = vpack.c.b16 %v2891, %v2890
  %v3908 = vpack.c.b16 %v2893, %v2892
  %v3909 = vpack.c.b16 %v2895, %v2894
  %v3910 = vpack.c.b16 %v2897, %v2896
  %v3911 = vpack.c.b16 %v2899, %v2898
  %v3912 = vpack.c.b16 %v2901, %v2900
  %v3913 = vpack.c.b16 %v2903, %v2902
  %v3914 = vpack.c.b16 %v2905, %v2904
  %v3915 = vpack.c.b16 %v2907, %v2906
  %v3916 = vpack.c.b16 %v2909, %v2908
  %v3917 = vpack.c.b16 %v2911, %v2910
  %v3918 = vpack.c.b16 %v2913, %v2912
  %v3919 = vpack.c.b16 %v2915, %v2914
  %v3920 = vpack.c.b16 %v2917, %v2916
  %v3921 = vpack.c.b16 %v2919, %v2918
  %v3922 = vpack.c.b16 %v2921, %v2920
  %v3923 = vpack.c.b16 %v2923, %v2922
  %v3924 = vpack.c.b16 %v2925, %v2924
  %v3925 = vpack.c.b16 %v2927, %v2926
  %v3926 = vpack.c.b16 %v2929, %v2928
  %v3927 = vpack.c.b16 %v2931, %v2930
  %v3928 = vpack.c.b16 %v2933, %v2932
  %v3929 = vpack.c.b16 %v2935, %v2934
  %v3930 = vpack.c.b16 %v2937, %v2936
  %v3931 = vpack.c.b16 %v2939, %v2938
  %v3932 = vpack.c.b16 %v2941, %v2940
  %v3933 = vpack.c.b16 %v2943, %v2942
  %v3934 = vpack.c.b16 %v2945, %v2944
  %v3935 = vpack.c.b16 %v2947, %v2946
  %v3936 = vpack.c.b16 %v2949, %v2948
  %v3937 = vpack.c.b16 %v2951, %v2950
  %v3938 = vpack.c.b16 %v2953, %v2952
  %v3939 = vpack.c.b16 %v2955, %v2954
  %v3940 = vpack.c.b16 %v2957, %v2956
  %v3941 = vpack.c.b16 %v2959, %v2958
  %v3942 = vpack.c.b16 %v2961, %v2960
  %v3943 = vpack.c.b16 %v2963, %v2962
  %v3944 = vpack.c.b16 %v2965, %v2964
  %v3945 = vpack.c.b16 %v2967, %v2966
  %v3946 = vpack.c.b16 %v2969, %v2968
  %v3947 = vpack.c.b16 %v2971, %v2970
  %v3948 = vpack.c.b16 %v2973, %v2972
  %v3949 = vpack.c.b16 %v2975, %v2974
  %v3950 = vpack.c.b16 %v2977, %v2976
  %v3951 = vpack.c.b16 %v2979, %v2978
  %v3952 = vpack.c.b16 %v2981, %v2980
  %v3953 = vpack.c.b16 %v2983, %v2982
  %v3954 = vpack.c.b16 %v2985, %v2984
  %v3955 = vpack.c.b16 %v2987, %v2986
  %v3956 = vpack.c.b16 %v2989, %v2988
  %v3957 = vpack.c.b16 %v2991, %v2990
  %v3958 = vpack.c.b16 %v2993, %v2992
  %v3959 = vpack.c.b16 %v2995, %v2994
  %v3960 = vpack.c.b16 %v2997, %v2996
  %v3961 = vpack.c.b16 %v2999, %v2998
  %v3962 = vpack.c.b16 %v3001, %v3000
  %v3963 = vpack.c.b16 %v3003, %v3002
  %v3964 = vpack.c.b16 %v3005, %v3004
  %v3965 = vpack.c.b16 %v3007, %v3006
  %v3966 = vpack.c.b16 %v3009, %v3008
  %v3967 = vpack.c.b16 %v3011, %v3010
  %v3968 = vpack.c.b16 %v3013, %v3012
  %v3969 = vpack.c.b16 %v3015, %v3014
  %v3970 = vpack.c.b16 %v3017, %v3016
  %v3971 = vpack.c.b16 %v3019, %v3018
  %v3972 = vpack.c.b16 %v3021, %v3020
  %v3973 = vpack.c.b16 %v3023, %v3022
  %v3974 = vpack.c.b16 %v3025, %v3024
  %v3975 = vpack.c.b16 %v3027, %v3026
  %v3976 = vpack.c.b16 %v3029, %v3028
  %v3977 = vpack.c.b16 %v3031, %v3030
  %v3978 = vpack.c.b16 %v3033, %v3032
  %v3979 = vpack.c.b16 %v3035, %v3034
  %v3980 = vpack.c.b16 %v3037, %v3036
  %v3981 = vpack.c.b16 %v3039, %v3038
  %v3982 = vpack.c.b16 %v3041, %v3040
  %v3983 = vpack.c.b16 %v3043, %v3042
  %v3984 = vpack.c.b16 %v3045, %v3044
  %v3985 = vpack.c.b16 %v3047, %v3046
  %v3986 = vpack.c.b16 %v3049, %v3048
  %v3987 = vpack.c.b16 %v3051, %v3050
  %v3988 = vpack.c.b16 %v3053, %v3052
  %v3989 = vpack.c.b16 %v3055, %v3054
  %v3990 = vpack.c.b16 %v3057, %v3056
  %v3991 = vpack.c.b16 %v3059, %v3058
  %v3992 = vpack.c.b16 %v3061, %v3060
  %v3993 = vpack.c.b16 %v3063, %v3062
  %v3994 = vpack.c.b16 %v3065, %v3064
  %v3995 = vpack.c.b16 %v3067, %v3066
  %v3996 = vpack.c.b16 %v3069, %v3068
  %v3997 = vpack.c.b16 %v3071, %v3070
  %v3998 = vpack.c.b16 %v3073, %v3072
  %v3999 = vpack.c.b16 %v3075, %v3074
  %v4000 = vpack.c.b16 %v3077, %v3076
  %v4001 = vpack.c.b16 %v3079, %v3078
  %v4002 = vpack.c.b16 %v3081, %v3080
  %v4003 = vpack.c.b16 %v3083, %v3082
  %v4004 = vpack.c.b16 %v3085, %v3084
  %v4005 = vpack.c.b16 %v3087, %v3086
  %v4006 = vpack.c.b16 %v3089, %v3088
  %v4007 = vpack.c.b16 %v3091, %v3090
  %v4008 = vpack.c.b16 %v3093, %v3092
  %v4009 = vpack.c.b16 %v3095, %v3094
  %v4010 = vpack.c.b16 %v3097, %v3096
  %v4011 = vpack.c.b16 %v3099, %v3098
  %v4012 = vpack.c.b16 %v3101, %v3100
  %v4013 = vpack.c.b16 %v3103, %v3102
  %v4014 = vpack.c.b16 %v3105, %v3104
  %v4015 = vpack.c.b16 %v3107, %v3106
  %v4016 = vpack.c.b16 %v3109, %v3108
  %v4017 = vpack.c.b16 %v3111, %v3110
  %v4018 = vpack.c.b16 %v3113, %v3112
  %v4019 = vpack.c.b16 %v3115, %v3114
  %v4020 = vpack.c.b16 %v3117, %v3116
  %v4021 = vpack.c.b16 %v3119, %v3118
  %v4022 = vpack.c.b16 %v3121, %v3120
  %v4023 = vpack.c.b16 %v3123, %v3122
  %v4024 = vpack.c.b16 %v3125, %v3124
  %v4025 = vpack.c.b16 %v3127, %v3126
  %v4026 = vpack.c.b16 %v3129, %v3128
  %v4027 = vpack.c.b16 %v3131, %v3130
  %v4028 = vpack.c.b16 %v3133, %v3132
  %v4029 = vpack.c.b16 %v3135, %v3134
  %v4030 = vpack.c.b16 %v3137, %v3136
  %v4031 = vpack.c.b16 %v3139, %v3138
  %v4032 = vpack.c.b16 %v3141, %v3140
  %v4033 = vpack.c.b16 %v3143, %v3142
  %v4034 = vpack.c.b16 %v3145, %v3144
  %v4035 = vpack.c.b16 %v3147, %v3146
  %v4036 = vpack.c.b16 %v3149, %v3148
  %v4037 = vpack.c.b16 %v3151, %v3150
  %v4038 = vpack.c.b16 %v3153, %v3152
  %v4039 = vpack.c.b16 %v3155, %v3154
  %v4040 = vpack.c.b16 %v3157, %v3156
  %v4041 = vpack.c.b16 %v3159, %v3158
  %v4042 = vpack.c.b16 %v3161, %v3160
  %v4043 = vpack.c.b16 %v3163, %v3162
  %v4044 = vpack.c.b16 %v3165, %v3164
  %v4045 = vpack.c.b16 %v3167, %v3166
  %v4046 = vpack.c.b16 %v3169, %v3168
  %v4047 = vpack.c.b16 %v3171, %v3170
  %v4048 = vpack.c.b16 %v3173, %v3172
  %v4049 = vpack.c.b16 %v3175, %v3174
  %v4050 = vpack.c.b16 %v3177, %v3176
  %v4051 = vpack.c.b16 %v3179, %v3178
  %v4052 = vpack.c.b16 %v3181, %v3180
  %v4053 = vpack.c.b16 %v3183, %v3182
  %v4054 = vpack.c.b16 %v3185, %v3184
  %v4055 = vpack.c.b16 %v3187, %v3186
  %v4056 = vpack.c.b16 %v3189, %v3188
  %v4057 = vpack.c.b16 %v3191, %v3190
  %v4058 = vpack.c.b16 %v3193, %v3192
  %v4059 = vpack.c.b16 %v3195, %v3194
  %v4060 = vpack.c.b16 %v3197, %v3196
  %v4061 = vpack.c.b16 %v3199, %v3198
  %v4062 = vpack.c.b16 %v3201, %v3200
  %v4063 = vpack.c.b16 %v3203, %v3202
  %v4064 = vpack.c.b16 %v3205, %v3204
  %v4065 = vpack.c.b16 %v3207, %v3206
  %v4066 = vpack.c.b16 %v3209, %v3208
  %v4067 = vpack.c.b16 %v3211, %v3210
  %v4068 = vpack.c.b16 %v3213, %v3212
  %v4069 = vpack.c.b16 %v3215, %v3214
  %v4070 = vpack.c.b16 %v3217, %v3216
  %v4071 = vpack.c.b16 %v3219, %v3218
  %v4072 = vpack.c.b16 %v3221, %v3220
  %v4073 = vpack.c.b16 %v3223, %v3222
  %v4074 = vpack.c.b16 %v3225, %v3224
  %v4075 = vpack.c.b16 %v3227, %v3226
  %v4076 = vpack.c.b16 %v3229, %v3228
  %v4077 = vpack.c.b16 %v3231, %v3230
  %v4078 = vpack.c.b16 %v3233, %v3232
  %v4079 = vpack.c.b16 %v3235, %v3234
  %v4080 = vpack.c.b16 %v3237, %v3236
  %v4081 = vpack.c.b16 %v3239, %v3238
  %v4082 = vpack.c.b16 %v3241, %v3240
  %v4083 = vpack.c.b16 %v3243, %v3242
  %v4084 = vpack.c.b16 %v3245, %v3244
  %v4085 = vpack.c.b16 %v3247, %v3246
  %v4086 = vpack.c.b16 %v3249, %v3248
  %v4087 = vpack.c.b16 %v3251, %v3250
  %v4088 = vpack.c.b16 %v3253, %v3252
  %v4089 = vpack.c.b16 %v3255, %v3254
  %v4090 = vpack.c.b16 %v3257, %v3256
  %v4091 = vpack.c.b16 %v3259, %v3258
  %v4092 = vpack.c.b16 %v3261, %v3260
  %v4093 = vpack.c.b16 %v3263, %v3262
  %v4094 = vpack.c.b16 %v3265, %v3264
  %v4095 = vpack.c.b16 %v3267, %v3266
  %v4096 = vpack.c.b16 %v3269, %v3268
  %v4097 = vpack.c.b16 %v3271, %v3270
  %v4098 = vpack.c.b16 %v3273, %v3272
  %v4099 = vpack.c.b16 %v3275, %v3274
  %v4100 = vpack.c.b16 %v3277, %v3276
  %v4101 = vpack.c.b16 %v3279, %v3278
  %v4102 = vpack.c.b16 %v3281, %v3280
  %v4103 = vpack.c.b16 %v3283, %v3282
  %v4104 = vpack.c.b16 %v3285, %v3284
  %v4105 = vpack.c.b16 %v3287, %v3286
  %v4106 = vpack.c.b16 %v3289, %v3288
  %v4107 = vpack.c.b16 %v3291, %v3290
  %v4108 = vpack.c.b16 %v3293, %v3292
  %v4109 = vpack.c.b16 %v3295, %v3294
  %v4110 = vpack.c.b16 %v3297, %v3296
  %v4111 = vpack.c.b16 %v3299, %v3298
  %v4112 = vpack.c.b16 %v3301, %v3300
  %v4113 = vpack.c.b16 %v3303, %v3302
  %v4114 = vpack.c.b16 %v3305, %v3304
  %v4115 = vpack.c.b16 %v3307, %v3306
  %v4116 = vpack.c.b16 %v3309, %v3308
  %v4117 = vpack.c.b16 %v3311, %v3310
  %v4118 = vpack.c.b16 %v3313, %v3312
  %v4119 = vpack.c.b16 %v3315, %v3314
  %v4120 = vpack.c.b16 %v3317, %v3316
  %v4121 = vpack.c.b16 %v3319, %v3318
  %v4122 = vpack.c.b16 %v3321, %v3320
  %v4123 = vpack.c.b16 %v3323, %v3322
  %v4124 = vpack.c.b16 %v3325, %v3324
  %v4125 = vpack.c.b16 %v3327, %v3326
  %v4126 = vpack.c.b16 %v3329, %v3328
  %v4127 = vpack.c.b16 %v3331, %v3330
  %v4128 = vpack.c.b16 %v3333, %v3332
  %v4129 = vpack.c.b16 %v3335, %v3334
  %v4130 = vpack.c.b16 %v3337, %v3336
  %v4131 = vpack.c.b16 %v3339, %v3338
  %v4132 = vpack.c.b16 %v3341, %v3340
  %v4133 = vpack.c.b16 %v3343, %v3342
  %v4134 = vpack.c.b16 %v3345, %v3344
  %v4135 = vpack.c.b16 %v3347, %v3346
  %v4136 = vpack.c.b16 %v3349, %v3348
  %v4137 = vpack.c.b16 %v3351, %v3350
  %v4138 = vpack.c.b16 %v3353, %v3352
  %v4139 = vpack.c.b16 %v3355, %v3354
  %v4140 = vpack.c.b16 %v3357, %v3356
  %v4141 = vpack.c.b16 %v3359, %v3358
  %v4142 = vpack.c.b16 %v3361, %v3360
  %v4143 = vpack.c.b16 %v3363, %v3362
  %v4144 = vpack.c.b16 %v3365, %v3364
  %v4145 = vpack.c.b16 %v3367, %v3366
  %v4146 = vpack.c.b16 %v3369, %v3368
  %v4147 = vpack.c.b16 %v3371, %v3370
  %v4148 = vpack.c.b16 %v3373, %v3372
  %v4149 = vpack.c.b16 %v3375, %v3374
  %v4150 = vpack.c.b16 %v3377, %v3376
  %v4151 = vpack.c.b16 %v3379, %v3378
  %v4152 = vpack.c.b16 %v3381, %v3380
  %v4153 = vpack.c.b16 %v3383, %v3382
  %v4154 = vpack.c.b16 %v3385, %v3384
  %v4155 = vpack.c.b16 %v3387, %v3386
  %v4156 = vpack.c.b16 %v3389, %v3388
  %v4157 = vpack.c.b16 %v3391, %v3390
  %v4158 = vpack.c.b16 %v3393, %v3392
  %v4159 = vpack.c.b16 %v3395, %v3394
  %v4160 = vpack.c.b16 %v3397, %v3396
  %v4161 = vpack.c.b16 %v3399, %v3398
  %v4162 = vpack.c.b16 %v3401, %v3400
  %v4163 = vpack.c.b16 %v3403, %v3402
  %v4164 = vpack.c.b16 %v3405, %v3404
  %v4165 = vpack.c.b16 %v3407, %v3406
  %v4166 = vpack.c.b16 %v3409, %v3408
  %v4167 = vpack.c.b16 %v3411, %v3410
  %v4168 = vpack.c.b16 %v3413, %v3412
  %v4169 = vpack.c.b16 %v3415, %v3414
  %v4170 = vpack.c.b16 %v3417, %v3416
  %v4171 = vpack.c.b16 %v3419, %v3418
  %v4172 = vpack.c.b16 %v3421, %v3420
  %v4173 = vpack.c.b16 %v3423, %v3422
  %v4174 = vpack.c.b16 %v3425, %v3424
  %v4175 = vpack.c.b16 %v3427, %v3426
  %v4176 = vpack.c.b16 %v3429, %v3428
  %v4177 = vpack.c.b16 %v3431, %v3430
  %v4178 = vpack.c.b16 %v3433, %v3432
  %v4179 = vpack.c.b16 %v3435, %v3434
  %v4180 = vpack.c.b16 %v3437, %v3436
  %v4181 = vpack.c.b16 %v3439, %v3438
  %v4182 = vpack.c.b16 %v3441, %v3440
  %v4183 = vpack.c.b16 %v3443, %v3442
  %v4184 = vpack.c.b16 %v3445, %v3444
  %v4185 = vpack.c.b16 %v3447, %v3446
  %v4186 = vpack.c.b16 %v3449, %v3448
  %v4187 = vpack.c.b16 %v3451, %v3450
  %v4188 = vpack.c.b16 %v3453, %v3452
  %v4189 = vpack.c.b16 %v3455, %v3454
  %v4190 = vpack.c.b16 %v3457, %v3456
  %v4191 = vpack.c.b16 %v3459, %v3458
  %v4192 = vpack.c.b16 %v3461, %v3460
  %v4193 = vpack.c.b16 %v3463, %v3462
  %v4194 = vpack.c.b16 %v3465, %v3464
  %v4195 = vpack.c.b16 %v3467, %v3466
  %v4196 = vpack.c.b16 %v3469, %v3468
  %v4197 = vpack.c.b16 %v3471, %v3470
  %v4198 = vpack.c.b16 %v3473, %v3472
  %v4199 = vpack.c.b16 %v3475, %v3474
  %v4200 = vpack.c.b16 %v3477, %v3476
  %v4201 = vpack.c.b16 %v3479, %v3478
  %v4202 = vpack.c.b16 %v3481, %v3480
  %v4203 = vpack.c.b16 %v3483, %v3482
  %v4204 = vpack.c.b16 %v3485, %v3484
  %v4205 = vpack.c.b16 %v3487, %v3486
  %v4206 = vpack.c.b16 %v3489, %v3488
  %v4207 = vpack.c.b16 %v3491, %v3490
  %v4208 = vpack.c.b16 %v3493, %v3492
  %v4209 = vpack.c.b16 %v3495, %v3494
  %v4210 = vpack.c.b16 %v3497, %v3496
  %v4211 = vpack.c.b16 %v3499, %v3498
  %v4212 = vpack.c.b16 %v3501, %v3500
  %v4213 = vpack.c.b16 %v3503, %v3502
  %v4214 = vpack.c.b16 %v3505, %v3504
  %v4215 = vpack.c.b16 %v3507, %v3506
  %v4216 = vpack.c.b16 %v3509, %v3508
  %v4217 = vpack.c.b16 %v3511, %v3510
  %v4218 = vpack.c.b16 %v3513, %v3512
  %v4219 = vpack.c.b16 %v3515, %v3514
  %v4220 = vpack.c.b16 %v3517, %v3516
  %v4221 = vpack.c.b16 %v3519, %v3518
  %v4222 = vpack.c.b16 %v3521, %v3520
  %v4223 = vpack.c.b16 %v3523, %v3522
  %v4224 = vpack.c.b16 %v3525, %v3524
  %v4225 = vpack.c.b16 %v3527, %v3526
  %v4226 = vpack.c.b16 %v3529, %v3528
  %v4227 = vpack.c.b16 %v3531, %v3530
  %v4228 = vpack.c.b16 %v3533, %v3532
  %v4229 = vpack.c.b16 %v3535, %v3534
  %v4230 = vpack.c.b16 %v3537, %v3536
  %v4231 = vpack.c.b16 %v3539, %v3538
  %v4232 = vpack.c.b16 %v3541, %v3540
  %v4233 = vpack.c.b16 %v3543, %v3542
  %v4234 = vpack.c.b16 %v3545, %v3544
  %v4235 = vpack.c.b16 %v3547, %v3546
  %v4236 = vpack.c.b16 %v3549, %v3548
  %v4237 = vpack.c.b16 %v3551, %v3550
  %v4238 = vpack.c.b16 %v3553, %v3552
  %v4239 = vpack.c.b16 %v3555, %v3554
  %v4240 = vpack.c.b16 %v3557, %v3556
  %v4241 = vpack.c.b16 %v3559, %v3558
  %v4242 = vpack.c.b16 %v3561, %v3560
  %v4243 = vpack.c.b16 %v3563, %v3562
  %v4244 = vpack.c.b16 %v3565, %v3564
  %v4245 = vpack.c.b16 %v3567, %v3566
  %v4246 = vpack.c.b16 %v3569, %v3568
  %v4247 = vpack.c.b16 %v3571, %v3570
  %v4248 = vpack.c.b16 %v3573, %v3572
  %v4249 = vpack.c.b16 %v3575, %v3574
  %v4250 = vpack.c.b16 %v3577, %v3576
  %v4251 = vpack.c.b16 %v3579, %v3578
  %v4252 = vpack.c.b16 %v3581, %v3580
  %v4253 = vpack.c.b16 %v3583, %v3582
  %v4254 = vpack.c.b16 %v3585, %v3584
  %v4255 = vpack.c.b16 %v3587, %v3586
  %v4256 = vpack.c.b16 %v3589, %v3588
  %v4257 = vpack.c.b16 %v3591, %v3590
  %v4258 = vpack.c.b16 %v3593, %v3592
  %v4259 = vpack.c.b16 %v3595, %v3594
  %v4260 = vpack.c.b16 %v3597, %v3596
  %v4261 = vpack.c.b16 %v3599, %v3598
  %v4262 = vpack.c.b16 %v3601, %v3600
  %v4263 = vpack.c.b16 %v3603, %v3602
  %v4264 = vpack.c.b16 %v3605, %v3604
  %v4265 = vpack.c.b16 %v3607, %v3606
  %v4266 = vpack.c.b16 %v3609, %v3608
  %v4267 = vpack.c.b16 %v3611, %v3610
  %v4268 = vpack.c.b16 %v3613, %v3612
  %v4269 = vpack.c.b16 %v3615, %v3614
  %v4270 = vpack.c.b16 %v3617, %v3616
  %v4271 = vpack.c.b16 %v3619, %v3618
  %v4272 = vpack.c.b16 %v3621, %v3620
  %v4273 = vpack.c.b16 %v3623, %v3622
  %v4274 = vpack.c.b16 %v3625, %v3624
  %v4275 = vpack.c.b16 %v3627, %v3626
  %v4276 = vpack.c.b16 %v3629, %v3628
  %v4277 = vpack.c.b16 %v3631, %v3630
  %v4278 = vpack.c.b16 %v3633, %v3632
  %v4279 = vpack.c.b16 %v3635, %v3634
  %v4280 = vpack.c.b16 %v3637, %v3636
  %v4281 = vpack.c.b16 %v3639, %v3638
  %v4282 = vpack.c.b16 %v3641, %v3640
  %v4283 = vpack.c.b16 %v3643, %v3642
  %v4284 = vpack.c.b16 %v3645, %v3644
  %v4285 = vpack.c.b16 %v3647, %v3646
  %v4286 = vpack.c.b16 %v3649, %v3648
  %v4287 = vpack.c.b16 %v3651, %v3650
  %v4288 = vpack.c.b16 %v3653, %v3652
  %v4289 = vpack.c.b16 %v3655, %v3654
  %v4290 = vpack.c.b16 %v3657, %v3656
  %v4291 = vpack.c.b16 %v3659, %v3658
  %v4292 = vpack.c.b16 %v3661, %v3660
  %v4293 = vpack.c.b16 %v3663, %v3662
  %v4294 = vpack.c.b16 %v3665, %v3664
  %v4295 = vpack.c.b16 %v3667, %v3666
  %v4296 = vpack.c.b16 %v3669, %v3668
  %v4297 = vpack.c.b16 %v3671, %v3670
  %v4298 = vpack.c.b16 %v3673, %v3672
  %v4299 = vpack.c.b16 %v3675, %v3674
  %v4300 = vpack.c.b16 %v3677, %v3676
  %v4301 = vpack.c.b16 %v3679, %v3678
  %v4302 = vpack.c.b16 %v3681, %v3680
  %v4303 = vpack.c.b16 %v3683, %v3682
  %v4304 = vpack.c.b16 %v3685, %v3684
  %v4305 = vpack.c.b16 %v3687, %v3686
  %v4306 = vpack.c.b16 %v3689, %v3688
  %v4307 = vpack.c.b16 %v3691, %v3690
  %v4308 = vpack.c.b16 %v3693, %v3692
  %v4309 = vpack.c.b16 %v3695, %v3694
  %v4310 = vpack.c.b16 %v3697, %v3696
  %v4311 = vpack.c.b16 %v3699, %v3698
  %v4312 = vpack.c.b16 %v3701, %v3700
  %v4313 = vpack.c.b16 %v3703, %v3702
  %v4314 = vpack.c.b16 %v3705, %v3704
  %v4315 = vpack.c.b16 %v3707, %v3706
  %v4316 = vpack.c.b16 %v3709, %v3708
  %v4317 = vpack.c.b16 %v3711, %v3710
  %v4318 = vpack.c.b16 %v3713, %v3712
  %v4319 = vpack.c.b16 %v3715, %v3714
  %v4320 = vpack.c.b16 %v3717, %v3716
  %v4321 = vpack.c.b16 %v3719, %v3718
  %v4322 = vpack.c.b16 %v3721, %v3720
  %v4323 = vpack.c.b16 %v3723, %v3722
  %v4324 = vpack.c.b16 %v3725, %v3724
  %v4325 = vpack.c.b16 %v3727, %v3726
  %v4326 = vpack.c.b16 %v3729, %v3728
  %v4327 = vpack.c.b16 %v3731, %v3730
  %v4328 = vpack.c.b16 %v3733, %v3732
  %v4329 = vpack.c.b16 %v3735, %v3734
  %v4330 = vpack.c.b16 %v3737, %v3736
  %v4331 = vpack.c.b16 %v3739, %v3738
  %v4332 = vpack.c.b16 %v3741, %v3740
  %v4333 = vpack.c.b16 %v3743, %v3742
  %v4334 = vpack.c.b16 %v3745, %v3744
  %v4335 = vpack.c.b16 %v3747, %v3746
  %v4336 = vpack.c.b16 %v3749, %v3748
  %v4337 = vpack.c.b16 %v3751, %v3750
  %v4338 = vpack.c.b16 %v3753, %v3752
  %v4339 = vpack.c.b16 %v3755, %v3754
  %v4340 = vpack.c.b16 %v3757, %v3756
  %v4341 = vpack.c.b16 %v3759, %v3758
  %v4342 = vpack.c.b16 %v3761, %v3760
  %v4343 = vpack.c.b16 %v3763, %v3762
  %v4344 = vpack.c.b16 %v3765, %v3764
  %v4345 = vpack.c.b16 %v3767, %v3766
  %v4346 = vpack.c.b16 %v3769, %v3768
  %v4347 = vpack.c.b16 %v3771, %v3770
  %4924 = vmatprep.subr.bf16.mxu0 0
  %4925 = vmatpush1.bf16.msra.mxu0 %v3772
  %4926 = vmatprep.subr.bf16.mxu0 0
  %4927 = vmatpush1.bf16.msra.mxu0 %v3773
  %4928 = vmatprep.subr.bf16.mxu0 0
  %4929 = vmatpush1.bf16.msra.mxu0 %v3774
  %4930 = vmatprep.subr.bf16.mxu0 0
  %4931 = vmatpush1.bf16.msra.mxu0 %v3775
  %4932 = vmatprep.subr.bf16.mxu0 0
  %4933 = vmatpush1.bf16.msra.mxu0 %v3776
  %4934 = vmatprep.subr.bf16.mxu0 0
  %4935 = vmatpush1.bf16.msra.mxu0 %v3777
  %4936 = vmatprep.subr.bf16.mxu0 0
  %4937 = vmatpush1.bf16.msra.mxu0 %v3778
  %4938 = vmatprep.subr.bf16.mxu0 0
  %4939 = vmatpush1.bf16.msra.mxu0 %v3779
  %4940 = vmatprep.subr.bf16.mxu0 0
  %4941 = vmatpush1.bf16.msra.mxu0 %v3780
  %4942 = vmatprep.subr.bf16.mxu0 0
  %4943 = vmatpush1.bf16.msra.mxu0 %v3781
  %4944 = vmatprep.subr.bf16.mxu0 0
  %4945 = vmatpush1.bf16.msra.mxu0 %v3782
  %4946 = vmatprep.subr.bf16.mxu0 0
  %4947 = vmatpush1.bf16.msra.mxu0 %v3783
  %4948 = vmatprep.subr.bf16.mxu0 0
  %4949 = vmatpush1.bf16.msra.mxu0 %v3784
  %4950 = vmatprep.subr.bf16.mxu0 0
  %4951 = vmatpush1.bf16.msra.mxu0 %v3785
  %4952 = vmatprep.subr.bf16.mxu0 0
  %4953 = vmatpush1.bf16.msra.mxu0 %v3786
  %4954 = vmatprep.subr.bf16.mxu0 0
  %4955 = vmatpush1.bf16.msra.mxu0 %v3787
  %4956 = vmatprep.mubr.bf16.mxu0 %v1325
  %4957 = vmatmul.mubr.bf16.gmra.mrb[0].mxu0 %v1324
  %v4958 = vpop.f32.mrb[0].mxu0
  %v4959 = vadd.f32 %v1214, %v4958
  %v4960 = vpop.f32.mrb[0].mxu0
  %v4961 = vpop.f32.mrb[0].mxu0
  %v4962 = vpop.f32.mrb[0].mxu0
  %4963 = vdwg.mxu0
  %4964 = vmatprep.subr.bf16.mxu0 0
  %4965 = vmatpush1.bf16.msra.mxu0 %v3788
  %4966 = vmatprep.subr.bf16.mxu0 0
  %4967 = vmatpush1.bf16.msra.mxu0 %v3789
  %4968 = vmatprep.subr.bf16.mxu0 0
  %4969 = vmatpush1.bf16.msra.mxu0 %v3790
  %4970 = vmatprep.subr.bf16.mxu0 0
  %4971 = vmatpush1.bf16.msra.mxu0 %v3791
  %4972 = vmatprep.subr.bf16.mxu0 0
  %4973 = vmatpush1.bf16.msra.mxu0 %v3792
  %4974 = vmatprep.subr.bf16.mxu0 0
  %4975 = vmatpush1.bf16.msra.mxu0 %v3793
  %4976 = vmatprep.subr.bf16.mxu0 0
  %4977 = vmatpush1.bf16.msra.mxu0 %v3794
  %4978 = vmatprep.subr.bf16.mxu0 0
  %4979 = vmatpush1.bf16.msra.mxu0 %v3795
  %4980 = vmatprep.subr.bf16.mxu0 0
  %4981 = vmatpush1.bf16.msra.mxu0 %v3796
  %4982 = vmatprep.subr.bf16.mxu0 0
  %4983 = vmatpush1.bf16.msra.mxu0 %v3797
  %4984 = vmatprep.subr.bf16.mxu0 0
  %4985 = vmatpush1.bf16.msra.mxu0 %v3798
  %4986 = vmatprep.subr.bf16.mxu0 0
  %4987 = vmatpush1.bf16.msra.mxu0 %v3799
  %4988 = vmatprep.subr.bf16.mxu0 0
  %4989 = vmatpush1.bf16.msra.mxu0 %v3800
  %4990 = vmatprep.subr.bf16.mxu0 0
  %4991 = vmatpush1.bf16.msra.mxu0 %v3801
  %4992 = vmatprep.subr.bf16.mxu0 0
  %4993 = vmatpush1.bf16.msra.mxu0 %v3802
  %4994 = vmatprep.subr.bf16.mxu0 0
  %4995 = vmatpush1.bf16.msra.mxu0 %v3803
  %4996 = vmatprep.mubr.bf16.mxu0 %v1327
  %4997 = vmatmul.mubr.bf16.gmra.mrb[0].mxu0 %v1326
  %v4998 = vpop.f32.mrb[0].mxu0
  %v4999 = vadd.f32 %v4959, %v4998
  %v5000 = vpop.f32.mrb[0].mxu0
  %v5001 = vpop.f32.mrb[0].mxu0
  %v5002 = vpop.f32.mrb[0].mxu0
  %5003 = vdwg.mxu0
  %5004 = vmatprep.subr.bf16.mxu0 0
  %5005 = vmatpush1.bf16.msra.mxu0 %v3804
  %5006 = vmatprep.subr.bf16.mxu0 0
  %5007 = vmatpush1.bf16.msra.mxu0 %v3805
  %5008 = vmatprep.subr.bf16.mxu0 0
  %5009 = vmatpush1.bf16.msra.mxu0 %v3806
  %5010 = vmatprep.subr.bf16.mxu0 0
  %5011 = vmatpush1.bf16.msra.mxu0 %v3807
  %5012 = vmatprep.subr.bf16.mxu0 0
  %5013 = vmatpush1.bf16.msra.mxu0 %v3808
  %5014 = vmatprep.subr.bf16.mxu0 0
  %5015 = vmatpush1.bf16.msra.mxu0 %v3809
  %5016 = vmatprep.subr.bf16.mxu0 0
  %5017 = vmatpush1.bf16.msra.mxu0 %v3810
  %5018 = vmatprep.subr.bf16.mxu0 0
  %5019 = vmatpush1.bf16.msra.mxu0 %v3811
  %5020 = vmatprep.subr.bf16.mxu0 0
  %5021 = vmatpush1.bf16.msra.mxu0 %v3812
  %5022 = vmatprep.subr.bf16.mxu0 0
  %5023 = vmatpush1.bf16.msra.mxu0 %v3813
  %5024 = vmatprep.subr.bf16.mxu0 0
  %5025 = vmatpush1.bf16.msra.mxu0 %v3814
  %5026 = vmatprep.subr.bf16.mxu0 0
  %5027 = vmatpush1.bf16.msra.mxu0 %v3815
  %5028 = vmatprep.subr.bf16.mxu0 0
  %5029 = vmatpush1.bf16.msra.mxu0 %v3816
  %5030 = vmatprep.subr.bf16.mxu0 0
  %5031 = vmatpush1.bf16.msra.mxu0 %v3817
  %5032 = vmatprep.subr.bf16.mxu0 0
  %5033 = vmatpush1.bf16.msra.mxu0 %v3818
  %5034 = vmatprep.subr.bf16.mxu0 0
  %5035 = vmatpush1.bf16.msra.mxu0 %v3819
  %5036 = vmatprep.mubr.bf16.mxu0 %v1329
  %5037 = vmatmul.mubr.bf16.gmra.mrb[0].mxu0 %v1328
  %v5038 = vpop.f32.mrb[0].mxu0
  %v5039 = vadd.f32 %v4999, %v5038
  %v5040 = vpop.f32.mrb[0].mxu0
  %v5041 = vpop.f32.mrb[0].mxu0
  %v5042 = vpop.f32.mrb[0].mxu0
  %5043 = vdwg.mxu0
  %5044 = vmatprep.subr.bf16.mxu0 0
  %5045 = vmatpush1.bf16.msra.mxu0 %v3820
  %5046 = vmatprep.subr.bf16.mxu0 0
  %5047 = vmatpush1.bf16.msra.mxu0 %v3821
  %5048 = vmatprep.subr.bf16.mxu0 0
  %5049 = vmatpush1.bf16.msra.mxu0 %v3822
  %5050 = vmatprep.subr.bf16.mxu0 0
  %5051 = vmatpush1.bf16.msra.mxu0 %v3823
  %5052 = vmatprep.subr.bf16.mxu0 0
  %5053 = vmatpush1.bf16.msra.mxu0 %v3824
  %5054 = vmatprep.subr.bf16.mxu0 0
  %5055 = vmatpush1.bf16.msra.mxu0 %v3825
  %5056 = vmatprep.subr.bf16.mxu0 0
  %5057 = vmatpush1.bf16.msra.mxu0 %v3826
  %5058 = vmatprep.subr.bf16.mxu0 0
  %5059 = vmatpush1.bf16.msra.mxu0 %v3827
  %5060 = vmatprep.subr.bf16.mxu0 0
  %5061 = vmatpush1.bf16.msra.mxu0 %v3828
  %5062 = vmatprep.subr.bf16.mxu0 0
  %5063 = vmatpush1.bf16.msra.mxu0 %v3829
  %5064 = vmatprep.subr.bf16.mxu0 0
  %5065 = vmatpush1.bf16.msra.mxu0 %v3830
  %5066 = vmatprep.subr.bf16.mxu0 0
  %5067 = vmatpush1.bf16.msra.mxu0 %v3831
  %5068 = vmatprep.subr.bf16.mxu0 0
  %5069 = vmatpush1.bf16.msra.mxu0 %v3832
  %5070 = vmatprep.subr.bf16.mxu0 0
  %5071 = vmatpush1.bf16.msra.mxu0 %v3833
  %5072 = vmatprep.subr.bf16.mxu0 0
  %5073 = vmatpush1.bf16.msra.mxu0 %v3834
  %5074 = vmatprep.subr.bf16.mxu0 0
  %5075 = vmatpush1.bf16.msra.mxu0 %v3835
  %5076 = vmatprep.mubr.bf16.mxu0 %v1331
  %5077 = vmatmul.mubr.bf16.gmra.mrb[0].mxu0 %v1330
  %v5078 = vpop.f32.mrb[0].mxu0
  %v5079 = vadd.f32 %v5039, %v5078
  %v5080 = vpop.f32.mrb[0].mxu0
  %v5081 = vpop.f32.mrb[0].mxu0
  %v5082 = vpop.f32.mrb[0].mxu0
  %5083 = vdwg.mxu0
  %5084 = vmatprep.subr.bf16.mxu0 0
  %5085 = vmatpush1.bf16.msra.mxu0 %v3836
  %5086 = vmatprep.subr.bf16.mxu0 0
  %5087 = vmatpush1.bf16.msra.mxu0 %v3837
  %5088 = vmatprep.subr.bf16.mxu0 0
  %5089 = vmatpush1.bf16.msra.mxu0 %v3838
  %5090 = vmatprep.subr.bf16.mxu0 0
  %5091 = vmatpush1.bf16.msra.mxu0 %v3839
  %5092 = vmatprep.subr.bf16.mxu0 0
  %5093 = vmatpush1.bf16.msra.mxu0 %v3840
  %5094 = vmatprep.subr.bf16.mxu0 0
  %5095 = vmatpush1.bf16.msra.mxu0 %v3841
  %5096 = vmatprep.subr.bf16.mxu0 0
  %5097 = vmatpush1.bf16.msra.mxu0 %v3842
  %5098 = vmatprep.subr.bf16.mxu0 0
  %5099 = vmatpush1.bf16.msra.mxu0 %v3843
  %5100 = vmatprep.subr.bf16.mxu0 0
  %5101 = vmatpush1.bf16.msra.mxu0 %v3844
  %5102 = vmatprep.subr.bf16.mxu0 0
  %5103 = vmatpush1.bf16.msra.mxu0 %v3845
  %5104 = vmatprep.subr.bf16.mxu0 0
  %5105 = vmatpush1.bf16.msra.mxu0 %v3846
  %5106 = vmatprep.subr.bf16.mxu0 0
  %5107 = vmatpush1.bf16.msra.mxu0 %v3847
  %5108 = vmatprep.subr.bf16.mxu0 0
  %5109 = vmatpush1.bf16.msra.mxu0 %v3848
  %5110 = vmatprep.subr.bf16.mxu0 0
  %5111 = vmatpush1.bf16.msra.mxu0 %v3849
  %5112 = vmatprep.subr.bf16.mxu0 0
  %5113 = vmatpush1.bf16.msra.mxu0 %v3850
  %5114 = vmatprep.subr.bf16.mxu0 0
  %5115 = vmatpush1.bf16.msra.mxu0 %v3851
  %5116 = vmatprep.mubr.bf16.mxu0 %v1333
  %5117 = vmatmul.mubr.bf16.gmra.mrb[0].mxu0 %v1332
  %v5118 = vpop.f32.mrb[0].mxu0
  %v5119 = vadd.f32 %v5079, %v5118
  %v5120 = vpop.f32.mrb[0].mxu0
  %v5121 = vpop.f32.mrb[0].mxu0
  %v5122 = vpop.f32.mrb[0].mxu0
  %5123 = vdwg.mxu0
  %5124 = vmatprep.subr.bf16.mxu0 0
  %5125 = vmatpush1.bf16.msra.mxu0 %v3852
  %5126 = vmatprep.subr.bf16.mxu0 0
  %5127 = vmatpush1.bf16.msra.mxu0 %v3853
  %5128 = vmatprep.subr.bf16.mxu0 0
  %5129 = vmatpush1.bf16.msra.mxu0 %v3854
  %5130 = vmatprep.subr.bf16.mxu0 0
  %5131 = vmatpush1.bf16.msra.mxu0 %v3855
  %5132 = vmatprep.subr.bf16.mxu0 0
  %5133 = vmatpush1.bf16.msra.mxu0 %v3856
  %5134 = vmatprep.subr.bf16.mxu0 0
  %5135 = vmatpush1.bf16.msra.mxu0 %v3857
  %5136 = vmatprep.subr.bf16.mxu0 0
  %5137 = vmatpush1.bf16.msra.mxu0 %v3858
  %5138 = vmatprep.subr.bf16.mxu0 0
  %5139 = vmatpush1.bf16.msra.mxu0 %v3859
  %5140 = vmatprep.subr.bf16.mxu0 0
  %5141 = vmatpush1.bf16.msra.mxu0 %v3860
  %5142 = vmatprep.subr.bf16.mxu0 0
  %5143 = vmatpush1.bf16.msra.mxu0 %v3861
  %5144 = vmatprep.subr.bf16.mxu0 0
  %5145 = vmatpush1.bf16.msra.mxu0 %v3862
  %5146 = vmatprep.subr.bf16.mxu0 0
  %5147 = vmatpush1.bf16.msra.mxu0 %v3863
  %5148 = vmatprep.subr.bf16.mxu0 0
  %5149 = vmatpush1.bf16.msra.mxu0 %v3864
  %5150 = vmatprep.subr.bf16.mxu0 0
  %5151 = vmatpush1.bf16.msra.mxu0 %v3865
  %5152 = vmatprep.subr.bf16.mxu0 0
  %5153 = vmatpush1.bf16.msra.mxu0 %v3866
  %5154 = vmatprep.subr.bf16.mxu0 0
  %5155 = vmatpush1.bf16.msra.mxu0 %v3867
  %5156 = vmatprep.mubr.bf16.mxu0 %v1335
  %5157 = vmatmul.mubr.bf16.gmra.mrb[0].mxu0 %v1334
  %v5158 = vpop.f32.mrb[0].mxu0
  %v5159 = vadd.f32 %v5119, %v5158
  %v5160 = vpop.f32.mrb[0].mxu0
  %v5161 = vpop.f32.mrb[0].mxu0
  %v5162 = vpop.f32.mrb[0].mxu0
  %5163 = vdwg.mxu0
  %5164 = vmatprep.subr.bf16.mxu0 0
  %5165 = vmatpush1.bf16.msra.mxu0 %v3868
  %5166 = vmatprep.subr.bf16.mxu0 0
  %5167 = vmatpush1.bf16.msra.mxu0 %v3869
  %5168 = vmatprep.subr.bf16.mxu0 0
  %5169 = vmatpush1.bf16.msra.mxu0 %v3870
  %5170 = vmatprep.subr.bf16.mxu0 0
  %5171 = vmatpush1.bf16.msra.mxu0 %v3871
  %5172 = vmatprep.subr.bf16.mxu0 0
  %5173 = vmatpush1.bf16.msra.mxu0 %v3872
  %5174 = vmatprep.subr.bf16.mxu0 0
  %5175 = vmatpush1.bf16.msra.mxu0 %v3873
  %5176 = vmatprep.subr.bf16.mxu0 0
  %5177 = vmatpush1.bf16.msra.mxu0 %v3874
  %5178 = vmatprep.subr.bf16.mxu0 0
  %5179 = vmatpush1.bf16.msra.mxu0 %v3875
  %5180 = vmatprep.subr.bf16.mxu0 0
  %5181 = vmatpush1.bf16.msra.mxu0 %v3876
  %5182 = vmatprep.subr.bf16.mxu0 0
  %5183 = vmatpush1.bf16.msra.mxu0 %v3877
  %5184 = vmatprep.subr.bf16.mxu0 0
  %5185 = vmatpush1.bf16.msra.mxu0 %v3878
  %5186 = vmatprep.subr.bf16.mxu0 0
  %5187 = vmatpush1.bf16.msra.mxu0 %v3879
  %5188 = vmatprep.subr.bf16.mxu0 0
  %5189 = vmatpush1.bf16.msra.mxu0 %v3880
  %5190 = vmatprep.subr.bf16.mxu0 0
  %5191 = vmatpush1.bf16.msra.mxu0 %v3881
  %5192 = vmatprep.subr.bf16.mxu0 0
  %5193 = vmatpush1.bf16.msra.mxu0 %v3882
  %5194 = vmatprep.subr.bf16.mxu0 0
  %5195 = vmatpush1.bf16.msra.mxu0 %v3883
  %5196 = vmatprep.mubr.bf16.mxu0 %v1337
  %5197 = vmatmul.mubr.bf16.gmra.mrb[0].mxu0 %v1336
  %v5198 = vpop.f32.mrb[0].mxu0
  %v5199 = vadd.f32 %v5159, %v5198
  %v5200 = vpop.f32.mrb[0].mxu0
  %v5201 = vpop.f32.mrb[0].mxu0
  %v5202 = vpop.f32.mrb[0].mxu0
  %5203 = vdwg.mxu0
  %5204 = vmatprep.subr.bf16.mxu0 0
  %5205 = vmatpush1.bf16.msra.mxu0 %v3884
  %5206 = vmatprep.subr.bf16.mxu0 0
  %5207 = vmatpush1.bf16.msra.mxu0 %v3885
  %5208 = vmatprep.subr.bf16.mxu0 0
  %5209 = vmatpush1.bf16.msra.mxu0 %v3886
  %5210 = vmatprep.subr.bf16.mxu0 0
  %5211 = vmatpush1.bf16.msra.mxu0 %v3887
  %5212 = vmatprep.subr.bf16.mxu0 0
  %5213 = vmatpush1.bf16.msra.mxu0 %v3888
  %5214 = vmatprep.subr.bf16.mxu0 0
  %5215 = vmatpush1.bf16.msra.mxu0 %v3889
  %5216 = vmatprep.subr.bf16.mxu0 0
  %5217 = vmatpush1.bf16.msra.mxu0 %v3890
  %5218 = vmatprep.subr.bf16.mxu0 0
  %5219 = vmatpush1.bf16.msra.mxu0 %v3891
  %5220 = vmatprep.subr.bf16.mxu0 0
  %5221 = vmatpush1.bf16.msra.mxu0 %v3892
  %5222 = vmatprep.subr.bf16.mxu0 0
  %5223 = vmatpush1.bf16.msra.mxu0 %v3893
  %5224 = vmatprep.subr.bf16.mxu0 0
  %5225 = vmatpush1.bf16.msra.mxu0 %v3894
  %5226 = vmatprep.subr.bf16.mxu0 0
  %5227 = vmatpush1.bf16.msra.mxu0 %v3895
  %5228 = vmatprep.subr.bf16.mxu0 0
  %5229 = vmatpush1.bf16.msra.mxu0 %v3896
  %5230 = vmatprep.subr.bf16.mxu0 0
  %5231 = vmatpush1.bf16.msra.mxu0 %v3897
  %5232 = vmatprep.subr.bf16.mxu0 0
  %5233 = vmatpush1.bf16.msra.mxu0 %v3898
  %5234 = vmatprep.subr.bf16.mxu0 0
  %5235 = vmatpush1.bf16.msra.mxu0 %v3899
  %5236 = vmatprep.mubr.bf16.mxu0 %v1339
  %5237 = vmatmul.mubr.bf16.gmra.mrb[0].mxu0 %v1338
  %v5238 = vpop.f32.mrb[0].mxu0
  %v5239 = vadd.f32 %v5199, %v5238
  %v5240 = vpop.f32.mrb[0].mxu0
  %v5241 = vpop.f32.mrb[0].mxu0
  %v5242 = vpop.f32.mrb[0].mxu0
  %5243 = vdwg.mxu0
  %5244 = vmatprep.subr.bf16.mxu0 0
  %5245 = vmatpush1.bf16.msra.mxu0 %v3900
  %5246 = vmatprep.subr.bf16.mxu0 0
  %5247 = vmatpush1.bf16.msra.mxu0 %v3901
  %5248 = vmatprep.subr.bf16.mxu0 0
  %5249 = vmatpush1.bf16.msra.mxu0 %v3902
  %5250 = vmatprep.subr.bf16.mxu0 0
  %5251 = vmatpush1.bf16.msra.mxu0 %v3903
  %5252 = vmatprep.subr.bf16.mxu0 0
  %5253 = vmatpush1.bf16.msra.mxu0 %v3904
  %5254 = vmatprep.subr.bf16.mxu0 0
  %5255 = vmatpush1.bf16.msra.mxu0 %v3905
  %5256 = vmatprep.subr.bf16.mxu0 0
  %5257 = vmatpush1.bf16.msra.mxu0 %v3906
  %5258 = vmatprep.subr.bf16.mxu0 0
  %5259 = vmatpush1.bf16.msra.mxu0 %v3907
  %5260 = vmatprep.subr.bf16.mxu0 0
  %5261 = vmatpush1.bf16.msra.mxu0 %v3908
  %5262 = vmatprep.subr.bf16.mxu0 0
  %5263 = vmatpush1.bf16.msra.mxu0 %v3909
  %5264 = vmatprep.subr.bf16.mxu0 0
  %5265 = vmatpush1.bf16.msra.mxu0 %v3910
  %5266 = vmatprep.subr.bf16.mxu0 0
  %5267 = vmatpush1.bf16.msra.mxu0 %v3911
  %5268 = vmatprep.subr.bf16.mxu0 0
  %5269 = vmatpush1.bf16.msra.mxu0 %v3912
  %5270 = vmatprep.subr.bf16.mxu0 0
  %5271 = vmatpush1.bf16.msra.mxu0 %v3913
  %5272 = vmatprep.subr.bf16.mxu0 0
  %5273 = vmatpush1.bf16.msra.mxu0 %v3914
  %5274 = vmatprep.subr.bf16.mxu0 0
  %5275 = vmatpush1.bf16.msra.mxu0 %v3915
  %5276 = vmatprep.mubr.bf16.mxu0 %v1341
  %5277 = vmatmul.mubr.bf16.gmra.mrb[0].mxu0 %v1340
  %v5278 = vpop.f32.mrb[0].mxu0
  %v5279 = vadd.f32 %v5239, %v5278
  %v5280 = vpop.f32.mrb[0].mxu0
  %v5281 = vpop.f32.mrb[0].mxu0
  %v5282 = vpop.f32.mrb[0].mxu0
  %5283 = vdwg.mxu0
  %5284 = vmatprep.subr.bf16.mxu0 0
  %5285 = vmatpush1.bf16.msra.mxu0 %v3916
  %5286 = vmatprep.subr.bf16.mxu0 0
  %5287 = vmatpush1.bf16.msra.mxu0 %v3917
  %5288 = vmatprep.subr.bf16.mxu0 0
  %5289 = vmatpush1.bf16.msra.mxu0 %v3918
  %5290 = vmatprep.subr.bf16.mxu0 0
  %5291 = vmatpush1.bf16.msra.mxu0 %v3919
  %5292 = vmatprep.subr.bf16.mxu0 0
  %5293 = vmatpush1.bf16.msra.mxu0 %v3920
  %5294 = vmatprep.subr.bf16.mxu0 0
  %5295 = vmatpush1.bf16.msra.mxu0 %v3921
  %5296 = vmatprep.subr.bf16.mxu0 0
  %5297 = vmatpush1.bf16.msra.mxu0 %v3922
  %5298 = vmatprep.subr.bf16.mxu0 0
  %5299 = vmatpush1.bf16.msra.mxu0 %v3923
  %5300 = vmatprep.subr.bf16.mxu0 0
  %5301 = vmatpush1.bf16.msra.mxu0 %v3924
  %5302 = vmatprep.subr.bf16.mxu0 0
  %5303 = vmatpush1.bf16.msra.mxu0 %v3925
  %5304 = vmatprep.subr.bf16.mxu0 0
  %5305 = vmatpush1.bf16.msra.mxu0 %v3926
  %5306 = vmatprep.subr.bf16.mxu0 0
  %5307 = vmatpush1.bf16.msra.mxu0 %v3927
  %5308 = vmatprep.subr.bf16.mxu0 0
  %5309 = vmatpush1.bf16.msra.mxu0 %v3928
  %5310 = vmatprep.subr.bf16.mxu0 0
  %5311 = vmatpush1.bf16.msra.mxu0 %v3929
  %5312 = vmatprep.subr.bf16.mxu0 0
  %5313 = vmatpush1.bf16.msra.mxu0 %v3930
  %5314 = vmatprep.subr.bf16.mxu0 0
  %5315 = vmatpush1.bf16.msra.mxu0 %v3931
  %5316 = vmatprep.mubr.bf16.mxu0 %v1343
  %5317 = vmatmul.mubr.bf16.gmra.mrb[0].mxu0 %v1342
  %v5318 = vpop.f32.mrb[0].mxu0
  %v5319 = vadd.f32 %v5279, %v5318
  %v5320 = vpop.f32.mrb[0].mxu0
  %v5321 = vpop.f32.mrb[0].mxu0
  %v5322 = vpop.f32.mrb[0].mxu0
  %5323 = vdwg.mxu0
  %5324 = vmatprep.subr.bf16.mxu0 0
  %5325 = vmatpush1.bf16.msra.mxu0 %v3932
  %5326 = vmatprep.subr.bf16.mxu0 0
  %5327 = vmatpush1.bf16.msra.mxu0 %v3933
  %5328 = vmatprep.subr.bf16.mxu0 0
  %5329 = vmatpush1.bf16.msra.mxu0 %v3934
  %5330 = vmatprep.subr.bf16.mxu0 0
  %5331 = vmatpush1.bf16.msra.mxu0 %v3935
  %5332 = vmatprep.subr.bf16.mxu0 0
  %5333 = vmatpush1.bf16.msra.mxu0 %v3936
  %5334 = vmatprep.subr.bf16.mxu0 0
  %5335 = vmatpush1.bf16.msra.mxu0 %v3937
  %5336 = vmatprep.subr.bf16.mxu0 0
  %5337 = vmatpush1.bf16.msra.mxu0 %v3938
  %5338 = vmatprep.subr.bf16.mxu0 0
  %5339 = vmatpush1.bf16.msra.mxu0 %v3939
  %5340 = vmatprep.subr.bf16.mxu0 0
  %5341 = vmatpush1.bf16.msra.mxu0 %v3940
  %5342 = vmatprep.subr.bf16.mxu0 0
  %5343 = vmatpush1.bf16.msra.mxu0 %v3941
  %5344 = vmatprep.subr.bf16.mxu0 0
  %5345 = vmatpush1.bf16.msra.mxu0 %v3942
  %5346 = vmatprep.subr.bf16.mxu0 0
  %5347 = vmatpush1.bf16.msra.mxu0 %v3943
  %5348 = vmatprep.subr.bf16.mxu0 0
  %5349 = vmatpush1.bf16.msra.mxu0 %v3944
  %5350 = vmatprep.subr.bf16.mxu0 0
  %5351 = vmatpush1.bf16.msra.mxu0 %v3945
  %5352 = vmatprep.subr.bf16.mxu0 0
  %5353 = vmatpush1.bf16.msra.mxu0 %v3946
  %5354 = vmatprep.subr.bf16.mxu0 0
  %5355 = vmatpush1.bf16.msra.mxu0 %v3947
  %5356 = vmatprep.mubr.bf16.mxu0 %v1345
  %5357 = vmatmul.mubr.bf16.gmra.mrb[0].mxu0 %v1344
  %v5358 = vpop.f32.mrb[0].mxu0
  %v5359 = vadd.f32 %v5319, %v5358
  %v5360 = vpop.f32.mrb[0].mxu0
  %v5361 = vpop.f32.mrb[0].mxu0
  %v5362 = vpop.f32.mrb[0].mxu0
  %5363 = vdwg.mxu0
  %5364 = vmatprep.subr.bf16.mxu0 0
  %5365 = vmatpush1.bf16.msra.mxu0 %v3948
  %5366 = vmatprep.subr.bf16.mxu0 0
  %5367 = vmatpush1.bf16.msra.mxu0 %v3949
  %5368 = vmatprep.subr.bf16.mxu0 0
  %5369 = vmatpush1.bf16.msra.mxu0 %v3950
  %5370 = vmatprep.subr.bf16.mxu0 0
  %5371 = vmatpush1.bf16.msra.mxu0 %v3951
  %5372 = vmatprep.subr.bf16.mxu0 0
  %5373 = vmatpush1.bf16.msra.mxu0 %v3952
  %5374 = vmatprep.subr.bf16.mxu0 0
  %5375 = vmatpush1.bf16.msra.mxu0 %v3953
  %5376 = vmatprep.subr.bf16.mxu0 0
  %5377 = vmatpush1.bf16.msra.mxu0 %v3954
  %5378 = vmatprep.subr.bf16.mxu0 0
  %5379 = vmatpush1.bf16.msra.mxu0 %v3955
  %5380 = vmatprep.subr.bf16.mxu0 0
  %5381 = vmatpush1.bf16.msra.mxu0 %v3956
  %5382 = vmatprep.subr.bf16.mxu0 0
  %5383 = vmatpush1.bf16.msra.mxu0 %v3957
  %5384 = vmatprep.subr.bf16.mxu0 0
  %5385 = vmatpush1.bf16.msra.mxu0 %v3958
  %5386 = vmatprep.subr.bf16.mxu0 0
  %5387 = vmatpush1.bf16.msra.mxu0 %v3959
  %5388 = vmatprep.subr.bf16.mxu0 0
  %5389 = vmatpush1.bf16.msra.mxu0 %v3960
  %5390 = vmatprep.subr.bf16.mxu0 0
  %5391 = vmatpush1.bf16.msra.mxu0 %v3961
  %5392 = vmatprep.subr.bf16.mxu0 0
  %5393 = vmatpush1.bf16.msra.mxu0 %v3962
  %5394 = vmatprep.subr.bf16.mxu0 0
  %5395 = vmatpush1.bf16.msra.mxu0 %v3963
  %5396 = vmatprep.mubr.bf16.mxu0 %v1347
  %5397 = vmatmul.mubr.bf16.gmra.mrb[0].mxu0 %v1346
  %v5398 = vpop.f32.mrb[0].mxu0
  %v5399 = vadd.f32 %v5359, %v5398
  %v5400 = vpop.f32.mrb[0].mxu0
  %v5401 = vpop.f32.mrb[0].mxu0
  %v5402 = vpop.f32.mrb[0].mxu0
  %5403 = vdwg.mxu0
  %5404 = vmatprep.subr.bf16.mxu0 0
  %5405 = vmatpush1.bf16.msra.mxu0 %v3964
  %5406 = vmatprep.subr.bf16.mxu0 0
  %5407 = vmatpush1.bf16.msra.mxu0 %v3965
  %5408 = vmatprep.subr.bf16.mxu0 0
  %5409 = vmatpush1.bf16.msra.mxu0 %v3966
  %5410 = vmatprep.subr.bf16.mxu0 0
  %5411 = vmatpush1.bf16.msra.mxu0 %v3967
  %5412 = vmatprep.subr.bf16.mxu0 0
  %5413 = vmatpush1.bf16.msra.mxu0 %v3968
  %5414 = vmatprep.subr.bf16.mxu0 0
  %5415 = vmatpush1.bf16.msra.mxu0 %v3969
  %5416 = vmatprep.subr.bf16.mxu0 0
  %5417 = vmatpush1.bf16.msra.mxu0 %v3970
  %5418 = vmatprep.subr.bf16.mxu0 0
  %5419 = vmatpush1.bf16.msra.mxu0 %v3971
  %5420 = vmatprep.subr.bf16.mxu0 0
  %5421 = vmatpush1.bf16.msra.mxu0 %v3972
  %5422 = vmatprep.subr.bf16.mxu0 0
  %5423 = vmatpush1.bf16.msra.mxu0 %v3973
  %5424 = vmatprep.subr.bf16.mxu0 0
  %5425 = vmatpush1.bf16.msra.mxu0 %v3974
  %5426 = vmatprep.subr.bf16.mxu0 0
  %5427 = vmatpush1.bf16.msra.mxu0 %v3975
  %5428 = vmatprep.subr.bf16.mxu0 0
  %5429 = vmatpush1.bf16.msra.mxu0 %v3976
  %5430 = vmatprep.subr.bf16.mxu0 0
  %5431 = vmatpush1.bf16.msra.mxu0 %v3977
  %5432 = vmatprep.subr.bf16.mxu0 0
  %5433 = vmatpush1.bf16.msra.mxu0 %v3978
  %5434 = vmatprep.subr.bf16.mxu0 0
  %5435 = vmatpush1.bf16.msra.mxu0 %v3979
  %5436 = vmatprep.mubr.bf16.mxu0 %v1349
  %5437 = vmatmul.mubr.bf16.gmra.mrb[0].mxu0 %v1348
  %v5438 = vpop.f32.mrb[0].mxu0
  %v5439 = vadd.f32 %v5399, %v5438
  %v5440 = vpop.f32.mrb[0].mxu0
  %v5441 = vpop.f32.mrb[0].mxu0
  %v5442 = vpop.f32.mrb[0].mxu0
  %5443 = vdwg.mxu0
  %5444 = vmatprep.subr.bf16.mxu0 0
  %5445 = vmatpush1.bf16.msra.mxu0 %v3980
  %5446 = vmatprep.subr.bf16.mxu0 0
  %5447 = vmatpush1.bf16.msra.mxu0 %v3981
  %5448 = vmatprep.subr.bf16.mxu0 0
  %5449 = vmatpush1.bf16.msra.mxu0 %v3982
  %5450 = vmatprep.subr.bf16.mxu0 0
  %5451 = vmatpush1.bf16.msra.mxu0 %v3983
  %5452 = vmatprep.subr.bf16.mxu0 0
  %5453 = vmatpush1.bf16.msra.mxu0 %v3984
  %5454 = vmatprep.subr.bf16.mxu0 0
  %5455 = vmatpush1.bf16.msra.mxu0 %v3985
  %5456 = vmatprep.subr.bf16.mxu0 0
  %5457 = vmatpush1.bf16.msra.mxu0 %v3986
  %5458 = vmatprep.subr.bf16.mxu0 0
  %5459 = vmatpush1.bf16.msra.mxu0 %v3987
  %5460 = vmatprep.subr.bf16.mxu0 0
  %5461 = vmatpush1.bf16.msra.mxu0 %v3988
  %5462 = vmatprep.subr.bf16.mxu0 0
  %5463 = vmatpush1.bf16.msra.mxu0 %v3989
  %5464 = vmatprep.subr.bf16.mxu0 0
  %5465 = vmatpush1.bf16.msra.mxu0 %v3990
  %5466 = vmatprep.subr.bf16.mxu0 0
  %5467 = vmatpush1.bf16.msra.mxu0 %v3991
  %5468 = vmatprep.subr.bf16.mxu0 0
  %5469 = vmatpush1.bf16.msra.mxu0 %v3992
  %5470 = vmatprep.subr.bf16.mxu0 0
  %5471 = vmatpush1.bf16.msra.mxu0 %v3993
  %5472 = vmatprep.subr.bf16.mxu0 0
  %5473 = vmatpush1.bf16.msra.mxu0 %v3994
  %5474 = vmatprep.subr.bf16.mxu0 0
  %5475 = vmatpush1.bf16.msra.mxu0 %v3995
  %5476 = vmatprep.mubr.bf16.mxu0 %v1351
  %5477 = vmatmul.mubr.bf16.gmra.mrb[0].mxu0 %v1350
  %v5478 = vpop.f32.mrb[0].mxu0
  %v5479 = vadd.f32 %v5439, %v5478
  %v5480 = vpop.f32.mrb[0].mxu0
  %v5481 = vpop.f32.mrb[0].mxu0
  %v5482 = vpop.f32.mrb[0].mxu0
  %5483 = vdwg.mxu0
  %5484 = vmatprep.subr.bf16.mxu0 0
  %5485 = vmatpush1.bf16.msra.mxu0 %v3996
  %5486 = vmatprep.subr.bf16.mxu0 0
  %5487 = vmatpush1.bf16.msra.mxu0 %v3997
  %5488 = vmatprep.subr.bf16.mxu0 0
  %5489 = vmatpush1.bf16.msra.mxu0 %v3998
  %5490 = vmatprep.subr.bf16.mxu0 0
  %5491 = vmatpush1.bf16.msra.mxu0 %v3999
  %5492 = vmatprep.subr.bf16.mxu0 0
  %5493 = vmatpush1.bf16.msra.mxu0 %v4000
  %5494 = vmatprep.subr.bf16.mxu0 0
  %5495 = vmatpush1.bf16.msra.mxu0 %v4001
  %5496 = vmatprep.subr.bf16.mxu0 0
  %5497 = vmatpush1.bf16.msra.mxu0 %v4002
  %5498 = vmatprep.subr.bf16.mxu0 0
  %5499 = vmatpush1.bf16.msra.mxu0 %v4003
  %5500 = vmatprep.subr.bf16.mxu0 0
  %5501 = vmatpush1.bf16.msra.mxu0 %v4004
  %5502 = vmatprep.subr.bf16.mxu0 0
  %5503 = vmatpush1.bf16.msra.mxu0 %v4005
  %5504 = vmatprep.subr.bf16.mxu0 0
  %5505 = vmatpush1.bf16.msra.mxu0 %v4006
  %5506 = vmatprep.subr.bf16.mxu0 0
  %5507 = vmatpush1.bf16.msra.mxu0 %v4007
  %5508 = vmatprep.subr.bf16.mxu0 0
  %5509 = vmatpush1.bf16.msra.mxu0 %v4008
  %5510 = vmatprep.subr.bf16.mxu0 0
  %5511 = vmatpush1.bf16.msra.mxu0 %v4009
  %5512 = vmatprep.subr.bf16.mxu0 0
  %5513 = vmatpush1.bf16.msra.mxu0 %v4010
  %5514 = vmatprep.subr.bf16.mxu0 0
  %5515 = vmatpush1.bf16.msra.mxu0 %v4011
  %5516 = vmatprep.mubr.bf16.mxu0 %v1353
  %5517 = vmatmul.mubr.bf16.gmra.mrb[0].mxu0 %v1352
  %v5518 = vpop.f32.mrb[0].mxu0
  %v5519 = vadd.f32 %v5479, %v5518
  %v5520 = vpop.f32.mrb[0].mxu0
  %v5521 = vpop.f32.mrb[0].mxu0
  %v5522 = vpop.f32.mrb[0].mxu0
  %5523 = vdwg.mxu0
  %5524 = vmatprep.subr.bf16.mxu0 0
  %5525 = vmatpush1.bf16.msra.mxu0 %v4012
  %5526 = vmatprep.subr.bf16.mxu0 0
  %5527 = vmatpush1.bf16.msra.mxu0 %v4013
  %5528 = vmatprep.subr.bf16.mxu0 0
  %5529 = vmatpush1.bf16.msra.mxu0 %v4014
  %5530 = vmatprep.subr.bf16.mxu0 0
  %5531 = vmatpush1.bf16.msra.mxu0 %v4015
  %5532 = vmatprep.subr.bf16.mxu0 0
  %5533 = vmatpush1.bf16.msra.mxu0 %v4016
  %5534 = vmatprep.subr.bf16.mxu0 0
  %5535 = vmatpush1.bf16.msra.mxu0 %v4017
  %5536 = vmatprep.subr.bf16.mxu0 0
  %5537 = vmatpush1.bf16.msra.mxu0 %v4018
  %5538 = vmatprep.subr.bf16.mxu0 0
  %5539 = vmatpush1.bf16.msra.mxu0 %v4019
  %5540 = vmatprep.subr.bf16.mxu0 0
  %5541 = vmatpush1.bf16.msra.mxu0 %v4020
  %5542 = vmatprep.subr.bf16.mxu0 0
  %5543 = vmatpush1.bf16.msra.mxu0 %v4021
  %5544 = vmatprep.subr.bf16.mxu0 0
  %5545 = vmatpush1.bf16.msra.mxu0 %v4022
  %5546 = vmatprep.subr.bf16.mxu0 0
  %5547 = vmatpush1.bf16.msra.mxu0 %v4023
  %5548 = vmatprep.subr.bf16.mxu0 0
  %5549 = vmatpush1.bf16.msra.mxu0 %v4024
  %5550 = vmatprep.subr.bf16.mxu0 0
  %5551 = vmatpush1.bf16.msra.mxu0 %v4025
  %5552 = vmatprep.subr.bf16.mxu0 0
  %5553 = vmatpush1.bf16.msra.mxu0 %v4026
  %5554 = vmatprep.subr.bf16.mxu0 0
  %5555 = vmatpush1.bf16.msra.mxu0 %v4027
  %5556 = vmatprep.mubr.bf16.mxu0 %v1355
  %5557 = vmatmul.mubr.bf16.gmra.mrb[0].mxu0 %v1354
  %v5558 = vpop.f32.mrb[0].mxu0
  %v5559 = vadd.f32 %v5519, %v5558
  %v5560 = vpop.f32.mrb[0].mxu0
  %v5561 = vpop.f32.mrb[0].mxu0
  %v5562 = vpop.f32.mrb[0].mxu0
  %5563 = vdwg.mxu0
  %5564 = vmatprep.subr.bf16.mxu0 0
  %5565 = vmatpush1.bf16.msra.mxu0 %v4028
  %5566 = vmatprep.subr.bf16.mxu0 0
  %5567 = vmatpush1.bf16.msra.mxu0 %v4029
  %5568 = vmatprep.subr.bf16.mxu0 0
  %5569 = vmatpush1.bf16.msra.mxu0 %v4030
  %5570 = vmatprep.subr.bf16.mxu0 0
  %5571 = vmatpush1.bf16.msra.mxu0 %v4031
  %5572 = vmatprep.subr.bf16.mxu0 0
  %5573 = vmatpush1.bf16.msra.mxu0 %v4032
  %5574 = vmatprep.subr.bf16.mxu0 0
  %5575 = vmatpush1.bf16.msra.mxu0 %v4033
  %5576 = vmatprep.subr.bf16.mxu0 0
  %5577 = vmatpush1.bf16.msra.mxu0 %v4034
  %5578 = vmatprep.subr.bf16.mxu0 0
  %5579 = vmatpush1.bf16.msra.mxu0 %v4035
  %5580 = vmatprep.subr.bf16.mxu0 0
  %5581 = vmatpush1.bf16.msra.mxu0 %v4036
  %5582 = vmatprep.subr.bf16.mxu0 0
  %5583 = vmatpush1.bf16.msra.mxu0 %v4037
  %5584 = vmatprep.subr.bf16.mxu0 0
  %5585 = vmatpush1.bf16.msra.mxu0 %v4038
  %5586 = vmatprep.subr.bf16.mxu0 0
  %5587 = vmatpush1.bf16.msra.mxu0 %v4039
  %5588 = vmatprep.subr.bf16.mxu0 0
  %5589 = vmatpush1.bf16.msra.mxu0 %v4040
  %5590 = vmatprep.subr.bf16.mxu0 0
  %5591 = vmatpush1.bf16.msra.mxu0 %v4041
  %5592 = vmatprep.subr.bf16.mxu0 0
  %5593 = vmatpush1.bf16.msra.mxu0 %v4042
  %5594 = vmatprep.subr.bf16.mxu0 0
  %5595 = vmatpush1.bf16.msra.mxu0 %v4043
  %5596 = vmatprep.mubr.bf16.mxu0 %v1357
  %5597 = vmatmul.mubr.bf16.gmra.mrb[0].mxu0 %v1356
  %v5598 = vpop.f32.mrb[0].mxu0
  %v5599 = vadd.f32 %v5559, %v5598
  %v5600 = vpop.f32.mrb[0].mxu0
  %v5601 = vpop.f32.mrb[0].mxu0
  %v5602 = vpop.f32.mrb[0].mxu0
  %5603 = vdwg.mxu0
  %5604 = vmatprep.subr.bf16.mxu0 0
  %5605 = vmatpush1.bf16.msra.mxu0 %v4044
  %5606 = vmatprep.subr.bf16.mxu0 0
  %5607 = vmatpush1.bf16.msra.mxu0 %v4045
  %5608 = vmatprep.subr.bf16.mxu0 0
  %5609 = vmatpush1.bf16.msra.mxu0 %v4046
  %5610 = vmatprep.subr.bf16.mxu0 0
  %5611 = vmatpush1.bf16.msra.mxu0 %v4047
  %5612 = vmatprep.subr.bf16.mxu0 0
  %5613 = vmatpush1.bf16.msra.mxu0 %v4048
  %5614 = vmatprep.subr.bf16.mxu0 0
  %5615 = vmatpush1.bf16.msra.mxu0 %v4049
  %5616 = vmatprep.subr.bf16.mxu0 0
  %5617 = vmatpush1.bf16.msra.mxu0 %v4050
  %5618 = vmatprep.subr.bf16.mxu0 0
  %5619 = vmatpush1.bf16.msra.mxu0 %v4051
  %5620 = vmatprep.subr.bf16.mxu0 0
  %5621 = vmatpush1.bf16.msra.mxu0 %v4052
  %5622 = vmatprep.subr.bf16.mxu0 0
  %5623 = vmatpush1.bf16.msra.mxu0 %v4053
  %5624 = vmatprep.subr.bf16.mxu0 0
  %5625 = vmatpush1.bf16.msra.mxu0 %v4054
  %5626 = vmatprep.subr.bf16.mxu0 0
  %5627 = vmatpush1.bf16.msra.mxu0 %v4055
  %5628 = vmatprep.subr.bf16.mxu0 0
  %5629 = vmatpush1.bf16.msra.mxu0 %v4056
  %5630 = vmatprep.subr.bf16.mxu0 0
  %5631 = vmatpush1.bf16.msra.mxu0 %v4057
  %5632 = vmatprep.subr.bf16.mxu0 0
  %5633 = vmatpush1.bf16.msra.mxu0 %v4058
  %5634 = vmatprep.subr.bf16.mxu0 0
  %5635 = vmatpush1.bf16.msra.mxu0 %v4059
  %5636 = vmatprep.mubr.bf16.mxu0 %v1359
  %5637 = vmatmul.mubr.bf16.gmra.mrb[0].mxu0 %v1358
  %v5638 = vpop.f32.mrb[0].mxu0
  %v5639 = vadd.f32 %v5599, %v5638
  %v5640 = vpop.f32.mrb[0].mxu0
  %v5641 = vpop.f32.mrb[0].mxu0
  %v5642 = vpop.f32.mrb[0].mxu0
  %5643 = vdwg.mxu0
  %5644 = vmatprep.subr.bf16.mxu0 0
  %5645 = vmatpush1.bf16.msra.mxu0 %v4060
  %5646 = vmatprep.subr.bf16.mxu0 0
  %5647 = vmatpush1.bf16.msra.mxu0 %v4061
  %5648 = vmatprep.subr.bf16.mxu0 0
  %5649 = vmatpush1.bf16.msra.mxu0 %v4062
  %5650 = vmatprep.subr.bf16.mxu0 0
  %5651 = vmatpush1.bf16.msra.mxu0 %v4063
  %5652 = vmatprep.subr.bf16.mxu0 0
  %5653 = vmatpush1.bf16.msra.mxu0 %v4064
  %5654 = vmatprep.subr.bf16.mxu0 0
  %5655 = vmatpush1.bf16.msra.mxu0 %v4065
  %5656 = vmatprep.subr.bf16.mxu0 0
  %5657 = vmatpush1.bf16.msra.mxu0 %v4066
  %5658 = vmatprep.subr.bf16.mxu0 0
  %5659 = vmatpush1.bf16.msra.mxu0 %v4067
  %5660 = vmatprep.subr.bf16.mxu0 0
  %5661 = vmatpush1.bf16.msra.mxu0 %v4068
  %5662 = vmatprep.subr.bf16.mxu0 0
  %5663 = vmatpush1.bf16.msra.mxu0 %v4069
  %5664 = vmatprep.subr.bf16.mxu0 0
  %5665 = vmatpush1.bf16.msra.mxu0 %v4070
  %5666 = vmatprep.subr.bf16.mxu0 0
  %5667 = vmatpush1.bf16.msra.mxu0 %v4071
  %5668 = vmatprep.subr.bf16.mxu0 0
  %5669 = vmatpush1.bf16.msra.mxu0 %v4072
  %5670 = vmatprep.subr.bf16.mxu0 0
  %5671 = vmatpush1.bf16.msra.mxu0 %v4073
  %5672 = vmatprep.subr.bf16.mxu0 0
  %5673 = vmatpush1.bf16.msra.mxu0 %v4074
  %5674 = vmatprep.subr.bf16.mxu0 0
  %5675 = vmatpush1.bf16.msra.mxu0 %v4075
  %5676 = vmatprep.mubr.bf16.mxu0 %v1361
  %5677 = vmatmul.mubr.bf16.gmra.mrb[0].mxu0 %v1360
  %v5678 = vpop.f32.mrb[0].mxu0
  %v5679 = vadd.f32 %v5639, %v5678
  %v5680 = vpop.f32.mrb[0].mxu0
  %v5681 = vpop.f32.mrb[0].mxu0
  %v5682 = vpop.f32.mrb[0].mxu0
  %5683 = vdwg.mxu0
  %5684 = vmatprep.subr.bf16.mxu0 0
  %5685 = vmatpush1.bf16.msra.mxu0 %v4076
  %5686 = vmatprep.subr.bf16.mxu0 0
  %5687 = vmatpush1.bf16.msra.mxu0 %v4077
  %5688 = vmatprep.subr.bf16.mxu0 0
  %5689 = vmatpush1.bf16.msra.mxu0 %v4078
  %5690 = vmatprep.subr.bf16.mxu0 0
  %5691 = vmatpush1.bf16.msra.mxu0 %v4079
  %5692 = vmatprep.subr.bf16.mxu0 0
  %5693 = vmatpush1.bf16.msra.mxu0 %v4080
  %5694 = vmatprep.subr.bf16.mxu0 0
  %5695 = vmatpush1.bf16.msra.mxu0 %v4081
  %5696 = vmatprep.subr.bf16.mxu0 0
  %5697 = vmatpush1.bf16.msra.mxu0 %v4082
  %5698 = vmatprep.subr.bf16.mxu0 0
  %5699 = vmatpush1.bf16.msra.mxu0 %v4083
  %5700 = vmatprep.subr.bf16.mxu0 0
  %5701 = vmatpush1.bf16.msra.mxu0 %v4084
  %5702 = vmatprep.subr.bf16.mxu0 0
  %5703 = vmatpush1.bf16.msra.mxu0 %v4085
  %5704 = vmatprep.subr.bf16.mxu0 0
  %5705 = vmatpush1.bf16.msra.mxu0 %v4086
  %5706 = vmatprep.subr.bf16.mxu0 0
  %5707 = vmatpush1.bf16.msra.mxu0 %v4087
  %5708 = vmatprep.subr.bf16.mxu0 0
  %5709 = vmatpush1.bf16.msra.mxu0 %v4088
  %5710 = vmatprep.subr.bf16.mxu0 0
  %5711 = vmatpush1.bf16.msra.mxu0 %v4089
  %5712 = vmatprep.subr.bf16.mxu0 0
  %5713 = vmatpush1.bf16.msra.mxu0 %v4090
  %5714 = vmatprep.subr.bf16.mxu0 0
  %5715 = vmatpush1.bf16.msra.mxu0 %v4091
  %5716 = vmatprep.mubr.bf16.mxu0 %v1363
  %5717 = vmatmul.mubr.bf16.gmra.mrb[0].mxu0 %v1362
  %v5718 = vpop.f32.mrb[0].mxu0
  %v5719 = vadd.f32 %v5679, %v5718
  %v5720 = vpop.f32.mrb[0].mxu0
  %v5721 = vpop.f32.mrb[0].mxu0
  %v5722 = vpop.f32.mrb[0].mxu0
  %5723 = vdwg.mxu0
  %5724 = vmatprep.subr.bf16.mxu0 0
  %5725 = vmatpush1.bf16.msra.mxu0 %v4092
  %5726 = vmatprep.subr.bf16.mxu0 0
  %5727 = vmatpush1.bf16.msra.mxu0 %v4093
  %5728 = vmatprep.subr.bf16.mxu0 0
  %5729 = vmatpush1.bf16.msra.mxu0 %v4094
  %5730 = vmatprep.subr.bf16.mxu0 0
  %5731 = vmatpush1.bf16.msra.mxu0 %v4095
  %5732 = vmatprep.subr.bf16.mxu0 0
  %5733 = vmatpush1.bf16.msra.mxu0 %v4096
  %5734 = vmatprep.subr.bf16.mxu0 0
  %5735 = vmatpush1.bf16.msra.mxu0 %v4097
  %5736 = vmatprep.subr.bf16.mxu0 0
  %5737 = vmatpush1.bf16.msra.mxu0 %v4098
  %5738 = vmatprep.subr.bf16.mxu0 0
  %5739 = vmatpush1.bf16.msra.mxu0 %v4099
  %5740 = vmatprep.subr.bf16.mxu0 0
  %5741 = vmatpush1.bf16.msra.mxu0 %v4100
  %5742 = vmatprep.subr.bf16.mxu0 0
  %5743 = vmatpush1.bf16.msra.mxu0 %v4101
  %5744 = vmatprep.subr.bf16.mxu0 0
  %5745 = vmatpush1.bf16.msra.mxu0 %v4102
  %5746 = vmatprep.subr.bf16.mxu0 0
  %5747 = vmatpush1.bf16.msra.mxu0 %v4103
  %5748 = vmatprep.subr.bf16.mxu0 0
  %5749 = vmatpush1.bf16.msra.mxu0 %v4104
  %5750 = vmatprep.subr.bf16.mxu0 0
  %5751 = vmatpush1.bf16.msra.mxu0 %v4105
  %5752 = vmatprep.subr.bf16.mxu0 0
  %5753 = vmatpush1.bf16.msra.mxu0 %v4106
  %5754 = vmatprep.subr.bf16.mxu0 0
  %5755 = vmatpush1.bf16.msra.mxu0 %v4107
  %5756 = vmatprep.mubr.bf16.mxu0 %v1365
  %5757 = vmatmul.mubr.bf16.gmra.mrb[0].mxu0 %v1364
  %v5758 = vpop.f32.mrb[0].mxu0
  %v5759 = vadd.f32 %v5719, %v5758
  %v5760 = vpop.f32.mrb[0].mxu0
  %v5761 = vpop.f32.mrb[0].mxu0
  %v5762 = vpop.f32.mrb[0].mxu0
  %5763 = vdwg.mxu0
  %5764 = vmatprep.subr.bf16.mxu0 0
  %5765 = vmatpush1.bf16.msra.mxu0 %v4108
  %5766 = vmatprep.subr.bf16.mxu0 0
  %5767 = vmatpush1.bf16.msra.mxu0 %v4109
  %5768 = vmatprep.subr.bf16.mxu0 0
  %5769 = vmatpush1.bf16.msra.mxu0 %v4110
  %5770 = vmatprep.subr.bf16.mxu0 0
  %5771 = vmatpush1.bf16.msra.mxu0 %v4111
  %5772 = vmatprep.subr.bf16.mxu0 0
  %5773 = vmatpush1.bf16.msra.mxu0 %v4112
  %5774 = vmatprep.subr.bf16.mxu0 0
  %5775 = vmatpush1.bf16.msra.mxu0 %v4113
  %5776 = vmatprep.subr.bf16.mxu0 0
  %5777 = vmatpush1.bf16.msra.mxu0 %v4114
  %5778 = vmatprep.subr.bf16.mxu0 0
  %5779 = vmatpush1.bf16.msra.mxu0 %v4115
  %5780 = vmatprep.subr.bf16.mxu0 0
  %5781 = vmatpush1.bf16.msra.mxu0 %v4116
  %5782 = vmatprep.subr.bf16.mxu0 0
  %5783 = vmatpush1.bf16.msra.mxu0 %v4117
  %5784 = vmatprep.subr.bf16.mxu0 0
  %5785 = vmatpush1.bf16.msra.mxu0 %v4118
  %5786 = vmatprep.subr.bf16.mxu0 0
  %5787 = vmatpush1.bf16.msra.mxu0 %v4119
  %5788 = vmatprep.subr.bf16.mxu0 0
  %5789 = vmatpush1.bf16.msra.mxu0 %v4120
  %5790 = vmatprep.subr.bf16.mxu0 0
  %5791 = vmatpush1.bf16.msra.mxu0 %v4121
  %5792 = vmatprep.subr.bf16.mxu0 0
  %5793 = vmatpush1.bf16.msra.mxu0 %v4122
  %5794 = vmatprep.subr.bf16.mxu0 0
  %5795 = vmatpush1.bf16.msra.mxu0 %v4123
  %5796 = vmatprep.mubr.bf16.mxu0 %v1367
  %5797 = vmatmul.mubr.bf16.gmra.mrb[0].mxu0 %v1366
  %v5798 = vpop.f32.mrb[0].mxu0
  %v5799 = vadd.f32 %v5759, %v5798
  %v5800 = vpop.f32.mrb[0].mxu0
  %v5801 = vpop.f32.mrb[0].mxu0
  %v5802 = vpop.f32.mrb[0].mxu0
  %5803 = vdwg.mxu0
  %5804 = vmatprep.subr.bf16.mxu0 0
  %5805 = vmatpush1.bf16.msra.mxu0 %v4124
  %5806 = vmatprep.subr.bf16.mxu0 0
  %5807 = vmatpush1.bf16.msra.mxu0 %v4125
  %5808 = vmatprep.subr.bf16.mxu0 0
  %5809 = vmatpush1.bf16.msra.mxu0 %v4126
  %5810 = vmatprep.subr.bf16.mxu0 0
  %5811 = vmatpush1.bf16.msra.mxu0 %v4127
  %5812 = vmatprep.subr.bf16.mxu0 0
  %5813 = vmatpush1.bf16.msra.mxu0 %v4128
  %5814 = vmatprep.subr.bf16.mxu0 0
  %5815 = vmatpush1.bf16.msra.mxu0 %v4129
  %5816 = vmatprep.subr.bf16.mxu0 0
  %5817 = vmatpush1.bf16.msra.mxu0 %v4130
  %5818 = vmatprep.subr.bf16.mxu0 0
  %5819 = vmatpush1.bf16.msra.mxu0 %v4131
  %5820 = vmatprep.subr.bf16.mxu0 0
  %5821 = vmatpush1.bf16.msra.mxu0 %v4132
  %5822 = vmatprep.subr.bf16.mxu0 0
  %5823 = vmatpush1.bf16.msra.mxu0 %v4133
  %5824 = vmatprep.subr.bf16.mxu0 0
  %5825 = vmatpush1.bf16.msra.mxu0 %v4134
  %5826 = vmatprep.subr.bf16.mxu0 0
  %5827 = vmatpush1.bf16.msra.mxu0 %v4135
  %5828 = vmatprep.subr.bf16.mxu0 0
  %5829 = vmatpush1.bf16.msra.mxu0 %v4136
  %5830 = vmatprep.subr.bf16.mxu0 0
  %5831 = vmatpush1.bf16.msra.mxu0 %v4137
  %5832 = vmatprep.subr.bf16.mxu0 0
  %5833 = vmatpush1.bf16.msra.mxu0 %v4138
  %5834 = vmatprep.subr.bf16.mxu0 0
  %5835 = vmatpush1.bf16.msra.mxu0 %v4139
  %5836 = vmatprep.mubr.bf16.mxu0 %v1369
  %5837 = vmatmul.mubr.bf16.gmra.mrb[0].mxu0 %v1368
  %v5838 = vpop.f32.mrb[0].mxu0
  %v5839 = vadd.f32 %v5799, %v5838
  %v5840 = vpop.f32.mrb[0].mxu0
  %v5841 = vpop.f32.mrb[0].mxu0
  %v5842 = vpop.f32.mrb[0].mxu0
  %5843 = vdwg.mxu0
  %5844 = vmatprep.subr.bf16.mxu0 0
  %5845 = vmatpush1.bf16.msra.mxu0 %v4140
  %5846 = vmatprep.subr.bf16.mxu0 0
  %5847 = vmatpush1.bf16.msra.mxu0 %v4141
  %5848 = vmatprep.subr.bf16.mxu0 0
  %5849 = vmatpush1.bf16.msra.mxu0 %v4142
  %5850 = vmatprep.subr.bf16.mxu0 0
  %5851 = vmatpush1.bf16.msra.mxu0 %v4143
  %5852 = vmatprep.subr.bf16.mxu0 0
  %5853 = vmatpush1.bf16.msra.mxu0 %v4144
  %5854 = vmatprep.subr.bf16.mxu0 0
  %5855 = vmatpush1.bf16.msra.mxu0 %v4145
  %5856 = vmatprep.subr.bf16.mxu0 0
  %5857 = vmatpush1.bf16.msra.mxu0 %v4146
  %5858 = vmatprep.subr.bf16.mxu0 0
  %5859 = vmatpush1.bf16.msra.mxu0 %v4147
  %5860 = vmatprep.subr.bf16.mxu0 0
  %5861 = vmatpush1.bf16.msra.mxu0 %v4148
  %5862 = vmatprep.subr.bf16.mxu0 0
  %5863 = vmatpush1.bf16.msra.mxu0 %v4149
  %5864 = vmatprep.subr.bf16.mxu0 0
  %5865 = vmatpush1.bf16.msra.mxu0 %v4150
  %5866 = vmatprep.subr.bf16.mxu0 0
  %5867 = vmatpush1.bf16.msra.mxu0 %v4151
  %5868 = vmatprep.subr.bf16.mxu0 0
  %5869 = vmatpush1.bf16.msra.mxu0 %v4152
  %5870 = vmatprep.subr.bf16.mxu0 0
  %5871 = vmatpush1.bf16.msra.mxu0 %v4153
  %5872 = vmatprep.subr.bf16.mxu0 0
  %5873 = vmatpush1.bf16.msra.mxu0 %v4154
  %5874 = vmatprep.subr.bf16.mxu0 0
  %5875 = vmatpush1.bf16.msra.mxu0 %v4155
  %5876 = vmatprep.mubr.bf16.mxu0 %v1371
  %5877 = vmatmul.mubr.bf16.gmra.mrb[0].mxu0 %v1370
  %v5878 = vpop.f32.mrb[0].mxu0
  %v5879 = vadd.f32 %v5839, %v5878
  %v5880 = vpop.f32.mrb[0].mxu0
  %v5881 = vpop.f32.mrb[0].mxu0
  %v5882 = vpop.f32.mrb[0].mxu0
  %5883 = vdwg.mxu0
  %5884 = vmatprep.subr.bf16.mxu0 0
  %5885 = vmatpush1.bf16.msra.mxu0 %v4156
  %5886 = vmatprep.subr.bf16.mxu0 0
  %5887 = vmatpush1.bf16.msra.mxu0 %v4157
  %5888 = vmatprep.subr.bf16.mxu0 0
  %5889 = vmatpush1.bf16.msra.mxu0 %v4158
  %5890 = vmatprep.subr.bf16.mxu0 0
  %5891 = vmatpush1.bf16.msra.mxu0 %v4159
  %5892 = vmatprep.subr.bf16.mxu0 0
  %5893 = vmatpush1.bf16.msra.mxu0 %v4160
  %5894 = vmatprep.subr.bf16.mxu0 0
  %5895 = vmatpush1.bf16.msra.mxu0 %v4161
  %5896 = vmatprep.subr.bf16.mxu0 0
  %5897 = vmatpush1.bf16.msra.mxu0 %v4162
  %5898 = vmatprep.subr.bf16.mxu0 0
  %5899 = vmatpush1.bf16.msra.mxu0 %v4163
  %5900 = vmatprep.subr.bf16.mxu0 0
  %5901 = vmatpush1.bf16.msra.mxu0 %v4164
  %5902 = vmatprep.subr.bf16.mxu0 0
  %5903 = vmatpush1.bf16.msra.mxu0 %v4165
  %5904 = vmatprep.subr.bf16.mxu0 0
  %5905 = vmatpush1.bf16.msra.mxu0 %v4166
  %5906 = vmatprep.subr.bf16.mxu0 0
  %5907 = vmatpush1.bf16.msra.mxu0 %v4167
  %5908 = vmatprep.subr.bf16.mxu0 0
  %5909 = vmatpush1.bf16.msra.mxu0 %v4168
  %5910 = vmatprep.subr.bf16.mxu0 0
  %5911 = vmatpush1.bf16.msra.mxu0 %v4169
  %5912 = vmatprep.subr.bf16.mxu0 0
  %5913 = vmatpush1.bf16.msra.mxu0 %v4170
  %5914 = vmatprep.subr.bf16.mxu0 0
  %5915 = vmatpush1.bf16.msra.mxu0 %v4171
  %5916 = vmatprep.mubr.bf16.mxu0 %v1373
  %5917 = vmatmul.mubr.bf16.gmra.mrb[0].mxu0 %v1372
  %v5918 = vpop.f32.mrb[0].mxu0
  %v5919 = vadd.f32 %v5879, %v5918
  %v5920 = vpop.f32.mrb[0].mxu0
  %v5921 = vpop.f32.mrb[0].mxu0
  %v5922 = vpop.f32.mrb[0].mxu0
  %5923 = vdwg.mxu0
  %5924 = vmatprep.subr.bf16.mxu0 0
  %5925 = vmatpush1.bf16.msra.mxu0 %v4172
  %5926 = vmatprep.subr.bf16.mxu0 0
  %5927 = vmatpush1.bf16.msra.mxu0 %v4173
  %5928 = vmatprep.subr.bf16.mxu0 0
  %5929 = vmatpush1.bf16.msra.mxu0 %v4174
  %5930 = vmatprep.subr.bf16.mxu0 0
  %5931 = vmatpush1.bf16.msra.mxu0 %v4175
  %5932 = vmatprep.subr.bf16.mxu0 0
  %5933 = vmatpush1.bf16.msra.mxu0 %v4176
  %5934 = vmatprep.subr.bf16.mxu0 0
  %5935 = vmatpush1.bf16.msra.mxu0 %v4177
  %5936 = vmatprep.subr.bf16.mxu0 0
  %5937 = vmatpush1.bf16.msra.mxu0 %v4178
  %5938 = vmatprep.subr.bf16.mxu0 0
  %5939 = vmatpush1.bf16.msra.mxu0 %v4179
  %5940 = vmatprep.subr.bf16.mxu0 0
  %5941 = vmatpush1.bf16.msra.mxu0 %v4180
  %5942 = vmatprep.subr.bf16.mxu0 0
  %5943 = vmatpush1.bf16.msra.mxu0 %v4181
  %5944 = vmatprep.subr.bf16.mxu0 0
  %5945 = vmatpush1.bf16.msra.mxu0 %v4182
  %5946 = vmatprep.subr.bf16.mxu0 0
  %5947 = vmatpush1.bf16.msra.mxu0 %v4183
  %5948 = vmatprep.subr.bf16.mxu0 0
  %5949 = vmatpush1.bf16.msra.mxu0 %v4184
  %5950 = vmatprep.subr.bf16.mxu0 0
  %5951 = vmatpush1.bf16.msra.mxu0 %v4185
  %5952 = vmatprep.subr.bf16.mxu0 0
  %5953 = vmatpush1.bf16.msra.mxu0 %v4186
  %5954 = vmatprep.subr.bf16.mxu0 0
  %5955 = vmatpush1.bf16.msra.mxu0 %v4187
  %5956 = vmatprep.mubr.bf16.mxu0 %v1375
  %5957 = vmatmul.mubr.bf16.gmra.mrb[0].mxu0 %v1374
  %v5958 = vpop.f32.mrb[0].mxu0
  %v5959 = vadd.f32 %v5919, %v5958
  %v5960 = vpop.f32.mrb[0].mxu0
  %v5961 = vpop.f32.mrb[0].mxu0
  %v5962 = vpop.f32.mrb[0].mxu0
  %5963 = vdwg.mxu0
  %5964 = vmatprep.subr.bf16.mxu0 0
  %5965 = vmatpush1.bf16.msra.mxu0 %v4188
  %5966 = vmatprep.subr.bf16.mxu0 0
  %5967 = vmatpush1.bf16.msra.mxu0 %v4189
  %5968 = vmatprep.subr.bf16.mxu0 0
  %5969 = vmatpush1.bf16.msra.mxu0 %v4190
  %5970 = vmatprep.subr.bf16.mxu0 0
  %5971 = vmatpush1.bf16.msra.mxu0 %v4191
  %5972 = vmatprep.subr.bf16.mxu0 0
  %5973 = vmatpush1.bf16.msra.mxu0 %v4192
  %5974 = vmatprep.subr.bf16.mxu0 0
  %5975 = vmatpush1.bf16.msra.mxu0 %v4193
  %5976 = vmatprep.subr.bf16.mxu0 0
  %5977 = vmatpush1.bf16.msra.mxu0 %v4194
  %5978 = vmatprep.subr.bf16.mxu0 0
  %5979 = vmatpush1.bf16.msra.mxu0 %v4195
  %5980 = vmatprep.subr.bf16.mxu0 0
  %5981 = vmatpush1.bf16.msra.mxu0 %v4196
  %5982 = vmatprep.subr.bf16.mxu0 0
  %5983 = vmatpush1.bf16.msra.mxu0 %v4197
  %5984 = vmatprep.subr.bf16.mxu0 0
  %5985 = vmatpush1.bf16.msra.mxu0 %v4198
  %5986 = vmatprep.subr.bf16.mxu0 0
  %5987 = vmatpush1.bf16.msra.mxu0 %v4199
  %5988 = vmatprep.subr.bf16.mxu0 0
  %5989 = vmatpush1.bf16.msra.mxu0 %v4200
  %5990 = vmatprep.subr.bf16.mxu0 0
  %5991 = vmatpush1.bf16.msra.mxu0 %v4201
  %5992 = vmatprep.subr.bf16.mxu0 0
  %5993 = vmatpush1.bf16.msra.mxu0 %v4202
  %5994 = vmatprep.subr.bf16.mxu0 0
  %5995 = vmatpush1.bf16.msra.mxu0 %v4203
  %5996 = vmatprep.mubr.bf16.mxu0 %v1377
  %5997 = vmatmul.mubr.bf16.gmra.mrb[0].mxu0 %v1376
  %v5998 = vpop.f32.mrb[0].mxu0
  %v5999 = vadd.f32 %v5959, %v5998
  %v6000 = vpop.f32.mrb[0].mxu0
  %v6001 = vpop.f32.mrb[0].mxu0
  %v6002 = vpop.f32.mrb[0].mxu0
  %6003 = vdwg.mxu0
  %6004 = vmatprep.subr.bf16.mxu0 0
  %6005 = vmatpush1.bf16.msra.mxu0 %v4204
  %6006 = vmatprep.subr.bf16.mxu0 0
  %6007 = vmatpush1.bf16.msra.mxu0 %v4205
  %6008 = vmatprep.subr.bf16.mxu0 0
  %6009 = vmatpush1.bf16.msra.mxu0 %v4206
  %6010 = vmatprep.subr.bf16.mxu0 0
  %6011 = vmatpush1.bf16.msra.mxu0 %v4207
  %6012 = vmatprep.subr.bf16.mxu0 0
  %6013 = vmatpush1.bf16.msra.mxu0 %v4208
  %6014 = vmatprep.subr.bf16.mxu0 0
  %6015 = vmatpush1.bf16.msra.mxu0 %v4209
  %6016 = vmatprep.subr.bf16.mxu0 0
  %6017 = vmatpush1.bf16.msra.mxu0 %v4210
  %6018 = vmatprep.subr.bf16.mxu0 0
  %6019 = vmatpush1.bf16.msra.mxu0 %v4211
  %6020 = vmatprep.subr.bf16.mxu0 0
  %6021 = vmatpush1.bf16.msra.mxu0 %v4212
  %6022 = vmatprep.subr.bf16.mxu0 0
  %6023 = vmatpush1.bf16.msra.mxu0 %v4213
  %6024 = vmatprep.subr.bf16.mxu0 0
  %6025 = vmatpush1.bf16.msra.mxu0 %v4214
  %6026 = vmatprep.subr.bf16.mxu0 0
  %6027 = vmatpush1.bf16.msra.mxu0 %v4215
  %6028 = vmatprep.subr.bf16.mxu0 0
  %6029 = vmatpush1.bf16.msra.mxu0 %v4216
  %6030 = vmatprep.subr.bf16.mxu0 0
  %6031 = vmatpush1.bf16.msra.mxu0 %v4217
  %6032 = vmatprep.subr.bf16.mxu0 0
  %6033 = vmatpush1.bf16.msra.mxu0 %v4218
  %6034 = vmatprep.subr.bf16.mxu0 0
  %6035 = vmatpush1.bf16.msra.mxu0 %v4219
  %6036 = vmatprep.mubr.bf16.mxu0 %v1379
  %6037 = vmatmul.mubr.bf16.gmra.mrb[0].mxu0 %v1378
  %v6038 = vpop.f32.mrb[0].mxu0
  %v6039 = vadd.f32 %v5999, %v6038
  %v6040 = vpop.f32.mrb[0].mxu0
  %v6041 = vpop.f32.mrb[0].mxu0
  %v6042 = vpop.f32.mrb[0].mxu0
  %6043 = vdwg.mxu0
  %6044 = vmatprep.subr.bf16.mxu0 0
  %6045 = vmatpush1.bf16.msra.mxu0 %v4220
  %6046 = vmatprep.subr.bf16.mxu0 0
  %6047 = vmatpush1.bf16.msra.mxu0 %v4221
  %6048 = vmatprep.subr.bf16.mxu0 0
  %6049 = vmatpush1.bf16.msra.mxu0 %v4222
  %6050 = vmatprep.subr.bf16.mxu0 0
  %6051 = vmatpush1.bf16.msra.mxu0 %v4223
  %6052 = vmatprep.subr.bf16.mxu0 0
  %6053 = vmatpush1.bf16.msra.mxu0 %v4224
  %6054 = vmatprep.subr.bf16.mxu0 0
  %6055 = vmatpush1.bf16.msra.mxu0 %v4225
  %6056 = vmatprep.subr.bf16.mxu0 0
  %6057 = vmatpush1.bf16.msra.mxu0 %v4226
  %6058 = vmatprep.subr.bf16.mxu0 0
  %6059 = vmatpush1.bf16.msra.mxu0 %v4227
  %6060 = vmatprep.subr.bf16.mxu0 0
  %6061 = vmatpush1.bf16.msra.mxu0 %v4228
  %6062 = vmatprep.subr.bf16.mxu0 0
  %6063 = vmatpush1.bf16.msra.mxu0 %v4229
  %6064 = vmatprep.subr.bf16.mxu0 0
  %6065 = vmatpush1.bf16.msra.mxu0 %v4230
  %6066 = vmatprep.subr.bf16.mxu0 0
  %6067 = vmatpush1.bf16.msra.mxu0 %v4231
  %6068 = vmatprep.subr.bf16.mxu0 0
  %6069 = vmatpush1.bf16.msra.mxu0 %v4232
  %6070 = vmatprep.subr.bf16.mxu0 0
  %6071 = vmatpush1.bf16.msra.mxu0 %v4233
  %6072 = vmatprep.subr.bf16.mxu0 0
  %6073 = vmatpush1.bf16.msra.mxu0 %v4234
  %6074 = vmatprep.subr.bf16.mxu0 0
  %6075 = vmatpush1.bf16.msra.mxu0 %v4235
  %6076 = vmatprep.mubr.bf16.mxu0 %v1381
  %6077 = vmatmul.mubr.bf16.gmra.mrb[0].mxu0 %v1380
  %v6078 = vpop.f32.mrb[0].mxu0
  %v6079 = vadd.f32 %v6039, %v6078
  %v6080 = vpop.f32.mrb[0].mxu0
  %v6081 = vpop.f32.mrb[0].mxu0
  %v6082 = vpop.f32.mrb[0].mxu0
  %6083 = vdwg.mxu0
  %6084 = vmatprep.subr.bf16.mxu0 0
  %6085 = vmatpush1.bf16.msra.mxu0 %v4236
  %6086 = vmatprep.subr.bf16.mxu0 0
  %6087 = vmatpush1.bf16.msra.mxu0 %v4237
  %6088 = vmatprep.subr.bf16.mxu0 0
  %6089 = vmatpush1.bf16.msra.mxu0 %v4238
  %6090 = vmatprep.subr.bf16.mxu0 0
  %6091 = vmatpush1.bf16.msra.mxu0 %v4239
  %6092 = vmatprep.subr.bf16.mxu0 0
  %6093 = vmatpush1.bf16.msra.mxu0 %v4240
  %6094 = vmatprep.subr.bf16.mxu0 0
  %6095 = vmatpush1.bf16.msra.mxu0 %v4241
  %6096 = vmatprep.subr.bf16.mxu0 0
  %6097 = vmatpush1.bf16.msra.mxu0 %v4242
  %6098 = vmatprep.subr.bf16.mxu0 0
  %6099 = vmatpush1.bf16.msra.mxu0 %v4243
  %6100 = vmatprep.subr.bf16.mxu0 0
  %6101 = vmatpush1.bf16.msra.mxu0 %v4244
  %6102 = vmatprep.subr.bf16.mxu0 0
  %6103 = vmatpush1.bf16.msra.mxu0 %v4245
  %6104 = vmatprep.subr.bf16.mxu0 0
  %6105 = vmatpush1.bf16.msra.mxu0 %v4246
  %6106 = vmatprep.subr.bf16.mxu0 0
  %6107 = vmatpush1.bf16.msra.mxu0 %v4247
  %6108 = vmatprep.subr.bf16.mxu0 0
  %6109 = vmatpush1.bf16.msra.mxu0 %v4248
  %6110 = vmatprep.subr.bf16.mxu0 0
  %6111 = vmatpush1.bf16.msra.mxu0 %v4249
  %6112 = vmatprep.subr.bf16.mxu0 0
  %6113 = vmatpush1.bf16.msra.mxu0 %v4250
  %6114 = vmatprep.subr.bf16.mxu0 0
  %6115 = vmatpush1.bf16.msra.mxu0 %v4251
  %6116 = vmatprep.mubr.bf16.mxu0 %v1383
  %6117 = vmatmul.mubr.bf16.gmra.mrb[0].mxu0 %v1382
  %v6118 = vpop.f32.mrb[0].mxu0
  %v6119 = vadd.f32 %v6079, %v6118
  %v6120 = vpop.f32.mrb[0].mxu0
  %v6121 = vpop.f32.mrb[0].mxu0
  %v6122 = vpop.f32.mrb[0].mxu0
  %6123 = vdwg.mxu0
  %6124 = vmatprep.subr.bf16.mxu0 0
  %6125 = vmatpush1.bf16.msra.mxu0 %v4252
  %6126 = vmatprep.subr.bf16.mxu0 0
  %6127 = vmatpush1.bf16.msra.mxu0 %v4253
  %6128 = vmatprep.subr.bf16.mxu0 0
  %6129 = vmatpush1.bf16.msra.mxu0 %v4254
  %6130 = vmatprep.subr.bf16.mxu0 0
  %6131 = vmatpush1.bf16.msra.mxu0 %v4255
  %6132 = vmatprep.subr.bf16.mxu0 0
  %6133 = vmatpush1.bf16.msra.mxu0 %v4256
  %6134 = vmatprep.subr.bf16.mxu0 0
  %6135 = vmatpush1.bf16.msra.mxu0 %v4257
  %6136 = vmatprep.subr.bf16.mxu0 0
  %6137 = vmatpush1.bf16.msra.mxu0 %v4258
  %6138 = vmatprep.subr.bf16.mxu0 0
  %6139 = vmatpush1.bf16.msra.mxu0 %v4259
  %6140 = vmatprep.subr.bf16.mxu0 0
  %6141 = vmatpush1.bf16.msra.mxu0 %v4260
  %6142 = vmatprep.subr.bf16.mxu0 0
  %6143 = vmatpush1.bf16.msra.mxu0 %v4261
  %6144 = vmatprep.subr.bf16.mxu0 0
  %6145 = vmatpush1.bf16.msra.mxu0 %v4262
  %6146 = vmatprep.subr.bf16.mxu0 0
  %6147 = vmatpush1.bf16.msra.mxu0 %v4263
  %6148 = vmatprep.subr.bf16.mxu0 0
  %6149 = vmatpush1.bf16.msra.mxu0 %v4264
  %6150 = vmatprep.subr.bf16.mxu0 0
  %6151 = vmatpush1.bf16.msra.mxu0 %v4265
  %6152 = vmatprep.subr.bf16.mxu0 0
  %6153 = vmatpush1.bf16.msra.mxu0 %v4266
  %6154 = vmatprep.subr.bf16.mxu0 0
  %6155 = vmatpush1.bf16.msra.mxu0 %v4267
  %6156 = vmatprep.mubr.bf16.mxu0 %v1385
  %6157 = vmatmul.mubr.bf16.gmra.mrb[0].mxu0 %v1384
  %v6158 = vpop.f32.mrb[0].mxu0
  %v6159 = vadd.f32 %v6119, %v6158
  %v6160 = vpop.f32.mrb[0].mxu0
  %v6161 = vpop.f32.mrb[0].mxu0
  %v6162 = vpop.f32.mrb[0].mxu0
  %6163 = vdwg.mxu0
  %6164 = vmatprep.subr.bf16.mxu0 0
  %6165 = vmatpush1.bf16.msra.mxu0 %v4268
  %6166 = vmatprep.subr.bf16.mxu0 0
  %6167 = vmatpush1.bf16.msra.mxu0 %v4269
  %6168 = vmatprep.subr.bf16.mxu0 0
  %6169 = vmatpush1.bf16.msra.mxu0 %v4270
  %6170 = vmatprep.subr.bf16.mxu0 0
  %6171 = vmatpush1.bf16.msra.mxu0 %v4271
  %6172 = vmatprep.subr.bf16.mxu0 0
  %6173 = vmatpush1.bf16.msra.mxu0 %v4272
  %6174 = vmatprep.subr.bf16.mxu0 0
  %6175 = vmatpush1.bf16.msra.mxu0 %v4273
  %6176 = vmatprep.subr.bf16.mxu0 0
  %6177 = vmatpush1.bf16.msra.mxu0 %v4274
  %6178 = vmatprep.subr.bf16.mxu0 0
  %6179 = vmatpush1.bf16.msra.mxu0 %v4275
  %6180 = vmatprep.subr.bf16.mxu0 0
  %6181 = vmatpush1.bf16.msra.mxu0 %v4276
  %6182 = vmatprep.subr.bf16.mxu0 0
  %6183 = vmatpush1.bf16.msra.mxu0 %v4277
  %6184 = vmatprep.subr.bf16.mxu0 0
  %6185 = vmatpush1.bf16.msra.mxu0 %v4278
  %6186 = vmatprep.subr.bf16.mxu0 0
  %6187 = vmatpush1.bf16.msra.mxu0 %v4279
  %6188 = vmatprep.subr.bf16.mxu0 0
  %6189 = vmatpush1.bf16.msra.mxu0 %v4280
  %6190 = vmatprep.subr.bf16.mxu0 0
  %6191 = vmatpush1.bf16.msra.mxu0 %v4281
  %6192 = vmatprep.subr.bf16.mxu0 0
  %6193 = vmatpush1.bf16.msra.mxu0 %v4282
  %6194 = vmatprep.subr.bf16.mxu0 0
  %6195 = vmatpush1.bf16.msra.mxu0 %v4283
  %6196 = vmatprep.mubr.bf16.mxu0 %v1387
  %6197 = vmatmul.mubr.bf16.gmra.mrb[0].mxu0 %v1386
  %v6198 = vpop.f32.mrb[0].mxu0
  %v6199 = vadd.f32 %v6159, %v6198
  %v6200 = vpop.f32.mrb[0].mxu0
  %v6201 = vpop.f32.mrb[0].mxu0
  %v6202 = vpop.f32.mrb[0].mxu0
  %6203 = vdwg.mxu0
  %6204 = vmatprep.subr.bf16.mxu0 0
  %6205 = vmatpush1.bf16.msra.mxu0 %v4284
  %6206 = vmatprep.subr.bf16.mxu0 0
  %6207 = vmatpush1.bf16.msra.mxu0 %v4285
  %6208 = vmatprep.subr.bf16.mxu0 0
  %6209 = vmatpush1.bf16.msra.mxu0 %v4286
  %6210 = vmatprep.subr.bf16.mxu0 0
  %6211 = vmatpush1.bf16.msra.mxu0 %v4287
  %6212 = vmatprep.subr.bf16.mxu0 0
  %6213 = vmatpush1.bf16.msra.mxu0 %v4288
  %6214 = vmatprep.subr.bf16.mxu0 0
  %6215 = vmatpush1.bf16.msra.mxu0 %v4289
  %6216 = vmatprep.subr.bf16.mxu0 0
  %6217 = vmatpush1.bf16.msra.mxu0 %v4290
  %6218 = vmatprep.subr.bf16.mxu0 0
  %6219 = vmatpush1.bf16.msra.mxu0 %v4291
  %6220 = vmatprep.subr.bf16.mxu0 0
  %6221 = vmatpush1.bf16.msra.mxu0 %v4292
  %6222 = vmatprep.subr.bf16.mxu0 0
  %6223 = vmatpush1.bf16.msra.mxu0 %v4293
  %6224 = vmatprep.subr.bf16.mxu0 0
  %6225 = vmatpush1.bf16.msra.mxu0 %v4294
  %6226 = vmatprep.subr.bf16.mxu0 0
  %6227 = vmatpush1.bf16.msra.mxu0 %v4295
  %6228 = vmatprep.subr.bf16.mxu0 0
  %6229 = vmatpush1.bf16.msra.mxu0 %v4296
  %6230 = vmatprep.subr.bf16.mxu0 0
  %6231 = vmatpush1.bf16.msra.mxu0 %v4297
  %6232 = vmatprep.subr.bf16.mxu0 0
  %6233 = vmatpush1.bf16.msra.mxu0 %v4298
  %6234 = vmatprep.subr.bf16.mxu0 0
  %6235 = vmatpush1.bf16.msra.mxu0 %v4299
  %6236 = vmatprep.mubr.bf16.mxu0 %v1389
  %6237 = vmatmul.mubr.bf16.gmra.mrb[0].mxu0 %v1388
  %v6238 = vpop.f32.mrb[0].mxu0
  %v6239 = vadd.f32 %v6199, %v6238
  %v6240 = vpop.f32.mrb[0].mxu0
  %v6241 = vpop.f32.mrb[0].mxu0
  %v6242 = vpop.f32.mrb[0].mxu0
  %6243 = vdwg.mxu0
  %6244 = vmatprep.subr.bf16.mxu0 0
  %6245 = vmatpush1.bf16.msra.mxu0 %v4300
  %6246 = vmatprep.subr.bf16.mxu0 0
  %6247 = vmatpush1.bf16.msra.mxu0 %v4301
  %6248 = vmatprep.subr.bf16.mxu0 0
  %6249 = vmatpush1.bf16.msra.mxu0 %v4302
  %6250 = vmatprep.subr.bf16.mxu0 0
  %6251 = vmatpush1.bf16.msra.mxu0 %v4303
  %6252 = vmatprep.subr.bf16.mxu0 0
  %6253 = vmatpush1.bf16.msra.mxu0 %v4304
  %6254 = vmatprep.subr.bf16.mxu0 0
  %6255 = vmatpush1.bf16.msra.mxu0 %v4305
  %6256 = vmatprep.subr.bf16.mxu0 0
  %6257 = vmatpush1.bf16.msra.mxu0 %v4306
  %6258 = vmatprep.subr.bf16.mxu0 0
  %6259 = vmatpush1.bf16.msra.mxu0 %v4307
  %6260 = vmatprep.subr.bf16.mxu0 0
  %6261 = vmatpush1.bf16.msra.mxu0 %v4308
  %6262 = vmatprep.subr.bf16.mxu0 0
  %6263 = vmatpush1.bf16.msra.mxu0 %v4309
  %6264 = vmatprep.subr.bf16.mxu0 0
  %6265 = vmatpush1.bf16.msra.mxu0 %v4310
  %6266 = vmatprep.subr.bf16.mxu0 0
  %6267 = vmatpush1.bf16.msra.mxu0 %v4311
  %6268 = vmatprep.subr.bf16.mxu0 0
  %6269 = vmatpush1.bf16.msra.mxu0 %v4312
  %6270 = vmatprep.subr.bf16.mxu0 0
  %6271 = vmatpush1.bf16.msra.mxu0 %v4313
  %6272 = vmatprep.subr.bf16.mxu0 0
  %6273 = vmatpush1.bf16.msra.mxu0 %v4314
  %6274 = vmatprep.subr.bf16.mxu0 0
  %6275 = vmatpush1.bf16.msra.mxu0 %v4315
  %6276 = vmatprep.mubr.bf16.mxu0 %v1391
  %6277 = vmatmul.mubr.bf16.gmra.mrb[0].mxu0 %v1390
  %v6278 = vpop.f32.mrb[0].mxu0
  %v6279 = vadd.f32 %v6239, %v6278
  %v6280 = vpop.f32.mrb[0].mxu0
  %v6281 = vpop.f32.mrb[0].mxu0
  %v6282 = vpop.f32.mrb[0].mxu0
  %6283 = vdwg.mxu0
  %6284 = vmatprep.subr.bf16.mxu0 0
  %6285 = vmatpush1.bf16.msra.mxu0 %v4316
  %6286 = vmatprep.subr.bf16.mxu0 0
  %6287 = vmatpush1.bf16.msra.mxu0 %v4317
  %6288 = vmatprep.subr.bf16.mxu0 0
  %6289 = vmatpush1.bf16.msra.mxu0 %v4318
  %6290 = vmatprep.subr.bf16.mxu0 0
  %6291 = vmatpush1.bf16.msra.mxu0 %v4319
  %6292 = vmatprep.subr.bf16.mxu0 0
  %6293 = vmatpush1.bf16.msra.mxu0 %v4320
  %6294 = vmatprep.subr.bf16.mxu0 0
  %6295 = vmatpush1.bf16.msra.mxu0 %v4321
  %6296 = vmatprep.subr.bf16.mxu0 0
  %6297 = vmatpush1.bf16.msra.mxu0 %v4322
  %6298 = vmatprep.subr.bf16.mxu0 0
  %6299 = vmatpush1.bf16.msra.mxu0 %v4323
  %6300 = vmatprep.subr.bf16.mxu0 0
  %6301 = vmatpush1.bf16.msra.mxu0 %v4324
  %6302 = vmatprep.subr.bf16.mxu0 0
  %6303 = vmatpush1.bf16.msra.mxu0 %v4325
  %6304 = vmatprep.subr.bf16.mxu0 0
  %6305 = vmatpush1.bf16.msra.mxu0 %v4326
  %6306 = vmatprep.subr.bf16.mxu0 0
  %6307 = vmatpush1.bf16.msra.mxu0 %v4327
  %6308 = vmatprep.subr.bf16.mxu0 0
  %6309 = vmatpush1.bf16.msra.mxu0 %v4328
  %6310 = vmatprep.subr.bf16.mxu0 0
  %6311 = vmatpush1.bf16.msra.mxu0 %v4329
  %6312 = vmatprep.subr.bf16.mxu0 0
  %6313 = vmatpush1.bf16.msra.mxu0 %v4330
  %6314 = vmatprep.subr.bf16.mxu0 0
  %6315 = vmatpush1.bf16.msra.mxu0 %v4331
  %6316 = vmatprep.mubr.bf16.mxu0 %v1393
  %6317 = vmatmul.mubr.bf16.gmra.mrb[0].mxu0 %v1392
  %v6318 = vpop.f32.mrb[0].mxu0
  %v6319 = vadd.f32 %v6279, %v6318
  %v6320 = vpop.f32.mrb[0].mxu0
  %v6321 = vpop.f32.mrb[0].mxu0
  %v6322 = vpop.f32.mrb[0].mxu0
  %6323 = vdwg.mxu0
  %6324 = vmatprep.subr.bf16.mxu0 0
  %6325 = vmatpush1.bf16.msra.mxu0 %v4332
  %6326 = vmatprep.subr.bf16.mxu0 0
  %6327 = vmatpush1.bf16.msra.mxu0 %v4333
  %6328 = vmatprep.subr.bf16.mxu0 0
  %6329 = vmatpush1.bf16.msra.mxu0 %v4334
  %6330 = vmatprep.subr.bf16.mxu0 0
  %6331 = vmatpush1.bf16.msra.mxu0 %v4335
  %6332 = vmatprep.subr.bf16.mxu0 0
  %6333 = vmatpush1.bf16.msra.mxu0 %v4336
  %6334 = vmatprep.subr.bf16.mxu0 0
  %6335 = vmatpush1.bf16.msra.mxu0 %v4337
  %6336 = vmatprep.subr.bf16.mxu0 0
  %6337 = vmatpush1.bf16.msra.mxu0 %v4338
  %6338 = vmatprep.subr.bf16.mxu0 0
  %6339 = vmatpush1.bf16.msra.mxu0 %v4339
  %6340 = vmatprep.subr.bf16.mxu0 0
  %6341 = vmatpush1.bf16.msra.mxu0 %v4340
  %6342 = vmatprep.subr.bf16.mxu0 0
  %6343 = vmatpush1.bf16.msra.mxu0 %v4341
  %6344 = vmatprep.subr.bf16.mxu0 0
  %6345 = vmatpush1.bf16.msra.mxu0 %v4342
  %6346 = vmatprep.subr.bf16.mxu0 0
  %6347 = vmatpush1.bf16.msra.mxu0 %v4343
  %6348 = vmatprep.subr.bf16.mxu0 0
  %6349 = vmatpush1.bf16.msra.mxu0 %v4344
  %6350 = vmatprep.subr.bf16.mxu0 0
  %6351 = vmatpush1.bf16.msra.mxu0 %v4345
  %6352 = vmatprep.subr.bf16.mxu0 0
  %6353 = vmatpush1.bf16.msra.mxu0 %v4346
  %6354 = vmatprep.subr.bf16.mxu0 0
  %6355 = vmatpush1.bf16.msra.mxu0 %v4347
  %6356 = vmatprep.mubr.bf16.mxu0 %v1395
  %6357 = vmatmul.mubr.bf16.gmra.mrb[0].mxu0 %v1394
  %v6358 = vpop.f32.mrb[0].mxu0
  %v6359 = vadd.f32 %v6319, %v6358
  %v6360 = vpop.f32.mrb[0].mxu0
  %v6361 = vpop.f32.mrb[0].mxu0
  %v6362 = vpop.f32.mrb[0].mxu0
  %6363 = vdwg.mxu0
  %v6364 = vmax.f32 %v6359, 0.0
  %v6365 = vld [vmem:[%s3] sm:$0xff]
  %v6366 = vld [vmem:[%s3 + $0x8] sm:$0xff]
  %v6367 = vld [vmem:[%s3 + $0x10] sm:$0xff]
  %v6368 = vld [vmem:[%s3 + $0x18] sm:$0xff]
  %v6369 = vld [vmem:[%s3 + $0x20] sm:$0xff]
  %v6370 = vld [vmem:[%s3 + $0x28] sm:$0xff]
  %v6371 = vld [vmem:[%s3 + $0x30] sm:$0xff]
  %v6372 = vld [vmem:[%s3 + $0x38] sm:$0xff]
  %v6373 = vld [vmem:[%s3 + $0x40] sm:$0xff]
  %v6374 = vld [vmem:[%s3 + $0x48] sm:$0xff]
  %v6375 = vld [vmem:[%s3 + $0x50] sm:$0xff]
  %v6376 = vld [vmem:[%s3 + $0x58] sm:$0xff]
  %v6377 = vld [vmem:[%s3 + $0x60] sm:$0xff]
  %v6378 = vld [vmem:[%s3 + $0x68] sm:$0xff]
  %v6379 = vld [vmem:[%s3 + $0x70] sm:$0xff]
  %v6380 = vld [vmem:[%s3 + $0x78] sm:$0xff]
  %v6381 = vld [vmem:[%s4] sm:$0x1]
  %v6383 = vlaneseq
  %v6384 = vshrl.u32 %v6383, 7
  %v6385 = vsub.s32 0, %v6384
  %v6386 = vrot.slane %v6381, %v6385
  %6388 = vmatprep.subr.mxu0 0.0
  %6389 = vmatpush1.msra.mxu0 %v6365
  %6390 = vmatprep.subr.mxu0 0.0
  %6391 = vmatpush1.msra.mxu0 %v6366
  %6392 = vmatprep.subr.mxu0 0.0
  %6393 = vmatpush1.msra.mxu0 %v6367
  %6394 = vmatprep.subr.mxu0 0.0
  %6395 = vmatpush1.msra.mxu0 %v6368
  %6396 = vmatprep.subr.mxu0 0.0
  %6397 = vmatpush1.msra.mxu0 %v6369
  %6398 = vmatprep.subr.mxu0 0.0
  %6399 = vmatpush1.msra.mxu0 %v6370
  %6400 = vmatprep.subr.mxu0 0.0
  %6401 = vmatpush1.msra.mxu0 %v6371
  %6402 = vmatprep.subr.mxu0 0.0
  %6403 = vmatpush1.msra.mxu0 %v6372
  %6404 = vmatprep.subr.mxu0 0.0
  %6405 = vmatpush1.msra.mxu0 %v6373
  %6406 = vmatprep.subr.mxu0 0.0
  %6407 = vmatpush1.msra.mxu0 %v6374
  %6408 = vmatprep.subr.mxu0 0.0
  %6409 = vmatpush1.msra.mxu0 %v6375
  %6410 = vmatprep.subr.mxu0 0.0
  %6411 = vmatpush1.msra.mxu0 %v6376
  %6412 = vmatprep.subr.mxu0 0.0
  %6413 = vmatpush1.msra.mxu0 %v6377
  %6414 = vmatprep.subr.mxu0 0.0
  %6415 = vmatpush1.msra.mxu0 %v6378
  %6416 = vmatprep.subr.mxu0 0.0
  %6417 = vmatpush1.msra.mxu0 %v6379
  %6418 = vmatprep.subr.mxu0 0.0
  %6419 = vmatpush1.msra.mxu0 %v6380
  %6420 = vmatprep.subr.mxu0 0.0
  %6421 = vmatpush1.msra.mxu0 0.0
  %6422 = vmatprep.subr.mxu0 0.0
  %6423 = vmatpush1.msra.mxu0 0.0
  %6424 = vmatprep.subr.mxu0 0.0
  %6425 = vmatpush1.msra.mxu0 0.0
  %6426 = vmatprep.subr.mxu0 0.0
  %6427 = vmatpush1.msra.mxu0 0.0
  %6428 = vmatprep.subr.mxu0 0.0
  %6429 = vmatpush1.msra.mxu0 0.0
  %6430 = vmatprep.subr.mxu0 0.0
  %6431 = vmatpush1.msra.mxu0 0.0
  %6432 = vmatprep.subr.mxu0 0.0
  %6433 = vmatpush1.msra.mxu0 0.0
  %6434 = vmatprep.subr.mxu0 0.0
  %6435 = vmatpush1.msra.mxu0 0.0
  %6436 = vmatprep.subr.mxu0 0.0
  %6437 = vmatpush1.msra.mxu0 0.0
  %6438 = vmatprep.subr.mxu0 0.0
  %6439 = vmatpush1.msra.mxu0 0.0
  %6440 = vmatprep.subr.mxu0 0.0
  %6441 = vmatpush1.msra.mxu0 0.0
  %6442 = vmatprep.subr.mxu0 0.0
  %6443 = vmatpush1.msra.mxu0 0.0
  %6444 = vmatprep.subr.mxu0 0.0
  %6445 = vmatpush1.msra.mxu0 0.0
  %6446 = vmatprep.subr.mxu0 0.0
  %6447 = vmatpush1.msra.mxu0 0.0
  %6448 = vmatprep.subr.mxu0 0.0
  %6449 = vmatpush1.msra.mxu0 0.0
  %6450 = vmatprep.subr.mxu0 0.0
  %6451 = vmatpush1.msra.mxu0 0.0
  %6452 = vmatprep.mubr.f32.mxu0 0.0
  %6453 = vmatmul.mubr.f32.gmra.mrb[0].mxu0 %v6364
  %v6454 = vpop.f32.mrb[0].mxu0
  %v6455 = vadd.f32 %v6386, %v6454
  %v6456 = vpop.f32.mrb[0].mxu0
  %6457 = vdwg.mxu0
  %vm6458 = vcmask 80896
  %v6459 = vsel %vm6458, %v6455, -inf
  %6460 = vmax.xlane.f32.xlu0 %v6459
  %v6461 = vpop.xlane.xlu0 %6460
  %v6462 = vsub.f32 %v6455, %v6461
  %v6463 = vmul.f32 %v6462, 1.442695
  %v6464 = vpow.pop %v6463
  %v6465 = vsel %vm6458, %v6464, 0.0
  %6466 = vadd.xlane.f32.xlu0 %v6465
  %v6467 = vpop.xlane.xlu0 %6466
  %v6468 = vlog2.pop %v6467
  %v6469 = vmul.f32 %v6468, 0.6931472
  %v6470 = vsub.f32 %v6462, %v6469
  %6471 = vst.msk [vmem:[%s5] sm:$0xff] %vm6458, %v6470
  // Predicated region
  $region22: #{cnn_forward.3} parent=0 // pred_check
    _
  $region23: #{cnn_forward.3} parent=0 // pred_check_branch
    %6473 = sbr.rel (0) target = $region25
  $region24: #{cnn_forward.3} parent=0 // pred_region
    _
  $region25: #{cnn_forward.3} parent=0 // pred_fallthru
    _
  // Predicated region
  $region26: #{cnn_forward.3} parent=0 // pred_check
    _
  $region27: #{cnn_forward.3} parent=0 // pred_check_branch
    %6475 = sbr.rel (0) target = $region29
  $region28: #{cnn_forward.3} parent=0 // pred_region
    _
  $region29: #{cnn_forward.3} parent=0 // pred_fallthru
    _

</llo_original>
